<compile_context>
chip_gen: v6e
topology: v6e:2x2x1
jax: 0.10.0
libtpu: 0.0.40
codegen_flags: <defaults>
</compile_context>

<pallas_src>
import functools
import math

import jax
import jax.numpy as jnp
from jax.experimental import pallas as pl
from jax.experimental.pallas import tpu as pltpu

_LN_EPS = 1e-5


@functools.lru_cache(maxsize=None)
def _vmem_limit_bytes():
    # Generation-aware scoped-VMEM budget: ~3/4 of physical, capped at 100 MiB.
    # v5e/v6e (128 MiB physical) -> 96 MiB; v7x (64 MiB physical) -> 48 MiB.
    try:
        cap = int(pltpu.get_tpu_info().vmem_capacity_bytes)
    except Exception:
        cap = 64 * 1024 * 1024
    return int(min(cap * 3 // 4, 100 * 1024 * 1024))


def _compiler_params(n_axes):
    return pltpu.CompilerParams(
        dimension_semantics=("parallel",) * n_axes,
        vmem_limit_bytes=_vmem_limit_bytes(),
    )


def _pick_block_rows(m, cap=512):
    """Row tile for the flattened (B*S, .) matmul: one block when it fits,
    else the largest multiple-of-8 divisor <= cap."""
    if m <= cap:
        return m
    for cand in range(cap, 7, -8):
        if m % cand == 0:
            return cand
    return cap  # ragged tail handled by Pallas block masking (pl.cdiv grid)


def _layer_norm(y, gamma, beta, eps):
    mu = jnp.mean(y, axis=-1, keepdims=True)
    var = jnp.mean((y - mu) * (y - mu), axis=-1, keepdims=True)
    return (y - mu) * jax.lax.rsqrt(var + eps) * gamma + beta


# ----------------------------- fused layer kernel --------------------------- #

def _decoder_layer_kernel(x_ref, enc_ref,
                          wqkv1_ref, bqkv1_ref, wo1_ref, bo1_ref, g1_ref, be1_ref,
                          wqkv2_ref, bqkv2_ref, wo2_ref, bo2_ref, g2_ref, be2_ref,
                          fw1_ref, fb1_ref, fw2_ref, fb2_ref, fg_ref, fbe_ref,
                          *out_refs, num_heads, head_dim, scale, eps, with_attn):
    """One batch element per grid step: the full DecoderLayer fused."""
    xo_ref = out_refs[0]
    a1_ref = out_refs[1] if with_attn else None
    a2_ref = out_refs[2] if with_attn else None

    d_model = num_heads * head_dim
    seq = x_ref.shape[1]

    def mha(src_bf, wqkv_ref, bqkv_ref, wo_ref, bo_ref):
        # src_bf: (S, D) bf16.  All matmuls are leading-batch dot_generals over
        # heads — no in-kernel reshape / transpose / lane-offset slicing.
        xb = jnp.broadcast_to(src_bf, (num_heads, seq, d_model))          # (H,S,D)
        q = jnp.einsum('hsd,hdf->hsf', xb, wqkv_ref[0],
                       preferred_element_type=jnp.float32) + bqkv_ref[0]  # (H,S,Dh)
        k = jnp.einsum('hsd,hdf->hsf', xb, wqkv_ref[1],
                       preferred_element_type=jnp.float32) + bqkv_ref[1]
        v = jnp.einsum('hsd,hdf->hsf', xb, wqkv_ref[2],
                       preferred_element_type=jnp.float32) + bqkv_ref[2]
        # scores for all heads in one batched matmul; 1/sqrt(d_k) folded into q.
        s = jnp.einsum('hqd,hkd->hqk',
                       (q * scale).astype(jnp.bfloat16), k.astype(jnp.bfloat16),
                       preferred_element_type=jnp.float32)                # (H,S,S)
        s = s - jnp.max(s, axis=-1, keepdims=True)
        e = jnp.exp(s)
        p = e / jnp.sum(e, axis=-1, keepdims=True)     # exact softmax (probs emitted)
        ctx = jnp.einsum('hqk,hkd->hqd', p.astype(jnp.bfloat16),
                         v.astype(jnp.bfloat16),
                         preferred_element_type=jnp.float32)              # (H,S,Dh)
        # per-head slice of the output projection, then reduce over heads.
        y = jnp.einsum('hsd,hdf->hsf', ctx.astype(jnp.bfloat16), wo_ref[...],
                       preferred_element_type=jnp.float32)                # (H,S,D)
        y = jnp.sum(y, axis=0) + bo_ref[...]                              # (S,D)
        return y, p

    x = x_ref[0].astype(jnp.float32)                                      # (S,D) f32

    # --- self attention (q = k = v = x) ---
    att1, p1 = mha(x_ref[0], wqkv1_ref, bqkv1_ref, wo1_ref, bo1_ref)
    x = x + _layer_norm(att1, g1_ref[...], be1_ref[...], eps)

    # --- second attention: q = k = v = enc_output (reference quirk) ---
    att2, p2 = mha(enc_ref[0], wqkv2_ref, bqkv2_ref, wo2_ref, bo2_ref)
    x = x + _layer_norm(att2, g2_ref[...], be2_ref[...], eps)

    # --- feed-forward (hidden never leaves VMEM) ---
    h = jnp.dot(x.astype(jnp.bfloat16), fw1_ref[...],
                preferred_element_type=jnp.float32) + fb1_ref[...]
    h = jnp.maximum(h, 0.0)
    y = jnp.dot(h.astype(jnp.bfloat16), fw2_ref[...],
                preferred_element_type=jnp.float32) + fb2_ref[...]
    x = x + _layer_norm(y, fg_ref[...], fbe_ref[...], eps)

    xo_ref[0] = x.astype(xo_ref.dtype)
    if with_attn:
        # single store per probs tensor; only the last layer pays this HBM write.
        # (At real S these could be emitted in bf16 to halve the largest write.)
        a1_ref[0] = p1.astype(a1_ref.dtype)
        a2_ref[0] = p2.astype(a2_ref.dtype)


def fused_decoder_layer(p, x, enc, num_heads, want_attn):
    bs, S, D = x.shape
    H = num_heads
    Dh = D // H
    dff = p["ff"]["w1"].shape[1]

    kernel = functools.partial(
        _decoder_layer_kernel, num_heads=H, head_dim=Dh,
        scale=1.0 / math.sqrt(Dh), eps=_LN_EPS, with_attn=want_attn)

    def act_spec():
        return pl.BlockSpec((1, S, D), lambda b: (b, 0, 0))

    def const(shape):
        n = len(shape)
        # Constant-index weight blocks: the pipeline never re-fetches them.
        # (pipeline_mode=pl.Buffered(1) would also drop the second VMEM buffer
        #  on v7x but is left out for broad version compatibility.)
        return pl.BlockSpec(shape, lambda b, _n=n: (0,) * _n)

    def mha_specs():
        return [const((3, H, D, Dh)), const((3, H, 1, Dh)), const((H, Dh, D)),
                const((1, D)), const((1, D)), const((1, D))]

    in_specs = ([act_spec(), act_spec()]
                + mha_specs() + mha_specs()
                + [const((D, dff)), const((1, dff)), const((dff, D)),
                   const((1, D)), const((1, D)), const((1, D))])

    m1, m2, ff = p["mha1"], p["mha2"], p["ff"]
    args = (x, enc,
            m1["wqkv"], m1["bqkv"], m1["wo"], m1["bo"], m1["ln_g"], m1["ln_b"],
            m2["wqkv"], m2["bqkv"], m2["wo"], m2["bo"], m2["ln_g"], m2["ln_b"],
            ff["w1"], ff["b1"], ff["w2"], ff["b2"], ff["ln_g"], ff["ln_b"])

    x_out_spec = pl.BlockSpec((1, S, D), lambda b: (b, 0, 0))
    if want_attn:
        out_specs = [x_out_spec,
                     pl.BlockSpec((1, H, S, S), lambda b: (b, 0, 0, 0)),
                     pl.BlockSpec((1, H, S, S), lambda b: (b, 0, 0, 0))]
        out_shape = (jax.ShapeDtypeStruct((bs, S, D), jnp.bfloat16),
                     jax.ShapeDtypeStruct((bs, H, S, S), jnp.float32),
                     jax.ShapeDtypeStruct((bs, H, S, S), jnp.float32))
    else:
        out_specs = x_out_spec
        out_shape = jax.ShapeDtypeStruct((bs, S, D), jnp.bfloat16)

    res = pl.pallas_call(
        kernel, grid=(bs,), in_specs=in_specs, out_specs=out_specs,
        out_shape=out_shape, compiler_params=_compiler_params(1),
    )(*args)

    if want_attn:
        return res[0], res[1], res[2]
    return res, None, None


# ----------------------------- output projection ---------------------------- #

def _out_proj_kernel(x_ref, w_ref, b_ref, o_ref):
    o_ref[...] = (jnp.dot(x_ref[...], w_ref[...],
                          preferred_element_type=jnp.float32)
                  + b_ref[...]).astype(o_ref.dtype)


def output_projection(x2d, w, b):
    M, D = x2d.shape
    N = w.shape[1]
    bm = _pick_block_rows(M)
    return pl.pallas_call(
        _out_proj_kernel,
        grid=(pl.cdiv(M, bm),),
        in_specs=[pl.BlockSpec((bm, D), lambda i: (i, 0)),
                  pl.BlockSpec((D, N), lambda i: (0, 0)),
                  pl.BlockSpec((1, N), lambda i: (0, 0))],
        out_specs=pl.BlockSpec((bm, N), lambda i: (i, 0)),
        out_shape=jax.ShapeDtypeStruct((M, N), jnp.float32),
        compiler_params=_compiler_params(1),
    )(x2d, w, b)


# --------------------------------- glue ------------------------------------- #

def make_pe_table(max_seq_len, d_model):
    position = jnp.arange(max_seq_len, dtype=jnp.float32)[:, None]
    div_term = jnp.exp(jnp.arange(0, d_model, 2, dtype=jnp.float32)
                       * (-math.log(10000.0) / d_model))
    pe = jnp.zeros((max_seq_len, d_model), dtype=jnp.float32)
    pe = pe.at[:, 0::2].set(jnp.sin(position * div_term))
    pe = pe.at[:, 1::2].set(jnp.cos(position * div_term))
    return pe


def decoder_forward(params, tokens, enc_output, num_heads, num_layers):
    bs, seq_len = tokens.shape
    d_model = params["embedding"].shape[1]
    # Embedding gather + sqrt(d_model) scale + positional encoding stay in plain
    # JAX (XLA fuses them with the gather); no standalone PE kernel.
    # TODO(synk): src_mask / trg_mask are not supported (None in the reference
    # call path); dropout is identity (eval mode).
    x = jnp.take(params["embedding"], tokens, axis=0) * math.sqrt(d_model)
    # pe indexed by BATCH and broadcast over positions (reference quirk).
    x = x + params["pe"][:bs][:, None, :]
    x = x.astype(jnp.bfloat16)                     # bf16 inter-layer activations
    enc_bf = enc_output.astype(jnp.bfloat16)

    attn1 = attn2 = None
    for l in range(num_layers):
        # only the last layer's attention probs are returned by the reference,
        # so earlier layers skip the (B,H,S,S) HBM writes entirely.
        want_attn = (l == num_layers - 1)
        x, a1, a2 = fused_decoder_layer(params["layers"][l], x, enc_bf,
                                        num_heads, want_attn)
        if want_attn:
            attn1, attn2 = a1, a2

    out = output_projection(x.reshape(bs * seq_len, d_model),
                            params["out_w"], params["out_b"])
    return out.reshape(bs, seq_len, -1), attn1, attn2


# ----------------------------- parameter init ------------------------------- #

def init_params(key, output_size, d_model, num_heads, num_layers, d_ff):
    assert d_model % num_heads == 0
    head_dim = d_model // num_heads

    def nrm(k, shape, scale=0.05, dtype=jnp.float32):
        return (scale * jax.random.normal(k, shape, jnp.float32)).astype(dtype)

    keys = jax.random.split(key, 3 + num_layers)
    params = {
        "embedding": nrm(keys[0], (output_size, d_model), 1.0),
        "pe": make_pe_table(1000, d_model),
        # matmul weights stored pre-transposed (in, out) / per-head in bf16;
        # biases and LayerNorm params stay f32.
        "out_w": nrm(keys[1], (d_model, output_size), dtype=jnp.bfloat16),
        "out_b": nrm(keys[2], (1, output_size)),
        "layers": [],
    }

    def mha_params(k):
        ks = jax.random.split(k, 4)
        return {
            # q/k/v stacked on a leading axis, heads batched: (3, H, D, Dh)
            "wqkv": nrm(ks[0], (3, num_heads, d_model, head_dim), dtype=jnp.bfloat16),
            "bqkv": nrm(ks[1], (3, num_heads, 1, head_dim)),
            # output projection split per head: (H, Dh, D)
            "wo": nrm(ks[2], (num_heads, head_dim, d_model), dtype=jnp.bfloat16),
            "bo": nrm(ks[3], (1, d_model)),
            "ln_g": jnp.ones((1, d_model), jnp.float32),
            "ln_b": jnp.zeros((1, d_model), jnp.float32),
        }

    for l in range(num_layers):
        ks = jax.random.split(keys[3 + l], 6)
        params["layers"].append({
            "mha1": mha_params(ks[0]),
            "mha2": mha_params(ks[1]),
            "ff": {
                "w1": nrm(ks[2], (d_model, d_ff), dtype=jnp.bfloat16),
                "b1": nrm(ks[3], (1, d_ff)),
                "w2": nrm(ks[4], (d_ff, d_model), dtype=jnp.bfloat16),
                "b2": nrm(ks[5], (1, d_model)),
                "ln_g": jnp.ones((1, d_model), jnp.float32),
                "ln_b": jnp.zeros((1, d_model), jnp.float32),
            },
        })
    return params


# ----------------------------------- main ------------------------------------ #

if __name__ == "__main__":
    bs = 2
    seq_len = 8          # trg_len == src_len (required by the reference residual add)
    d_model = 128        # lane-dense last dim
    num_heads = 4        # head_dim = 32
    num_layers = 2
    output_size = 256    # lane-dense output projection
    d_ff = 256           # scaled-down FeedForward hidden (reference default 2048)

    root = jax.random.PRNGKey(0)
    k_par, k_tok, k_enc = jax.random.split(root, 3)

    params = init_params(k_par, output_size, d_model, num_heads, num_layers, d_ff)
    trg_tokens = jax.random.randint(k_tok, (bs, seq_len), 0, output_size,
                                    dtype=jnp.int32)
    enc_output = jax.random.normal(k_enc, (bs, seq_len, d_model), dtype=jnp.float32)

    fwd = jax.jit(functools.partial(decoder_forward,
                                    num_heads=num_heads, num_layers=num_layers))
    out, attn1, attn2 = fwd(params, trg_tokens, enc_output)
    jax.block_until_ready((out, attn1, attn2))

    assert out.shape == (bs, seq_len, output_size)
    assert attn1.shape == (bs, num_heads, seq_len, seq_len)
    assert attn2.shape == (bs, num_heads, seq_len, seq_len)
    assert bool(jnp.all(jnp.isfinite(out)))
    assert bool(jnp.all(jnp.isfinite(attn1)))
    assert bool(jnp.all(jnp.isfinite(attn2)))
    # exact-division softmax -> rows sum to 1 (tight tolerance)
    assert bool(jnp.allclose(jnp.sum(attn1, axis=-1), 1.0, atol=2e-3))
    assert bool(jnp.allclose(jnp.sum(attn2, axis=-1), 1.0, atol=2e-3))

    print("KERNEL_OK")
</pallas_src>

<mosaic_0001>
module attributes {stable_mosaic.version = 11 : i64} {
  func.func @_out_proj_kernel(%arg0: i32, %arg1: memref<16x128xbf16, #tpu.memory_space<vmem>>, %arg2: memref<128x256xbf16, #tpu.memory_space<vmem>>, %arg3: memref<1x256xf32, #tpu.memory_space<vmem>>, %arg4: memref<16x256xf32, #tpu.memory_space<vmem>>) attributes {dimension_semantics = [#tpu.dimension_semantics<parallel>], iteration_bounds = array<i64: 1>, scalar_prefetch = 0 : i64, scratch_operands = 0 : i64, tpu.core_type = #tpu.core_type<tc>, window_params = [{transform_indices = @transform_0, window_bounds = array<i64: 16, 128>}, {pipeline_mode = #tpu.pipeline_mode<synchronous>, transform_indices = @transform_1, window_bounds = array<i64: 128, 256>}, {pipeline_mode = #tpu.pipeline_mode<synchronous>, transform_indices = @transform_2, window_bounds = array<i64: 1, 256>}, {transform_indices = @transform_3, window_bounds = array<i64: 16, 256>}]} {
    %c0 = arith.constant 0 : index
    %c0_0 = arith.constant 0 : index
    %0 = vector.load %arg1[%c0, %c0_0] : memref<16x128xbf16, #tpu.memory_space<vmem>>, vector<16x128xbf16>
    %c0_1 = arith.constant 0 : index
    %c0_2 = arith.constant 0 : index
    %1 = vector.load %arg2[%c0_1, %c0_2] : memref<128x256xbf16, #tpu.memory_space<vmem>>, vector<128x256xbf16>
    %cst = arith.constant dense<0.000000e+00> : vector<16x256xf32>
    %2 = tpu.matmul %0, %1, %cst {dimension_numbers = #tpu.dot_dimension_numbers<[1], [0], [0], [1], [0, 0, 1, 1], [], []>} : vector<16x128xbf16>, vector<128x256xbf16>, vector<16x256xf32> -> vector<16x256xf32>
    %c0_3 = arith.constant 0 : index
    %c0_4 = arith.constant 0 : index
    %3 = vector.load %arg3[%c0_3, %c0_4] : memref<1x256xf32, #tpu.memory_space<vmem>>, vector<1x256xf32>
    %4 = vector.broadcast %3 : vector<1x256xf32> to vector<16x256xf32>
    %5 = arith.addf %2, %4 : vector<16x256xf32>
    %c0_5 = arith.constant 0 : index
    %c0_6 = arith.constant 0 : index
    %6 = vector.load %arg4[%c0_5, %c0_6] : memref<16x256xf32, #tpu.memory_space<vmem>>, vector<16x256xf32>
    tpu.vector_store %arg4[%c0_5, %c0_6], %5 {strides = array<i32>} : memref<16x256xf32, #tpu.memory_space<vmem>>, vector<16x256xf32>,
    return
  }
  func.func @transform_0(%arg0: i32) -> (i32, i32) {
    %c0_i32 = arith.constant 0 : i32
    %c0_i32_0 = arith.constant 0 : i32
    return %arg0, %c0_i32 : i32, i32
  }
  func.func @transform_1(%arg0: i32) -> (i32, i32) {
    %c0_i32 = arith.constant 0 : i32
    %c0_i32_0 = arith.constant 0 : i32
    %c0_i32_1 = arith.constant 0 : i32
    return %c0_i32, %c0_i32_0 : i32, i32
  }
  func.func @transform_2(%arg0: i32) -> (i32, i32) {
    %c0_i32 = arith.constant 0 : i32
    %c0_i32_0 = arith.constant 0 : i32
    %c0_i32_1 = arith.constant 0 : i32
    return %c0_i32, %c0_i32_0 : i32, i32
  }
  func.func @transform_3(%arg0: i32) -> (i32, i32) {
    %c0_i32 = arith.constant 0 : i32
    %c0_i32_0 = arith.constant 0 : i32
    return %arg0, %c0_i32 : i32, i32
  }
}

module attributes {stable_mosaic.version = 11 : i64} {
  func.func @_decoder_layer_kernel(%arg0: i32, %arg1: memref<1x8x128xbf16, #tpu.memory_space<vmem>>, %arg2: memref<1x8x128xbf16, #tpu.memory_space<vmem>>, %arg3: memref<3x4x128x32xbf16, #tpu.memory_space<vmem>>, %arg4: memref<3x4x1x32xf32, #tpu.memory_space<vmem>>, %arg5: memref<4x32x128xbf16, #tpu.memory_space<vmem>>, %arg6: memref<1x128xf32, #tpu.memory_space<vmem>>, %arg7: memref<1x128xf32, #tpu.memory_space<vmem>>, %arg8: memref<1x128xf32, #tpu.memory_space<vmem>>, %arg9: memref<3x4x128x32xbf16, #tpu.memory_space<vmem>>, %arg10: memref<3x4x1x32xf32, #tpu.memory_space<vmem>>, %arg11: memref<4x32x128xbf16, #tpu.memory_space<vmem>>, %arg12: memref<1x128xf32, #tpu.memory_space<vmem>>, %arg13: memref<1x128xf32, #tpu.memory_space<vmem>>, %arg14: memref<1x128xf32, #tpu.memory_space<vmem>>, %arg15: memref<128x256xbf16, #tpu.memory_space<vmem>>, %arg16: memref<1x256xf32, #tpu.memory_space<vmem>>, %arg17: memref<256x128xbf16, #tpu.memory_space<vmem>>, %arg18: memref<1x128xf32, #tpu.memory_space<vmem>>, %arg19: memref<1x128xf32, #tpu.memory_space<vmem>>, %arg20: memref<1x128xf32, #tpu.memory_space<vmem>>, %arg21: memref<1x8x128xbf16, #tpu.memory_space<vmem>>, %arg22: memref<1x4x8x8xf32, #tpu.memory_space<vmem>>, %arg23: memref<1x4x8x8xf32, #tpu.memory_space<vmem>>) attributes {dimension_semantics = [#tpu.dimension_semantics<parallel>], iteration_bounds = array<i64: 2>, scalar_prefetch = 0 : i64, scratch_operands = 0 : i64, tpu.core_type = #tpu.core_type<tc>, window_params = [{transform_indices = @transform_0, window_bounds = array<i64: 1, 8, 128>}, {transform_indices = @transform_1, window_bounds = array<i64: 1, 8, 128>}, {pipeline_mode = #tpu.pipeline_mode<synchronous>, transform_indices = @transform_2, window_bounds = array<i64: 3, 4, 128, 32>}, {pipeline_mode = #tpu.pipeline_mode<synchronous>, transform_indices = @transform_3, window_bounds = array<i64: 3, 4, 1, 32>}, {pipeline_mode = #tpu.pipeline_mode<synchronous>, transform_indices = @transform_4, window_bounds = array<i64: 4, 32, 128>}, {pipeline_mode = #tpu.pipeline_mode<synchronous>, transform_indices = @transform_5, window_bounds = array<i64: 1, 128>}, {pipeline_mode = #tpu.pipeline_mode<synchronous>, transform_indices = @transform_6, window_bounds = array<i64: 1, 128>}, {pipeline_mode = #tpu.pipeline_mode<synchronous>, transform_indices = @transform_7, window_bounds = array<i64: 1, 128>}, {pipeline_mode = #tpu.pipeline_mode<synchronous>, transform_indices = @transform_8, window_bounds = array<i64: 3, 4, 128, 32>}, {pipeline_mode = #tpu.pipeline_mode<synchronous>, transform_indices = @transform_9, window_bounds = array<i64: 3, 4, 1, 32>}, {pipeline_mode = #tpu.pipeline_mode<synchronous>, transform_indices = @transform_10, window_bounds = array<i64: 4, 32, 128>}, {pipeline_mode = #tpu.pipeline_mode<synchronous>, transform_indices = @transform_11, window_bounds = array<i64: 1, 128>}, {pipeline_mode = #tpu.pipeline_mode<synchronous>, transform_indices = @transform_12, window_bounds = array<i64: 1, 128>}, {pipeline_mode = #tpu.pipeline_mode<synchronous>, transform_indices = @transform_13, window_bounds = array<i64: 1, 128>}, {pipeline_mode = #tpu.pipeline_mode<synchronous>, transform_indices = @transform_14, window_bounds = array<i64: 128, 256>}, {pipeline_mode = #tpu.pipeline_mode<synchronous>, transform_indices = @transform_15, window_bounds = array<i64: 1, 256>}, {pipeline_mode = #tpu.pipeline_mode<synchronous>, transform_indices = @transform_16, window_bounds = array<i64: 256, 128>}, {pipeline_mode = #tpu.pipeline_mode<synchronous>, transform_indices = @transform_17, window_bounds = array<i64: 1, 128>}, {pipeline_mode = #tpu.pipeline_mode<synchronous>, transform_indices = @transform_18, window_bounds = array<i64: 1, 128>}, {pipeline_mode = #tpu.pipeline_mode<synchronous>, transform_indices = @transform_19, window_bounds = array<i64: 1, 128>}, {transform_indices = @transform_20, window_bounds = array<i64: 1, 8, 128>}, {transform_indices = @transform_21, window_bounds = array<i64: 1, 4, 8, 8>}, {transform_indices = @transform_22, window_bounds = array<i64: 1, 4, 8, 8>}]} {
    %c0 = arith.constant 0 : index
    %c0_0 = arith.constant 0 : index
    %c0_1 = arith.constant 0 : index
    %0 = vector.load %arg1[%c0, %c0_0, %c0_1] : memref<1x8x128xbf16, #tpu.memory_space<vmem>>, vector<1x8x128xbf16>
    %1 = vector.shape_cast %0 : vector<1x8x128xbf16> to vector<8x128xbf16>
    %2 = arith.extf %1 : vector<8x128xbf16> to vector<8x128xf32>
    %c0_2 = arith.constant 0 : index
    %c0_3 = arith.constant 0 : index
    %c0_4 = arith.constant 0 : index
    %3 = vector.load %arg1[%c0_2, %c0_3, %c0_4] : memref<1x8x128xbf16, #tpu.memory_space<vmem>>, vector<1x8x128xbf16>
    %4 = vector.shape_cast %3 : vector<1x8x128xbf16> to vector<8x128xbf16>
    %5 = vector.shape_cast %4 : vector<8x128xbf16> to vector<1x8x128xbf16>
    %6 = vector.broadcast %5 : vector<1x8x128xbf16> to vector<4x8x128xbf16>
    %c0_5 = arith.constant 0 : index
    %c0_6 = arith.constant 0 : index
    %c0_7 = arith.constant 0 : index
    %c0_8 = arith.constant 0 : index
    %7 = vector.load %arg3[%c0_5, %c0_6, %c0_7, %c0_8] : memref<3x4x128x32xbf16, #tpu.memory_space<vmem>>, vector<1x4x128x32xbf16>
    %8 = vector.shape_cast %7 : vector<1x4x128x32xbf16> to vector<4x128x32xbf16>
    "tpu.trace_start"() <{level = 10 : i32, message = "hsd,hdf->hsf"}> : () -> ()
    %cst = arith.constant dense<0.000000e+00> : vector<4x8x32xf32>
    %9 = tpu.matmul %6, %8, %cst {dimension_numbers = #tpu.dot_dimension_numbers<[2], [1], [1], [2], [0, 0, 0, 1, 1, 2], [0], [0]>} : vector<4x8x128xbf16>, vector<4x128x32xbf16>, vector<4x8x32xf32> -> vector<4x8x32xf32>
    "tpu.trace_stop"() : () -> ()
    %c0_9 = arith.constant 0 : index
    %c0_10 = arith.constant 0 : index
    %c0_11 = arith.constant 0 : index
    %c0_12 = arith.constant 0 : index
    %10 = vector.load %arg4[%c0_9, %c0_10, %c0_11, %c0_12] : memref<3x4x1x32xf32, #tpu.memory_space<vmem>>, vector<1x4x1x32xf32>
    %11 = vector.shape_cast %10 : vector<1x4x1x32xf32> to vector<4x1x32xf32>
    %12 = vector.broadcast %11 : vector<4x1x32xf32> to vector<4x8x32xf32>
    %13 = arith.addf %9, %12 : vector<4x8x32xf32>
    %c1 = arith.constant 1 : index
    %c0_13 = arith.constant 0 : index
    %c0_14 = arith.constant 0 : index
    %c0_15 = arith.constant 0 : index
    %14 = vector.load %arg3[%c1, %c0_13, %c0_14, %c0_15] : memref<3x4x128x32xbf16, #tpu.memory_space<vmem>>, vector<1x4x128x32xbf16>
    %15 = vector.shape_cast %14 : vector<1x4x128x32xbf16> to vector<4x128x32xbf16>
    "tpu.trace_start"() <{level = 10 : i32, message = "hsd,hdf->hsf"}> : () -> ()
    %cst_16 = arith.constant dense<0.000000e+00> : vector<4x8x32xf32>
    %16 = tpu.matmul %6, %15, %cst_16 {dimension_numbers = #tpu.dot_dimension_numbers<[2], [1], [1], [2], [0, 0, 0, 1, 1, 2], [0], [0]>} : vector<4x8x128xbf16>, vector<4x128x32xbf16>, vector<4x8x32xf32> -> vector<4x8x32xf32>
    "tpu.trace_stop"() : () -> ()
    %c1_17 = arith.constant 1 : index
    %c0_18 = arith.constant 0 : index
    %c0_19 = arith.constant 0 : index
    %c0_20 = arith.constant 0 : index
    %17 = vector.load %arg4[%c1_17, %c0_18, %c0_19, %c0_20] : memref<3x4x1x32xf32, #tpu.memory_space<vmem>>, vector<1x4x1x32xf32>
    %18 = vector.shape_cast %17 : vector<1x4x1x32xf32> to vector<4x1x32xf32>
    %19 = vector.broadcast %18 : vector<4x1x32xf32> to vector<4x8x32xf32>
    %20 = arith.addf %16, %19 : vector<4x8x32xf32>
    %c2 = arith.constant 2 : index
    %c0_21 = arith.constant 0 : index
    %c0_22 = arith.constant 0 : index
    %c0_23 = arith.constant 0 : index
    %21 = vector.load %arg3[%c2, %c0_21, %c0_22, %c0_23] : memref<3x4x128x32xbf16, #tpu.memory_space<vmem>>, vector<1x4x128x32xbf16>
    %22 = vector.shape_cast %21 : vector<1x4x128x32xbf16> to vector<4x128x32xbf16>
    "tpu.trace_start"() <{level = 10 : i32, message = "hsd,hdf->hsf"}> : () -> ()
    %cst_24 = arith.constant dense<0.000000e+00> : vector<4x8x32xf32>
    %23 = tpu.matmul %6, %22, %cst_24 {dimension_numbers = #tpu.dot_dimension_numbers<[2], [1], [1], [2], [0, 0, 0, 1, 1, 2], [0], [0]>} : vector<4x8x128xbf16>, vector<4x128x32xbf16>, vector<4x8x32xf32> -> vector<4x8x32xf32>
    "tpu.trace_stop"() : () -> ()
    %c2_25 = arith.constant 2 : index
    %c0_26 = arith.constant 0 : index
    %c0_27 = arith.constant 0 : index
    %c0_28 = arith.constant 0 : index
    %24 = vector.load %arg4[%c2_25, %c0_26, %c0_27, %c0_28] : memref<3x4x1x32xf32, #tpu.memory_space<vmem>>, vector<1x4x1x32xf32>
    %25 = vector.shape_cast %24 : vector<1x4x1x32xf32> to vector<4x1x32xf32>
    %26 = vector.broadcast %25 : vector<4x1x32xf32> to vector<4x8x32xf32>
    %27 = arith.addf %23, %26 : vector<4x8x32xf32>
    %cst_29 = arith.constant 0.176776692 : f32
    %28 = vector.broadcast %cst_29 : f32 to vector<4x8x32xf32>
    %29 = arith.mulf %13, %28 : vector<4x8x32xf32>
    %30 = arith.truncf %29 : vector<4x8x32xf32> to vector<4x8x32xbf16>
    %31 = arith.truncf %20 : vector<4x8x32xf32> to vector<4x8x32xbf16>
    "tpu.trace_start"() <{level = 10 : i32, message = "hqd,hkd->hqk"}> : () -> ()
    %cst_30 = arith.constant dense<0.000000e+00> : vector<4x8x8xf32>
    %32 = tpu.matmul %30, %31, %cst_30 {dimension_numbers = #tpu.dot_dimension_numbers<[2], [2], [1], [1], [0, 0, 0, 1, 1, 1], [0], [0]>} : vector<4x8x32xbf16>, vector<4x8x32xbf16>, vector<4x8x8xf32> -> vector<4x8x8xf32>
    "tpu.trace_stop"() : () -> ()
    %cst_31 = arith.constant dense<0xFF800000> : vector<4x8xf32>
    %33 = vector.multi_reduction <maximumf>, %32, %cst_31 [2] : vector<4x8x8xf32> to vector<4x8xf32>
    %34 = vector.shape_cast %33 : vector<4x8xf32> to vector<4x8x1xf32>
    %35 = vector.broadcast %34 : vector<4x8x1xf32> to vector<4x8x8xf32>
    %36 = arith.subf %32, %35 : vector<4x8x8xf32>
    %37 = math.exp %36 : vector<4x8x8xf32>
    %cst_32 = arith.constant dense<0.000000e+00> : vector<4x8xf32>
    %38 = vector.multi_reduction <add>, %37, %cst_32 [2] : vector<4x8x8xf32> to vector<4x8xf32>
    %39 = vector.shape_cast %38 : vector<4x8xf32> to vector<4x8x1xf32>
    %40 = vector.broadcast %39 : vector<4x8x1xf32> to vector<4x8x8xf32>
    %41 = arith.divf %37, %40 : vector<4x8x8xf32>
    %42 = arith.truncf %41 : vector<4x8x8xf32> to vector<4x8x8xbf16>
    %43 = arith.truncf %27 : vector<4x8x32xf32> to vector<4x8x32xbf16>
    "tpu.trace_start"() <{level = 10 : i32, message = "hqk,hkd->hqd"}> : () -> ()
    %cst_33 = arith.constant dense<0.000000e+00> : vector<4x8x32xf32>
    %44 = tpu.matmul %42, %43, %cst_33 {dimension_numbers = #tpu.dot_dimension_numbers<[2], [1], [1], [2], [0, 0, 0, 1, 1, 2], [0], [0]>} : vector<4x8x8xbf16>, vector<4x8x32xbf16>, vector<4x8x32xf32> -> vector<4x8x32xf32>
    "tpu.trace_stop"() : () -> ()
    %45 = arith.truncf %44 : vector<4x8x32xf32> to vector<4x8x32xbf16>
    %c0_34 = arith.constant 0 : index
    %c0_35 = arith.constant 0 : index
    %c0_36 = arith.constant 0 : index
    %46 = vector.load %arg5[%c0_34, %c0_35, %c0_36] : memref<4x32x128xbf16, #tpu.memory_space<vmem>>, vector<4x32x128xbf16>
    "tpu.trace_start"() <{level = 10 : i32, message = "hsd,hdf->hsf"}> : () -> ()
    %cst_37 = arith.constant dense<0.000000e+00> : vector<4x8x128xf32>
    %47 = tpu.matmul %45, %46, %cst_37 {dimension_numbers = #tpu.dot_dimension_numbers<[2], [1], [1], [2], [0, 0, 0, 1, 1, 2], [0], [0]>} : vector<4x8x32xbf16>, vector<4x32x128xbf16>, vector<4x8x128xf32> -> vector<4x8x128xf32>
    "tpu.trace_stop"() : () -> ()
    %cst_38 = arith.constant dense<0.000000e+00> : vector<8x128xf32>
    %48 = vector.multi_reduction <add>, %47, %cst_38 [0] : vector<4x8x128xf32> to vector<8x128xf32>
    %c0_39 = arith.constant 0 : index
    %c0_40 = arith.constant 0 : index
    %49 = vector.load %arg6[%c0_39, %c0_40] : memref<1x128xf32, #tpu.memory_space<vmem>>, vector<1x128xf32>
    %50 = vector.broadcast %49 : vector<1x128xf32> to vector<8x128xf32>
    %51 = arith.addf %48, %50 : vector<8x128xf32>
    %c0_41 = arith.constant 0 : index
    %c0_42 = arith.constant 0 : index
    %52 = vector.load %arg7[%c0_41, %c0_42] : memref<1x128xf32, #tpu.memory_space<vmem>>, vector<1x128xf32>
    %c0_43 = arith.constant 0 : index
    %c0_44 = arith.constant 0 : index
    %53 = vector.load %arg8[%c0_43, %c0_44] : memref<1x128xf32, #tpu.memory_space<vmem>>, vector<1x128xf32>
    %cst_45 = arith.constant dense<0.000000e+00> : vector<8xf32>
    %54 = vector.multi_reduction <add>, %51, %cst_45 [1] : vector<8x128xf32> to vector<8xf32>
    %55 = vector.shape_cast %54 : vector<8xf32> to vector<8x1xf32>
    %cst_46 = arith.constant 1.280000e+02 : f32
    %56 = vector.broadcast %cst_46 : f32 to vector<8x1xf32>
    %57 = arith.divf %55, %56 : vector<8x1xf32>
    %58 = vector.broadcast %57 : vector<8x1xf32> to vector<8x128xf32>
    %59 = arith.subf %51, %58 : vector<8x128xf32>
    %60 = vector.broadcast %57 : vector<8x1xf32> to vector<8x128xf32>
    %61 = arith.subf %51, %60 : vector<8x128xf32>
    %62 = arith.mulf %59, %61 : vector<8x128xf32>
    %cst_47 = arith.constant dense<0.000000e+00> : vector<8xf32>
    %63 = vector.multi_reduction <add>, %62, %cst_47 [1] : vector<8x128xf32> to vector<8xf32>
    %64 = vector.shape_cast %63 : vector<8xf32> to vector<8x1xf32>
    %cst_48 = arith.constant 1.280000e+02 : f32
    %65 = vector.broadcast %cst_48 : f32 to vector<8x1xf32>
    %66 = arith.divf %64, %65 : vector<8x1xf32>
    %67 = vector.broadcast %57 : vector<8x1xf32> to vector<8x128xf32>
    %68 = arith.subf %51, %67 : vector<8x128xf32>
    %cst_49 = arith.constant 9.99999974E-6 : f32
    %69 = vector.broadcast %cst_49 : f32 to vector<8x1xf32>
    %70 = arith.addf %66, %69 : vector<8x1xf32>
    %71 = math.rsqrt %70 : vector<8x1xf32>
    %72 = vector.broadcast %71 : vector<8x1xf32> to vector<8x128xf32>
    %73 = arith.mulf %68, %72 : vector<8x128xf32>
    %74 = vector.broadcast %52 : vector<1x128xf32> to vector<8x128xf32>
    %75 = arith.mulf %73, %74 : vector<8x128xf32>
    %76 = vector.broadcast %53 : vector<1x128xf32> to vector<8x128xf32>
    %77 = arith.addf %75, %76 : vector<8x128xf32>
    %78 = arith.addf %2, %77 : vector<8x128xf32>
    %c0_50 = arith.constant 0 : index
    %c0_51 = arith.constant 0 : index
    %c0_52 = arith.constant 0 : index
    %79 = vector.load %arg2[%c0_50, %c0_51, %c0_52] : memref<1x8x128xbf16, #tpu.memory_space<vmem>>, vector<1x8x128xbf16>
    %80 = vector.shape_cast %79 : vector<1x8x128xbf16> to vector<8x128xbf16>
    %81 = vector.shape_cast %80 : vector<8x128xbf16> to vector<1x8x128xbf16>
    %82 = vector.broadcast %81 : vector<1x8x128xbf16> to vector<4x8x128xbf16>
    %c0_53 = arith.constant 0 : index
    %c0_54 = arith.constant 0 : index
    %c0_55 = arith.constant 0 : index
    %c0_56 = arith.constant 0 : index
    %83 = vector.load %arg9[%c0_53, %c0_54, %c0_55, %c0_56] : memref<3x4x128x32xbf16, #tpu.memory_space<vmem>>, vector<1x4x128x32xbf16>
    %84 = vector.shape_cast %83 : vector<1x4x128x32xbf16> to vector<4x128x32xbf16>
    "tpu.trace_start"() <{level = 10 : i32, message = "hsd,hdf->hsf"}> : () -> ()
    %cst_57 = arith.constant dense<0.000000e+00> : vector<4x8x32xf32>
    %85 = tpu.matmul %82, %84, %cst_57 {dimension_numbers = #tpu.dot_dimension_numbers<[2], [1], [1], [2], [0, 0, 0, 1, 1, 2], [0], [0]>} : vector<4x8x128xbf16>, vector<4x128x32xbf16>, vector<4x8x32xf32> -> vector<4x8x32xf32>
    "tpu.trace_stop"() : () -> ()
    %c0_58 = arith.constant 0 : index
    %c0_59 = arith.constant 0 : index
    %c0_60 = arith.constant 0 : index
    %c0_61 = arith.constant 0 : index
    %86 = vector.load %arg10[%c0_58, %c0_59, %c0_60, %c0_61] : memref<3x4x1x32xf32, #tpu.memory_space<vmem>>, vector<1x4x1x32xf32>
    %87 = vector.shape_cast %86 : vector<1x4x1x32xf32> to vector<4x1x32xf32>
    %88 = vector.broadcast %87 : vector<4x1x32xf32> to vector<4x8x32xf32>
    %89 = arith.addf %85, %88 : vector<4x8x32xf32>
    %c1_62 = arith.constant 1 : index
    %c0_63 = arith.constant 0 : index
    %c0_64 = arith.constant 0 : index
    %c0_65 = arith.constant 0 : index
    %90 = vector.load %arg9[%c1_62, %c0_63, %c0_64, %c0_65] : memref<3x4x128x32xbf16, #tpu.memory_space<vmem>>, vector<1x4x128x32xbf16>
    %91 = vector.shape_cast %90 : vector<1x4x128x32xbf16> to vector<4x128x32xbf16>
    "tpu.trace_start"() <{level = 10 : i32, message = "hsd,hdf->hsf"}> : () -> ()
    %cst_66 = arith.constant dense<0.000000e+00> : vector<4x8x32xf32>
    %92 = tpu.matmul %82, %91, %cst_66 {dimension_numbers = #tpu.dot_dimension_numbers<[2], [1], [1], [2], [0, 0, 0, 1, 1, 2], [0], [0]>} : vector<4x8x128xbf16>, vector<4x128x32xbf16>, vector<4x8x32xf32> -> vector<4x8x32xf32>
    "tpu.trace_stop"() : () -> ()
    %c1_67 = arith.constant 1 : index
    %c0_68 = arith.constant 0 : index
    %c0_69 = arith.constant 0 : index
    %c0_70 = arith.constant 0 : index
    %93 = vector.load %arg10[%c1_67, %c0_68, %c0_69, %c0_70] : memref<3x4x1x32xf32, #tpu.memory_space<vmem>>, vector<1x4x1x32xf32>
    %94 = vector.shape_cast %93 : vector<1x4x1x32xf32> to vector<4x1x32xf32>
    %95 = vector.broadcast %94 : vector<4x1x32xf32> to vector<4x8x32xf32>
    %96 = arith.addf %92, %95 : vector<4x8x32xf32>
    %c2_71 = arith.constant 2 : index
    %c0_72 = arith.constant 0 : index
    %c0_73 = arith.constant 0 : index
    %c0_74 = arith.constant 0 : index
    %97 = vector.load %arg9[%c2_71, %c0_72, %c0_73, %c0_74] : memref<3x4x128x32xbf16, #tpu.memory_space<vmem>>, vector<1x4x128x32xbf16>
    %98 = vector.shape_cast %97 : vector<1x4x128x32xbf16> to vector<4x128x32xbf16>
    "tpu.trace_start"() <{level = 10 : i32, message = "hsd,hdf->hsf"}> : () -> ()
    %cst_75 = arith.constant dense<0.000000e+00> : vector<4x8x32xf32>
    %99 = tpu.matmul %82, %98, %cst_75 {dimension_numbers = #tpu.dot_dimension_numbers<[2], [1], [1], [2], [0, 0, 0, 1, 1, 2], [0], [0]>} : vector<4x8x128xbf16>, vector<4x128x32xbf16>, vector<4x8x32xf32> -> vector<4x8x32xf32>
    "tpu.trace_stop"() : () -> ()
    %c2_76 = arith.constant 2 : index
    %c0_77 = arith.constant 0 : index
    %c0_78 = arith.constant 0 : index
    %c0_79 = arith.constant 0 : index
    %100 = vector.load %arg10[%c2_76, %c0_77, %c0_78, %c0_79] : memref<3x4x1x32xf32, #tpu.memory_space<vmem>>, vector<1x4x1x32xf32>
    %101 = vector.shape_cast %100 : vector<1x4x1x32xf32> to vector<4x1x32xf32>
    %102 = vector.broadcast %101 : vector<4x1x32xf32> to vector<4x8x32xf32>
    %103 = arith.addf %99, %102 : vector<4x8x32xf32>
    %cst_80 = arith.constant 0.176776692 : f32
    %104 = vector.broadcast %cst_80 : f32 to vector<4x8x32xf32>
    %105 = arith.mulf %89, %104 : vector<4x8x32xf32>
    %106 = arith.truncf %105 : vector<4x8x32xf32> to vector<4x8x32xbf16>
    %107 = arith.truncf %96 : vector<4x8x32xf32> to vector<4x8x32xbf16>
    "tpu.trace_start"() <{level = 10 : i32, message = "hqd,hkd->hqk"}> : () -> ()
    %cst_81 = arith.constant dense<0.000000e+00> : vector<4x8x8xf32>
    %108 = tpu.matmul %106, %107, %cst_81 {dimension_numbers = #tpu.dot_dimension_numbers<[2], [2], [1], [1], [0, 0, 0, 1, 1, 1], [0], [0]>} : vector<4x8x32xbf16>, vector<4x8x32xbf16>, vector<4x8x8xf32> -> vector<4x8x8xf32>
    "tpu.trace_stop"() : () -> ()
    %cst_82 = arith.constant dense<0xFF800000> : vector<4x8xf32>
    %109 = vector.multi_reduction <maximumf>, %108, %cst_82 [2] : vector<4x8x8xf32> to vector<4x8xf32>
    %110 = vector.shape_cast %109 : vector<4x8xf32> to vector<4x8x1xf32>
    %111 = vector.broadcast %110 : vector<4x8x1xf32> to vector<4x8x8xf32>
    %112 = arith.subf %108, %111 : vector<4x8x8xf32>
    %113 = math.exp %112 : vector<4x8x8xf32>
    %cst_83 = arith.constant dense<0.000000e+00> : vector<4x8xf32>
    %114 = vector.multi_reduction <add>, %113, %cst_83 [2] : vector<4x8x8xf32> to vector<4x8xf32>
    %115 = vector.shape_cast %114 : vector<4x8xf32> to vector<4x8x1xf32>
    %116 = vector.broadcast %115 : vector<4x8x1xf32> to vector<4x8x8xf32>
    %117 = arith.divf %113, %116 : vector<4x8x8xf32>
    %118 = arith.truncf %117 : vector<4x8x8xf32> to vector<4x8x8xbf16>
    %119 = arith.truncf %103 : vector<4x8x32xf32> to vector<4x8x32xbf16>
    "tpu.trace_start"() <{level = 10 : i32, message = "hqk,hkd->hqd"}> : () -> ()
    %cst_84 = arith.constant dense<0.000000e+00> : vector<4x8x32xf32>
    %120 = tpu.matmul %118, %119, %cst_84 {dimension_numbers = #tpu.dot_dimension_numbers<[2], [1], [1], [2], [0, 0, 0, 1, 1, 2], [0], [0]>} : vector<4x8x8xbf16>, vector<4x8x32xbf16>, vector<4x8x32xf32> -> vector<4x8x32xf32>
    "tpu.trace_stop"() : () -> ()
    %121 = arith.truncf %120 : vector<4x8x32xf32> to vector<4x8x32xbf16>
    %c0_85 = arith.constant 0 : index
    %c0_86 = arith.constant 0 : index
    %c0_87 = arith.constant 0 : index
    %122 = vector.load %arg11[%c0_85, %c0_86, %c0_87] : memref<4x32x128xbf16, #tpu.memory_space<vmem>>, vector<4x32x128xbf16>
    "tpu.trace_start"() <{level = 10 : i32, message = "hsd,hdf->hsf"}> : () -> ()
    %cst_88 = arith.constant dense<0.000000e+00> : vector<4x8x128xf32>
    %123 = tpu.matmul %121, %122, %cst_88 {dimension_numbers = #tpu.dot_dimension_numbers<[2], [1], [1], [2], [0, 0, 0, 1, 1, 2], [0], [0]>} : vector<4x8x32xbf16>, vector<4x32x128xbf16>, vector<4x8x128xf32> -> vector<4x8x128xf32>
    "tpu.trace_stop"() : () -> ()
    %cst_89 = arith.constant dense<0.000000e+00> : vector<8x128xf32>
    %124 = vector.multi_reduction <add>, %123, %cst_89 [0] : vector<4x8x128xf32> to vector<8x128xf32>
    %c0_90 = arith.constant 0 : index
    %c0_91 = arith.constant 0 : index
    %125 = vector.load %arg12[%c0_90, %c0_91] : memref<1x128xf32, #tpu.memory_space<vmem>>, vector<1x128xf32>
    %126 = vector.broadcast %125 : vector<1x128xf32> to vector<8x128xf32>
    %127 = arith.addf %124, %126 : vector<8x128xf32>
    %c0_92 = arith.constant 0 : index
    %c0_93 = arith.constant 0 : index
    %128 = vector.load %arg13[%c0_92, %c0_93] : memref<1x128xf32, #tpu.memory_space<vmem>>, vector<1x128xf32>
    %c0_94 = arith.constant 0 : index
    %c0_95 = arith.constant 0 : index
    %129 = vector.load %arg14[%c0_94, %c0_95] : memref<1x128xf32, #tpu.memory_space<vmem>>, vector<1x128xf32>
    %cst_96 = arith.constant dense<0.000000e+00> : vector<8xf32>
    %130 = vector.multi_reduction <add>, %127, %cst_96 [1] : vector<8x128xf32> to vector<8xf32>
    %131 = vector.shape_cast %130 : vector<8xf32> to vector<8x1xf32>
    %cst_97 = arith.constant 1.280000e+02 : f32
    %132 = vector.broadcast %cst_97 : f32 to vector<8x1xf32>
    %133 = arith.divf %131, %132 : vector<8x1xf32>
    %134 = vector.broadcast %133 : vector<8x1xf32> to vector<8x128xf32>
    %135 = arith.subf %127, %134 : vector<8x128xf32>
    %136 = vector.broadcast %133 : vector<8x1xf32> to vector<8x128xf32>
    %137 = arith.subf %127, %136 : vector<8x128xf32>
    %138 = arith.mulf %135, %137 : vector<8x128xf32>
    %cst_98 = arith.constant dense<0.000000e+00> : vector<8xf32>
    %139 = vector.multi_reduction <add>, %138, %cst_98 [1] : vector<8x128xf32> to vector<8xf32>
    %140 = vector.shape_cast %139 : vector<8xf32> to vector<8x1xf32>
    %cst_99 = arith.constant 1.280000e+02 : f32
    %141 = vector.broadcast %cst_99 : f32 to vector<8x1xf32>
    %142 = arith.divf %140, %141 : vector<8x1xf32>
    %143 = vector.broadcast %133 : vector<8x1xf32> to vector<8x128xf32>
    %144 = arith.subf %127, %143 : vector<8x128xf32>
    %cst_100 = arith.constant 9.99999974E-6 : f32
    %145 = vector.broadcast %cst_100 : f32 to vector<8x1xf32>
    %146 = arith.addf %142, %145 : vector<8x1xf32>
    %147 = math.rsqrt %146 : vector<8x1xf32>
    %148 = vector.broadcast %147 : vector<8x1xf32> to vector<8x128xf32>
    %149 = arith.mulf %144, %148 : vector<8x128xf32>
    %150 = vector.broadcast %128 : vector<1x128xf32> to vector<8x128xf32>
    %151 = arith.mulf %149, %150 : vector<8x128xf32>
    %152 = vector.broadcast %129 : vector<1x128xf32> to vector<8x128xf32>
    %153 = arith.addf %151, %152 : vector<8x128xf32>
    %154 = arith.addf %78, %153 : vector<8x128xf32>
    %155 = arith.truncf %154 : vector<8x128xf32> to vector<8x128xbf16>
    %c0_101 = arith.constant 0 : index
    %c0_102 = arith.constant 0 : index
    %156 = vector.load %arg15[%c0_101, %c0_102] : memref<128x256xbf16, #tpu.memory_space<vmem>>, vector<128x256xbf16>
    %cst_103 = arith.constant dense<0.000000e+00> : vector<8x256xf32>
    %157 = tpu.matmul %155, %156, %cst_103 {dimension_numbers = #tpu.dot_dimension_numbers<[1], [0], [0], [1], [0, 0, 1, 1], [], []>} : vector<8x128xbf16>, vector<128x256xbf16>, vector<8x256xf32> -> vector<8x256xf32>
    %c0_104 = arith.constant 0 : index
    %c0_105 = arith.constant 0 : index
    %158 = vector.load %arg16[%c0_104, %c0_105] : memref<1x256xf32, #tpu.memory_space<vmem>>, vector<1x256xf32>
    %159 = vector.broadcast %158 : vector<1x256xf32> to vector<8x256xf32>
    %160 = arith.addf %157, %159 : vector<8x256xf32>
    %cst_106 = arith.constant 0.000000e+00 : f32
    %161 = vector.broadcast %cst_106 : f32 to vector<8x256xf32>
    %162 = arith.maximumf %160, %161 : vector<8x256xf32>
    %163 = arith.truncf %162 : vector<8x256xf32> to vector<8x256xbf16>
    %c0_107 = arith.constant 0 : index
    %c0_108 = arith.constant 0 : index
    %164 = vector.load %arg17[%c0_107, %c0_108] : memref<256x128xbf16, #tpu.memory_space<vmem>>, vector<256x128xbf16>
    %cst_109 = arith.constant dense<0.000000e+00> : vector<8x128xf32>
    %165 = tpu.matmul %163, %164, %cst_109 {dimension_numbers = #tpu.dot_dimension_numbers<[1], [0], [0], [1], [0, 0, 1, 1], [], []>} : vector<8x256xbf16>, vector<256x128xbf16>, vector<8x128xf32> -> vector<8x128xf32>
    %c0_110 = arith.constant 0 : index
    %c0_111 = arith.constant 0 : index
    %166 = vector.load %arg18[%c0_110, %c0_111] : memref<1x128xf32, #tpu.memory_space<vmem>>, vector<1x128xf32>
    %167 = vector.broadcast %166 : vector<1x128xf32> to vector<8x128xf32>
    %168 = arith.addf %165, %167 : vector<8x128xf32>
    %c0_112 = arith.constant 0 : index
    %c0_113 = arith.constant 0 : index
    %169 = vector.load %arg19[%c0_112, %c0_113] : memref<1x128xf32, #tpu.memory_space<vmem>>, vector<1x128xf32>
    %c0_114 = arith.constant 0 : index
    %c0_115 = arith.constant 0 : index
    %170 = vector.load %arg20[%c0_114, %c0_115] : memref<1x128xf32, #tpu.memory_space<vmem>>, vector<1x128xf32>
    %cst_116 = arith.constant dense<0.000000e+00> : vector<8xf32>
    %171 = vector.multi_reduction <add>, %168, %cst_116 [1] : vector<8x128xf32> to vector<8xf32>
    %172 = vector.shape_cast %171 : vector<8xf32> to vector<8x1xf32>
    %cst_117 = arith.constant 1.280000e+02 : f32
    %173 = vector.broadcast %cst_117 : f32 to vector<8x1xf32>
    %174 = arith.divf %172, %173 : vector<8x1xf32>
    %175 = vector.broadcast %174 : vector<8x1xf32> to vector<8x128xf32>
    %176 = arith.subf %168, %175 : vector<8x128xf32>
    %177 = vector.broadcast %174 : vector<8x1xf32> to vector<8x128xf32>
    %178 = arith.subf %168, %177 : vector<8x128xf32>
    %179 = arith.mulf %176, %178 : vector<8x128xf32>
    %cst_118 = arith.constant dense<0.000000e+00> : vector<8xf32>
    %180 = vector.multi_reduction <add>, %179, %cst_118 [1] : vector<8x128xf32> to vector<8xf32>
    %181 = vector.shape_cast %180 : vector<8xf32> to vector<8x1xf32>
    %cst_119 = arith.constant 1.280000e+02 : f32
    %182 = vector.broadcast %cst_119 : f32 to vector<8x1xf32>
    %183 = arith.divf %181, %182 : vector<8x1xf32>
    %184 = vector.broadcast %174 : vector<8x1xf32> to vector<8x128xf32>
    %185 = arith.subf %168, %184 : vector<8x128xf32>
    %cst_120 = arith.constant 9.99999974E-6 : f32
    %186 = vector.broadcast %cst_120 : f32 to vector<8x1xf32>
    %187 = arith.addf %183, %186 : vector<8x1xf32>
    %188 = math.rsqrt %187 : vector<8x1xf32>
    %189 = vector.broadcast %188 : vector<8x1xf32> to vector<8x128xf32>
    %190 = arith.mulf %185, %189 : vector<8x128xf32>
    %191 = vector.broadcast %169 : vector<1x128xf32> to vector<8x128xf32>
    %192 = arith.mulf %190, %191 : vector<8x128xf32>
    %193 = vector.broadcast %170 : vector<1x128xf32> to vector<8x128xf32>
    %194 = arith.addf %192, %193 : vector<8x128xf32>
    %195 = arith.addf %154, %194 : vector<8x128xf32>
    %196 = arith.truncf %195 : vector<8x128xf32> to vector<8x128xbf16>
    %c0_121 = arith.constant 0 : index
    %c0_122 = arith.constant 0 : index
    %c0_123 = arith.constant 0 : index
    %197 = vector.load %arg21[%c0_121, %c0_122, %c0_123] : memref<1x8x128xbf16, #tpu.memory_space<vmem>>, vector<1x8x128xbf16>
    %198 = vector.shape_cast %197 : vector<1x8x128xbf16> to vector<8x128xbf16>
    %199 = vector.shape_cast %196 : vector<8x128xbf16> to vector<1x8x128xbf16>
    tpu.vector_store %arg21[%c0_121, %c0_122, %c0_123], %199 {strides = array<i32>} : memref<1x8x128xbf16, #tpu.memory_space<vmem>>, vector<1x8x128xbf16>,
    %c0_124 = arith.constant 0 : index
    %c0_125 = arith.constant 0 : index
    %c0_126 = arith.constant 0 : index
    %c0_127 = arith.constant 0 : index
    %200 = vector.load %arg22[%c0_124, %c0_125, %c0_126, %c0_127] : memref<1x4x8x8xf32, #tpu.memory_space<vmem>>, vector<1x4x8x8xf32>
    %201 = vector.shape_cast %200 : vector<1x4x8x8xf32> to vector<4x8x8xf32>
    %202 = vector.shape_cast %41 : vector<4x8x8xf32> to vector<1x4x8x8xf32>
    tpu.vector_store %arg22[%c0_124, %c0_125, %c0_126, %c0_127], %202 {strides = array<i32>} : memref<1x4x8x8xf32, #tpu.memory_space<vmem>>, vector<1x4x8x8xf32>,
    %c0_128 = arith.constant 0 : index
    %c0_129 = arith.constant 0 : index
    %c0_130 = arith.constant 0 : index
    %c0_131 = arith.constant 0 : index
    %203 = vector.load %arg23[%c0_128, %c0_129, %c0_130, %c0_131] : memref<1x4x8x8xf32, #tpu.memory_space<vmem>>, vector<1x4x8x8xf32>
    %204 = vector.shape_cast %203 : vector<1x4x8x8xf32> to vector<4x8x8xf32>
    %205 = vector.shape_cast %117 : vector<4x8x8xf32> to vector<1x4x8x8xf32>
    tpu.vector_store %arg23[%c0_128, %c0_129, %c0_130, %c0_131], %205 {strides = array<i32>} : memref<1x4x8x8xf32, #tpu.memory_space<vmem>>, vector<1x4x8x8xf32>,
    return
  }
  func.func @transform_0(%arg0: i32) -> (i32, i32, i32) {
    %c0_i32 = arith.constant 0 : i32
    %c0_i32_0 = arith.constant 0 : i32
    %c0_i32_1 = arith.constant 0 : i32
    return %arg0, %c0_i32, %c0_i32_0 : i32, i32, i32
  }
  func.func @transform_1(%arg0: i32) -> (i32, i32, i32) {
    %c0_i32 = arith.constant 0 : i32
    %c0_i32_0 = arith.constant 0 : i32
    %c0_i32_1 = arith.constant 0 : i32
    return %arg0, %c0_i32, %c0_i32_0 : i32, i32, i32
  }
  func.func @transform_2(%arg0: i32) -> (i32, i32, i32, i32) {
    %c0_i32 = arith.constant 0 : i32
    %c0_i32_0 = arith.constant 0 : i32
    %c0_i32_1 = arith.constant 0 : i32
    %c0_i32_2 = arith.constant 0 : i32
    %c0_i32_3 = arith.constant 0 : i32
    return %c0_i32, %c0_i32_0, %c0_i32_1, %c0_i32_2 : i32, i32, i32, i32
  }
  func.func @transform_3(%arg0: i32) -> (i32, i32, i32, i32) {
    %c0_i32 = arith.constant 0 : i32
    %c0_i32_0 = arith.constant 0 : i32
    %c0_i32_1 = arith.constant 0 : i32
    %c0_i32_2 = arith.constant 0 : i32
    %c0_i32_3 = arith.constant 0 : i32
    return %c0_i32, %c0_i32_0, %c0_i32_1, %c0_i32_2 : i32, i32, i32, i32
  }
  func.func @transform_4(%arg0: i32) -> (i32, i32, i32) {
    %c0_i32 = arith.constant 0 : i32
    %c0_i32_0 = arith.constant 0 : i32
    %c0_i32_1 = arith.constant 0 : i32
    %c0_i32_2 = arith.constant 0 : i32
    return %c0_i32, %c0_i32_0, %c0_i32_1 : i32, i32, i32
  }
  func.func @transform_5(%arg0: i32) -> (i32, i32) {
    %c0_i32 = arith.constant 0 : i32
    %c0_i32_0 = arith.constant 0 : i32
    %c0_i32_1 = arith.constant 0 : i32
    return %c0_i32, %c0_i32_0 : i32, i32
  }
  func.func @transform_6(%arg0: i32) -> (i32, i32) {
    %c0_i32 = arith.constant 0 : i32
    %c0_i32_0 = arith.constant 0 : i32
    %c0_i32_1 = arith.constant 0 : i32
    return %c0_i32, %c0_i32_0 : i32, i32
  }
  func.func @transform_7(%arg0: i32) -> (i32, i32) {
    %c0_i32 = arith.constant 0 : i32
    %c0_i32_0 = arith.constant 0 : i32
    %c0_i32_1 = arith.constant 0 : i32
    return %c0_i32, %c0_i32_0 : i32, i32
  }
  func.func @transform_8(%arg0: i32) -> (i32, i32, i32, i32) {
    %c0_i32 = arith.constant 0 : i32
    %c0_i32_0 = arith.constant 0 : i32
    %c0_i32_1 = arith.constant 0 : i32
    %c0_i32_2 = arith.constant 0 : i32
    %c0_i32_3 = arith.constant 0 : i32
    return %c0_i32, %c0_i32_0, %c0_i32_1, %c0_i32_2 : i32, i32, i32, i32
  }
  func.func @transform_9(%arg0: i32) -> (i32, i32, i32, i32) {
    %c0_i32 = arith.constant 0 : i32
    %c0_i32_0 = arith.constant 0 : i32
    %c0_i32_1 = arith.constant 0 : i32
    %c0_i32_2 = arith.constant 0 : i32
    %c0_i32_3 = arith.constant 0 : i32
    return %c0_i32, %c0_i32_0, %c0_i32_1, %c0_i32_2 : i32, i32, i32, i32
  }
  func.func @transform_10(%arg0: i32) -> (i32, i32, i32) {
    %c0_i32 = arith.constant 0 : i32
    %c0_i32_0 = arith.constant 0 : i32
    %c0_i32_1 = arith.constant 0 : i32
    %c0_i32_2 = arith.constant 0 : i32
    return %c0_i32, %c0_i32_0, %c0_i32_1 : i32, i32, i32
  }
  func.func @transform_11(%arg0: i32) -> (i32, i32) {
    %c0_i32 = arith.constant 0 : i32
    %c0_i32_0 = arith.constant 0 : i32
    %c0_i32_1 = arith.constant 0 : i32
    return %c0_i32, %c0_i32_0 : i32, i32
  }
  func.func @transform_12(%arg0: i32) -> (i32, i32) {
    %c0_i32 = arith.constant 0 : i32
    %c0_i32_0 = arith.constant 0 : i32
    %c0_i32_1 = arith.constant 0 : i32
    return %c0_i32, %c0_i32_0 : i32, i32
  }
  func.func @transform_13(%arg0: i32) -> (i32, i32) {
    %c0_i32 = arith.constant 0 : i32
    %c0_i32_0 = arith.constant 0 : i32
    %c0_i32_1 = arith.constant 0 : i32
    return %c0_i32, %c0_i32_0 : i32, i32
  }
  func.func @transform_14(%arg0: i32) -> (i32, i32) {
    %c0_i32 = arith.constant 0 : i32
    %c0_i32_0 = arith.constant 0 : i32
    %c0_i32_1 = arith.constant 0 : i32
    return %c0_i32, %c0_i32_0 : i32, i32
  }
  func.func @transform_15(%arg0: i32) -> (i32, i32) {
    %c0_i32 = arith.constant 0 : i32
    %c0_i32_0 = arith.constant 0 : i32
    %c0_i32_1 = arith.constant 0 : i32
    return %c0_i32, %c0_i32_0 : i32, i32
  }
  func.func @transform_16(%arg0: i32) -> (i32, i32) {
    %c0_i32 = arith.constant 0 : i32
    %c0_i32_0 = arith.constant 0 : i32
    %c0_i32_1 = arith.constant 0 : i32
    return %c0_i32, %c0_i32_0 : i32, i32
  }
  func.func @transform_17(%arg0: i32) -> (i32, i32) {
    %c0_i32 = arith.constant 0 : i32
    %c0_i32_0 = arith.constant 0 : i32
    %c0_i32_1 = arith.constant 0 : i32
    return %c0_i32, %c0_i32_0 : i32, i32
  }
  func.func @transform_18(%arg0: i32) -> (i32, i32) {
    %c0_i32 = arith.constant 0 : i32
    %c0_i32_0 = arith.constant 0 : i32
    %c0_i32_1 = arith.constant 0 : i32
    return %c0_i32, %c0_i32_0 : i32, i32
  }
  func.func @transform_19(%arg0: i32) -> (i32, i32) {
    %c0_i32 = arith.constant 0 : i32
    %c0_i32_0 = arith.constant 0 : i32
    %c0_i32_1 = arith.constant 0 : i32
    return %c0_i32, %c0_i32_0 : i32, i32
  }
  func.func @transform_20(%arg0: i32) -> (i32, i32, i32) {
    %c0_i32 = arith.constant 0 : i32
    %c0_i32_0 = arith.constant 0 : i32
    %c0_i32_1 = arith.constant 0 : i32
    return %arg0, %c0_i32, %c0_i32_0 : i32, i32, i32
  }
  func.func @transform_21(%arg0: i32) -> (i32, i32, i32, i32) {
    %c0_i32 = arith.constant 0 : i32
    %c0_i32_0 = arith.constant 0 : i32
    %c0_i32_1 = arith.constant 0 : i32
    %c0_i32_2 = arith.constant 0 : i32
    return %arg0, %c0_i32, %c0_i32_0, %c0_i32_1 : i32, i32, i32, i32
  }
  func.func @transform_22(%arg0: i32) -> (i32, i32, i32, i32) {
    %c0_i32 = arith.constant 0 : i32
    %c0_i32_0 = arith.constant 0 : i32
    %c0_i32_1 = arith.constant 0 : i32
    %c0_i32_2 = arith.constant 0 : i32
    return %arg0, %c0_i32, %c0_i32_0, %c0_i32_1 : i32, i32, i32, i32
  }
}

module attributes {stable_mosaic.version = 11 : i64} {
  func.func @_decoder_layer_kernel(%arg0: i32, %arg1: memref<1x8x128xbf16, #tpu.memory_space<vmem>>, %arg2: memref<1x8x128xbf16, #tpu.memory_space<vmem>>, %arg3: memref<3x4x128x32xbf16, #tpu.memory_space<vmem>>, %arg4: memref<3x4x1x32xf32, #tpu.memory_space<vmem>>, %arg5: memref<4x32x128xbf16, #tpu.memory_space<vmem>>, %arg6: memref<1x128xf32, #tpu.memory_space<vmem>>, %arg7: memref<1x128xf32, #tpu.memory_space<vmem>>, %arg8: memref<1x128xf32, #tpu.memory_space<vmem>>, %arg9: memref<3x4x128x32xbf16, #tpu.memory_space<vmem>>, %arg10: memref<3x4x1x32xf32, #tpu.memory_space<vmem>>, %arg11: memref<4x32x128xbf16, #tpu.memory_space<vmem>>, %arg12: memref<1x128xf32, #tpu.memory_space<vmem>>, %arg13: memref<1x128xf32, #tpu.memory_space<vmem>>, %arg14: memref<1x128xf32, #tpu.memory_space<vmem>>, %arg15: memref<128x256xbf16, #tpu.memory_space<vmem>>, %arg16: memref<1x256xf32, #tpu.memory_space<vmem>>, %arg17: memref<256x128xbf16, #tpu.memory_space<vmem>>, %arg18: memref<1x128xf32, #tpu.memory_space<vmem>>, %arg19: memref<1x128xf32, #tpu.memory_space<vmem>>, %arg20: memref<1x128xf32, #tpu.memory_space<vmem>>, %arg21: memref<1x8x128xbf16, #tpu.memory_space<vmem>>) attributes {dimension_semantics = [#tpu.dimension_semantics<parallel>], iteration_bounds = array<i64: 2>, scalar_prefetch = 0 : i64, scratch_operands = 0 : i64, tpu.core_type = #tpu.core_type<tc>, window_params = [{transform_indices = @transform_0, window_bounds = array<i64: 1, 8, 128>}, {transform_indices = @transform_1, window_bounds = array<i64: 1, 8, 128>}, {pipeline_mode = #tpu.pipeline_mode<synchronous>, transform_indices = @transform_2, window_bounds = array<i64: 3, 4, 128, 32>}, {pipeline_mode = #tpu.pipeline_mode<synchronous>, transform_indices = @transform_3, window_bounds = array<i64: 3, 4, 1, 32>}, {pipeline_mode = #tpu.pipeline_mode<synchronous>, transform_indices = @transform_4, window_bounds = array<i64: 4, 32, 128>}, {pipeline_mode = #tpu.pipeline_mode<synchronous>, transform_indices = @transform_5, window_bounds = array<i64: 1, 128>}, {pipeline_mode = #tpu.pipeline_mode<synchronous>, transform_indices = @transform_6, window_bounds = array<i64: 1, 128>}, {pipeline_mode = #tpu.pipeline_mode<synchronous>, transform_indices = @transform_7, window_bounds = array<i64: 1, 128>}, {pipeline_mode = #tpu.pipeline_mode<synchronous>, transform_indices = @transform_8, window_bounds = array<i64: 3, 4, 128, 32>}, {pipeline_mode = #tpu.pipeline_mode<synchronous>, transform_indices = @transform_9, window_bounds = array<i64: 3, 4, 1, 32>}, {pipeline_mode = #tpu.pipeline_mode<synchronous>, transform_indices = @transform_10, window_bounds = array<i64: 4, 32, 128>}, {pipeline_mode = #tpu.pipeline_mode<synchronous>, transform_indices = @transform_11, window_bounds = array<i64: 1, 128>}, {pipeline_mode = #tpu.pipeline_mode<synchronous>, transform_indices = @transform_12, window_bounds = array<i64: 1, 128>}, {pipeline_mode = #tpu.pipeline_mode<synchronous>, transform_indices = @transform_13, window_bounds = array<i64: 1, 128>}, {pipeline_mode = #tpu.pipeline_mode<synchronous>, transform_indices = @transform_14, window_bounds = array<i64: 128, 256>}, {pipeline_mode = #tpu.pipeline_mode<synchronous>, transform_indices = @transform_15, window_bounds = array<i64: 1, 256>}, {pipeline_mode = #tpu.pipeline_mode<synchronous>, transform_indices = @transform_16, window_bounds = array<i64: 256, 128>}, {pipeline_mode = #tpu.pipeline_mode<synchronous>, transform_indices = @transform_17, window_bounds = array<i64: 1, 128>}, {pipeline_mode = #tpu.pipeline_mode<synchronous>, transform_indices = @transform_18, window_bounds = array<i64: 1, 128>}, {pipeline_mode = #tpu.pipeline_mode<synchronous>, transform_indices = @transform_19, window_bounds = array<i64: 1, 128>}, {transform_indices = @transform_20, window_bounds = array<i64: 1, 8, 128>}]} {
    %c0 = arith.constant 0 : index
    %c0_0 = arith.constant 0 : index
    %c0_1 = arith.constant 0 : index
    %0 = vector.load %arg1[%c0, %c0_0, %c0_1] : memref<1x8x128xbf16, #tpu.memory_space<vmem>>, vector<1x8x128xbf16>
    %1 = vector.shape_cast %0 : vector<1x8x128xbf16> to vector<8x128xbf16>
    %2 = arith.extf %1 : vector<8x128xbf16> to vector<8x128xf32>
    %c0_2 = arith.constant 0 : index
    %c0_3 = arith.constant 0 : index
    %c0_4 = arith.constant 0 : index
    %3 = vector.load %arg1[%c0_2, %c0_3, %c0_4] : memref<1x8x128xbf16, #tpu.memory_space<vmem>>, vector<1x8x128xbf16>
    %4 = vector.shape_cast %3 : vector<1x8x128xbf16> to vector<8x128xbf16>
    %5 = vector.shape_cast %4 : vector<8x128xbf16> to vector<1x8x128xbf16>
    %6 = vector.broadcast %5 : vector<1x8x128xbf16> to vector<4x8x128xbf16>
    %c0_5 = arith.constant 0 : index
    %c0_6 = arith.constant 0 : index
    %c0_7 = arith.constant 0 : index
    %c0_8 = arith.constant 0 : index
    %7 = vector.load %arg3[%c0_5, %c0_6, %c0_7, %c0_8] : memref<3x4x128x32xbf16, #tpu.memory_space<vmem>>, vector<1x4x128x32xbf16>
    %8 = vector.shape_cast %7 : vector<1x4x128x32xbf16> to vector<4x128x32xbf16>
    "tpu.trace_start"() <{level = 10 : i32, message = "hsd,hdf->hsf"}> : () -> ()
    %cst = arith.constant dense<0.000000e+00> : vector<4x8x32xf32>
    %9 = tpu.matmul %6, %8, %cst {dimension_numbers = #tpu.dot_dimension_numbers<[2], [1], [1], [2], [0, 0, 0, 1, 1, 2], [0], [0]>} : vector<4x8x128xbf16>, vector<4x128x32xbf16>, vector<4x8x32xf32> -> vector<4x8x32xf32>
    "tpu.trace_stop"() : () -> ()
    %c0_9 = arith.constant 0 : index
    %c0_10 = arith.constant 0 : index
    %c0_11 = arith.constant 0 : index
    %c0_12 = arith.constant 0 : index
    %10 = vector.load %arg4[%c0_9, %c0_10, %c0_11, %c0_12] : memref<3x4x1x32xf32, #tpu.memory_space<vmem>>, vector<1x4x1x32xf32>
    %11 = vector.shape_cast %10 : vector<1x4x1x32xf32> to vector<4x1x32xf32>
    %12 = vector.broadcast %11 : vector<4x1x32xf32> to vector<4x8x32xf32>
    %13 = arith.addf %9, %12 : vector<4x8x32xf32>
    %c1 = arith.constant 1 : index
    %c0_13 = arith.constant 0 : index
    %c0_14 = arith.constant 0 : index
    %c0_15 = arith.constant 0 : index
    %14 = vector.load %arg3[%c1, %c0_13, %c0_14, %c0_15] : memref<3x4x128x32xbf16, #tpu.memory_space<vmem>>, vector<1x4x128x32xbf16>
    %15 = vector.shape_cast %14 : vector<1x4x128x32xbf16> to vector<4x128x32xbf16>
    "tpu.trace_start"() <{level = 10 : i32, message = "hsd,hdf->hsf"}> : () -> ()
    %cst_16 = arith.constant dense<0.000000e+00> : vector<4x8x32xf32>
    %16 = tpu.matmul %6, %15, %cst_16 {dimension_numbers = #tpu.dot_dimension_numbers<[2], [1], [1], [2], [0, 0, 0, 1, 1, 2], [0], [0]>} : vector<4x8x128xbf16>, vector<4x128x32xbf16>, vector<4x8x32xf32> -> vector<4x8x32xf32>
    "tpu.trace_stop"() : () -> ()
    %c1_17 = arith.constant 1 : index
    %c0_18 = arith.constant 0 : index
    %c0_19 = arith.constant 0 : index
    %c0_20 = arith.constant 0 : index
    %17 = vector.load %arg4[%c1_17, %c0_18, %c0_19, %c0_20] : memref<3x4x1x32xf32, #tpu.memory_space<vmem>>, vector<1x4x1x32xf32>
    %18 = vector.shape_cast %17 : vector<1x4x1x32xf32> to vector<4x1x32xf32>
    %19 = vector.broadcast %18 : vector<4x1x32xf32> to vector<4x8x32xf32>
    %20 = arith.addf %16, %19 : vector<4x8x32xf32>
    %c2 = arith.constant 2 : index
    %c0_21 = arith.constant 0 : index
    %c0_22 = arith.constant 0 : index
    %c0_23 = arith.constant 0 : index
    %21 = vector.load %arg3[%c2, %c0_21, %c0_22, %c0_23] : memref<3x4x128x32xbf16, #tpu.memory_space<vmem>>, vector<1x4x128x32xbf16>
    %22 = vector.shape_cast %21 : vector<1x4x128x32xbf16> to vector<4x128x32xbf16>
    "tpu.trace_start"() <{level = 10 : i32, message = "hsd,hdf->hsf"}> : () -> ()
    %cst_24 = arith.constant dense<0.000000e+00> : vector<4x8x32xf32>
    %23 = tpu.matmul %6, %22, %cst_24 {dimension_numbers = #tpu.dot_dimension_numbers<[2], [1], [1], [2], [0, 0, 0, 1, 1, 2], [0], [0]>} : vector<4x8x128xbf16>, vector<4x128x32xbf16>, vector<4x8x32xf32> -> vector<4x8x32xf32>
    "tpu.trace_stop"() : () -> ()
    %c2_25 = arith.constant 2 : index
    %c0_26 = arith.constant 0 : index
    %c0_27 = arith.constant 0 : index
    %c0_28 = arith.constant 0 : index
    %24 = vector.load %arg4[%c2_25, %c0_26, %c0_27, %c0_28] : memref<3x4x1x32xf32, #tpu.memory_space<vmem>>, vector<1x4x1x32xf32>
    %25 = vector.shape_cast %24 : vector<1x4x1x32xf32> to vector<4x1x32xf32>
    %26 = vector.broadcast %25 : vector<4x1x32xf32> to vector<4x8x32xf32>
    %27 = arith.addf %23, %26 : vector<4x8x32xf32>
    %cst_29 = arith.constant 0.176776692 : f32
    %28 = vector.broadcast %cst_29 : f32 to vector<4x8x32xf32>
    %29 = arith.mulf %13, %28 : vector<4x8x32xf32>
    %30 = arith.truncf %29 : vector<4x8x32xf32> to vector<4x8x32xbf16>
    %31 = arith.truncf %20 : vector<4x8x32xf32> to vector<4x8x32xbf16>
    "tpu.trace_start"() <{level = 10 : i32, message = "hqd,hkd->hqk"}> : () -> ()
    %cst_30 = arith.constant dense<0.000000e+00> : vector<4x8x8xf32>
    %32 = tpu.matmul %30, %31, %cst_30 {dimension_numbers = #tpu.dot_dimension_numbers<[2], [2], [1], [1], [0, 0, 0, 1, 1, 1], [0], [0]>} : vector<4x8x32xbf16>, vector<4x8x32xbf16>, vector<4x8x8xf32> -> vector<4x8x8xf32>
    "tpu.trace_stop"() : () -> ()
    %cst_31 = arith.constant dense<0xFF800000> : vector<4x8xf32>
    %33 = vector.multi_reduction <maximumf>, %32, %cst_31 [2] : vector<4x8x8xf32> to vector<4x8xf32>
    %34 = vector.shape_cast %33 : vector<4x8xf32> to vector<4x8x1xf32>
    %35 = vector.broadcast %34 : vector<4x8x1xf32> to vector<4x8x8xf32>
    %36 = arith.subf %32, %35 : vector<4x8x8xf32>
    %37 = math.exp %36 : vector<4x8x8xf32>
    %cst_32 = arith.constant dense<0.000000e+00> : vector<4x8xf32>
    %38 = vector.multi_reduction <add>, %37, %cst_32 [2] : vector<4x8x8xf32> to vector<4x8xf32>
    %39 = vector.shape_cast %38 : vector<4x8xf32> to vector<4x8x1xf32>
    %40 = vector.broadcast %39 : vector<4x8x1xf32> to vector<4x8x8xf32>
    %41 = arith.divf %37, %40 : vector<4x8x8xf32>
    %42 = arith.truncf %41 : vector<4x8x8xf32> to vector<4x8x8xbf16>
    %43 = arith.truncf %27 : vector<4x8x32xf32> to vector<4x8x32xbf16>
    "tpu.trace_start"() <{level = 10 : i32, message = "hqk,hkd->hqd"}> : () -> ()
    %cst_33 = arith.constant dense<0.000000e+00> : vector<4x8x32xf32>
    %44 = tpu.matmul %42, %43, %cst_33 {dimension_numbers = #tpu.dot_dimension_numbers<[2], [1], [1], [2], [0, 0, 0, 1, 1, 2], [0], [0]>} : vector<4x8x8xbf16>, vector<4x8x32xbf16>, vector<4x8x32xf32> -> vector<4x8x32xf32>
    "tpu.trace_stop"() : () -> ()
    %45 = arith.truncf %44 : vector<4x8x32xf32> to vector<4x8x32xbf16>
    %c0_34 = arith.constant 0 : index
    %c0_35 = arith.constant 0 : index
    %c0_36 = arith.constant 0 : index
    %46 = vector.load %arg5[%c0_34, %c0_35, %c0_36] : memref<4x32x128xbf16, #tpu.memory_space<vmem>>, vector<4x32x128xbf16>
    "tpu.trace_start"() <{level = 10 : i32, message = "hsd,hdf->hsf"}> : () -> ()
    %cst_37 = arith.constant dense<0.000000e+00> : vector<4x8x128xf32>
    %47 = tpu.matmul %45, %46, %cst_37 {dimension_numbers = #tpu.dot_dimension_numbers<[2], [1], [1], [2], [0, 0, 0, 1, 1, 2], [0], [0]>} : vector<4x8x32xbf16>, vector<4x32x128xbf16>, vector<4x8x128xf32> -> vector<4x8x128xf32>
    "tpu.trace_stop"() : () -> ()
    %cst_38 = arith.constant dense<0.000000e+00> : vector<8x128xf32>
    %48 = vector.multi_reduction <add>, %47, %cst_38 [0] : vector<4x8x128xf32> to vector<8x128xf32>
    %c0_39 = arith.constant 0 : index
    %c0_40 = arith.constant 0 : index
    %49 = vector.load %arg6[%c0_39, %c0_40] : memref<1x128xf32, #tpu.memory_space<vmem>>, vector<1x128xf32>
    %50 = vector.broadcast %49 : vector<1x128xf32> to vector<8x128xf32>
    %51 = arith.addf %48, %50 : vector<8x128xf32>
    %c0_41 = arith.constant 0 : index
    %c0_42 = arith.constant 0 : index
    %52 = vector.load %arg7[%c0_41, %c0_42] : memref<1x128xf32, #tpu.memory_space<vmem>>, vector<1x128xf32>
    %c0_43 = arith.constant 0 : index
    %c0_44 = arith.constant 0 : index
    %53 = vector.load %arg8[%c0_43, %c0_44] : memref<1x128xf32, #tpu.memory_space<vmem>>, vector<1x128xf32>
    %cst_45 = arith.constant dense<0.000000e+00> : vector<8xf32>
    %54 = vector.multi_reduction <add>, %51, %cst_45 [1] : vector<8x128xf32> to vector<8xf32>
    %55 = vector.shape_cast %54 : vector<8xf32> to vector<8x1xf32>
    %cst_46 = arith.constant 1.280000e+02 : f32
    %56 = vector.broadcast %cst_46 : f32 to vector<8x1xf32>
    %57 = arith.divf %55, %56 : vector<8x1xf32>
    %58 = vector.broadcast %57 : vector<8x1xf32> to vector<8x128xf32>
    %59 = arith.subf %51, %58 : vector<8x128xf32>
    %60 = vector.broadcast %57 : vector<8x1xf32> to vector<8x128xf32>
    %61 = arith.subf %51, %60 : vector<8x128xf32>
    %62 = arith.mulf %59, %61 : vector<8x128xf32>
    %cst_47 = arith.constant dense<0.000000e+00> : vector<8xf32>
    %63 = vector.multi_reduction <add>, %62, %cst_47 [1] : vector<8x128xf32> to vector<8xf32>
    %64 = vector.shape_cast %63 : vector<8xf32> to vector<8x1xf32>
    %cst_48 = arith.constant 1.280000e+02 : f32
    %65 = vector.broadcast %cst_48 : f32 to vector<8x1xf32>
    %66 = arith.divf %64, %65 : vector<8x1xf32>
    %67 = vector.broadcast %57 : vector<8x1xf32> to vector<8x128xf32>
    %68 = arith.subf %51, %67 : vector<8x128xf32>
    %cst_49 = arith.constant 9.99999974E-6 : f32
    %69 = vector.broadcast %cst_49 : f32 to vector<8x1xf32>
    %70 = arith.addf %66, %69 : vector<8x1xf32>
    %71 = math.rsqrt %70 : vector<8x1xf32>
    %72 = vector.broadcast %71 : vector<8x1xf32> to vector<8x128xf32>
    %73 = arith.mulf %68, %72 : vector<8x128xf32>
    %74 = vector.broadcast %52 : vector<1x128xf32> to vector<8x128xf32>
    %75 = arith.mulf %73, %74 : vector<8x128xf32>
    %76 = vector.broadcast %53 : vector<1x128xf32> to vector<8x128xf32>
    %77 = arith.addf %75, %76 : vector<8x128xf32>
    %78 = arith.addf %2, %77 : vector<8x128xf32>
    %c0_50 = arith.constant 0 : index
    %c0_51 = arith.constant 0 : index
    %c0_52 = arith.constant 0 : index
    %79 = vector.load %arg2[%c0_50, %c0_51, %c0_52] : memref<1x8x128xbf16, #tpu.memory_space<vmem>>, vector<1x8x128xbf16>
    %80 = vector.shape_cast %79 : vector<1x8x128xbf16> to vector<8x128xbf16>
    %81 = vector.shape_cast %80 : vector<8x128xbf16> to vector<1x8x128xbf16>
    %82 = vector.broadcast %81 : vector<1x8x128xbf16> to vector<4x8x128xbf16>
    %c0_53 = arith.constant 0 : index
    %c0_54 = arith.constant 0 : index
    %c0_55 = arith.constant 0 : index
    %c0_56 = arith.constant 0 : index
    %83 = vector.load %arg9[%c0_53, %c0_54, %c0_55, %c0_56] : memref<3x4x128x32xbf16, #tpu.memory_space<vmem>>, vector<1x4x128x32xbf16>
    %84 = vector.shape_cast %83 : vector<1x4x128x32xbf16> to vector<4x128x32xbf16>
    "tpu.trace_start"() <{level = 10 : i32, message = "hsd,hdf->hsf"}> : () -> ()
    %cst_57 = arith.constant dense<0.000000e+00> : vector<4x8x32xf32>
    %85 = tpu.matmul %82, %84, %cst_57 {dimension_numbers = #tpu.dot_dimension_numbers<[2], [1], [1], [2], [0, 0, 0, 1, 1, 2], [0], [0]>} : vector<4x8x128xbf16>, vector<4x128x32xbf16>, vector<4x8x32xf32> -> vector<4x8x32xf32>
    "tpu.trace_stop"() : () -> ()
    %c0_58 = arith.constant 0 : index
    %c0_59 = arith.constant 0 : index
    %c0_60 = arith.constant 0 : index
    %c0_61 = arith.constant 0 : index
    %86 = vector.load %arg10[%c0_58, %c0_59, %c0_60, %c0_61] : memref<3x4x1x32xf32, #tpu.memory_space<vmem>>, vector<1x4x1x32xf32>
    %87 = vector.shape_cast %86 : vector<1x4x1x32xf32> to vector<4x1x32xf32>
    %88 = vector.broadcast %87 : vector<4x1x32xf32> to vector<4x8x32xf32>
    %89 = arith.addf %85, %88 : vector<4x8x32xf32>
    %c1_62 = arith.constant 1 : index
    %c0_63 = arith.constant 0 : index
    %c0_64 = arith.constant 0 : index
    %c0_65 = arith.constant 0 : index
    %90 = vector.load %arg9[%c1_62, %c0_63, %c0_64, %c0_65] : memref<3x4x128x32xbf16, #tpu.memory_space<vmem>>, vector<1x4x128x32xbf16>
    %91 = vector.shape_cast %90 : vector<1x4x128x32xbf16> to vector<4x128x32xbf16>
    "tpu.trace_start"() <{level = 10 : i32, message = "hsd,hdf->hsf"}> : () -> ()
    %cst_66 = arith.constant dense<0.000000e+00> : vector<4x8x32xf32>
    %92 = tpu.matmul %82, %91, %cst_66 {dimension_numbers = #tpu.dot_dimension_numbers<[2], [1], [1], [2], [0, 0, 0, 1, 1, 2], [0], [0]>} : vector<4x8x128xbf16>, vector<4x128x32xbf16>, vector<4x8x32xf32> -> vector<4x8x32xf32>
    "tpu.trace_stop"() : () -> ()
    %c1_67 = arith.constant 1 : index
    %c0_68 = arith.constant 0 : index
    %c0_69 = arith.constant 0 : index
    %c0_70 = arith.constant 0 : index
    %93 = vector.load %arg10[%c1_67, %c0_68, %c0_69, %c0_70] : memref<3x4x1x32xf32, #tpu.memory_space<vmem>>, vector<1x4x1x32xf32>
    %94 = vector.shape_cast %93 : vector<1x4x1x32xf32> to vector<4x1x32xf32>
    %95 = vector.broadcast %94 : vector<4x1x32xf32> to vector<4x8x32xf32>
    %96 = arith.addf %92, %95 : vector<4x8x32xf32>
    %c2_71 = arith.constant 2 : index
    %c0_72 = arith.constant 0 : index
    %c0_73 = arith.constant 0 : index
    %c0_74 = arith.constant 0 : index
    %97 = vector.load %arg9[%c2_71, %c0_72, %c0_73, %c0_74] : memref<3x4x128x32xbf16, #tpu.memory_space<vmem>>, vector<1x4x128x32xbf16>
    %98 = vector.shape_cast %97 : vector<1x4x128x32xbf16> to vector<4x128x32xbf16>
    "tpu.trace_start"() <{level = 10 : i32, message = "hsd,hdf->hsf"}> : () -> ()
    %cst_75 = arith.constant dense<0.000000e+00> : vector<4x8x32xf32>
    %99 = tpu.matmul %82, %98, %cst_75 {dimension_numbers = #tpu.dot_dimension_numbers<[2], [1], [1], [2], [0, 0, 0, 1, 1, 2], [0], [0]>} : vector<4x8x128xbf16>, vector<4x128x32xbf16>, vector<4x8x32xf32> -> vector<4x8x32xf32>
    "tpu.trace_stop"() : () -> ()
    %c2_76 = arith.constant 2 : index
    %c0_77 = arith.constant 0 : index
    %c0_78 = arith.constant 0 : index
    %c0_79 = arith.constant 0 : index
    %100 = vector.load %arg10[%c2_76, %c0_77, %c0_78, %c0_79] : memref<3x4x1x32xf32, #tpu.memory_space<vmem>>, vector<1x4x1x32xf32>
    %101 = vector.shape_cast %100 : vector<1x4x1x32xf32> to vector<4x1x32xf32>
    %102 = vector.broadcast %101 : vector<4x1x32xf32> to vector<4x8x32xf32>
    %103 = arith.addf %99, %102 : vector<4x8x32xf32>
    %cst_80 = arith.constant 0.176776692 : f32
    %104 = vector.broadcast %cst_80 : f32 to vector<4x8x32xf32>
    %105 = arith.mulf %89, %104 : vector<4x8x32xf32>
    %106 = arith.truncf %105 : vector<4x8x32xf32> to vector<4x8x32xbf16>
    %107 = arith.truncf %96 : vector<4x8x32xf32> to vector<4x8x32xbf16>
    "tpu.trace_start"() <{level = 10 : i32, message = "hqd,hkd->hqk"}> : () -> ()
    %cst_81 = arith.constant dense<0.000000e+00> : vector<4x8x8xf32>
    %108 = tpu.matmul %106, %107, %cst_81 {dimension_numbers = #tpu.dot_dimension_numbers<[2], [2], [1], [1], [0, 0, 0, 1, 1, 1], [0], [0]>} : vector<4x8x32xbf16>, vector<4x8x32xbf16>, vector<4x8x8xf32> -> vector<4x8x8xf32>
    "tpu.trace_stop"() : () -> ()
    %cst_82 = arith.constant dense<0xFF800000> : vector<4x8xf32>
    %109 = vector.multi_reduction <maximumf>, %108, %cst_82 [2] : vector<4x8x8xf32> to vector<4x8xf32>
    %110 = vector.shape_cast %109 : vector<4x8xf32> to vector<4x8x1xf32>
    %111 = vector.broadcast %110 : vector<4x8x1xf32> to vector<4x8x8xf32>
    %112 = arith.subf %108, %111 : vector<4x8x8xf32>
    %113 = math.exp %112 : vector<4x8x8xf32>
    %cst_83 = arith.constant dense<0.000000e+00> : vector<4x8xf32>
    %114 = vector.multi_reduction <add>, %113, %cst_83 [2] : vector<4x8x8xf32> to vector<4x8xf32>
    %115 = vector.shape_cast %114 : vector<4x8xf32> to vector<4x8x1xf32>
    %116 = vector.broadcast %115 : vector<4x8x1xf32> to vector<4x8x8xf32>
    %117 = arith.divf %113, %116 : vector<4x8x8xf32>
    %118 = arith.truncf %117 : vector<4x8x8xf32> to vector<4x8x8xbf16>
    %119 = arith.truncf %103 : vector<4x8x32xf32> to vector<4x8x32xbf16>
    "tpu.trace_start"() <{level = 10 : i32, message = "hqk,hkd->hqd"}> : () -> ()
    %cst_84 = arith.constant dense<0.000000e+00> : vector<4x8x32xf32>
    %120 = tpu.matmul %118, %119, %cst_84 {dimension_numbers = #tpu.dot_dimension_numbers<[2], [1], [1], [2], [0, 0, 0, 1, 1, 2], [0], [0]>} : vector<4x8x8xbf16>, vector<4x8x32xbf16>, vector<4x8x32xf32> -> vector<4x8x32xf32>
    "tpu.trace_stop"() : () -> ()
    %121 = arith.truncf %120 : vector<4x8x32xf32> to vector<4x8x32xbf16>
    %c0_85 = arith.constant 0 : index
    %c0_86 = arith.constant 0 : index
    %c0_87 = arith.constant 0 : index
    %122 = vector.load %arg11[%c0_85, %c0_86, %c0_87] : memref<4x32x128xbf16, #tpu.memory_space<vmem>>, vector<4x32x128xbf16>
    "tpu.trace_start"() <{level = 10 : i32, message = "hsd,hdf->hsf"}> : () -> ()
    %cst_88 = arith.constant dense<0.000000e+00> : vector<4x8x128xf32>
    %123 = tpu.matmul %121, %122, %cst_88 {dimension_numbers = #tpu.dot_dimension_numbers<[2], [1], [1], [2], [0, 0, 0, 1, 1, 2], [0], [0]>} : vector<4x8x32xbf16>, vector<4x32x128xbf16>, vector<4x8x128xf32> -> vector<4x8x128xf32>
    "tpu.trace_stop"() : () -> ()
    %cst_89 = arith.constant dense<0.000000e+00> : vector<8x128xf32>
    %124 = vector.multi_reduction <add>, %123, %cst_89 [0] : vector<4x8x128xf32> to vector<8x128xf32>
    %c0_90 = arith.constant 0 : index
    %c0_91 = arith.constant 0 : index
    %125 = vector.load %arg12[%c0_90, %c0_91] : memref<1x128xf32, #tpu.memory_space<vmem>>, vector<1x128xf32>
    %126 = vector.broadcast %125 : vector<1x128xf32> to vector<8x128xf32>
    %127 = arith.addf %124, %126 : vector<8x128xf32>
    %c0_92 = arith.constant 0 : index
    %c0_93 = arith.constant 0 : index
    %128 = vector.load %arg13[%c0_92, %c0_93] : memref<1x128xf32, #tpu.memory_space<vmem>>, vector<1x128xf32>
    %c0_94 = arith.constant 0 : index
    %c0_95 = arith.constant 0 : index
    %129 = vector.load %arg14[%c0_94, %c0_95] : memref<1x128xf32, #tpu.memory_space<vmem>>, vector<1x128xf32>
    %cst_96 = arith.constant dense<0.000000e+00> : vector<8xf32>
    %130 = vector.multi_reduction <add>, %127, %cst_96 [1] : vector<8x128xf32> to vector<8xf32>
    %131 = vector.shape_cast %130 : vector<8xf32> to vector<8x1xf32>
    %cst_97 = arith.constant 1.280000e+02 : f32
    %132 = vector.broadcast %cst_97 : f32 to vector<8x1xf32>
    %133 = arith.divf %131, %132 : vector<8x1xf32>
    %134 = vector.broadcast %133 : vector<8x1xf32> to vector<8x128xf32>
    %135 = arith.subf %127, %134 : vector<8x128xf32>
    %136 = vector.broadcast %133 : vector<8x1xf32> to vector<8x128xf32>
    %137 = arith.subf %127, %136 : vector<8x128xf32>
    %138 = arith.mulf %135, %137 : vector<8x128xf32>
    %cst_98 = arith.constant dense<0.000000e+00> : vector<8xf32>
    %139 = vector.multi_reduction <add>, %138, %cst_98 [1] : vector<8x128xf32> to vector<8xf32>
    %140 = vector.shape_cast %139 : vector<8xf32> to vector<8x1xf32>
    %cst_99 = arith.constant 1.280000e+02 : f32
    %141 = vector.broadcast %cst_99 : f32 to vector<8x1xf32>
    %142 = arith.divf %140, %141 : vector<8x1xf32>
    %143 = vector.broadcast %133 : vector<8x1xf32> to vector<8x128xf32>
    %144 = arith.subf %127, %143 : vector<8x128xf32>
    %cst_100 = arith.constant 9.99999974E-6 : f32
    %145 = vector.broadcast %cst_100 : f32 to vector<8x1xf32>
    %146 = arith.addf %142, %145 : vector<8x1xf32>
    %147 = math.rsqrt %146 : vector<8x1xf32>
    %148 = vector.broadcast %147 : vector<8x1xf32> to vector<8x128xf32>
    %149 = arith.mulf %144, %148 : vector<8x128xf32>
    %150 = vector.broadcast %128 : vector<1x128xf32> to vector<8x128xf32>
    %151 = arith.mulf %149, %150 : vector<8x128xf32>
    %152 = vector.broadcast %129 : vector<1x128xf32> to vector<8x128xf32>
    %153 = arith.addf %151, %152 : vector<8x128xf32>
    %154 = arith.addf %78, %153 : vector<8x128xf32>
    %155 = arith.truncf %154 : vector<8x128xf32> to vector<8x128xbf16>
    %c0_101 = arith.constant 0 : index
    %c0_102 = arith.constant 0 : index
    %156 = vector.load %arg15[%c0_101, %c0_102] : memref<128x256xbf16, #tpu.memory_space<vmem>>, vector<128x256xbf16>
    %cst_103 = arith.constant dense<0.000000e+00> : vector<8x256xf32>
    %157 = tpu.matmul %155, %156, %cst_103 {dimension_numbers = #tpu.dot_dimension_numbers<[1], [0], [0], [1], [0, 0, 1, 1], [], []>} : vector<8x128xbf16>, vector<128x256xbf16>, vector<8x256xf32> -> vector<8x256xf32>
    %c0_104 = arith.constant 0 : index
    %c0_105 = arith.constant 0 : index
    %158 = vector.load %arg16[%c0_104, %c0_105] : memref<1x256xf32, #tpu.memory_space<vmem>>, vector<1x256xf32>
    %159 = vector.broadcast %158 : vector<1x256xf32> to vector<8x256xf32>
    %160 = arith.addf %157, %159 : vector<8x256xf32>
    %cst_106 = arith.constant 0.000000e+00 : f32
    %161 = vector.broadcast %cst_106 : f32 to vector<8x256xf32>
    %162 = arith.maximumf %160, %161 : vector<8x256xf32>
    %163 = arith.truncf %162 : vector<8x256xf32> to vector<8x256xbf16>
    %c0_107 = arith.constant 0 : index
    %c0_108 = arith.constant 0 : index
    %164 = vector.load %arg17[%c0_107, %c0_108] : memref<256x128xbf16, #tpu.memory_space<vmem>>, vector<256x128xbf16>
    %cst_109 = arith.constant dense<0.000000e+00> : vector<8x128xf32>
    %165 = tpu.matmul %163, %164, %cst_109 {dimension_numbers = #tpu.dot_dimension_numbers<[1], [0], [0], [1], [0, 0, 1, 1], [], []>} : vector<8x256xbf16>, vector<256x128xbf16>, vector<8x128xf32> -> vector<8x128xf32>
    %c0_110 = arith.constant 0 : index
    %c0_111 = arith.constant 0 : index
    %166 = vector.load %arg18[%c0_110, %c0_111] : memref<1x128xf32, #tpu.memory_space<vmem>>, vector<1x128xf32>
    %167 = vector.broadcast %166 : vector<1x128xf32> to vector<8x128xf32>
    %168 = arith.addf %165, %167 : vector<8x128xf32>
    %c0_112 = arith.constant 0 : index
    %c0_113 = arith.constant 0 : index
    %169 = vector.load %arg19[%c0_112, %c0_113] : memref<1x128xf32, #tpu.memory_space<vmem>>, vector<1x128xf32>
    %c0_114 = arith.constant 0 : index
    %c0_115 = arith.constant 0 : index
    %170 = vector.load %arg20[%c0_114, %c0_115] : memref<1x128xf32, #tpu.memory_space<vmem>>, vector<1x128xf32>
    %cst_116 = arith.constant dense<0.000000e+00> : vector<8xf32>
    %171 = vector.multi_reduction <add>, %168, %cst_116 [1] : vector<8x128xf32> to vector<8xf32>
    %172 = vector.shape_cast %171 : vector<8xf32> to vector<8x1xf32>
    %cst_117 = arith.constant 1.280000e+02 : f32
    %173 = vector.broadcast %cst_117 : f32 to vector<8x1xf32>
    %174 = arith.divf %172, %173 : vector<8x1xf32>
    %175 = vector.broadcast %174 : vector<8x1xf32> to vector<8x128xf32>
    %176 = arith.subf %168, %175 : vector<8x128xf32>
    %177 = vector.broadcast %174 : vector<8x1xf32> to vector<8x128xf32>
    %178 = arith.subf %168, %177 : vector<8x128xf32>
    %179 = arith.mulf %176, %178 : vector<8x128xf32>
    %cst_118 = arith.constant dense<0.000000e+00> : vector<8xf32>
    %180 = vector.multi_reduction <add>, %179, %cst_118 [1] : vector<8x128xf32> to vector<8xf32>
    %181 = vector.shape_cast %180 : vector<8xf32> to vector<8x1xf32>
    %cst_119 = arith.constant 1.280000e+02 : f32
    %182 = vector.broadcast %cst_119 : f32 to vector<8x1xf32>
    %183 = arith.divf %181, %182 : vector<8x1xf32>
    %184 = vector.broadcast %174 : vector<8x1xf32> to vector<8x128xf32>
    %185 = arith.subf %168, %184 : vector<8x128xf32>
    %cst_120 = arith.constant 9.99999974E-6 : f32
    %186 = vector.broadcast %cst_120 : f32 to vector<8x1xf32>
    %187 = arith.addf %183, %186 : vector<8x1xf32>
    %188 = math.rsqrt %187 : vector<8x1xf32>
    %189 = vector.broadcast %188 : vector<8x1xf32> to vector<8x128xf32>
    %190 = arith.mulf %185, %189 : vector<8x128xf32>
    %191 = vector.broadcast %169 : vector<1x128xf32> to vector<8x128xf32>
    %192 = arith.mulf %190, %191 : vector<8x128xf32>
    %193 = vector.broadcast %170 : vector<1x128xf32> to vector<8x128xf32>
    %194 = arith.addf %192, %193 : vector<8x128xf32>
    %195 = arith.addf %154, %194 : vector<8x128xf32>
    %196 = arith.truncf %195 : vector<8x128xf32> to vector<8x128xbf16>
    %c0_121 = arith.constant 0 : index
    %c0_122 = arith.constant 0 : index
    %c0_123 = arith.constant 0 : index
    %197 = vector.load %arg21[%c0_121, %c0_122, %c0_123] : memref<1x8x128xbf16, #tpu.memory_space<vmem>>, vector<1x8x128xbf16>
    %198 = vector.shape_cast %197 : vector<1x8x128xbf16> to vector<8x128xbf16>
    %199 = vector.shape_cast %196 : vector<8x128xbf16> to vector<1x8x128xbf16>
    tpu.vector_store %arg21[%c0_121, %c0_122, %c0_123], %199 {strides = array<i32>} : memref<1x8x128xbf16, #tpu.memory_space<vmem>>, vector<1x8x128xbf16>,
    return
  }
  func.func @transform_0(%arg0: i32) -> (i32, i32, i32) {
    %c0_i32 = arith.constant 0 : i32
    %c0_i32_0 = arith.constant 0 : i32
    %c0_i32_1 = arith.constant 0 : i32
    return %arg0, %c0_i32, %c0_i32_0 : i32, i32, i32
  }
  func.func @transform_1(%arg0: i32) -> (i32, i32, i32) {
    %c0_i32 = arith.constant 0 : i32
    %c0_i32_0 = arith.constant 0 : i32
    %c0_i32_1 = arith.constant 0 : i32
    return %arg0, %c0_i32, %c0_i32_0 : i32, i32, i32
  }
  func.func @transform_2(%arg0: i32) -> (i32, i32, i32, i32) {
    %c0_i32 = arith.constant 0 : i32
    %c0_i32_0 = arith.constant 0 : i32
    %c0_i32_1 = arith.constant 0 : i32
    %c0_i32_2 = arith.constant 0 : i32
    %c0_i32_3 = arith.constant 0 : i32
    return %c0_i32, %c0_i32_0, %c0_i32_1, %c0_i32_2 : i32, i32, i32, i32
  }
  func.func @transform_3(%arg0: i32) -> (i32, i32, i32, i32) {
    %c0_i32 = arith.constant 0 : i32
    %c0_i32_0 = arith.constant 0 : i32
    %c0_i32_1 = arith.constant 0 : i32
    %c0_i32_2 = arith.constant 0 : i32
    %c0_i32_3 = arith.constant 0 : i32
    return %c0_i32, %c0_i32_0, %c0_i32_1, %c0_i32_2 : i32, i32, i32, i32
  }
  func.func @transform_4(%arg0: i32) -> (i32, i32, i32) {
    %c0_i32 = arith.constant 0 : i32
    %c0_i32_0 = arith.constant 0 : i32
    %c0_i32_1 = arith.constant 0 : i32
    %c0_i32_2 = arith.constant 0 : i32
    return %c0_i32, %c0_i32_0, %c0_i32_1 : i32, i32, i32
  }
  func.func @transform_5(%arg0: i32) -> (i32, i32) {
    %c0_i32 = arith.constant 0 : i32
    %c0_i32_0 = arith.constant 0 : i32
    %c0_i32_1 = arith.constant 0 : i32
    return %c0_i32, %c0_i32_0 : i32, i32
  }
  func.func @transform_6(%arg0: i32) -> (i32, i32) {
    %c0_i32 = arith.constant 0 : i32
    %c0_i32_0 = arith.constant 0 : i32
    %c0_i32_1 = arith.constant 0 : i32
    return %c0_i32, %c0_i32_0 : i32, i32
  }
  func.func @transform_7(%arg0: i32) -> (i32, i32) {
    %c0_i32 = arith.constant 0 : i32
    %c0_i32_0 = arith.constant 0 : i32
    %c0_i32_1 = arith.constant 0 : i32
    return %c0_i32, %c0_i32_0 : i32, i32
  }
  func.func @transform_8(%arg0: i32) -> (i32, i32, i32, i32) {
    %c0_i32 = arith.constant 0 : i32
    %c0_i32_0 = arith.constant 0 : i32
    %c0_i32_1 = arith.constant 0 : i32
    %c0_i32_2 = arith.constant 0 : i32
    %c0_i32_3 = arith.constant 0 : i32
    return %c0_i32, %c0_i32_0, %c0_i32_1, %c0_i32_2 : i32, i32, i32, i32
  }
  func.func @transform_9(%arg0: i32) -> (i32, i32, i32, i32) {
    %c0_i32 = arith.constant 0 : i32
    %c0_i32_0 = arith.constant 0 : i32
    %c0_i32_1 = arith.constant 0 : i32
    %c0_i32_2 = arith.constant 0 : i32
    %c0_i32_3 = arith.constant 0 : i32
    return %c0_i32, %c0_i32_0, %c0_i32_1, %c0_i32_2 : i32, i32, i32, i32
  }
  func.func @transform_10(%arg0: i32) -> (i32, i32, i32) {
    %c0_i32 = arith.constant 0 : i32
    %c0_i32_0 = arith.constant 0 : i32
    %c0_i32_1 = arith.constant 0 : i32
    %c0_i32_2 = arith.constant 0 : i32
    return %c0_i32, %c0_i32_0, %c0_i32_1 : i32, i32, i32
  }
  func.func @transform_11(%arg0: i32) -> (i32, i32) {
    %c0_i32 = arith.constant 0 : i32
    %c0_i32_0 = arith.constant 0 : i32
    %c0_i32_1 = arith.constant 0 : i32
    return %c0_i32, %c0_i32_0 : i32, i32
  }
  func.func @transform_12(%arg0: i32) -> (i32, i32) {
    %c0_i32 = arith.constant 0 : i32
    %c0_i32_0 = arith.constant 0 : i32
    %c0_i32_1 = arith.constant 0 : i32
    return %c0_i32, %c0_i32_0 : i32, i32
  }
  func.func @transform_13(%arg0: i32) -> (i32, i32) {
    %c0_i32 = arith.constant 0 : i32
    %c0_i32_0 = arith.constant 0 : i32
    %c0_i32_1 = arith.constant 0 : i32
    return %c0_i32, %c0_i32_0 : i32, i32
  }
  func.func @transform_14(%arg0: i32) -> (i32, i32) {
    %c0_i32 = arith.constant 0 : i32
    %c0_i32_0 = arith.constant 0 : i32
    %c0_i32_1 = arith.constant 0 : i32
    return %c0_i32, %c0_i32_0 : i32, i32
  }
  func.func @transform_15(%arg0: i32) -> (i32, i32) {
    %c0_i32 = arith.constant 0 : i32
    %c0_i32_0 = arith.constant 0 : i32
    %c0_i32_1 = arith.constant 0 : i32
    return %c0_i32, %c0_i32_0 : i32, i32
  }
  func.func @transform_16(%arg0: i32) -> (i32, i32) {
    %c0_i32 = arith.constant 0 : i32
    %c0_i32_0 = arith.constant 0 : i32
    %c0_i32_1 = arith.constant 0 : i32
    return %c0_i32, %c0_i32_0 : i32, i32
  }
  func.func @transform_17(%arg0: i32) -> (i32, i32) {
    %c0_i32 = arith.constant 0 : i32
    %c0_i32_0 = arith.constant 0 : i32
    %c0_i32_1 = arith.constant 0 : i32
    return %c0_i32, %c0_i32_0 : i32, i32
  }
  func.func @transform_18(%arg0: i32) -> (i32, i32) {
    %c0_i32 = arith.constant 0 : i32
    %c0_i32_0 = arith.constant 0 : i32
    %c0_i32_1 = arith.constant 0 : i32
    return %c0_i32, %c0_i32_0 : i32, i32
  }
  func.func @transform_19(%arg0: i32) -> (i32, i32) {
    %c0_i32 = arith.constant 0 : i32
    %c0_i32_0 = arith.constant 0 : i32
    %c0_i32_1 = arith.constant 0 : i32
    return %c0_i32, %c0_i32_0 : i32, i32
  }
  func.func @transform_20(%arg0: i32) -> (i32, i32, i32) {
    %c0_i32 = arith.constant 0 : i32
    %c0_i32_0 = arith.constant 0 : i32
    %c0_i32_1 = arith.constant 0 : i32
    return %arg0, %c0_i32, %c0_i32_0 : i32, i32, i32
  }
}

</mosaic_0001>

<llo_original>
// kernel: decoder_forward.5
$region0: #{decoder_forward.5}
  #allocation0 [shape = 'u32[]', space=smem, size = 0x4, offset = 0x4, fixed_abs, tag = 'smem constant byte address 0x4 - core index']
  #allocation1 [shape = 'u32[144,128]{1,0:T(1,128)}', space=vmem, size = 0x12000, scoped, tag = 'internal scratch']
  %s0 = inlined_call_operand.vmem [shape: bf16[16,128], index: 0, kind: input, shape index: {}]
  %s1 = inlined_call_operand.vmem [shape: bf16[128,256], index: 1, kind: input, shape index: {}]
  %s2 = inlined_call_operand.vmem [shape: f32[1,256], index: 2, kind: input, shape index: {}]
  %s3 = inlined_call_operand.hbm [shape: f32[16,256], index: 3, kind: output, shape index: {}]
  %s4 = sld [smem:[#allocation0]]
  $region22: #{decoder_forward.5} parent=0
    _
  %s6 = ssub.s32 1, %s4
  %s7 = scalar_select 0, %s6, %s4
  $region1: #{decoder_forward.5} parent=0
    #allocation2 [shape = 'u8[16384]{0}', space=vmem, size = 0x4000, scoped, tag = 'output window, operand 0, single buffered']
    #allocation3 [shape = 's32[1]{0}', space=sflag, size = 0x4, scoped, tag = 'scoped memory for decoder_forward.5']
    %8 = vsyncpa [#allocation3], 0
    // Predicated region
    $region2: #{decoder_forward.5} parent=1 // pred_check
      _
    $region3: #{decoder_forward.5} parent=1 // pred_check_branch
      %10 = sbr.rel (0) target = $region5
    $region4: #{decoder_forward.5} parent=1 // pred_region
      _
    $region5: #{decoder_forward.5} parent=1 // pred_fallthru
      _
    // Predicated region
    $region6: #{decoder_forward.5} parent=1 // pred_check
      _
    $region7: #{decoder_forward.5} parent=1 // pred_check_branch
      %12 = sbr.rel (0) target = $region9
    $region8: #{decoder_forward.5} parent=1 // pred_region
      _
    $region9: #{decoder_forward.5} parent=1 // pred_fallthru
      _
    // Predicated region
    $region10: #{decoder_forward.5} parent=1 // pred_check
      _
    $region11: #{decoder_forward.5} parent=1 // pred_check_branch
      %14 = sbr.rel (0) target = $region13
    $region12: #{decoder_forward.5} parent=1 // pred_region
      _
    $region13: #{decoder_forward.5} parent=1 // pred_fallthru
      _
    %v16 = vld [vmem:[%s0] sm:$0xf]
    %v17 = vld [vmem:[%s0 + $0x4] sm:$0xf]
    %v18 = vld [vmem:[%s1] sm:$0xff]
    %v19 = vld [vmem:[%s1 + $0x8] sm:$0xff]
    %v20 = vld [vmem:[%s1 + $0x10] sm:$0xff]
    %v21 = vld [vmem:[%s1 + $0x18] sm:$0xff]
    %v22 = vld [vmem:[%s1 + $0x20] sm:$0xff]
    %v23 = vld [vmem:[%s1 + $0x28] sm:$0xff]
    %v24 = vld [vmem:[%s1 + $0x30] sm:$0xff]
    %v25 = vld [vmem:[%s1 + $0x38] sm:$0xff]
    %v26 = vld [vmem:[%s1 + $0x40] sm:$0xff]
    %v27 = vld [vmem:[%s1 + $0x48] sm:$0xff]
    %v28 = vld [vmem:[%s1 + $0x50] sm:$0xff]
    %v29 = vld [vmem:[%s1 + $0x58] sm:$0xff]
    %v30 = vld [vmem:[%s1 + $0x60] sm:$0xff]
    %v31 = vld [vmem:[%s1 + $0x68] sm:$0xff]
    %v32 = vld [vmem:[%s1 + $0x70] sm:$0xff]
    %v33 = vld [vmem:[%s1 + $0x78] sm:$0xff]
    %v34 = vld [vmem:[%s2] sm:$0x3]
    %v36 = vlaneseq
    %v37 = vshrl.u32 %v36, 7
    %v38 = vsub.s32 0, %v37
    %v39 = vrot.slane %v34, %v38
    %v40 = vlaneseq
    %v41 = vshrl.u32 %v40, 7
    %v42 = vsub.s32 1, %v41
    %v43 = vrot.slane %v34, %v42
    %v48 = vunpack.c.l.b16 %v16
    %v49 = vunpack.c.l.b16 %v17
    %v50 = vpack.c.b16 %v49, %v48
    %v68 = vunpack.c.l.b16 %v18
    %v69 = vunpack.c.h.b16 %v18
    %v70 = vunpack.c.l.b16 %v19
    %v71 = vunpack.c.h.b16 %v19
    %v72 = vunpack.c.l.b16 %v20
    %v73 = vunpack.c.h.b16 %v20
    %v74 = vunpack.c.l.b16 %v21
    %v75 = vunpack.c.h.b16 %v21
    %v76 = vunpack.c.l.b16 %v22
    %v77 = vunpack.c.h.b16 %v22
    %v78 = vunpack.c.l.b16 %v23
    %v79 = vunpack.c.h.b16 %v23
    %v80 = vunpack.c.l.b16 %v24
    %v81 = vunpack.c.h.b16 %v24
    %v82 = vunpack.c.l.b16 %v25
    %v83 = vunpack.c.h.b16 %v25
    %v84 = vunpack.c.l.b16 %v26
    %v85 = vunpack.c.h.b16 %v26
    %v86 = vunpack.c.l.b16 %v27
    %v87 = vunpack.c.h.b16 %v27
    %v88 = vunpack.c.l.b16 %v28
    %v89 = vunpack.c.h.b16 %v28
    %v90 = vunpack.c.l.b16 %v29
    %v91 = vunpack.c.h.b16 %v29
    %v92 = vunpack.c.l.b16 %v30
    %v93 = vunpack.c.h.b16 %v30
    %v94 = vunpack.c.l.b16 %v31
    %v95 = vunpack.c.h.b16 %v31
    %v96 = vunpack.c.l.b16 %v32
    %v97 = vunpack.c.h.b16 %v32
    %v98 = vunpack.c.l.b16 %v33
    %v99 = vunpack.c.h.b16 %v33
    %v100 = vpack.c.b16 %v70, %v68
    %v101 = vpack.c.b16 %v71, %v69
    %v102 = vpack.c.b16 %v74, %v72
    %v103 = vpack.c.b16 %v75, %v73
    %v104 = vpack.c.b16 %v78, %v76
    %v105 = vpack.c.b16 %v79, %v77
    %v106 = vpack.c.b16 %v82, %v80
    %v107 = vpack.c.b16 %v83, %v81
    %v108 = vpack.c.b16 %v86, %v84
    %v109 = vpack.c.b16 %v87, %v85
    %v110 = vpack.c.b16 %v90, %v88
    %v111 = vpack.c.b16 %v91, %v89
    %v112 = vpack.c.b16 %v94, %v92
    %v113 = vpack.c.b16 %v95, %v93
    %v114 = vpack.c.b16 %v98, %v96
    %v115 = vpack.c.b16 %v99, %v97
    %132 = vmatprep.subr.bf16.mxu0 %v115
    %133 = vmatpush1.bf16.msra.mxu0 %v114
    %134 = vmatprep.subr.bf16.mxu0 %v113
    %135 = vmatpush1.bf16.msra.mxu0 %v112
    %136 = vmatprep.subr.bf16.mxu0 %v111
    %137 = vmatpush1.bf16.msra.mxu0 %v110
    %138 = vmatprep.subr.bf16.mxu0 %v109
    %139 = vmatpush1.bf16.msra.mxu0 %v108
    %140 = vmatprep.subr.bf16.mxu0 %v107
    %141 = vmatpush1.bf16.msra.mxu0 %v106
    %142 = vmatprep.subr.bf16.mxu0 %v105
    %143 = vmatpush1.bf16.msra.mxu0 %v104
    %144 = vmatprep.subr.bf16.mxu0 %v103
    %145 = vmatpush1.bf16.msra.mxu0 %v102
    %146 = vmatprep.subr.bf16.mxu0 %v101
    %147 = vmatpush1.bf16.msra.mxu0 %v100
    %148 = vmatprep.subr.bf16.mxu0 0
    %149 = vmatpush2.bf16.msra.mxu0 0
    %150 = vmatprep.subr.bf16.mxu0 0
    %151 = vmatpush2.bf16.msra.mxu0 0
    %152 = vmatprep.subr.bf16.mxu0 0
    %153 = vmatpush2.bf16.msra.mxu0 0
    %154 = vmatprep.subr.bf16.mxu0 0
    %155 = vmatpush2.bf16.msra.mxu0 0
    %156 = vmatprep.subr.bf16.mxu0 0
    %157 = vmatpush2.bf16.msra.mxu0 0
    %158 = vmatprep.subr.bf16.mxu0 0
    %159 = vmatpush2.bf16.msra.mxu0 0
    %160 = vmatprep.subr.bf16.mxu0 0
    %161 = vmatpush2.bf16.msra.mxu0 0
    %162 = vmatprep.subr.bf16.mxu0 0
    %163 = vmatpush2.bf16.msra.mxu0 0
    %164 = vmatprep.mubr.bf16.mxu0 0
    %165 = vmatmul.mubr.bf16.gmra.mxu0 %v50
    %v166 = vpop.f32.mrf.mxu0
    %v167 = vadd.f32 %v39, %v166
    %v168 = vpop.f32.mrf.mxu0
    %v169 = vadd.f32 %v43, %v168
    %v170 = vpop.f32.mrf.mxu0
    %v171 = vadd.f32 %v39, %v170
    %v172 = vpop.f32.mrf.mxu0
    %v173 = vadd.f32 %v43, %v172
    %174 = vdwg.mxu0
    %175 = vst [vmem:[#allocation2] sm:$0xff] %v167
    %176 = vst [vmem:[#allocation2 + $0x8] sm:$0xff] %v169
    %177 = vst [vmem:[#allocation2 + $0x10] sm:$0xff] %v171
    %178 = vst [vmem:[#allocation2 + $0x18] sm:$0xff] %v173
    // Predicated region
    $region14: #{decoder_forward.5} parent=1 // pred_check
      _
    $region15: #{decoder_forward.5} parent=1 // pred_check_branch
      %180 = sbr.rel (0) target = $region17
    $region16: #{decoder_forward.5} parent=1 // pred_region
      %s182 = ssub.s32 512, 512
      %183 = vsyncadd [#allocation3], %s182
      %s184 = sshll.u32 [#allocation2], 4
      %s185 = int_to_ptr.vmem [resolvable:$true] %s184
      %190 = dma.vmem_to_hbm [thread:$0]  %s185, 512, %s3, [#allocation3], 256, 256, 16
    $region17: #{decoder_forward.5} parent=1 // pred_fallthru
      _
    // Predicated region
    $region18: #{decoder_forward.5} parent=1 // pred_check
      _
    $region19: #{decoder_forward.5} parent=1 // pred_check_branch
      %192 = sbr.rel (0) target = $region21
    $region20: #{decoder_forward.5} parent=1 // pred_region
      %193 = dma.done [#allocation3], 512
    $region21: #{decoder_forward.5} parent=1 // pred_fallthru
      _
    %194 = vsyncpa [#allocation3], 1

// kernel: decoder_forward.3
$region0: #{decoder_forward.3}
  #allocation0 [shape = 'u32[]', space=smem, size = 0x4, offset = 0x4, fixed_abs, tag = 'smem constant byte address 0x4 - core index']
  #allocation1 [shape = 'u32[144,128]{1,0:T(1,128)}', space=vmem, size = 0x12000, scoped, tag = 'internal scratch']
  %s0 = inlined_call_operand.vmem [shape: bf16[2,8,128], index: 0, kind: input, shape index: {}]
  %s1 = inlined_call_operand.vmem [shape: bf16[2,8,128], index: 1, kind: input, shape index: {}]
  %s2 = inlined_call_operand.vmem [shape: bf16[3,4,128,32], index: 2, kind: input, shape index: {}]
  %s3 = inlined_call_operand.vmem [shape: f32[3,4,1,32], index: 3, kind: input, shape index: {}]
  %s4 = inlined_call_operand.vmem [shape: bf16[4,32,128], index: 4, kind: input, shape index: {}]
  %s5 = inlined_call_operand.vmem [shape: f32[1,128], index: 5, kind: input, shape index: {}]
  %s6 = inlined_call_operand.vmem [shape: f32[1,128], index: 6, kind: input, shape index: {}]
  %s7 = inlined_call_operand.vmem [shape: f32[1,128], index: 7, kind: input, shape index: {}]
  %s8 = inlined_call_operand.vmem [shape: bf16[3,4,128,32], index: 8, kind: input, shape index: {}]
  %s9 = inlined_call_operand.vmem [shape: f32[3,4,1,32], index: 9, kind: input, shape index: {}]
  %s10 = inlined_call_operand.vmem [shape: bf16[4,32,128], index: 10, kind: input, shape index: {}]
  %s11 = inlined_call_operand.vmem [shape: f32[1,128], index: 11, kind: input, shape index: {}]
  %s12 = inlined_call_operand.vmem [shape: f32[1,128], index: 12, kind: input, shape index: {}]
  %s13 = inlined_call_operand.vmem [shape: f32[1,128], index: 13, kind: input, shape index: {}]
  %s14 = inlined_call_operand.vmem [shape: bf16[128,256], index: 14, kind: input, shape index: {}]
  %s15 = inlined_call_operand.vmem [shape: f32[1,256], index: 15, kind: input, shape index: {}]
  %s16 = inlined_call_operand.vmem [shape: bf16[256,128], index: 16, kind: input, shape index: {}]
  %s17 = inlined_call_operand.vmem [shape: f32[1,128], index: 17, kind: input, shape index: {}]
  %s18 = inlined_call_operand.vmem [shape: f32[1,128], index: 18, kind: input, shape index: {}]
  %s19 = inlined_call_operand.vmem [shape: f32[1,128], index: 19, kind: input, shape index: {}]
  %s20 = inlined_call_operand.vmem [shape: bf16[2,8,128], index: 20, kind: output, shape index: {}]
  %s21 = sld [smem:[#allocation0]]
  $region113: #{decoder_forward.3} parent=0
    _
  %s23 = ssub.s32 1, %s21
  %s24 = scalar_select 0, %s23, %s21
  loop: start=0, step=1, limit=4
  $region2: #{decoder_forward.3} parent=0 // loop_pre_header
    _
  $region3: #{decoder_forward.3} parent=0 // loop_header
    %s26 = sphi 0, %s30
    %p27 = scmp.ge.s32.totalorder %s26, 4
    %s36 = sphi 0, %s38
    %s39 = sphi 0, %s36
    %s40 = sphi 0, %s39
    %s56 = sphi 0, %s40
    %s62 = sphi 0, %s64
    %s65 = sphi 0, %s62
    %s66 = sphi 0, %s65
    %s82 = sphi 0, %s66
    %s86 = sphi 0, %s86
    %s88 = sphi 0, %s86
    %s89 = sphi 0, %s88
    %s103 = sphi 0, %s89
    %s107 = sphi 0, %s107
    %s109 = sphi 0, %s107
    %s110 = sphi 0, %s109
    %s124 = sphi 0, %s110
    %s128 = sphi 0, %s128
    %s130 = sphi 0, %s128
    %s131 = sphi 0, %s130
    %s145 = sphi 0, %s131
    %s149 = sphi 0, %s149
    %s151 = sphi 0, %s149
    %s152 = sphi 0, %s151
    %s166 = sphi 0, %s152
    %s170 = sphi 0, %s170
    %s172 = sphi 0, %s170
    %s173 = sphi 0, %s172
    %s187 = sphi 0, %s173
    %s191 = sphi 0, %s191
    %s193 = sphi 0, %s191
    %s194 = sphi 0, %s193
    %s208 = sphi 0, %s194
    %s212 = sphi 0, %s212
    %s214 = sphi 0, %s212
    %s215 = sphi 0, %s214
    %s229 = sphi 0, %s215
    %s233 = sphi 0, %s233
    %s235 = sphi 0, %s233
    %s236 = sphi 0, %s235
    %s250 = sphi 0, %s236
    %s254 = sphi 0, %s254
    %s256 = sphi 0, %s254
    %s257 = sphi 0, %s256
    %s271 = sphi 0, %s257
    %s275 = sphi 0, %s275
    %s277 = sphi 0, %s275
    %s278 = sphi 0, %s277
    %s292 = sphi 0, %s278
    %s296 = sphi 0, %s296
    %s298 = sphi 0, %s296
    %s299 = sphi 0, %s298
    %s313 = sphi 0, %s299
    %s317 = sphi 0, %s317
    %s319 = sphi 0, %s317
    %s320 = sphi 0, %s319
    %s334 = sphi 0, %s320
    %s338 = sphi 0, %s338
    %s340 = sphi 0, %s338
    %s341 = sphi 0, %s340
    %s355 = sphi 0, %s341
    %s359 = sphi 0, %s359
    %s361 = sphi 0, %s359
    %s362 = sphi 0, %s361
    %s376 = sphi 0, %s362
    %s380 = sphi 0, %s380
    %s382 = sphi 0, %s380
    %s383 = sphi 0, %s382
    %s397 = sphi 0, %s383
    %s401 = sphi 0, %s401
    %s403 = sphi 0, %s401
    %s404 = sphi 0, %s403
    %s418 = sphi 0, %s404
    %s422 = sphi 0, %s422
    %s424 = sphi 0, %s422
    %s425 = sphi 0, %s424
    %s439 = sphi 0, %s425
    %s443 = sphi 0, %s443
    %s445 = sphi 0, %s443
    %s446 = sphi 0, %s445
    %s460 = sphi 0, %s446
    %s466 = sphi 0, %s468
    %s469 = sphi 0, %s466
    %s470 = sphi 0, %s469
    %s486 = sphi 0, %s470
  $region4: #{decoder_forward.3} parent=0 // loop_header_branch
    %29 = sbr.rel (%p27) target = $region8
  $region5: #{decoder_forward.3} parent=0 // loop_body
    %s31 = ssub.s32 %s26, 1
    %s32 = ssub.s32 %s26, 2
    %s33 = sadd.s32 %s26, 1
    %s34 = ssub.s32 %s26, %s33
    %p35 = scmp.eq.s32.totalorder %s34, 0
    %s37 = sadd.s32 %s36, 1
    %s38 = scalar_select %p35, %s36, %s37
    %p41 = pneg %p35
    %p42 = scmp.eq.s32.totalorder %s26, 1
    %p43 = por %p41, %p42
    %p44 = scmp.ne.s32.totalorder %s36, %s39
    %p45 = scmp.eq.s32.totalorder %s26, 0
    %p46 = por %p44, %p45
    %p47 = scmp.ne.s32.totalorder %s36, %s39
    %p48 = scmp.eq.s32.totalorder %s31, 1
    %p49 = por %p47, %p48
    %p50 = scmp.ne.s32.totalorder %s39, %s40
    %p51 = scmp.eq.s32.totalorder %s31, 0
    %p52 = por %p50, %p51
    %p53 = scmp.ne.s32.totalorder %s39, %s40
    %p54 = scmp.eq.s32.totalorder %s32, 1
    %p55 = por %p53, %p54
    %p57 = scmp.ne.s32.totalorder %s40, %s56
    %p58 = scmp.eq.s32.totalorder %s32, 0
    %p59 = por %p57, %p58
    %s60 = ssub.s32 %s26, %s33
    %p61 = scmp.eq.s32.totalorder %s60, 0
    %s63 = sadd.s32 %s62, 1
    %s64 = scalar_select %p61, %s62, %s63
    %p67 = pneg %p61
    %p68 = scmp.eq.s32.totalorder %s26, 1
    %p69 = por %p67, %p68
    %p70 = scmp.ne.s32.totalorder %s62, %s65
    %p71 = scmp.eq.s32.totalorder %s26, 0
    %p72 = por %p70, %p71
    %p73 = scmp.ne.s32.totalorder %s62, %s65
    %p74 = scmp.eq.s32.totalorder %s31, 1
    %p75 = por %p73, %p74
    %p76 = scmp.ne.s32.totalorder %s65, %s66
    %p77 = scmp.eq.s32.totalorder %s31, 0
    %p78 = por %p76, %p77
    %p79 = scmp.ne.s32.totalorder %s65, %s66
    %p80 = scmp.eq.s32.totalorder %s32, 1
    %p81 = por %p79, %p80
    %p83 = scmp.ne.s32.totalorder %s66, %s82
    %p84 = scmp.eq.s32.totalorder %s32, 0
    %p85 = por %p83, %p84
    %s87 = sadd.s32 %s86, 1
    %p90 = scmp.eq.s32.totalorder %s26, 1
    %p91 = scmp.ne.s32.totalorder %s86, %s88
    %p92 = scmp.eq.s32.totalorder %s26, 0
    %p93 = por %p91, %p92
    %p94 = scmp.ne.s32.totalorder %s86, %s88
    %p95 = scmp.eq.s32.totalorder %s31, 1
    %p96 = por %p94, %p95
    %p97 = scmp.ne.s32.totalorder %s88, %s89
    %p98 = scmp.eq.s32.totalorder %s31, 0
    %p99 = por %p97, %p98
    %p100 = scmp.ne.s32.totalorder %s88, %s89
    %p101 = scmp.eq.s32.totalorder %s32, 1
    %p102 = por %p100, %p101
    %p104 = scmp.ne.s32.totalorder %s89, %s103
    %p105 = scmp.eq.s32.totalorder %s32, 0
    %p106 = por %p104, %p105
    %s108 = sadd.s32 %s107, 1
    %p111 = scmp.eq.s32.totalorder %s26, 1
    %p112 = scmp.ne.s32.totalorder %s107, %s109
    %p113 = scmp.eq.s32.totalorder %s26, 0
    %p114 = por %p112, %p113
    %p115 = scmp.ne.s32.totalorder %s107, %s109
    %p116 = scmp.eq.s32.totalorder %s31, 1
    %p117 = por %p115, %p116
    %p118 = scmp.ne.s32.totalorder %s109, %s110
    %p119 = scmp.eq.s32.totalorder %s31, 0
    %p120 = por %p118, %p119
    %p121 = scmp.ne.s32.totalorder %s109, %s110
    %p122 = scmp.eq.s32.totalorder %s32, 1
    %p123 = por %p121, %p122
    %p125 = scmp.ne.s32.totalorder %s110, %s124
    %p126 = scmp.eq.s32.totalorder %s32, 0
    %p127 = por %p125, %p126
    %s129 = sadd.s32 %s128, 1
    %p132 = scmp.eq.s32.totalorder %s26, 1
    %p133 = scmp.ne.s32.totalorder %s128, %s130
    %p134 = scmp.eq.s32.totalorder %s26, 0
    %p135 = por %p133, %p134
    %p136 = scmp.ne.s32.totalorder %s128, %s130
    %p137 = scmp.eq.s32.totalorder %s31, 1
    %p138 = por %p136, %p137
    %p139 = scmp.ne.s32.totalorder %s130, %s131
    %p140 = scmp.eq.s32.totalorder %s31, 0
    %p141 = por %p139, %p140
    %p142 = scmp.ne.s32.totalorder %s130, %s131
    %p143 = scmp.eq.s32.totalorder %s32, 1
    %p144 = por %p142, %p143
    %p146 = scmp.ne.s32.totalorder %s131, %s145
    %p147 = scmp.eq.s32.totalorder %s32, 0
    %p148 = por %p146, %p147
    %s150 = sadd.s32 %s149, 1
    %p153 = scmp.eq.s32.totalorder %s26, 1
    %p154 = scmp.ne.s32.totalorder %s149, %s151
    %p155 = scmp.eq.s32.totalorder %s26, 0
    %p156 = por %p154, %p155
    %p157 = scmp.ne.s32.totalorder %s149, %s151
    %p158 = scmp.eq.s32.totalorder %s31, 1
    %p159 = por %p157, %p158
    %p160 = scmp.ne.s32.totalorder %s151, %s152
    %p161 = scmp.eq.s32.totalorder %s31, 0
    %p162 = por %p160, %p161
    %p163 = scmp.ne.s32.totalorder %s151, %s152
    %p164 = scmp.eq.s32.totalorder %s32, 1
    %p165 = por %p163, %p164
    %p167 = scmp.ne.s32.totalorder %s152, %s166
    %p168 = scmp.eq.s32.totalorder %s32, 0
    %p169 = por %p167, %p168
    %s171 = sadd.s32 %s170, 1
    %p174 = scmp.eq.s32.totalorder %s26, 1
    %p175 = scmp.ne.s32.totalorder %s170, %s172
    %p176 = scmp.eq.s32.totalorder %s26, 0
    %p177 = por %p175, %p176
    %p178 = scmp.ne.s32.totalorder %s170, %s172
    %p179 = scmp.eq.s32.totalorder %s31, 1
    %p180 = por %p178, %p179
    %p181 = scmp.ne.s32.totalorder %s172, %s173
    %p182 = scmp.eq.s32.totalorder %s31, 0
    %p183 = por %p181, %p182
    %p184 = scmp.ne.s32.totalorder %s172, %s173
    %p185 = scmp.eq.s32.totalorder %s32, 1
    %p186 = por %p184, %p185
    %p188 = scmp.ne.s32.totalorder %s173, %s187
    %p189 = scmp.eq.s32.totalorder %s32, 0
    %p190 = por %p188, %p189
    %s192 = sadd.s32 %s191, 1
    %p195 = scmp.eq.s32.totalorder %s26, 1
    %p196 = scmp.ne.s32.totalorder %s191, %s193
    %p197 = scmp.eq.s32.totalorder %s26, 0
    %p198 = por %p196, %p197
    %p199 = scmp.ne.s32.totalorder %s191, %s193
    %p200 = scmp.eq.s32.totalorder %s31, 1
    %p201 = por %p199, %p200
    %p202 = scmp.ne.s32.totalorder %s193, %s194
    %p203 = scmp.eq.s32.totalorder %s31, 0
    %p204 = por %p202, %p203
    %p205 = scmp.ne.s32.totalorder %s193, %s194
    %p206 = scmp.eq.s32.totalorder %s32, 1
    %p207 = por %p205, %p206
    %p209 = scmp.ne.s32.totalorder %s194, %s208
    %p210 = scmp.eq.s32.totalorder %s32, 0
    %p211 = por %p209, %p210
    %s213 = sadd.s32 %s212, 1
    %p216 = scmp.eq.s32.totalorder %s26, 1
    %p217 = scmp.ne.s32.totalorder %s212, %s214
    %p218 = scmp.eq.s32.totalorder %s26, 0
    %p219 = por %p217, %p218
    %p220 = scmp.ne.s32.totalorder %s212, %s214
    %p221 = scmp.eq.s32.totalorder %s31, 1
    %p222 = por %p220, %p221
    %p223 = scmp.ne.s32.totalorder %s214, %s215
    %p224 = scmp.eq.s32.totalorder %s31, 0
    %p225 = por %p223, %p224
    %p226 = scmp.ne.s32.totalorder %s214, %s215
    %p227 = scmp.eq.s32.totalorder %s32, 1
    %p228 = por %p226, %p227
    %p230 = scmp.ne.s32.totalorder %s215, %s229
    %p231 = scmp.eq.s32.totalorder %s32, 0
    %p232 = por %p230, %p231
    %s234 = sadd.s32 %s233, 1
    %p237 = scmp.eq.s32.totalorder %s26, 1
    %p238 = scmp.ne.s32.totalorder %s233, %s235
    %p239 = scmp.eq.s32.totalorder %s26, 0
    %p240 = por %p238, %p239
    %p241 = scmp.ne.s32.totalorder %s233, %s235
    %p242 = scmp.eq.s32.totalorder %s31, 1
    %p243 = por %p241, %p242
    %p244 = scmp.ne.s32.totalorder %s235, %s236
    %p245 = scmp.eq.s32.totalorder %s31, 0
    %p246 = por %p244, %p245
    %p247 = scmp.ne.s32.totalorder %s235, %s236
    %p248 = scmp.eq.s32.totalorder %s32, 1
    %p249 = por %p247, %p248
    %p251 = scmp.ne.s32.totalorder %s236, %s250
    %p252 = scmp.eq.s32.totalorder %s32, 0
    %p253 = por %p251, %p252
    %s255 = sadd.s32 %s254, 1
    %p258 = scmp.eq.s32.totalorder %s26, 1
    %p259 = scmp.ne.s32.totalorder %s254, %s256
    %p260 = scmp.eq.s32.totalorder %s26, 0
    %p261 = por %p259, %p260
    %p262 = scmp.ne.s32.totalorder %s254, %s256
    %p263 = scmp.eq.s32.totalorder %s31, 1
    %p264 = por %p262, %p263
    %p265 = scmp.ne.s32.totalorder %s256, %s257
    %p266 = scmp.eq.s32.totalorder %s31, 0
    %p267 = por %p265, %p266
    %p268 = scmp.ne.s32.totalorder %s256, %s257
    %p269 = scmp.eq.s32.totalorder %s32, 1
    %p270 = por %p268, %p269
    %p272 = scmp.ne.s32.totalorder %s257, %s271
    %p273 = scmp.eq.s32.totalorder %s32, 0
    %p274 = por %p272, %p273
    %s276 = sadd.s32 %s275, 1
    %p279 = scmp.eq.s32.totalorder %s26, 1
    %p280 = scmp.ne.s32.totalorder %s275, %s277
    %p281 = scmp.eq.s32.totalorder %s26, 0
    %p282 = por %p280, %p281
    %p283 = scmp.ne.s32.totalorder %s275, %s277
    %p284 = scmp.eq.s32.totalorder %s31, 1
    %p285 = por %p283, %p284
    %p286 = scmp.ne.s32.totalorder %s277, %s278
    %p287 = scmp.eq.s32.totalorder %s31, 0
    %p288 = por %p286, %p287
    %p289 = scmp.ne.s32.totalorder %s277, %s278
    %p290 = scmp.eq.s32.totalorder %s32, 1
    %p291 = por %p289, %p290
    %p293 = scmp.ne.s32.totalorder %s278, %s292
    %p294 = scmp.eq.s32.totalorder %s32, 0
    %p295 = por %p293, %p294
    %s297 = sadd.s32 %s296, 1
    %p300 = scmp.eq.s32.totalorder %s26, 1
    %p301 = scmp.ne.s32.totalorder %s296, %s298
    %p302 = scmp.eq.s32.totalorder %s26, 0
    %p303 = por %p301, %p302
    %p304 = scmp.ne.s32.totalorder %s296, %s298
    %p305 = scmp.eq.s32.totalorder %s31, 1
    %p306 = por %p304, %p305
    %p307 = scmp.ne.s32.totalorder %s298, %s299
    %p308 = scmp.eq.s32.totalorder %s31, 0
    %p309 = por %p307, %p308
    %p310 = scmp.ne.s32.totalorder %s298, %s299
    %p311 = scmp.eq.s32.totalorder %s32, 1
    %p312 = por %p310, %p311
    %p314 = scmp.ne.s32.totalorder %s299, %s313
    %p315 = scmp.eq.s32.totalorder %s32, 0
    %p316 = por %p314, %p315
    %s318 = sadd.s32 %s317, 1
    %p321 = scmp.eq.s32.totalorder %s26, 1
    %p322 = scmp.ne.s32.totalorder %s317, %s319
    %p323 = scmp.eq.s32.totalorder %s26, 0
    %p324 = por %p322, %p323
    %p325 = scmp.ne.s32.totalorder %s317, %s319
    %p326 = scmp.eq.s32.totalorder %s31, 1
    %p327 = por %p325, %p326
    %p328 = scmp.ne.s32.totalorder %s319, %s320
    %p329 = scmp.eq.s32.totalorder %s31, 0
    %p330 = por %p328, %p329
    %p331 = scmp.ne.s32.totalorder %s319, %s320
    %p332 = scmp.eq.s32.totalorder %s32, 1
    %p333 = por %p331, %p332
    %p335 = scmp.ne.s32.totalorder %s320, %s334
    %p336 = scmp.eq.s32.totalorder %s32, 0
    %p337 = por %p335, %p336
    %s339 = sadd.s32 %s338, 1
    %p342 = scmp.eq.s32.totalorder %s26, 1
    %p343 = scmp.ne.s32.totalorder %s338, %s340
    %p344 = scmp.eq.s32.totalorder %s26, 0
    %p345 = por %p343, %p344
    %p346 = scmp.ne.s32.totalorder %s338, %s340
    %p347 = scmp.eq.s32.totalorder %s31, 1
    %p348 = por %p346, %p347
    %p349 = scmp.ne.s32.totalorder %s340, %s341
    %p350 = scmp.eq.s32.totalorder %s31, 0
    %p351 = por %p349, %p350
    %p352 = scmp.ne.s32.totalorder %s340, %s341
    %p353 = scmp.eq.s32.totalorder %s32, 1
    %p354 = por %p352, %p353
    %p356 = scmp.ne.s32.totalorder %s341, %s355
    %p357 = scmp.eq.s32.totalorder %s32, 0
    %p358 = por %p356, %p357
    %s360 = sadd.s32 %s359, 1
    %p363 = scmp.eq.s32.totalorder %s26, 1
    %p364 = scmp.ne.s32.totalorder %s359, %s361
    %p365 = scmp.eq.s32.totalorder %s26, 0
    %p366 = por %p364, %p365
    %p367 = scmp.ne.s32.totalorder %s359, %s361
    %p368 = scmp.eq.s32.totalorder %s31, 1
    %p369 = por %p367, %p368
    %p370 = scmp.ne.s32.totalorder %s361, %s362
    %p371 = scmp.eq.s32.totalorder %s31, 0
    %p372 = por %p370, %p371
    %p373 = scmp.ne.s32.totalorder %s361, %s362
    %p374 = scmp.eq.s32.totalorder %s32, 1
    %p375 = por %p373, %p374
    %p377 = scmp.ne.s32.totalorder %s362, %s376
    %p378 = scmp.eq.s32.totalorder %s32, 0
    %p379 = por %p377, %p378
    %s381 = sadd.s32 %s380, 1
    %p384 = scmp.eq.s32.totalorder %s26, 1
    %p385 = scmp.ne.s32.totalorder %s380, %s382
    %p386 = scmp.eq.s32.totalorder %s26, 0
    %p387 = por %p385, %p386
    %p388 = scmp.ne.s32.totalorder %s380, %s382
    %p389 = scmp.eq.s32.totalorder %s31, 1
    %p390 = por %p388, %p389
    %p391 = scmp.ne.s32.totalorder %s382, %s383
    %p392 = scmp.eq.s32.totalorder %s31, 0
    %p393 = por %p391, %p392
    %p394 = scmp.ne.s32.totalorder %s382, %s383
    %p395 = scmp.eq.s32.totalorder %s32, 1
    %p396 = por %p394, %p395
    %p398 = scmp.ne.s32.totalorder %s383, %s397
    %p399 = scmp.eq.s32.totalorder %s32, 0
    %p400 = por %p398, %p399
    %s402 = sadd.s32 %s401, 1
    %p405 = scmp.eq.s32.totalorder %s26, 1
    %p406 = scmp.ne.s32.totalorder %s401, %s403
    %p407 = scmp.eq.s32.totalorder %s26, 0
    %p408 = por %p406, %p407
    %p409 = scmp.ne.s32.totalorder %s401, %s403
    %p410 = scmp.eq.s32.totalorder %s31, 1
    %p411 = por %p409, %p410
    %p412 = scmp.ne.s32.totalorder %s403, %s404
    %p413 = scmp.eq.s32.totalorder %s31, 0
    %p414 = por %p412, %p413
    %p415 = scmp.ne.s32.totalorder %s403, %s404
    %p416 = scmp.eq.s32.totalorder %s32, 1
    %p417 = por %p415, %p416
    %p419 = scmp.ne.s32.totalorder %s404, %s418
    %p420 = scmp.eq.s32.totalorder %s32, 0
    %p421 = por %p419, %p420
    %s423 = sadd.s32 %s422, 1
    %p426 = scmp.eq.s32.totalorder %s26, 1
    %p427 = scmp.ne.s32.totalorder %s422, %s424
    %p428 = scmp.eq.s32.totalorder %s26, 0
    %p429 = por %p427, %p428
    %p430 = scmp.ne.s32.totalorder %s422, %s424
    %p431 = scmp.eq.s32.totalorder %s31, 1
    %p432 = por %p430, %p431
    %p433 = scmp.ne.s32.totalorder %s424, %s425
    %p434 = scmp.eq.s32.totalorder %s31, 0
    %p435 = por %p433, %p434
    %p436 = scmp.ne.s32.totalorder %s424, %s425
    %p437 = scmp.eq.s32.totalorder %s32, 1
    %p438 = por %p436, %p437
    %p440 = scmp.ne.s32.totalorder %s425, %s439
    %p441 = scmp.eq.s32.totalorder %s32, 0
    %p442 = por %p440, %p441
    %s444 = sadd.s32 %s443, 1
    %p447 = scmp.eq.s32.totalorder %s26, 1
    %p448 = scmp.ne.s32.totalorder %s443, %s445
    %p449 = scmp.eq.s32.totalorder %s26, 0
    %p450 = por %p448, %p449
    %p451 = scmp.ne.s32.totalorder %s443, %s445
    %p452 = scmp.eq.s32.totalorder %s31, 1
    %p453 = por %p451, %p452
    %p454 = scmp.ne.s32.totalorder %s445, %s446
    %p455 = scmp.eq.s32.totalorder %s31, 0
    %p456 = por %p454, %p455
    %p457 = scmp.ne.s32.totalorder %s445, %s446
    %p458 = scmp.eq.s32.totalorder %s32, 1
    %p459 = por %p457, %p458
    %p461 = scmp.ne.s32.totalorder %s446, %s460
    %p462 = scmp.eq.s32.totalorder %s32, 0
    %p463 = por %p461, %p462
    %s464 = ssub.s32 %s26, %s33
    %p465 = scmp.eq.s32.totalorder %s464, 0
    %s467 = sadd.s32 %s466, 1
    %s468 = scalar_select %p465, %s466, %s467
    %p471 = pneg %p465
    %p472 = scmp.eq.s32.totalorder %s26, 1
    %p473 = por %p471, %p472
    %p474 = scmp.ne.s32.totalorder %s466, %s469
    %p475 = scmp.eq.s32.totalorder %s26, 0
    %p476 = por %p474, %p475
    %p477 = scmp.ne.s32.totalorder %s466, %s469
    %p478 = scmp.eq.s32.totalorder %s31, 1
    %p479 = por %p477, %p478
    %p480 = scmp.ne.s32.totalorder %s469, %s470
    %p481 = scmp.eq.s32.totalorder %s31, 0
    %p482 = por %p480, %p481
    %p483 = scmp.ne.s32.totalorder %s469, %s470
    %p484 = scmp.eq.s32.totalorder %s32, 1
    %p485 = por %p483, %p484
    %p487 = scmp.ne.s32.totalorder %s470, %s486
    %p488 = scmp.eq.s32.totalorder %s32, 0
    %p489 = por %p487, %p488
    %p490 = scmp.le.s32.totalorder 1, %s26
    %p491 = scmp.lt.s32.totalorder %s26, 3
    %p492 = pnand %p490, %p491
    %p493 = pneg %p492
    // Predicated region
    $region9: #{decoder_forward.3} parent=5 // pred_check
      _
    $region10: #{decoder_forward.3} parent=5 // pred_check_branch
      %495 = sbr.rel (%p492) target = $region12
    $region11: #{decoder_forward.3} parent=5 // pred_region
      %s496 = ssub.s32 %s26, 1
      // Predicated region
      $region13: #{decoder_forward.3} parent=11 // pred_check
        %p497 = pneg %p99
      $region14: #{decoder_forward.3} parent=11 // pred_check_branch
        %499 = sbr.rel (%p497) target = $region16
      $region15: #{decoder_forward.3} parent=11 // pred_region
        _
      $region16: #{decoder_forward.3} parent=11 // pred_fallthru
        _
      // Predicated region
      $region17: #{decoder_forward.3} parent=11 // pred_check
        %p500 = pneg %p120
      $region18: #{decoder_forward.3} parent=11 // pred_check_branch
        %502 = sbr.rel (%p500) target = $region20
      $region19: #{decoder_forward.3} parent=11 // pred_region
        _
      $region20: #{decoder_forward.3} parent=11 // pred_fallthru
        _
      // Predicated region
      $region21: #{decoder_forward.3} parent=11 // pred_check
        %p503 = pneg %p141
      $region22: #{decoder_forward.3} parent=11 // pred_check_branch
        %505 = sbr.rel (%p503) target = $region24
      $region23: #{decoder_forward.3} parent=11 // pred_region
        _
      $region24: #{decoder_forward.3} parent=11 // pred_fallthru
        _
      // Predicated region
      $region25: #{decoder_forward.3} parent=11 // pred_check
        %p506 = pneg %p162
      $region26: #{decoder_forward.3} parent=11 // pred_check_branch
        %508 = sbr.rel (%p506) target = $region28
      $region27: #{decoder_forward.3} parent=11 // pred_region
        _
      $region28: #{decoder_forward.3} parent=11 // pred_fallthru
        _
      // Predicated region
      $region29: #{decoder_forward.3} parent=11 // pred_check
        %p509 = pneg %p183
      $region30: #{decoder_forward.3} parent=11 // pred_check_branch
        %511 = sbr.rel (%p509) target = $region32
      $region31: #{decoder_forward.3} parent=11 // pred_region
        _
      $region32: #{decoder_forward.3} parent=11 // pred_fallthru
        _
      // Predicated region
      $region33: #{decoder_forward.3} parent=11 // pred_check
        %p512 = pneg %p204
      $region34: #{decoder_forward.3} parent=11 // pred_check_branch
        %514 = sbr.rel (%p512) target = $region36
      $region35: #{decoder_forward.3} parent=11 // pred_region
        _
      $region36: #{decoder_forward.3} parent=11 // pred_fallthru
        _
      // Predicated region
      $region37: #{decoder_forward.3} parent=11 // pred_check
        %p515 = pneg %p225
      $region38: #{decoder_forward.3} parent=11 // pred_check_branch
        %517 = sbr.rel (%p515) target = $region40
      $region39: #{decoder_forward.3} parent=11 // pred_region
        _
      $region40: #{decoder_forward.3} parent=11 // pred_fallthru
        _
      // Predicated region
      $region41: #{decoder_forward.3} parent=11 // pred_check
        %p518 = pneg %p246
      $region42: #{decoder_forward.3} parent=11 // pred_check_branch
        %520 = sbr.rel (%p518) target = $region44
      $region43: #{decoder_forward.3} parent=11 // pred_region
        _
      $region44: #{decoder_forward.3} parent=11 // pred_fallthru
        _
      // Predicated region
      $region45: #{decoder_forward.3} parent=11 // pred_check
        %p521 = pneg %p267
      $region46: #{decoder_forward.3} parent=11 // pred_check_branch
        %523 = sbr.rel (%p521) target = $region48
      $region47: #{decoder_forward.3} parent=11 // pred_region
        _
      $region48: #{decoder_forward.3} parent=11 // pred_fallthru
        _
      // Predicated region
      $region49: #{decoder_forward.3} parent=11 // pred_check
        %p524 = pneg %p288
      $region50: #{decoder_forward.3} parent=11 // pred_check_branch
        %526 = sbr.rel (%p524) target = $region52
      $region51: #{decoder_forward.3} parent=11 // pred_region
        _
      $region52: #{decoder_forward.3} parent=11 // pred_fallthru
        _
      // Predicated region
      $region53: #{decoder_forward.3} parent=11 // pred_check
        %p527 = pneg %p309
      $region54: #{decoder_forward.3} parent=11 // pred_check_branch
        %529 = sbr.rel (%p527) target = $region56
      $region55: #{decoder_forward.3} parent=11 // pred_region
        _
      $region56: #{decoder_forward.3} parent=11 // pred_fallthru
        _
      // Predicated region
      $region57: #{decoder_forward.3} parent=11 // pred_check
        %p530 = pneg %p330
      $region58: #{decoder_forward.3} parent=11 // pred_check_branch
        %532 = sbr.rel (%p530) target = $region60
      $region59: #{decoder_forward.3} parent=11 // pred_region
        _
      $region60: #{decoder_forward.3} parent=11 // pred_fallthru
        _
      // Predicated region
      $region61: #{decoder_forward.3} parent=11 // pred_check
        %p533 = pneg %p351
      $region62: #{decoder_forward.3} parent=11 // pred_check_branch
        %535 = sbr.rel (%p533) target = $region64
      $region63: #{decoder_forward.3} parent=11 // pred_region
        _
      $region64: #{decoder_forward.3} parent=11 // pred_fallthru
        _
      // Predicated region
      $region65: #{decoder_forward.3} parent=11 // pred_check
        %p536 = pneg %p372
      $region66: #{decoder_forward.3} parent=11 // pred_check_branch
        %538 = sbr.rel (%p536) target = $region68
      $region67: #{decoder_forward.3} parent=11 // pred_region
        _
      $region68: #{decoder_forward.3} parent=11 // pred_fallthru
        _
      // Predicated region
      $region69: #{decoder_forward.3} parent=11 // pred_check
        %p539 = pneg %p393
      $region70: #{decoder_forward.3} parent=11 // pred_check_branch
        %541 = sbr.rel (%p539) target = $region72
      $region71: #{decoder_forward.3} parent=11 // pred_region
        _
      $region72: #{decoder_forward.3} parent=11 // pred_fallthru
        _
      // Predicated region
      $region73: #{decoder_forward.3} parent=11 // pred_check
        %p542 = pneg %p414
      $region74: #{decoder_forward.3} parent=11 // pred_check_branch
        %544 = sbr.rel (%p542) target = $region76
      $region75: #{decoder_forward.3} parent=11 // pred_region
        _
      $region76: #{decoder_forward.3} parent=11 // pred_fallthru
        _
      // Predicated region
      $region77: #{decoder_forward.3} parent=11 // pred_check
        %p545 = pneg %p435
      $region78: #{decoder_forward.3} parent=11 // pred_check_branch
        %547 = sbr.rel (%p545) target = $region80
      $region79: #{decoder_forward.3} parent=11 // pred_region
        _
      $region80: #{decoder_forward.3} parent=11 // pred_fallthru
        _
      // Predicated region
      $region81: #{decoder_forward.3} parent=11 // pred_check
        %p548 = pneg %p456
      $region82: #{decoder_forward.3} parent=11 // pred_check_branch
        %550 = sbr.rel (%p548) target = $region84
      $region83: #{decoder_forward.3} parent=11 // pred_region
        _
      $region84: #{decoder_forward.3} parent=11 // pred_fallthru
        _
    $region12: #{decoder_forward.3} parent=5 // pred_fallthru
      _
    %p551 = scmp.lt.s32.totalorder %s26, 2
    // Predicated region
    $region85: #{decoder_forward.3} parent=5 // pred_check
      %p552 = pneg %p551
    $region86: #{decoder_forward.3} parent=5 // pred_check_branch
      %554 = sbr.rel (%p552) target = $region88
    $region87: #{decoder_forward.3} parent=5 // pred_region
      // Predicated region
      $region89: #{decoder_forward.3} parent=87 // pred_check
        %p555 = pneg %p46
      $region90: #{decoder_forward.3} parent=87 // pred_check_branch
        %557 = sbr.rel (%p555) target = $region92
      $region91: #{decoder_forward.3} parent=87 // pred_region
        %p558 = scmp.lt.s32.totalorder %s26, 1
        %s559 = scalar_select %p558, %s26, 1
        %s560 = smul.addr %s559, 4
        %s561 = scalar_lea.vmem %s0, %s560
      $region92: #{decoder_forward.3} parent=87 // pred_fallthru
        _
      // Predicated region
      $region93: #{decoder_forward.3} parent=87 // pred_check
        %p562 = pneg %p72
      $region94: #{decoder_forward.3} parent=87 // pred_check_branch
        %564 = sbr.rel (%p562) target = $region96
      $region95: #{decoder_forward.3} parent=87 // pred_region
        %p565 = scmp.lt.s32.totalorder %s26, 1
        %s566 = scalar_select %p565, %s26, 1
        %s567 = smul.addr %s566, 4
        %s568 = scalar_lea.vmem %s1, %s567
      $region96: #{decoder_forward.3} parent=87 // pred_fallthru
        _
    $region88: #{decoder_forward.3} parent=5 // pred_fallthru
      _
    %p569 = scmp.le.s32.totalorder 1, %s26
    %p570 = scmp.lt.s32.totalorder %s26, 3
    %p571 = pnand %p569, %p570
    %p572 = pneg %p571
    // Predicated region
    $region97: #{decoder_forward.3} parent=5 // pred_check
      _
    $region98: #{decoder_forward.3} parent=5 // pred_check_branch
      %574 = sbr.rel (%p571) target = $region100
    $region99: #{decoder_forward.3} parent=5 // pred_region
      %s575 = ssub.s32 %s26, 1
      %p576 = scmp.lt.s32.totalorder %s31, 1
      %s577 = scalar_select %p576, %s31, 1
      %s578 = smul.addr %s577, 4
      %s579 = scalar_lea.vmem %s0, %s578
      %p580 = pneg %p52
      %p581 = pneg %p49
      %p582 = scmp.lt.s32.totalorder %s31, 1
      %s583 = scalar_select %p582, %s31, 1
      %s584 = smul.addr %s583, 4
      %s585 = scalar_lea.vmem %s1, %s584
      %p586 = pneg %p78
      %p587 = pneg %p75
      %p588 = pneg %p99
      %p589 = pneg %p96
      %p590 = pneg %p120
      %p591 = pneg %p117
      %p592 = pneg %p141
      %p593 = pneg %p138
      %p594 = pneg %p162
      %p595 = pneg %p159
      %p596 = pneg %p183
      %p597 = pneg %p180
      %p598 = pneg %p204
      %p599 = pneg %p201
      %p600 = pneg %p225
      %p601 = pneg %p222
      %p602 = pneg %p246
      %p603 = pneg %p243
      %p604 = pneg %p267
      %p605 = pneg %p264
      %p606 = pneg %p288
      %p607 = pneg %p285
      %p608 = pneg %p309
      %p609 = pneg %p306
      %p610 = pneg %p330
      %p611 = pneg %p327
      %p612 = pneg %p351
      %p613 = pneg %p348
      %p614 = pneg %p372
      %p615 = pneg %p369
      %p616 = pneg %p393
      %p617 = pneg %p390
      %p618 = pneg %p414
      %p619 = pneg %p411
      %p620 = pneg %p435
      %p621 = pneg %p432
      %p622 = pneg %p456
      %p623 = pneg %p453
      %p624 = pneg %p482
      %p625 = pneg %p479
      %p626 = scmp.lt.s32.totalorder %s31, 1
      %s627 = scalar_select %p626, %s31, 1
      %s628 = smul.addr %s627, 4
      %s629 = scalar_lea.vmem %s20, %s628
      %p630 = scmp.lt.s32.totalorder %s31, 1
      %s631 = scalar_select %p630, %s31, 1
      %s632 = smul.addr %s631, 4
      %s633 = scalar_lea.vmem %s0, %s632
      %p634 = scmp.lt.s32.totalorder %s31, 1
      %s635 = scalar_select %p634, %s31, 1
      %s636 = smul.addr %s635, 4
      %s637 = scalar_lea.vmem %s1, %s636
      %p638 = scmp.lt.s32.totalorder %s31, 1
      %s639 = scalar_select %p638, %s31, 1
      %s640 = smul.addr %s639, 4
      %s641 = scalar_lea.vmem %s20, %s640
      %v643 = vld [vmem:[%s633] sm:$0xf]
      %v644 = vunpack.c.l.bf16 %v643
      %v645 = vld [vmem:[%s2] sm:$0xf]
      %v646 = vld [vmem:[%s2 + $0x4] sm:$0xf]
      %v647 = vld [vmem:[%s2 + $0x8] sm:$0xf]
      %v648 = vld [vmem:[%s2 + $0xc] sm:$0xf]
      %v649 = vld [vmem:[%s2 + $0x10] sm:$0xf]
      %v650 = vld [vmem:[%s2 + $0x14] sm:$0xf]
      %v651 = vld [vmem:[%s2 + $0x18] sm:$0xf]
      %v652 = vld [vmem:[%s2 + $0x1c] sm:$0xf]
      %v653 = vld [vmem:[%s2 + $0x20] sm:$0xf]
      %v654 = vld [vmem:[%s2 + $0x24] sm:$0xf]
      %v655 = vld [vmem:[%s2 + $0x28] sm:$0xf]
      %v656 = vld [vmem:[%s2 + $0x2c] sm:$0xf]
      %v657 = vld [vmem:[%s2 + $0x30] sm:$0xf]
      %v658 = vld [vmem:[%s2 + $0x34] sm:$0xf]
      %v659 = vld [vmem:[%s2 + $0x38] sm:$0xf]
      %v660 = vld [vmem:[%s2 + $0x3c] sm:$0xf]
      %v661 = vld [vmem:[%s2 + $0x40] sm:$0xf]
      %v662 = vld [vmem:[%s2 + $0x44] sm:$0xf]
      %v663 = vld [vmem:[%s2 + $0x48] sm:$0xf]
      %v664 = vld [vmem:[%s2 + $0x4c] sm:$0xf]
      %v665 = vld [vmem:[%s2 + $0x50] sm:$0xf]
      %v666 = vld [vmem:[%s2 + $0x54] sm:$0xf]
      %v667 = vld [vmem:[%s2 + $0x58] sm:$0xf]
      %v668 = vld [vmem:[%s2 + $0x5c] sm:$0xf]
      %v669 = vld [vmem:[%s2 + $0x60] sm:$0xf]
      %v670 = vld [vmem:[%s2 + $0x64] sm:$0xf]
      %v671 = vld [vmem:[%s2 + $0x68] sm:$0xf]
      %v672 = vld [vmem:[%s2 + $0x6c] sm:$0xf]
      %v673 = vld [vmem:[%s2 + $0x70] sm:$0xf]
      %v674 = vld [vmem:[%s2 + $0x74] sm:$0xf]
      %v675 = vld [vmem:[%s2 + $0x78] sm:$0xf]
      %v676 = vld [vmem:[%s2 + $0x7c] sm:$0xf]
      %v677 = vld [vmem:[%s2 + $0x80] sm:$0xf]
      %v678 = vld [vmem:[%s2 + $0x84] sm:$0xf]
      %v679 = vld [vmem:[%s2 + $0x88] sm:$0xf]
      %v680 = vld [vmem:[%s2 + $0x8c] sm:$0xf]
      %v681 = vld [vmem:[%s2 + $0x90] sm:$0xf]
      %v682 = vld [vmem:[%s2 + $0x94] sm:$0xf]
      %v683 = vld [vmem:[%s2 + $0x98] sm:$0xf]
      %v684 = vld [vmem:[%s2 + $0x9c] sm:$0xf]
      %v685 = vld [vmem:[%s2 + $0xa0] sm:$0xf]
      %v686 = vld [vmem:[%s2 + $0xa4] sm:$0xf]
      %v687 = vld [vmem:[%s2 + $0xa8] sm:$0xf]
      %v688 = vld [vmem:[%s2 + $0xac] sm:$0xf]
      %v689 = vld [vmem:[%s2 + $0xb0] sm:$0xf]
      %v690 = vld [vmem:[%s2 + $0xb4] sm:$0xf]
      %v691 = vld [vmem:[%s2 + $0xb8] sm:$0xf]
      %v692 = vld [vmem:[%s2 + $0xbc] sm:$0xf]
      %v693 = vld [vmem:[%s2 + $0xc0] sm:$0xf]
      %v694 = vld [vmem:[%s2 + $0xc4] sm:$0xf]
      %v695 = vld [vmem:[%s2 + $0xc8] sm:$0xf]
      %v696 = vld [vmem:[%s2 + $0xcc] sm:$0xf]
      %v697 = vld [vmem:[%s2 + $0xd0] sm:$0xf]
      %v698 = vld [vmem:[%s2 + $0xd4] sm:$0xf]
      %v699 = vld [vmem:[%s2 + $0xd8] sm:$0xf]
      %v700 = vld [vmem:[%s2 + $0xdc] sm:$0xf]
      %v701 = vld [vmem:[%s2 + $0xe0] sm:$0xf]
      %v702 = vld [vmem:[%s2 + $0xe4] sm:$0xf]
      %v703 = vld [vmem:[%s2 + $0xe8] sm:$0xf]
      %v704 = vld [vmem:[%s2 + $0xec] sm:$0xf]
      %v705 = vld [vmem:[%s2 + $0xf0] sm:$0xf]
      %v706 = vld [vmem:[%s2 + $0xf4] sm:$0xf]
      %v707 = vld [vmem:[%s2 + $0xf8] sm:$0xf]
      %v708 = vld [vmem:[%s2 + $0xfc] sm:$0xf]
      %v709 = vld [vmem:[%s3] sm:$0x1]
      %v710 = vld [vmem:[%s3 + $0x1] sm:$0x1]
      %v711 = vld [vmem:[%s3 + $0x2] sm:$0x1]
      %v712 = vld [vmem:[%s3 + $0x3] sm:$0x1]
      %v717 = vlaneseq
      %v718 = vshrl.u32 %v717, 7
      %v719 = vsub.s32 0, %v718
      %v720 = vrot.slane %v709, %v719
      %v721 = vlaneseq
      %v722 = vshrl.u32 %v721, 7
      %v723 = vsub.s32 0, %v722
      %v724 = vrot.slane %v710, %v723
      %v725 = vlaneseq
      %v726 = vshrl.u32 %v725, 7
      %v727 = vsub.s32 0, %v726
      %v728 = vrot.slane %v711, %v727
      %v729 = vlaneseq
      %v730 = vshrl.u32 %v729, 7
      %v731 = vsub.s32 0, %v730
      %v732 = vrot.slane %v712, %v731
      %v753 = vunpack.c.l.b16 %v645
      %v754 = vunpack.c.l.b16 %v646
      %v755 = vunpack.c.l.b16 %v647
      %v756 = vunpack.c.l.b16 %v648
      %v757 = vunpack.c.l.b16 %v649
      %v758 = vunpack.c.l.b16 %v650
      %v759 = vunpack.c.l.b16 %v651
      %v760 = vunpack.c.l.b16 %v652
      %v761 = vunpack.c.l.b16 %v653
      %v762 = vunpack.c.l.b16 %v654
      %v763 = vunpack.c.l.b16 %v655
      %v764 = vunpack.c.l.b16 %v656
      %v765 = vunpack.c.l.b16 %v657
      %v766 = vunpack.c.l.b16 %v658
      %v767 = vunpack.c.l.b16 %v659
      %v768 = vunpack.c.l.b16 %v660
      %v769 = vpack.c.b16 %v754, %v753
      %v770 = vpack.c.b16 %v756, %v755
      %v771 = vpack.c.b16 %v758, %v757
      %v772 = vpack.c.b16 %v760, %v759
      %v773 = vpack.c.b16 %v762, %v761
      %v774 = vpack.c.b16 %v764, %v763
      %v775 = vpack.c.b16 %v766, %v765
      %v776 = vpack.c.b16 %v768, %v767
      %785 = vmatprep.subr.bf16.mxu0 0
      %786 = vmatpush1.bf16.msra.mxu0 %v776
      %787 = vmatprep.subr.bf16.mxu0 0
      %788 = vmatpush1.bf16.msra.mxu0 %v775
      %789 = vmatprep.subr.bf16.mxu0 0
      %790 = vmatpush1.bf16.msra.mxu0 %v774
      %791 = vmatprep.subr.bf16.mxu0 0
      %792 = vmatpush1.bf16.msra.mxu0 %v773
      %793 = vmatprep.subr.bf16.mxu0 0
      %794 = vmatpush1.bf16.msra.mxu0 %v772
      %795 = vmatprep.subr.bf16.mxu0 0
      %796 = vmatpush1.bf16.msra.mxu0 %v771
      %797 = vmatprep.subr.bf16.mxu0 0
      %798 = vmatpush1.bf16.msra.mxu0 %v770
      %799 = vmatprep.subr.bf16.mxu0 0
      %800 = vmatpush1.bf16.msra.mxu0 %v769
      %801 = vmatprep.subr.bf16.mxu0 0
      %802 = vmatpush2.bf16.msra.mxu0 0
      %803 = vmatprep.subr.bf16.mxu0 0
      %804 = vmatpush2.bf16.msra.mxu0 0
      %805 = vmatprep.subr.bf16.mxu0 0
      %806 = vmatpush2.bf16.msra.mxu0 0
      %807 = vmatprep.subr.bf16.mxu0 0
      %808 = vmatpush2.bf16.msra.mxu0 0
      %809 = vmatprep.subr.bf16.mxu0 0
      %810 = vmatpush2.bf16.msra.mxu0 0
      %811 = vmatprep.subr.bf16.mxu0 0
      %812 = vmatpush2.bf16.msra.mxu0 0
      %813 = vmatprep.subr.bf16.mxu0 0
      %814 = vmatpush2.bf16.msra.mxu0 0
      %815 = vmatprep.subr.bf16.mxu0 0
      %816 = vmatpush2.bf16.msra.mxu0 0
      %817 = vmatprep.mubr.bf16.mxu0 0
      %818 = vmatmul.mubr.bf16.gmra.mxu0 %v643
      %v819 = vpop.f32.mrf.mxu0
      %v820 = vadd.f32 %v720, %v819
      %v821 = vpop.f32.mrf.mxu0
      %v822 = vpop.f32.mrf.mxu0
      %v823 = vpop.f32.mrf.mxu0
      %824 = vdwg.mxu0
      %v841 = vunpack.c.l.b16 %v661
      %v842 = vunpack.c.l.b16 %v662
      %v843 = vunpack.c.l.b16 %v663
      %v844 = vunpack.c.l.b16 %v664
      %v845 = vunpack.c.l.b16 %v665
      %v846 = vunpack.c.l.b16 %v666
      %v847 = vunpack.c.l.b16 %v667
      %v848 = vunpack.c.l.b16 %v668
      %v849 = vunpack.c.l.b16 %v669
      %v850 = vunpack.c.l.b16 %v670
      %v851 = vunpack.c.l.b16 %v671
      %v852 = vunpack.c.l.b16 %v672
      %v853 = vunpack.c.l.b16 %v673
      %v854 = vunpack.c.l.b16 %v674
      %v855 = vunpack.c.l.b16 %v675
      %v856 = vunpack.c.l.b16 %v676
      %v857 = vpack.c.b16 %v842, %v841
      %v858 = vpack.c.b16 %v844, %v843
      %v859 = vpack.c.b16 %v846, %v845
      %v860 = vpack.c.b16 %v848, %v847
      %v861 = vpack.c.b16 %v850, %v849
      %v862 = vpack.c.b16 %v852, %v851
      %v863 = vpack.c.b16 %v854, %v853
      %v864 = vpack.c.b16 %v856, %v855
      %873 = vmatprep.subr.bf16.mxu0 0
      %874 = vmatpush1.bf16.msra.mxu0 %v864
      %875 = vmatprep.subr.bf16.mxu0 0
      %876 = vmatpush1.bf16.msra.mxu0 %v863
      %877 = vmatprep.subr.bf16.mxu0 0
      %878 = vmatpush1.bf16.msra.mxu0 %v862
      %879 = vmatprep.subr.bf16.mxu0 0
      %880 = vmatpush1.bf16.msra.mxu0 %v861
      %881 = vmatprep.subr.bf16.mxu0 0
      %882 = vmatpush1.bf16.msra.mxu0 %v860
      %883 = vmatprep.subr.bf16.mxu0 0
      %884 = vmatpush1.bf16.msra.mxu0 %v859
      %885 = vmatprep.subr.bf16.mxu0 0
      %886 = vmatpush1.bf16.msra.mxu0 %v858
      %887 = vmatprep.subr.bf16.mxu0 0
      %888 = vmatpush1.bf16.msra.mxu0 %v857
      %889 = vmatprep.subr.bf16.mxu0 0
      %890 = vmatpush2.bf16.msra.mxu0 0
      %891 = vmatprep.subr.bf16.mxu0 0
      %892 = vmatpush2.bf16.msra.mxu0 0
      %893 = vmatprep.subr.bf16.mxu0 0
      %894 = vmatpush2.bf16.msra.mxu0 0
      %895 = vmatprep.subr.bf16.mxu0 0
      %896 = vmatpush2.bf16.msra.mxu0 0
      %897 = vmatprep.subr.bf16.mxu0 0
      %898 = vmatpush2.bf16.msra.mxu0 0
      %899 = vmatprep.subr.bf16.mxu0 0
      %900 = vmatpush2.bf16.msra.mxu0 0
      %901 = vmatprep.subr.bf16.mxu0 0
      %902 = vmatpush2.bf16.msra.mxu0 0
      %903 = vmatprep.subr.bf16.mxu0 0
      %904 = vmatpush2.bf16.msra.mxu0 0
      %905 = vmatprep.mubr.bf16.mxu0 0
      %906 = vmatmul.mubr.bf16.gmra.mxu0 %v643
      %v907 = vpop.f32.mrf.mxu0
      %v908 = vadd.f32 %v724, %v907
      %v909 = vpop.f32.mrf.mxu0
      %v910 = vpop.f32.mrf.mxu0
      %v911 = vpop.f32.mrf.mxu0
      %912 = vdwg.mxu0
      %v929 = vunpack.c.l.b16 %v677
      %v930 = vunpack.c.l.b16 %v678
      %v931 = vunpack.c.l.b16 %v679
      %v932 = vunpack.c.l.b16 %v680
      %v933 = vunpack.c.l.b16 %v681
      %v934 = vunpack.c.l.b16 %v682
      %v935 = vunpack.c.l.b16 %v683
      %v936 = vunpack.c.l.b16 %v684
      %v937 = vunpack.c.l.b16 %v685
      %v938 = vunpack.c.l.b16 %v686
      %v939 = vunpack.c.l.b16 %v687
      %v940 = vunpack.c.l.b16 %v688
      %v941 = vunpack.c.l.b16 %v689
      %v942 = vunpack.c.l.b16 %v690
      %v943 = vunpack.c.l.b16 %v691
      %v944 = vunpack.c.l.b16 %v692
      %v945 = vpack.c.b16 %v930, %v929
      %v946 = vpack.c.b16 %v932, %v931
      %v947 = vpack.c.b16 %v934, %v933
      %v948 = vpack.c.b16 %v936, %v935
      %v949 = vpack.c.b16 %v938, %v937
      %v950 = vpack.c.b16 %v940, %v939
      %v951 = vpack.c.b16 %v942, %v941
      %v952 = vpack.c.b16 %v944, %v943
      %961 = vmatprep.subr.bf16.mxu0 0
      %962 = vmatpush1.bf16.msra.mxu0 %v952
      %963 = vmatprep.subr.bf16.mxu0 0
      %964 = vmatpush1.bf16.msra.mxu0 %v951
      %965 = vmatprep.subr.bf16.mxu0 0
      %966 = vmatpush1.bf16.msra.mxu0 %v950
      %967 = vmatprep.subr.bf16.mxu0 0
      %968 = vmatpush1.bf16.msra.mxu0 %v949
      %969 = vmatprep.subr.bf16.mxu0 0
      %970 = vmatpush1.bf16.msra.mxu0 %v948
      %971 = vmatprep.subr.bf16.mxu0 0
      %972 = vmatpush1.bf16.msra.mxu0 %v947
      %973 = vmatprep.subr.bf16.mxu0 0
      %974 = vmatpush1.bf16.msra.mxu0 %v946
      %975 = vmatprep.subr.bf16.mxu0 0
      %976 = vmatpush1.bf16.msra.mxu0 %v945
      %977 = vmatprep.subr.bf16.mxu0 0
      %978 = vmatpush2.bf16.msra.mxu0 0
      %979 = vmatprep.subr.bf16.mxu0 0
      %980 = vmatpush2.bf16.msra.mxu0 0
      %981 = vmatprep.subr.bf16.mxu0 0
      %982 = vmatpush2.bf16.msra.mxu0 0
      %983 = vmatprep.subr.bf16.mxu0 0
      %984 = vmatpush2.bf16.msra.mxu0 0
      %985 = vmatprep.subr.bf16.mxu0 0
      %986 = vmatpush2.bf16.msra.mxu0 0
      %987 = vmatprep.subr.bf16.mxu0 0
      %988 = vmatpush2.bf16.msra.mxu0 0
      %989 = vmatprep.subr.bf16.mxu0 0
      %990 = vmatpush2.bf16.msra.mxu0 0
      %991 = vmatprep.subr.bf16.mxu0 0
      %992 = vmatpush2.bf16.msra.mxu0 0
      %993 = vmatprep.mubr.bf16.mxu0 0
      %994 = vmatmul.mubr.bf16.gmra.mxu0 %v643
      %v995 = vpop.f32.mrf.mxu0
      %v996 = vadd.f32 %v728, %v995
      %v997 = vpop.f32.mrf.mxu0
      %v998 = vpop.f32.mrf.mxu0
      %v999 = vpop.f32.mrf.mxu0
      %1000 = vdwg.mxu0
      %v1017 = vunpack.c.l.b16 %v693
      %v1018 = vunpack.c.l.b16 %v694
      %v1019 = vunpack.c.l.b16 %v695
      %v1020 = vunpack.c.l.b16 %v696
      %v1021 = vunpack.c.l.b16 %v697
      %v1022 = vunpack.c.l.b16 %v698
      %v1023 = vunpack.c.l.b16 %v699
      %v1024 = vunpack.c.l.b16 %v700
      %v1025 = vunpack.c.l.b16 %v701
      %v1026 = vunpack.c.l.b16 %v702
      %v1027 = vunpack.c.l.b16 %v703
      %v1028 = vunpack.c.l.b16 %v704
      %v1029 = vunpack.c.l.b16 %v705
      %v1030 = vunpack.c.l.b16 %v706
      %v1031 = vunpack.c.l.b16 %v707
      %v1032 = vunpack.c.l.b16 %v708
      %v1033 = vpack.c.b16 %v1018, %v1017
      %v1034 = vpack.c.b16 %v1020, %v1019
      %v1035 = vpack.c.b16 %v1022, %v1021
      %v1036 = vpack.c.b16 %v1024, %v1023
      %v1037 = vpack.c.b16 %v1026, %v1025
      %v1038 = vpack.c.b16 %v1028, %v1027
      %v1039 = vpack.c.b16 %v1030, %v1029
      %v1040 = vpack.c.b16 %v1032, %v1031
      %1049 = vmatprep.subr.bf16.mxu0 0
      %1050 = vmatpush1.bf16.msra.mxu0 %v1040
      %1051 = vmatprep.subr.bf16.mxu0 0
      %1052 = vmatpush1.bf16.msra.mxu0 %v1039
      %1053 = vmatprep.subr.bf16.mxu0 0
      %1054 = vmatpush1.bf16.msra.mxu0 %v1038
      %1055 = vmatprep.subr.bf16.mxu0 0
      %1056 = vmatpush1.bf16.msra.mxu0 %v1037
      %1057 = vmatprep.subr.bf16.mxu0 0
      %1058 = vmatpush1.bf16.msra.mxu0 %v1036
      %1059 = vmatprep.subr.bf16.mxu0 0
      %1060 = vmatpush1.bf16.msra.mxu0 %v1035
      %1061 = vmatprep.subr.bf16.mxu0 0
      %1062 = vmatpush1.bf16.msra.mxu0 %v1034
      %1063 = vmatprep.subr.bf16.mxu0 0
      %1064 = vmatpush1.bf16.msra.mxu0 %v1033
      %1065 = vmatprep.subr.bf16.mxu0 0
      %1066 = vmatpush2.bf16.msra.mxu0 0
      %1067 = vmatprep.subr.bf16.mxu0 0
      %1068 = vmatpush2.bf16.msra.mxu0 0
      %1069 = vmatprep.subr.bf16.mxu0 0
      %1070 = vmatpush2.bf16.msra.mxu0 0
      %1071 = vmatprep.subr.bf16.mxu0 0
      %1072 = vmatpush2.bf16.msra.mxu0 0
      %1073 = vmatprep.subr.bf16.mxu0 0
      %1074 = vmatpush2.bf16.msra.mxu0 0
      %1075 = vmatprep.subr.bf16.mxu0 0
      %1076 = vmatpush2.bf16.msra.mxu0 0
      %1077 = vmatprep.subr.bf16.mxu0 0
      %1078 = vmatpush2.bf16.msra.mxu0 0
      %1079 = vmatprep.subr.bf16.mxu0 0
      %1080 = vmatpush2.bf16.msra.mxu0 0
      %1081 = vmatprep.mubr.bf16.mxu0 0
      %1082 = vmatmul.mubr.bf16.gmra.mxu0 %v643
      %v1083 = vpop.f32.mrf.mxu0
      %v1084 = vadd.f32 %v732, %v1083
      %v1085 = vpop.f32.mrf.mxu0
      %v1086 = vpop.f32.mrf.mxu0
      %v1087 = vpop.f32.mrf.mxu0
      %1088 = vdwg.mxu0
      %s1089 = scalar_lea.vmem %s2, 256
      %v1090 = vld [vmem:[%s1089] sm:$0xf]
      %v1091 = vld [vmem:[%s1089 + $0x4] sm:$0xf]
      %v1092 = vld [vmem:[%s1089 + $0x8] sm:$0xf]
      %v1093 = vld [vmem:[%s1089 + $0xc] sm:$0xf]
      %v1094 = vld [vmem:[%s1089 + $0x10] sm:$0xf]
      %v1095 = vld [vmem:[%s1089 + $0x14] sm:$0xf]
      %v1096 = vld [vmem:[%s1089 + $0x18] sm:$0xf]
      %v1097 = vld [vmem:[%s1089 + $0x1c] sm:$0xf]
      %v1098 = vld [vmem:[%s1089 + $0x20] sm:$0xf]
      %v1099 = vld [vmem:[%s1089 + $0x24] sm:$0xf]
      %v1100 = vld [vmem:[%s1089 + $0x28] sm:$0xf]
      %v1101 = vld [vmem:[%s1089 + $0x2c] sm:$0xf]
      %v1102 = vld [vmem:[%s1089 + $0x30] sm:$0xf]
      %v1103 = vld [vmem:[%s1089 + $0x34] sm:$0xf]
      %v1104 = vld [vmem:[%s1089 + $0x38] sm:$0xf]
      %v1105 = vld [vmem:[%s1089 + $0x3c] sm:$0xf]
      %v1106 = vld [vmem:[%s1089 + $0x40] sm:$0xf]
      %v1107 = vld [vmem:[%s1089 + $0x44] sm:$0xf]
      %v1108 = vld [vmem:[%s1089 + $0x48] sm:$0xf]
      %v1109 = vld [vmem:[%s1089 + $0x4c] sm:$0xf]
      %v1110 = vld [vmem:[%s1089 + $0x50] sm:$0xf]
      %v1111 = vld [vmem:[%s1089 + $0x54] sm:$0xf]
      %v1112 = vld [vmem:[%s1089 + $0x58] sm:$0xf]
      %v1113 = vld [vmem:[%s1089 + $0x5c] sm:$0xf]
      %v1114 = vld [vmem:[%s1089 + $0x60] sm:$0xf]
      %v1115 = vld [vmem:[%s1089 + $0x64] sm:$0xf]
      %v1116 = vld [vmem:[%s1089 + $0x68] sm:$0xf]
      %v1117 = vld [vmem:[%s1089 + $0x6c] sm:$0xf]
      %v1118 = vld [vmem:[%s1089 + $0x70] sm:$0xf]
      %v1119 = vld [vmem:[%s1089 + $0x74] sm:$0xf]
      %v1120 = vld [vmem:[%s1089 + $0x78] sm:$0xf]
      %v1121 = vld [vmem:[%s1089 + $0x7c] sm:$0xf]
      %v1122 = vld [vmem:[%s1089 + $0x80] sm:$0xf]
      %v1123 = vld [vmem:[%s1089 + $0x84] sm:$0xf]
      %v1124 = vld [vmem:[%s1089 + $0x88] sm:$0xf]
      %v1125 = vld [vmem:[%s1089 + $0x8c] sm:$0xf]
      %v1126 = vld [vmem:[%s1089 + $0x90] sm:$0xf]
      %v1127 = vld [vmem:[%s1089 + $0x94] sm:$0xf]
      %v1128 = vld [vmem:[%s1089 + $0x98] sm:$0xf]
      %v1129 = vld [vmem:[%s1089 + $0x9c] sm:$0xf]
      %v1130 = vld [vmem:[%s1089 + $0xa0] sm:$0xf]
      %v1131 = vld [vmem:[%s1089 + $0xa4] sm:$0xf]
      %v1132 = vld [vmem:[%s1089 + $0xa8] sm:$0xf]
      %v1133 = vld [vmem:[%s1089 + $0xac] sm:$0xf]
      %v1134 = vld [vmem:[%s1089 + $0xb0] sm:$0xf]
      %v1135 = vld [vmem:[%s1089 + $0xb4] sm:$0xf]
      %v1136 = vld [vmem:[%s1089 + $0xb8] sm:$0xf]
      %v1137 = vld [vmem:[%s1089 + $0xbc] sm:$0xf]
      %v1138 = vld [vmem:[%s1089 + $0xc0] sm:$0xf]
      %v1139 = vld [vmem:[%s1089 + $0xc4] sm:$0xf]
      %v1140 = vld [vmem:[%s1089 + $0xc8] sm:$0xf]
      %v1141 = vld [vmem:[%s1089 + $0xcc] sm:$0xf]
      %v1142 = vld [vmem:[%s1089 + $0xd0] sm:$0xf]
      %v1143 = vld [vmem:[%s1089 + $0xd4] sm:$0xf]
      %v1144 = vld [vmem:[%s1089 + $0xd8] sm:$0xf]
      %v1145 = vld [vmem:[%s1089 + $0xdc] sm:$0xf]
      %v1146 = vld [vmem:[%s1089 + $0xe0] sm:$0xf]
      %v1147 = vld [vmem:[%s1089 + $0xe4] sm:$0xf]
      %v1148 = vld [vmem:[%s1089 + $0xe8] sm:$0xf]
      %v1149 = vld [vmem:[%s1089 + $0xec] sm:$0xf]
      %v1150 = vld [vmem:[%s1089 + $0xf0] sm:$0xf]
      %v1151 = vld [vmem:[%s1089 + $0xf4] sm:$0xf]
      %v1152 = vld [vmem:[%s1089 + $0xf8] sm:$0xf]
      %v1153 = vld [vmem:[%s1089 + $0xfc] sm:$0xf]
      %s1154 = scalar_lea.vmem %s3, 4
      %v1155 = vld [vmem:[%s1154] sm:$0x1]
      %v1156 = vld [vmem:[%s1154 + $0x1] sm:$0x1]
      %v1157 = vld [vmem:[%s1154 + $0x2] sm:$0x1]
      %v1158 = vld [vmem:[%s1154 + $0x3] sm:$0x1]
      %v1163 = vlaneseq
      %v1164 = vshrl.u32 %v1163, 7
      %v1165 = vsub.s32 0, %v1164
      %v1166 = vrot.slane %v1155, %v1165
      %v1167 = vlaneseq
      %v1168 = vshrl.u32 %v1167, 7
      %v1169 = vsub.s32 0, %v1168
      %v1170 = vrot.slane %v1156, %v1169
      %v1171 = vlaneseq
      %v1172 = vshrl.u32 %v1171, 7
      %v1173 = vsub.s32 0, %v1172
      %v1174 = vrot.slane %v1157, %v1173
      %v1175 = vlaneseq
      %v1176 = vshrl.u32 %v1175, 7
      %v1177 = vsub.s32 0, %v1176
      %v1178 = vrot.slane %v1158, %v1177
      %v1199 = vunpack.c.l.b16 %v1090
      %v1200 = vunpack.c.l.b16 %v1091
      %v1201 = vunpack.c.l.b16 %v1092
      %v1202 = vunpack.c.l.b16 %v1093
      %v1203 = vunpack.c.l.b16 %v1094
      %v1204 = vunpack.c.l.b16 %v1095
      %v1205 = vunpack.c.l.b16 %v1096
      %v1206 = vunpack.c.l.b16 %v1097
      %v1207 = vunpack.c.l.b16 %v1098
      %v1208 = vunpack.c.l.b16 %v1099
      %v1209 = vunpack.c.l.b16 %v1100
      %v1210 = vunpack.c.l.b16 %v1101
      %v1211 = vunpack.c.l.b16 %v1102
      %v1212 = vunpack.c.l.b16 %v1103
      %v1213 = vunpack.c.l.b16 %v1104
      %v1214 = vunpack.c.l.b16 %v1105
      %v1215 = vpack.c.b16 %v1200, %v1199
      %v1216 = vpack.c.b16 %v1202, %v1201
      %v1217 = vpack.c.b16 %v1204, %v1203
      %v1218 = vpack.c.b16 %v1206, %v1205
      %v1219 = vpack.c.b16 %v1208, %v1207
      %v1220 = vpack.c.b16 %v1210, %v1209
      %v1221 = vpack.c.b16 %v1212, %v1211
      %v1222 = vpack.c.b16 %v1214, %v1213
      %1231 = vmatprep.subr.bf16.mxu0 0
      %1232 = vmatpush1.bf16.msra.mxu0 %v1222
      %1233 = vmatprep.subr.bf16.mxu0 0
      %1234 = vmatpush1.bf16.msra.mxu0 %v1221
      %1235 = vmatprep.subr.bf16.mxu0 0
      %1236 = vmatpush1.bf16.msra.mxu0 %v1220
      %1237 = vmatprep.subr.bf16.mxu0 0
      %1238 = vmatpush1.bf16.msra.mxu0 %v1219
      %1239 = vmatprep.subr.bf16.mxu0 0
      %1240 = vmatpush1.bf16.msra.mxu0 %v1218
      %1241 = vmatprep.subr.bf16.mxu0 0
      %1242 = vmatpush1.bf16.msra.mxu0 %v1217
      %1243 = vmatprep.subr.bf16.mxu0 0
      %1244 = vmatpush1.bf16.msra.mxu0 %v1216
      %1245 = vmatprep.subr.bf16.mxu0 0
      %1246 = vmatpush1.bf16.msra.mxu0 %v1215
      %1247 = vmatprep.subr.bf16.mxu0 0
      %1248 = vmatpush2.bf16.msra.mxu0 0
      %1249 = vmatprep.subr.bf16.mxu0 0
      %1250 = vmatpush2.bf16.msra.mxu0 0
      %1251 = vmatprep.subr.bf16.mxu0 0
      %1252 = vmatpush2.bf16.msra.mxu0 0
      %1253 = vmatprep.subr.bf16.mxu0 0
      %1254 = vmatpush2.bf16.msra.mxu0 0
      %1255 = vmatprep.subr.bf16.mxu0 0
      %1256 = vmatpush2.bf16.msra.mxu0 0
      %1257 = vmatprep.subr.bf16.mxu0 0
      %1258 = vmatpush2.bf16.msra.mxu0 0
      %1259 = vmatprep.subr.bf16.mxu0 0
      %1260 = vmatpush2.bf16.msra.mxu0 0
      %1261 = vmatprep.subr.bf16.mxu0 0
      %1262 = vmatpush2.bf16.msra.mxu0 0
      %1263 = vmatprep.mubr.bf16.mxu0 0
      %1264 = vmatmul.mubr.bf16.gmra.mxu0 %v643
      %v1265 = vpop.f32.mrf.mxu0
      %v1266 = vadd.f32 %v1166, %v1265
      %v1267 = vpop.f32.mrf.mxu0
      %v1268 = vpop.f32.mrf.mxu0
      %v1269 = vpop.f32.mrf.mxu0
      %1270 = vdwg.mxu0
      %v1287 = vunpack.c.l.b16 %v1106
      %v1288 = vunpack.c.l.b16 %v1107
      %v1289 = vunpack.c.l.b16 %v1108
      %v1290 = vunpack.c.l.b16 %v1109
      %v1291 = vunpack.c.l.b16 %v1110
      %v1292 = vunpack.c.l.b16 %v1111
      %v1293 = vunpack.c.l.b16 %v1112
      %v1294 = vunpack.c.l.b16 %v1113
      %v1295 = vunpack.c.l.b16 %v1114
      %v1296 = vunpack.c.l.b16 %v1115
      %v1297 = vunpack.c.l.b16 %v1116
      %v1298 = vunpack.c.l.b16 %v1117
      %v1299 = vunpack.c.l.b16 %v1118
      %v1300 = vunpack.c.l.b16 %v1119
      %v1301 = vunpack.c.l.b16 %v1120
      %v1302 = vunpack.c.l.b16 %v1121
      %v1303 = vpack.c.b16 %v1288, %v1287
      %v1304 = vpack.c.b16 %v1290, %v1289
      %v1305 = vpack.c.b16 %v1292, %v1291
      %v1306 = vpack.c.b16 %v1294, %v1293
      %v1307 = vpack.c.b16 %v1296, %v1295
      %v1308 = vpack.c.b16 %v1298, %v1297
      %v1309 = vpack.c.b16 %v1300, %v1299
      %v1310 = vpack.c.b16 %v1302, %v1301
      %1319 = vmatprep.subr.bf16.mxu0 0
      %1320 = vmatpush1.bf16.msra.mxu0 %v1310
      %1321 = vmatprep.subr.bf16.mxu0 0
      %1322 = vmatpush1.bf16.msra.mxu0 %v1309
      %1323 = vmatprep.subr.bf16.mxu0 0
      %1324 = vmatpush1.bf16.msra.mxu0 %v1308
      %1325 = vmatprep.subr.bf16.mxu0 0
      %1326 = vmatpush1.bf16.msra.mxu0 %v1307
      %1327 = vmatprep.subr.bf16.mxu0 0
      %1328 = vmatpush1.bf16.msra.mxu0 %v1306
      %1329 = vmatprep.subr.bf16.mxu0 0
      %1330 = vmatpush1.bf16.msra.mxu0 %v1305
      %1331 = vmatprep.subr.bf16.mxu0 0
      %1332 = vmatpush1.bf16.msra.mxu0 %v1304
      %1333 = vmatprep.subr.bf16.mxu0 0
      %1334 = vmatpush1.bf16.msra.mxu0 %v1303
      %1335 = vmatprep.subr.bf16.mxu0 0
      %1336 = vmatpush2.bf16.msra.mxu0 0
      %1337 = vmatprep.subr.bf16.mxu0 0
      %1338 = vmatpush2.bf16.msra.mxu0 0
      %1339 = vmatprep.subr.bf16.mxu0 0
      %1340 = vmatpush2.bf16.msra.mxu0 0
      %1341 = vmatprep.subr.bf16.mxu0 0
      %1342 = vmatpush2.bf16.msra.mxu0 0
      %1343 = vmatprep.subr.bf16.mxu0 0
      %1344 = vmatpush2.bf16.msra.mxu0 0
      %1345 = vmatprep.subr.bf16.mxu0 0
      %1346 = vmatpush2.bf16.msra.mxu0 0
      %1347 = vmatprep.subr.bf16.mxu0 0
      %1348 = vmatpush2.bf16.msra.mxu0 0
      %1349 = vmatprep.subr.bf16.mxu0 0
      %1350 = vmatpush2.bf16.msra.mxu0 0
      %1351 = vmatprep.mubr.bf16.mxu0 0
      %1352 = vmatmul.mubr.bf16.gmra.mxu0 %v643
      %v1353 = vpop.f32.mrf.mxu0
      %v1354 = vadd.f32 %v1170, %v1353
      %v1355 = vpop.f32.mrf.mxu0
      %v1356 = vpop.f32.mrf.mxu0
      %v1357 = vpop.f32.mrf.mxu0
      %1358 = vdwg.mxu0
      %v1375 = vunpack.c.l.b16 %v1122
      %v1376 = vunpack.c.l.b16 %v1123
      %v1377 = vunpack.c.l.b16 %v1124
      %v1378 = vunpack.c.l.b16 %v1125
      %v1379 = vunpack.c.l.b16 %v1126
      %v1380 = vunpack.c.l.b16 %v1127
      %v1381 = vunpack.c.l.b16 %v1128
      %v1382 = vunpack.c.l.b16 %v1129
      %v1383 = vunpack.c.l.b16 %v1130
      %v1384 = vunpack.c.l.b16 %v1131
      %v1385 = vunpack.c.l.b16 %v1132
      %v1386 = vunpack.c.l.b16 %v1133
      %v1387 = vunpack.c.l.b16 %v1134
      %v1388 = vunpack.c.l.b16 %v1135
      %v1389 = vunpack.c.l.b16 %v1136
      %v1390 = vunpack.c.l.b16 %v1137
      %v1391 = vpack.c.b16 %v1376, %v1375
      %v1392 = vpack.c.b16 %v1378, %v1377
      %v1393 = vpack.c.b16 %v1380, %v1379
      %v1394 = vpack.c.b16 %v1382, %v1381
      %v1395 = vpack.c.b16 %v1384, %v1383
      %v1396 = vpack.c.b16 %v1386, %v1385
      %v1397 = vpack.c.b16 %v1388, %v1387
      %v1398 = vpack.c.b16 %v1390, %v1389
      %1407 = vmatprep.subr.bf16.mxu0 0
      %1408 = vmatpush1.bf16.msra.mxu0 %v1398
      %1409 = vmatprep.subr.bf16.mxu0 0
      %1410 = vmatpush1.bf16.msra.mxu0 %v1397
      %1411 = vmatprep.subr.bf16.mxu0 0
      %1412 = vmatpush1.bf16.msra.mxu0 %v1396
      %1413 = vmatprep.subr.bf16.mxu0 0
      %1414 = vmatpush1.bf16.msra.mxu0 %v1395
      %1415 = vmatprep.subr.bf16.mxu0 0
      %1416 = vmatpush1.bf16.msra.mxu0 %v1394
      %1417 = vmatprep.subr.bf16.mxu0 0
      %1418 = vmatpush1.bf16.msra.mxu0 %v1393
      %1419 = vmatprep.subr.bf16.mxu0 0
      %1420 = vmatpush1.bf16.msra.mxu0 %v1392
      %1421 = vmatprep.subr.bf16.mxu0 0
      %1422 = vmatpush1.bf16.msra.mxu0 %v1391
      %1423 = vmatprep.subr.bf16.mxu0 0
      %1424 = vmatpush2.bf16.msra.mxu0 0
      %1425 = vmatprep.subr.bf16.mxu0 0
      %1426 = vmatpush2.bf16.msra.mxu0 0
      %1427 = vmatprep.subr.bf16.mxu0 0
      %1428 = vmatpush2.bf16.msra.mxu0 0
      %1429 = vmatprep.subr.bf16.mxu0 0
      %1430 = vmatpush2.bf16.msra.mxu0 0
      %1431 = vmatprep.subr.bf16.mxu0 0
      %1432 = vmatpush2.bf16.msra.mxu0 0
      %1433 = vmatprep.subr.bf16.mxu0 0
      %1434 = vmatpush2.bf16.msra.mxu0 0
      %1435 = vmatprep.subr.bf16.mxu0 0
      %1436 = vmatpush2.bf16.msra.mxu0 0
      %1437 = vmatprep.subr.bf16.mxu0 0
      %1438 = vmatpush2.bf16.msra.mxu0 0
      %1439 = vmatprep.mubr.bf16.mxu0 0
      %1440 = vmatmul.mubr.bf16.gmra.mxu0 %v643
      %v1441 = vpop.f32.mrf.mxu0
      %v1442 = vadd.f32 %v1174, %v1441
      %v1443 = vpop.f32.mrf.mxu0
      %v1444 = vpop.f32.mrf.mxu0
      %v1445 = vpop.f32.mrf.mxu0
      %1446 = vdwg.mxu0
      %v1463 = vunpack.c.l.b16 %v1138
      %v1464 = vunpack.c.l.b16 %v1139
      %v1465 = vunpack.c.l.b16 %v1140
      %v1466 = vunpack.c.l.b16 %v1141
      %v1467 = vunpack.c.l.b16 %v1142
      %v1468 = vunpack.c.l.b16 %v1143
      %v1469 = vunpack.c.l.b16 %v1144
      %v1470 = vunpack.c.l.b16 %v1145
      %v1471 = vunpack.c.l.b16 %v1146
      %v1472 = vunpack.c.l.b16 %v1147
      %v1473 = vunpack.c.l.b16 %v1148
      %v1474 = vunpack.c.l.b16 %v1149
      %v1475 = vunpack.c.l.b16 %v1150
      %v1476 = vunpack.c.l.b16 %v1151
      %v1477 = vunpack.c.l.b16 %v1152
      %v1478 = vunpack.c.l.b16 %v1153
      %v1479 = vpack.c.b16 %v1464, %v1463
      %v1480 = vpack.c.b16 %v1466, %v1465
      %v1481 = vpack.c.b16 %v1468, %v1467
      %v1482 = vpack.c.b16 %v1470, %v1469
      %v1483 = vpack.c.b16 %v1472, %v1471
      %v1484 = vpack.c.b16 %v1474, %v1473
      %v1485 = vpack.c.b16 %v1476, %v1475
      %v1486 = vpack.c.b16 %v1478, %v1477
      %1495 = vmatprep.subr.bf16.mxu0 0
      %1496 = vmatpush1.bf16.msra.mxu0 %v1486
      %1497 = vmatprep.subr.bf16.mxu0 0
      %1498 = vmatpush1.bf16.msra.mxu0 %v1485
      %1499 = vmatprep.subr.bf16.mxu0 0
      %1500 = vmatpush1.bf16.msra.mxu0 %v1484
      %1501 = vmatprep.subr.bf16.mxu0 0
      %1502 = vmatpush1.bf16.msra.mxu0 %v1483
      %1503 = vmatprep.subr.bf16.mxu0 0
      %1504 = vmatpush1.bf16.msra.mxu0 %v1482
      %1505 = vmatprep.subr.bf16.mxu0 0
      %1506 = vmatpush1.bf16.msra.mxu0 %v1481
      %1507 = vmatprep.subr.bf16.mxu0 0
      %1508 = vmatpush1.bf16.msra.mxu0 %v1480
      %1509 = vmatprep.subr.bf16.mxu0 0
      %1510 = vmatpush1.bf16.msra.mxu0 %v1479
      %1511 = vmatprep.subr.bf16.mxu0 0
      %1512 = vmatpush2.bf16.msra.mxu0 0
      %1513 = vmatprep.subr.bf16.mxu0 0
      %1514 = vmatpush2.bf16.msra.mxu0 0
      %1515 = vmatprep.subr.bf16.mxu0 0
      %1516 = vmatpush2.bf16.msra.mxu0 0
      %1517 = vmatprep.subr.bf16.mxu0 0
      %1518 = vmatpush2.bf16.msra.mxu0 0
      %1519 = vmatprep.subr.bf16.mxu0 0
      %1520 = vmatpush2.bf16.msra.mxu0 0
      %1521 = vmatprep.subr.bf16.mxu0 0
      %1522 = vmatpush2.bf16.msra.mxu0 0
      %1523 = vmatprep.subr.bf16.mxu0 0
      %1524 = vmatpush2.bf16.msra.mxu0 0
      %1525 = vmatprep.subr.bf16.mxu0 0
      %1526 = vmatpush2.bf16.msra.mxu0 0
      %1527 = vmatprep.mubr.bf16.mxu0 0
      %1528 = vmatmul.mubr.bf16.gmra.mxu0 %v643
      %v1529 = vpop.f32.mrf.mxu0
      %v1530 = vadd.f32 %v1178, %v1529
      %v1531 = vpop.f32.mrf.mxu0
      %v1532 = vpop.f32.mrf.mxu0
      %v1533 = vpop.f32.mrf.mxu0
      %1534 = vdwg.mxu0
      %s1535 = scalar_lea.vmem %s2, 512
      %v1536 = vld [vmem:[%s1535] sm:$0xf]
      %v1537 = vld [vmem:[%s1535 + $0x4] sm:$0xf]
      %v1538 = vld [vmem:[%s1535 + $0x8] sm:$0xf]
      %v1539 = vld [vmem:[%s1535 + $0xc] sm:$0xf]
      %v1540 = vld [vmem:[%s1535 + $0x10] sm:$0xf]
      %v1541 = vld [vmem:[%s1535 + $0x14] sm:$0xf]
      %v1542 = vld [vmem:[%s1535 + $0x18] sm:$0xf]
      %v1543 = vld [vmem:[%s1535 + $0x1c] sm:$0xf]
      %v1544 = vld [vmem:[%s1535 + $0x20] sm:$0xf]
      %v1545 = vld [vmem:[%s1535 + $0x24] sm:$0xf]
      %v1546 = vld [vmem:[%s1535 + $0x28] sm:$0xf]
      %v1547 = vld [vmem:[%s1535 + $0x2c] sm:$0xf]
      %v1548 = vld [vmem:[%s1535 + $0x30] sm:$0xf]
      %v1549 = vld [vmem:[%s1535 + $0x34] sm:$0xf]
      %v1550 = vld [vmem:[%s1535 + $0x38] sm:$0xf]
      %v1551 = vld [vmem:[%s1535 + $0x3c] sm:$0xf]
      %v1552 = vld [vmem:[%s1535 + $0x40] sm:$0xf]
      %v1553 = vld [vmem:[%s1535 + $0x44] sm:$0xf]
      %v1554 = vld [vmem:[%s1535 + $0x48] sm:$0xf]
      %v1555 = vld [vmem:[%s1535 + $0x4c] sm:$0xf]
      %v1556 = vld [vmem:[%s1535 + $0x50] sm:$0xf]
      %v1557 = vld [vmem:[%s1535 + $0x54] sm:$0xf]
      %v1558 = vld [vmem:[%s1535 + $0x58] sm:$0xf]
      %v1559 = vld [vmem:[%s1535 + $0x5c] sm:$0xf]
      %v1560 = vld [vmem:[%s1535 + $0x60] sm:$0xf]
      %v1561 = vld [vmem:[%s1535 + $0x64] sm:$0xf]
      %v1562 = vld [vmem:[%s1535 + $0x68] sm:$0xf]
      %v1563 = vld [vmem:[%s1535 + $0x6c] sm:$0xf]
      %v1564 = vld [vmem:[%s1535 + $0x70] sm:$0xf]
      %v1565 = vld [vmem:[%s1535 + $0x74] sm:$0xf]
      %v1566 = vld [vmem:[%s1535 + $0x78] sm:$0xf]
      %v1567 = vld [vmem:[%s1535 + $0x7c] sm:$0xf]
      %v1568 = vld [vmem:[%s1535 + $0x80] sm:$0xf]
      %v1569 = vld [vmem:[%s1535 + $0x84] sm:$0xf]
      %v1570 = vld [vmem:[%s1535 + $0x88] sm:$0xf]
      %v1571 = vld [vmem:[%s1535 + $0x8c] sm:$0xf]
      %v1572 = vld [vmem:[%s1535 + $0x90] sm:$0xf]
      %v1573 = vld [vmem:[%s1535 + $0x94] sm:$0xf]
      %v1574 = vld [vmem:[%s1535 + $0x98] sm:$0xf]
      %v1575 = vld [vmem:[%s1535 + $0x9c] sm:$0xf]
      %v1576 = vld [vmem:[%s1535 + $0xa0] sm:$0xf]
      %v1577 = vld [vmem:[%s1535 + $0xa4] sm:$0xf]
      %v1578 = vld [vmem:[%s1535 + $0xa8] sm:$0xf]
      %v1579 = vld [vmem:[%s1535 + $0xac] sm:$0xf]
      %v1580 = vld [vmem:[%s1535 + $0xb0] sm:$0xf]
      %v1581 = vld [vmem:[%s1535 + $0xb4] sm:$0xf]
      %v1582 = vld [vmem:[%s1535 + $0xb8] sm:$0xf]
      %v1583 = vld [vmem:[%s1535 + $0xbc] sm:$0xf]
      %v1584 = vld [vmem:[%s1535 + $0xc0] sm:$0xf]
      %v1585 = vld [vmem:[%s1535 + $0xc4] sm:$0xf]
      %v1586 = vld [vmem:[%s1535 + $0xc8] sm:$0xf]
      %v1587 = vld [vmem:[%s1535 + $0xcc] sm:$0xf]
      %v1588 = vld [vmem:[%s1535 + $0xd0] sm:$0xf]
      %v1589 = vld [vmem:[%s1535 + $0xd4] sm:$0xf]
      %v1590 = vld [vmem:[%s1535 + $0xd8] sm:$0xf]
      %v1591 = vld [vmem:[%s1535 + $0xdc] sm:$0xf]
      %v1592 = vld [vmem:[%s1535 + $0xe0] sm:$0xf]
      %v1593 = vld [vmem:[%s1535 + $0xe4] sm:$0xf]
      %v1594 = vld [vmem:[%s1535 + $0xe8] sm:$0xf]
      %v1595 = vld [vmem:[%s1535 + $0xec] sm:$0xf]
      %v1596 = vld [vmem:[%s1535 + $0xf0] sm:$0xf]
      %v1597 = vld [vmem:[%s1535 + $0xf4] sm:$0xf]
      %v1598 = vld [vmem:[%s1535 + $0xf8] sm:$0xf]
      %v1599 = vld [vmem:[%s1535 + $0xfc] sm:$0xf]
      %s1600 = scalar_lea.vmem %s3, 8
      %v1601 = vld [vmem:[%s1600] sm:$0x1]
      %v1602 = vld [vmem:[%s1600 + $0x1] sm:$0x1]
      %v1603 = vld [vmem:[%s1600 + $0x2] sm:$0x1]
      %v1604 = vld [vmem:[%s1600 + $0x3] sm:$0x1]
      %v1609 = vlaneseq
      %v1610 = vshrl.u32 %v1609, 7
      %v1611 = vsub.s32 0, %v1610
      %v1612 = vrot.slane %v1601, %v1611
      %v1613 = vlaneseq
      %v1614 = vshrl.u32 %v1613, 7
      %v1615 = vsub.s32 0, %v1614
      %v1616 = vrot.slane %v1602, %v1615
      %v1617 = vlaneseq
      %v1618 = vshrl.u32 %v1617, 7
      %v1619 = vsub.s32 0, %v1618
      %v1620 = vrot.slane %v1603, %v1619
      %v1621 = vlaneseq
      %v1622 = vshrl.u32 %v1621, 7
      %v1623 = vsub.s32 0, %v1622
      %v1624 = vrot.slane %v1604, %v1623
      %v1645 = vunpack.c.l.b16 %v1536
      %v1646 = vunpack.c.l.b16 %v1537
      %v1647 = vunpack.c.l.b16 %v1538
      %v1648 = vunpack.c.l.b16 %v1539
      %v1649 = vunpack.c.l.b16 %v1540
      %v1650 = vunpack.c.l.b16 %v1541
      %v1651 = vunpack.c.l.b16 %v1542
      %v1652 = vunpack.c.l.b16 %v1543
      %v1653 = vunpack.c.l.b16 %v1544
      %v1654 = vunpack.c.l.b16 %v1545
      %v1655 = vunpack.c.l.b16 %v1546
      %v1656 = vunpack.c.l.b16 %v1547
      %v1657 = vunpack.c.l.b16 %v1548
      %v1658 = vunpack.c.l.b16 %v1549
      %v1659 = vunpack.c.l.b16 %v1550
      %v1660 = vunpack.c.l.b16 %v1551
      %v1661 = vpack.c.b16 %v1646, %v1645
      %v1662 = vpack.c.b16 %v1648, %v1647
      %v1663 = vpack.c.b16 %v1650, %v1649
      %v1664 = vpack.c.b16 %v1652, %v1651
      %v1665 = vpack.c.b16 %v1654, %v1653
      %v1666 = vpack.c.b16 %v1656, %v1655
      %v1667 = vpack.c.b16 %v1658, %v1657
      %v1668 = vpack.c.b16 %v1660, %v1659
      %1677 = vmatprep.subr.bf16.mxu0 0
      %1678 = vmatpush1.bf16.msra.mxu0 %v1668
      %1679 = vmatprep.subr.bf16.mxu0 0
      %1680 = vmatpush1.bf16.msra.mxu0 %v1667
      %1681 = vmatprep.subr.bf16.mxu0 0
      %1682 = vmatpush1.bf16.msra.mxu0 %v1666
      %1683 = vmatprep.subr.bf16.mxu0 0
      %1684 = vmatpush1.bf16.msra.mxu0 %v1665
      %1685 = vmatprep.subr.bf16.mxu0 0
      %1686 = vmatpush1.bf16.msra.mxu0 %v1664
      %1687 = vmatprep.subr.bf16.mxu0 0
      %1688 = vmatpush1.bf16.msra.mxu0 %v1663
      %1689 = vmatprep.subr.bf16.mxu0 0
      %1690 = vmatpush1.bf16.msra.mxu0 %v1662
      %1691 = vmatprep.subr.bf16.mxu0 0
      %1692 = vmatpush1.bf16.msra.mxu0 %v1661
      %1693 = vmatprep.subr.bf16.mxu0 0
      %1694 = vmatpush2.bf16.msra.mxu0 0
      %1695 = vmatprep.subr.bf16.mxu0 0
      %1696 = vmatpush2.bf16.msra.mxu0 0
      %1697 = vmatprep.subr.bf16.mxu0 0
      %1698 = vmatpush2.bf16.msra.mxu0 0
      %1699 = vmatprep.subr.bf16.mxu0 0
      %1700 = vmatpush2.bf16.msra.mxu0 0
      %1701 = vmatprep.subr.bf16.mxu0 0
      %1702 = vmatpush2.bf16.msra.mxu0 0
      %1703 = vmatprep.subr.bf16.mxu0 0
      %1704 = vmatpush2.bf16.msra.mxu0 0
      %1705 = vmatprep.subr.bf16.mxu0 0
      %1706 = vmatpush2.bf16.msra.mxu0 0
      %1707 = vmatprep.subr.bf16.mxu0 0
      %1708 = vmatpush2.bf16.msra.mxu0 0
      %1709 = vmatprep.mubr.bf16.mxu0 0
      %1710 = vmatmul.mubr.bf16.gmra.mxu0 %v643
      %v1711 = vpop.f32.mrf.mxu0
      %v1712 = vadd.f32 %v1612, %v1711
      %v1713 = vpop.f32.mrf.mxu0
      %v1714 = vpop.f32.mrf.mxu0
      %v1715 = vpop.f32.mrf.mxu0
      %1716 = vdwg.mxu0
      %v1733 = vunpack.c.l.b16 %v1552
      %v1734 = vunpack.c.l.b16 %v1553
      %v1735 = vunpack.c.l.b16 %v1554
      %v1736 = vunpack.c.l.b16 %v1555
      %v1737 = vunpack.c.l.b16 %v1556
      %v1738 = vunpack.c.l.b16 %v1557
      %v1739 = vunpack.c.l.b16 %v1558
      %v1740 = vunpack.c.l.b16 %v1559
      %v1741 = vunpack.c.l.b16 %v1560
      %v1742 = vunpack.c.l.b16 %v1561
      %v1743 = vunpack.c.l.b16 %v1562
      %v1744 = vunpack.c.l.b16 %v1563
      %v1745 = vunpack.c.l.b16 %v1564
      %v1746 = vunpack.c.l.b16 %v1565
      %v1747 = vunpack.c.l.b16 %v1566
      %v1748 = vunpack.c.l.b16 %v1567
      %v1749 = vpack.c.b16 %v1734, %v1733
      %v1750 = vpack.c.b16 %v1736, %v1735
      %v1751 = vpack.c.b16 %v1738, %v1737
      %v1752 = vpack.c.b16 %v1740, %v1739
      %v1753 = vpack.c.b16 %v1742, %v1741
      %v1754 = vpack.c.b16 %v1744, %v1743
      %v1755 = vpack.c.b16 %v1746, %v1745
      %v1756 = vpack.c.b16 %v1748, %v1747
      %1765 = vmatprep.subr.bf16.mxu0 0
      %1766 = vmatpush1.bf16.msra.mxu0 %v1756
      %1767 = vmatprep.subr.bf16.mxu0 0
      %1768 = vmatpush1.bf16.msra.mxu0 %v1755
      %1769 = vmatprep.subr.bf16.mxu0 0
      %1770 = vmatpush1.bf16.msra.mxu0 %v1754
      %1771 = vmatprep.subr.bf16.mxu0 0
      %1772 = vmatpush1.bf16.msra.mxu0 %v1753
      %1773 = vmatprep.subr.bf16.mxu0 0
      %1774 = vmatpush1.bf16.msra.mxu0 %v1752
      %1775 = vmatprep.subr.bf16.mxu0 0
      %1776 = vmatpush1.bf16.msra.mxu0 %v1751
      %1777 = vmatprep.subr.bf16.mxu0 0
      %1778 = vmatpush1.bf16.msra.mxu0 %v1750
      %1779 = vmatprep.subr.bf16.mxu0 0
      %1780 = vmatpush1.bf16.msra.mxu0 %v1749
      %1781 = vmatprep.subr.bf16.mxu0 0
      %1782 = vmatpush2.bf16.msra.mxu0 0
      %1783 = vmatprep.subr.bf16.mxu0 0
      %1784 = vmatpush2.bf16.msra.mxu0 0
      %1785 = vmatprep.subr.bf16.mxu0 0
      %1786 = vmatpush2.bf16.msra.mxu0 0
      %1787 = vmatprep.subr.bf16.mxu0 0
      %1788 = vmatpush2.bf16.msra.mxu0 0
      %1789 = vmatprep.subr.bf16.mxu0 0
      %1790 = vmatpush2.bf16.msra.mxu0 0
      %1791 = vmatprep.subr.bf16.mxu0 0
      %1792 = vmatpush2.bf16.msra.mxu0 0
      %1793 = vmatprep.subr.bf16.mxu0 0
      %1794 = vmatpush2.bf16.msra.mxu0 0
      %1795 = vmatprep.subr.bf16.mxu0 0
      %1796 = vmatpush2.bf16.msra.mxu0 0
      %1797 = vmatprep.mubr.bf16.mxu0 0
      %1798 = vmatmul.mubr.bf16.gmra.mxu0 %v643
      %v1799 = vpop.f32.mrf.mxu0
      %v1800 = vadd.f32 %v1616, %v1799
      %v1801 = vpop.f32.mrf.mxu0
      %v1802 = vpop.f32.mrf.mxu0
      %v1803 = vpop.f32.mrf.mxu0
      %1804 = vdwg.mxu0
      %v1821 = vunpack.c.l.b16 %v1568
      %v1822 = vunpack.c.l.b16 %v1569
      %v1823 = vunpack.c.l.b16 %v1570
      %v1824 = vunpack.c.l.b16 %v1571
      %v1825 = vunpack.c.l.b16 %v1572
      %v1826 = vunpack.c.l.b16 %v1573
      %v1827 = vunpack.c.l.b16 %v1574
      %v1828 = vunpack.c.l.b16 %v1575
      %v1829 = vunpack.c.l.b16 %v1576
      %v1830 = vunpack.c.l.b16 %v1577
      %v1831 = vunpack.c.l.b16 %v1578
      %v1832 = vunpack.c.l.b16 %v1579
      %v1833 = vunpack.c.l.b16 %v1580
      %v1834 = vunpack.c.l.b16 %v1581
      %v1835 = vunpack.c.l.b16 %v1582
      %v1836 = vunpack.c.l.b16 %v1583
      %v1837 = vpack.c.b16 %v1822, %v1821
      %v1838 = vpack.c.b16 %v1824, %v1823
      %v1839 = vpack.c.b16 %v1826, %v1825
      %v1840 = vpack.c.b16 %v1828, %v1827
      %v1841 = vpack.c.b16 %v1830, %v1829
      %v1842 = vpack.c.b16 %v1832, %v1831
      %v1843 = vpack.c.b16 %v1834, %v1833
      %v1844 = vpack.c.b16 %v1836, %v1835
      %1853 = vmatprep.subr.bf16.mxu0 0
      %1854 = vmatpush1.bf16.msra.mxu0 %v1844
      %1855 = vmatprep.subr.bf16.mxu0 0
      %1856 = vmatpush1.bf16.msra.mxu0 %v1843
      %1857 = vmatprep.subr.bf16.mxu0 0
      %1858 = vmatpush1.bf16.msra.mxu0 %v1842
      %1859 = vmatprep.subr.bf16.mxu0 0
      %1860 = vmatpush1.bf16.msra.mxu0 %v1841
      %1861 = vmatprep.subr.bf16.mxu0 0
      %1862 = vmatpush1.bf16.msra.mxu0 %v1840
      %1863 = vmatprep.subr.bf16.mxu0 0
      %1864 = vmatpush1.bf16.msra.mxu0 %v1839
      %1865 = vmatprep.subr.bf16.mxu0 0
      %1866 = vmatpush1.bf16.msra.mxu0 %v1838
      %1867 = vmatprep.subr.bf16.mxu0 0
      %1868 = vmatpush1.bf16.msra.mxu0 %v1837
      %1869 = vmatprep.subr.bf16.mxu0 0
      %1870 = vmatpush2.bf16.msra.mxu0 0
      %1871 = vmatprep.subr.bf16.mxu0 0
      %1872 = vmatpush2.bf16.msra.mxu0 0
      %1873 = vmatprep.subr.bf16.mxu0 0
      %1874 = vmatpush2.bf16.msra.mxu0 0
      %1875 = vmatprep.subr.bf16.mxu0 0
      %1876 = vmatpush2.bf16.msra.mxu0 0
      %1877 = vmatprep.subr.bf16.mxu0 0
      %1878 = vmatpush2.bf16.msra.mxu0 0
      %1879 = vmatprep.subr.bf16.mxu0 0
      %1880 = vmatpush2.bf16.msra.mxu0 0
      %1881 = vmatprep.subr.bf16.mxu0 0
      %1882 = vmatpush2.bf16.msra.mxu0 0
      %1883 = vmatprep.subr.bf16.mxu0 0
      %1884 = vmatpush2.bf16.msra.mxu0 0
      %1885 = vmatprep.mubr.bf16.mxu0 0
      %1886 = vmatmul.mubr.bf16.gmra.mxu0 %v643
      %v1887 = vpop.f32.mrf.mxu0
      %v1888 = vadd.f32 %v1620, %v1887
      %v1889 = vpop.f32.mrf.mxu0
      %v1890 = vpop.f32.mrf.mxu0
      %v1891 = vpop.f32.mrf.mxu0
      %1892 = vdwg.mxu0
      %v1909 = vunpack.c.l.b16 %v1584
      %v1910 = vunpack.c.l.b16 %v1585
      %v1911 = vunpack.c.l.b16 %v1586
      %v1912 = vunpack.c.l.b16 %v1587
      %v1913 = vunpack.c.l.b16 %v1588
      %v1914 = vunpack.c.l.b16 %v1589
      %v1915 = vunpack.c.l.b16 %v1590
      %v1916 = vunpack.c.l.b16 %v1591
      %v1917 = vunpack.c.l.b16 %v1592
      %v1918 = vunpack.c.l.b16 %v1593
      %v1919 = vunpack.c.l.b16 %v1594
      %v1920 = vunpack.c.l.b16 %v1595
      %v1921 = vunpack.c.l.b16 %v1596
      %v1922 = vunpack.c.l.b16 %v1597
      %v1923 = vunpack.c.l.b16 %v1598
      %v1924 = vunpack.c.l.b16 %v1599
      %v1925 = vpack.c.b16 %v1910, %v1909
      %v1926 = vpack.c.b16 %v1912, %v1911
      %v1927 = vpack.c.b16 %v1914, %v1913
      %v1928 = vpack.c.b16 %v1916, %v1915
      %v1929 = vpack.c.b16 %v1918, %v1917
      %v1930 = vpack.c.b16 %v1920, %v1919
      %v1931 = vpack.c.b16 %v1922, %v1921
      %v1932 = vpack.c.b16 %v1924, %v1923
      %1941 = vmatprep.subr.bf16.mxu0 0
      %1942 = vmatpush1.bf16.msra.mxu0 %v1932
      %1943 = vmatprep.subr.bf16.mxu0 0
      %1944 = vmatpush1.bf16.msra.mxu0 %v1931
      %1945 = vmatprep.subr.bf16.mxu0 0
      %1946 = vmatpush1.bf16.msra.mxu0 %v1930
      %1947 = vmatprep.subr.bf16.mxu0 0
      %1948 = vmatpush1.bf16.msra.mxu0 %v1929
      %1949 = vmatprep.subr.bf16.mxu0 0
      %1950 = vmatpush1.bf16.msra.mxu0 %v1928
      %1951 = vmatprep.subr.bf16.mxu0 0
      %1952 = vmatpush1.bf16.msra.mxu0 %v1927
      %1953 = vmatprep.subr.bf16.mxu0 0
      %1954 = vmatpush1.bf16.msra.mxu0 %v1926
      %1955 = vmatprep.subr.bf16.mxu0 0
      %1956 = vmatpush1.bf16.msra.mxu0 %v1925
      %1957 = vmatprep.subr.bf16.mxu0 0
      %1958 = vmatpush2.bf16.msra.mxu0 0
      %1959 = vmatprep.subr.bf16.mxu0 0
      %1960 = vmatpush2.bf16.msra.mxu0 0
      %1961 = vmatprep.subr.bf16.mxu0 0
      %1962 = vmatpush2.bf16.msra.mxu0 0
      %1963 = vmatprep.subr.bf16.mxu0 0
      %1964 = vmatpush2.bf16.msra.mxu0 0
      %1965 = vmatprep.subr.bf16.mxu0 0
      %1966 = vmatpush2.bf16.msra.mxu0 0
      %1967 = vmatprep.subr.bf16.mxu0 0
      %1968 = vmatpush2.bf16.msra.mxu0 0
      %1969 = vmatprep.subr.bf16.mxu0 0
      %1970 = vmatpush2.bf16.msra.mxu0 0
      %1971 = vmatprep.subr.bf16.mxu0 0
      %1972 = vmatpush2.bf16.msra.mxu0 0
      %1973 = vmatprep.mubr.bf16.mxu0 0
      %1974 = vmatmul.mubr.bf16.gmra.mxu0 %v643
      %v1975 = vpop.f32.mrf.mxu0
      %v1976 = vadd.f32 %v1624, %v1975
      %v1977 = vpop.f32.mrf.mxu0
      %v1978 = vpop.f32.mrf.mxu0
      %v1979 = vpop.f32.mrf.mxu0
      %1980 = vdwg.mxu0
      %v1981 = vmul.f32 %v820, 0.17677669
      %v1982 = vmul.f32 %v908, 0.17677669
      %v1983 = vmul.f32 %v996, 0.17677669
      %v1984 = vmul.f32 %v1084, 0.17677669
      %v1985 = vpack.c.bf16 %v1981, %v1981
      %v1986 = vpack.c.bf16 %v1982, %v1982
      %v1987 = vpack.c.bf16 %v1983, %v1983
      %v1988 = vpack.c.bf16 %v1984, %v1984
      %v1989 = vpack.c.bf16 %v1266, %v1266
      %v1990 = vpack.c.bf16 %v1354, %v1354
      %v1991 = vpack.c.bf16 %v1442, %v1442
      %v1992 = vpack.c.bf16 %v1530, %v1530
      %vm1993 = vcmask 261120
      %v1995 = vsel %vm1993, %v1985, 0
      %v1998 = vsel %vm1993, %v1989, 0
      %2000 = vmatprep.subr.bf16.mxu0 0
      %2001 = vmatpush1.bf16.xpose.msra.mxu0 0
      %2002 = vmatprep.subr.bf16.mxu0 0
      %2003 = vmatpush1.bf16.xpose.msra.mxu0 0
      %2004 = vmatprep.subr.bf16.mxu0 0
      %2005 = vmatpush1.bf16.xpose.msra.mxu0 0
      %2006 = vmatprep.subr.bf16.mxu0 0
      %2007 = vmatpush1.bf16.xpose.msra.mxu0 0
      %2008 = vmatprep.subr.bf16.mxu0 0
      %2009 = vmatpush1.bf16.xpose.msra.mxu0 0
      %2010 = vmatprep.subr.bf16.mxu0 0
      %2011 = vmatpush1.bf16.xpose.msra.mxu0 0
      %2012 = vmatprep.subr.bf16.mxu0 0
      %2013 = vmatpush1.bf16.xpose.msra.mxu0 0
      %2014 = vmatprep.subr.bf16.mxu0 0
      %2015 = vmatpush1.bf16.xpose.msra.mxu0 %v1998
      %2016 = vmatprep.subr.bf16.mxu0 0
      %2017 = vmatpush2.bf16.xpose.msra.mxu0 0
      %2018 = vmatprep.subr.bf16.mxu0 0
      %2019 = vmatpush2.bf16.xpose.msra.mxu0 0
      %2020 = vmatprep.subr.bf16.mxu0 0
      %2021 = vmatpush2.bf16.xpose.msra.mxu0 0
      %2022 = vmatprep.subr.bf16.mxu0 0
      %2023 = vmatpush2.bf16.xpose.msra.mxu0 0
      %2024 = vmatprep.subr.bf16.mxu0 0
      %2025 = vmatpush2.bf16.xpose.msra.mxu0 0
      %2026 = vmatprep.subr.bf16.mxu0 0
      %2027 = vmatpush2.bf16.xpose.msra.mxu0 0
      %2028 = vmatprep.subr.bf16.mxu0 0
      %2029 = vmatpush2.bf16.xpose.msra.mxu0 0
      %2030 = vmatprep.subr.bf16.mxu0 0
      %2031 = vmatpush2.bf16.xpose.msra.mxu0 0
      %2032 = vmatprep.mubr.bf16.mxu0 0
      %2033 = vmatmul.mubr.bf16.gmra.mxu0 %v1995
      %v2034 = vpop.f32.mrf.mxu0
      %v2035 = vadd.f32 0.0, %v2034
      %v2036 = vpop.f32.mrf.mxu0
      %v2037 = vpop.f32.mrf.mxu0
      %v2038 = vpop.f32.mrf.mxu0
      %2039 = vdwg.mxu0
      %v2041 = vsel %vm1993, %v1986, 0
      %v2044 = vsel %vm1993, %v1990, 0
      %2046 = vmatprep.subr.bf16.mxu0 0
      %2047 = vmatpush1.bf16.xpose.msra.mxu0 0
      %2048 = vmatprep.subr.bf16.mxu0 0
      %2049 = vmatpush1.bf16.xpose.msra.mxu0 0
      %2050 = vmatprep.subr.bf16.mxu0 0
      %2051 = vmatpush1.bf16.xpose.msra.mxu0 0
      %2052 = vmatprep.subr.bf16.mxu0 0
      %2053 = vmatpush1.bf16.xpose.msra.mxu0 0
      %2054 = vmatprep.subr.bf16.mxu0 0
      %2055 = vmatpush1.bf16.xpose.msra.mxu0 0
      %2056 = vmatprep.subr.bf16.mxu0 0
      %2057 = vmatpush1.bf16.xpose.msra.mxu0 0
      %2058 = vmatprep.subr.bf16.mxu0 0
      %2059 = vmatpush1.bf16.xpose.msra.mxu0 0
      %2060 = vmatprep.subr.bf16.mxu0 0
      %2061 = vmatpush1.bf16.xpose.msra.mxu0 %v2044
      %2062 = vmatprep.subr.bf16.mxu0 0
      %2063 = vmatpush2.bf16.xpose.msra.mxu0 0
      %2064 = vmatprep.subr.bf16.mxu0 0
      %2065 = vmatpush2.bf16.xpose.msra.mxu0 0
      %2066 = vmatprep.subr.bf16.mxu0 0
      %2067 = vmatpush2.bf16.xpose.msra.mxu0 0
      %2068 = vmatprep.subr.bf16.mxu0 0
      %2069 = vmatpush2.bf16.xpose.msra.mxu0 0
      %2070 = vmatprep.subr.bf16.mxu0 0
      %2071 = vmatpush2.bf16.xpose.msra.mxu0 0
      %2072 = vmatprep.subr.bf16.mxu0 0
      %2073 = vmatpush2.bf16.xpose.msra.mxu0 0
      %2074 = vmatprep.subr.bf16.mxu0 0
      %2075 = vmatpush2.bf16.xpose.msra.mxu0 0
      %2076 = vmatprep.subr.bf16.mxu0 0
      %2077 = vmatpush2.bf16.xpose.msra.mxu0 0
      %2078 = vmatprep.mubr.bf16.mxu0 0
      %2079 = vmatmul.mubr.bf16.gmra.mxu0 %v2041
      %v2080 = vpop.f32.mrf.mxu0
      %v2081 = vadd.f32 0.0, %v2080
      %v2082 = vpop.f32.mrf.mxu0
      %v2083 = vpop.f32.mrf.mxu0
      %v2084 = vpop.f32.mrf.mxu0
      %2085 = vdwg.mxu0
      %v2087 = vsel %vm1993, %v1987, 0
      %v2090 = vsel %vm1993, %v1991, 0
      %2092 = vmatprep.subr.bf16.mxu0 0
      %2093 = vmatpush1.bf16.xpose.msra.mxu0 0
      %2094 = vmatprep.subr.bf16.mxu0 0
      %2095 = vmatpush1.bf16.xpose.msra.mxu0 0
      %2096 = vmatprep.subr.bf16.mxu0 0
      %2097 = vmatpush1.bf16.xpose.msra.mxu0 0
      %2098 = vmatprep.subr.bf16.mxu0 0
      %2099 = vmatpush1.bf16.xpose.msra.mxu0 0
      %2100 = vmatprep.subr.bf16.mxu0 0
      %2101 = vmatpush1.bf16.xpose.msra.mxu0 0
      %2102 = vmatprep.subr.bf16.mxu0 0
      %2103 = vmatpush1.bf16.xpose.msra.mxu0 0
      %2104 = vmatprep.subr.bf16.mxu0 0
      %2105 = vmatpush1.bf16.xpose.msra.mxu0 0
      %2106 = vmatprep.subr.bf16.mxu0 0
      %2107 = vmatpush1.bf16.xpose.msra.mxu0 %v2090
      %2108 = vmatprep.subr.bf16.mxu0 0
      %2109 = vmatpush2.bf16.xpose.msra.mxu0 0
      %2110 = vmatprep.subr.bf16.mxu0 0
      %2111 = vmatpush2.bf16.xpose.msra.mxu0 0
      %2112 = vmatprep.subr.bf16.mxu0 0
      %2113 = vmatpush2.bf16.xpose.msra.mxu0 0
      %2114 = vmatprep.subr.bf16.mxu0 0
      %2115 = vmatpush2.bf16.xpose.msra.mxu0 0
      %2116 = vmatprep.subr.bf16.mxu0 0
      %2117 = vmatpush2.bf16.xpose.msra.mxu0 0
      %2118 = vmatprep.subr.bf16.mxu0 0
      %2119 = vmatpush2.bf16.xpose.msra.mxu0 0
      %2120 = vmatprep.subr.bf16.mxu0 0
      %2121 = vmatpush2.bf16.xpose.msra.mxu0 0
      %2122 = vmatprep.subr.bf16.mxu0 0
      %2123 = vmatpush2.bf16.xpose.msra.mxu0 0
      %2124 = vmatprep.mubr.bf16.mxu0 0
      %2125 = vmatmul.mubr.bf16.gmra.mxu0 %v2087
      %v2126 = vpop.f32.mrf.mxu0
      %v2127 = vadd.f32 0.0, %v2126
      %v2128 = vpop.f32.mrf.mxu0
      %v2129 = vpop.f32.mrf.mxu0
      %v2130 = vpop.f32.mrf.mxu0
      %2131 = vdwg.mxu0
      %v2133 = vsel %vm1993, %v1988, 0
      %v2136 = vsel %vm1993, %v1992, 0
      %2138 = vmatprep.subr.bf16.mxu0 0
      %2139 = vmatpush1.bf16.xpose.msra.mxu0 0
      %2140 = vmatprep.subr.bf16.mxu0 0
      %2141 = vmatpush1.bf16.xpose.msra.mxu0 0
      %2142 = vmatprep.subr.bf16.mxu0 0
      %2143 = vmatpush1.bf16.xpose.msra.mxu0 0
      %2144 = vmatprep.subr.bf16.mxu0 0
      %2145 = vmatpush1.bf16.xpose.msra.mxu0 0
      %2146 = vmatprep.subr.bf16.mxu0 0
      %2147 = vmatpush1.bf16.xpose.msra.mxu0 0
      %2148 = vmatprep.subr.bf16.mxu0 0
      %2149 = vmatpush1.bf16.xpose.msra.mxu0 0
      %2150 = vmatprep.subr.bf16.mxu0 0
      %2151 = vmatpush1.bf16.xpose.msra.mxu0 0
      %2152 = vmatprep.subr.bf16.mxu0 0
      %2153 = vmatpush1.bf16.xpose.msra.mxu0 %v2136
      %2154 = vmatprep.subr.bf16.mxu0 0
      %2155 = vmatpush2.bf16.xpose.msra.mxu0 0
      %2156 = vmatprep.subr.bf16.mxu0 0
      %2157 = vmatpush2.bf16.xpose.msra.mxu0 0
      %2158 = vmatprep.subr.bf16.mxu0 0
      %2159 = vmatpush2.bf16.xpose.msra.mxu0 0
      %2160 = vmatprep.subr.bf16.mxu0 0
      %2161 = vmatpush2.bf16.xpose.msra.mxu0 0
      %2162 = vmatprep.subr.bf16.mxu0 0
      %2163 = vmatpush2.bf16.xpose.msra.mxu0 0
      %2164 = vmatprep.subr.bf16.mxu0 0
      %2165 = vmatpush2.bf16.xpose.msra.mxu0 0
      %2166 = vmatprep.subr.bf16.mxu0 0
      %2167 = vmatpush2.bf16.xpose.msra.mxu0 0
      %2168 = vmatprep.subr.bf16.mxu0 0
      %2169 = vmatpush2.bf16.xpose.msra.mxu0 0
      %2170 = vmatprep.mubr.bf16.mxu0 0
      %2171 = vmatmul.mubr.bf16.gmra.mxu0 %v2133
      %v2172 = vpop.f32.mrf.mxu0
      %v2173 = vadd.f32 0.0, %v2172
      %v2174 = vpop.f32.mrf.mxu0
      %v2175 = vpop.f32.mrf.mxu0
      %v2176 = vpop.f32.mrf.mxu0
      %2177 = vdwg.mxu0
      %vm2178 = vcmask 64512
      %v2179 = vsel %vm2178, %v2035, -inf
      %2180 = vmax.xlane.f32.xlu0 %v2179
      %v2181 = vpop.xlane.xlu0 %2180
      %v2182 = vsel %vm2178, %v2081, -inf
      %2183 = vmax.xlane.f32.xlu0 %v2182
      %v2184 = vpop.xlane.xlu0 %2183
      %v2185 = vsel %vm2178, %v2127, -inf
      %2186 = vmax.xlane.f32.xlu0 %v2185
      %v2187 = vpop.xlane.xlu0 %2186
      %v2188 = vsel %vm2178, %v2173, -inf
      %2189 = vmax.xlane.f32.xlu0 %v2188
      %v2190 = vpop.xlane.xlu0 %2189
      %v2191 = vsub.f32 %v2035, %v2181
      %v2192 = vsub.f32 %v2081, %v2184
      %v2193 = vsub.f32 %v2127, %v2187
      %v2194 = vsub.f32 %v2173, %v2190
      %v2195 = vmul.f32 %v2191, 1.442695
      %v2196 = vpow.pop %v2195
      %v2197 = vmul.f32 %v2192, 1.442695
      %v2198 = vpow.pop %v2197
      %v2199 = vmul.f32 %v2193, 1.442695
      %v2200 = vpow.pop %v2199
      %v2201 = vmul.f32 %v2194, 1.442695
      %v2202 = vpow.pop %v2201
      %v2203 = vsel %vm2178, %v2196, 0.0
      %2204 = vadd.xlane.f32.xlu0 %v2203
      %v2205 = vpop.xlane.xlu0 %2204
      %v2206 = vsel %vm2178, %v2198, 0.0
      %2207 = vadd.xlane.f32.xlu0 %v2206
      %v2208 = vpop.xlane.xlu0 %2207
      %v2209 = vsel %vm2178, %v2200, 0.0
      %2210 = vadd.xlane.f32.xlu0 %v2209
      %v2211 = vpop.xlane.xlu0 %2210
      %v2212 = vsel %vm2178, %v2202, 0.0
      %2213 = vadd.xlane.f32.xlu0 %v2212
      %v2214 = vpop.xlane.xlu0 %2213
      %v2215 = vrcp.pop %v2205
      %v2216 = vmul.f32 %v2196, %v2215
      %v2217 = vrcp.pop %v2208
      %v2218 = vmul.f32 %v2198, %v2217
      %v2219 = vrcp.pop %v2211
      %v2220 = vmul.f32 %v2200, %v2219
      %v2221 = vrcp.pop %v2214
      %v2222 = vmul.f32 %v2202, %v2221
      %v2223 = vpack.c.bf16 %v2216, %v2216
      %v2224 = vpack.c.bf16 %v2218, %v2218
      %v2225 = vpack.c.bf16 %v2220, %v2220
      %v2226 = vpack.c.bf16 %v2222, %v2222
      %v2227 = vpack.c.bf16 %v1712, %v1712
      %v2228 = vpack.c.bf16 %v1800, %v1800
      %v2229 = vpack.c.bf16 %v1888, %v1888
      %v2230 = vpack.c.bf16 %v1976, %v1976
      %v2232 = vsel %vm2178, %v2223, 0
      %vm2234 = vcmask 1043456
      %v2236 = vsel %vm2234, %v2227, 0
      %2238 = vmatprep.subr.bf16.mxu0 0
      %2239 = vmatpush1.bf16.msra.mxu0 0
      %2240 = vmatprep.subr.bf16.mxu0 0
      %2241 = vmatpush1.bf16.msra.mxu0 0
      %2242 = vmatprep.subr.bf16.mxu0 0
      %2243 = vmatpush1.bf16.msra.mxu0 0
      %2244 = vmatprep.subr.bf16.mxu0 0
      %2245 = vmatpush1.bf16.msra.mxu0 0
      %2246 = vmatprep.subr.bf16.mxu0 0
      %2247 = vmatpush1.bf16.msra.mxu0 0
      %2248 = vmatprep.subr.bf16.mxu0 0
      %2249 = vmatpush1.bf16.msra.mxu0 0
      %2250 = vmatprep.subr.bf16.mxu0 0
      %2251 = vmatpush1.bf16.msra.mxu0 0
      %2252 = vmatprep.subr.bf16.mxu0 0
      %2253 = vmatpush1.bf16.msra.mxu0 %v2236
      %2254 = vmatprep.subr.bf16.mxu0 0
      %2255 = vmatpush2.bf16.msra.mxu0 0
      %2256 = vmatprep.subr.bf16.mxu0 0
      %2257 = vmatpush2.bf16.msra.mxu0 0
      %2258 = vmatprep.subr.bf16.mxu0 0
      %2259 = vmatpush2.bf16.msra.mxu0 0
      %2260 = vmatprep.subr.bf16.mxu0 0
      %2261 = vmatpush2.bf16.msra.mxu0 0
      %2262 = vmatprep.subr.bf16.mxu0 0
      %2263 = vmatpush2.bf16.msra.mxu0 0
      %2264 = vmatprep.subr.bf16.mxu0 0
      %2265 = vmatpush2.bf16.msra.mxu0 0
      %2266 = vmatprep.subr.bf16.mxu0 0
      %2267 = vmatpush2.bf16.msra.mxu0 0
      %2268 = vmatprep.subr.bf16.mxu0 0
      %2269 = vmatpush2.bf16.msra.mxu0 0
      %2270 = vmatprep.mubr.bf16.mxu0 0
      %2271 = vmatmul.mubr.bf16.gmra.mxu0 %v2232
      %v2272 = vpop.f32.mrf.mxu0
      %v2273 = vadd.f32 0.0, %v2272
      %v2274 = vpop.f32.mrf.mxu0
      %v2275 = vpop.f32.mrf.mxu0
      %v2276 = vpop.f32.mrf.mxu0
      %2277 = vdwg.mxu0
      %v2279 = vsel %vm2178, %v2224, 0
      %v2282 = vsel %vm2234, %v2228, 0
      %2284 = vmatprep.subr.bf16.mxu0 0
      %2285 = vmatpush1.bf16.msra.mxu0 0
      %2286 = vmatprep.subr.bf16.mxu0 0
      %2287 = vmatpush1.bf16.msra.mxu0 0
      %2288 = vmatprep.subr.bf16.mxu0 0
      %2289 = vmatpush1.bf16.msra.mxu0 0
      %2290 = vmatprep.subr.bf16.mxu0 0
      %2291 = vmatpush1.bf16.msra.mxu0 0
      %2292 = vmatprep.subr.bf16.mxu0 0
      %2293 = vmatpush1.bf16.msra.mxu0 0
      %2294 = vmatprep.subr.bf16.mxu0 0
      %2295 = vmatpush1.bf16.msra.mxu0 0
      %2296 = vmatprep.subr.bf16.mxu0 0
      %2297 = vmatpush1.bf16.msra.mxu0 0
      %2298 = vmatprep.subr.bf16.mxu0 0
      %2299 = vmatpush1.bf16.msra.mxu0 %v2282
      %2300 = vmatprep.subr.bf16.mxu0 0
      %2301 = vmatpush2.bf16.msra.mxu0 0
      %2302 = vmatprep.subr.bf16.mxu0 0
      %2303 = vmatpush2.bf16.msra.mxu0 0
      %2304 = vmatprep.subr.bf16.mxu0 0
      %2305 = vmatpush2.bf16.msra.mxu0 0
      %2306 = vmatprep.subr.bf16.mxu0 0
      %2307 = vmatpush2.bf16.msra.mxu0 0
      %2308 = vmatprep.subr.bf16.mxu0 0
      %2309 = vmatpush2.bf16.msra.mxu0 0
      %2310 = vmatprep.subr.bf16.mxu0 0
      %2311 = vmatpush2.bf16.msra.mxu0 0
      %2312 = vmatprep.subr.bf16.mxu0 0
      %2313 = vmatpush2.bf16.msra.mxu0 0
      %2314 = vmatprep.subr.bf16.mxu0 0
      %2315 = vmatpush2.bf16.msra.mxu0 0
      %2316 = vmatprep.mubr.bf16.mxu0 0
      %2317 = vmatmul.mubr.bf16.gmra.mxu0 %v2279
      %v2318 = vpop.f32.mrf.mxu0
      %v2319 = vadd.f32 0.0, %v2318
      %v2320 = vpop.f32.mrf.mxu0
      %v2321 = vpop.f32.mrf.mxu0
      %v2322 = vpop.f32.mrf.mxu0
      %2323 = vdwg.mxu0
      %v2325 = vsel %vm2178, %v2225, 0
      %v2328 = vsel %vm2234, %v2229, 0
      %2330 = vmatprep.subr.bf16.mxu0 0
      %2331 = vmatpush1.bf16.msra.mxu0 0
      %2332 = vmatprep.subr.bf16.mxu0 0
      %2333 = vmatpush1.bf16.msra.mxu0 0
      %2334 = vmatprep.subr.bf16.mxu0 0
      %2335 = vmatpush1.bf16.msra.mxu0 0
      %2336 = vmatprep.subr.bf16.mxu0 0
      %2337 = vmatpush1.bf16.msra.mxu0 0
      %2338 = vmatprep.subr.bf16.mxu0 0
      %2339 = vmatpush1.bf16.msra.mxu0 0
      %2340 = vmatprep.subr.bf16.mxu0 0
      %2341 = vmatpush1.bf16.msra.mxu0 0
      %2342 = vmatprep.subr.bf16.mxu0 0
      %2343 = vmatpush1.bf16.msra.mxu0 0
      %2344 = vmatprep.subr.bf16.mxu0 0
      %2345 = vmatpush1.bf16.msra.mxu0 %v2328
      %2346 = vmatprep.subr.bf16.mxu0 0
      %2347 = vmatpush2.bf16.msra.mxu0 0
      %2348 = vmatprep.subr.bf16.mxu0 0
      %2349 = vmatpush2.bf16.msra.mxu0 0
      %2350 = vmatprep.subr.bf16.mxu0 0
      %2351 = vmatpush2.bf16.msra.mxu0 0
      %2352 = vmatprep.subr.bf16.mxu0 0
      %2353 = vmatpush2.bf16.msra.mxu0 0
      %2354 = vmatprep.subr.bf16.mxu0 0
      %2355 = vmatpush2.bf16.msra.mxu0 0
      %2356 = vmatprep.subr.bf16.mxu0 0
      %2357 = vmatpush2.bf16.msra.mxu0 0
      %2358 = vmatprep.subr.bf16.mxu0 0
      %2359 = vmatpush2.bf16.msra.mxu0 0
      %2360 = vmatprep.subr.bf16.mxu0 0
      %2361 = vmatpush2.bf16.msra.mxu0 0
      %2362 = vmatprep.mubr.bf16.mxu0 0
      %2363 = vmatmul.mubr.bf16.gmra.mxu0 %v2325
      %v2364 = vpop.f32.mrf.mxu0
      %v2365 = vadd.f32 0.0, %v2364
      %v2366 = vpop.f32.mrf.mxu0
      %v2367 = vpop.f32.mrf.mxu0
      %v2368 = vpop.f32.mrf.mxu0
      %2369 = vdwg.mxu0
      %v2371 = vsel %vm2178, %v2226, 0
      %v2374 = vsel %vm2234, %v2230, 0
      %2376 = vmatprep.subr.bf16.mxu0 0
      %2377 = vmatpush1.bf16.msra.mxu0 0
      %2378 = vmatprep.subr.bf16.mxu0 0
      %2379 = vmatpush1.bf16.msra.mxu0 0
      %2380 = vmatprep.subr.bf16.mxu0 0
      %2381 = vmatpush1.bf16.msra.mxu0 0
      %2382 = vmatprep.subr.bf16.mxu0 0
      %2383 = vmatpush1.bf16.msra.mxu0 0
      %2384 = vmatprep.subr.bf16.mxu0 0
      %2385 = vmatpush1.bf16.msra.mxu0 0
      %2386 = vmatprep.subr.bf16.mxu0 0
      %2387 = vmatpush1.bf16.msra.mxu0 0
      %2388 = vmatprep.subr.bf16.mxu0 0
      %2389 = vmatpush1.bf16.msra.mxu0 0
      %2390 = vmatprep.subr.bf16.mxu0 0
      %2391 = vmatpush1.bf16.msra.mxu0 %v2374
      %2392 = vmatprep.subr.bf16.mxu0 0
      %2393 = vmatpush2.bf16.msra.mxu0 0
      %2394 = vmatprep.subr.bf16.mxu0 0
      %2395 = vmatpush2.bf16.msra.mxu0 0
      %2396 = vmatprep.subr.bf16.mxu0 0
      %2397 = vmatpush2.bf16.msra.mxu0 0
      %2398 = vmatprep.subr.bf16.mxu0 0
      %2399 = vmatpush2.bf16.msra.mxu0 0
      %2400 = vmatprep.subr.bf16.mxu0 0
      %2401 = vmatpush2.bf16.msra.mxu0 0
      %2402 = vmatprep.subr.bf16.mxu0 0
      %2403 = vmatpush2.bf16.msra.mxu0 0
      %2404 = vmatprep.subr.bf16.mxu0 0
      %2405 = vmatpush2.bf16.msra.mxu0 0
      %2406 = vmatprep.subr.bf16.mxu0 0
      %2407 = vmatpush2.bf16.msra.mxu0 0
      %2408 = vmatprep.mubr.bf16.mxu0 0
      %2409 = vmatmul.mubr.bf16.gmra.mxu0 %v2371
      %v2410 = vpop.f32.mrf.mxu0
      %v2411 = vadd.f32 0.0, %v2410
      %v2412 = vpop.f32.mrf.mxu0
      %v2413 = vpop.f32.mrf.mxu0
      %v2414 = vpop.f32.mrf.mxu0
      %2415 = vdwg.mxu0
      %v2416 = vpack.c.bf16 %v2273, %v2273
      %v2417 = vpack.c.bf16 %v2319, %v2319
      %v2418 = vpack.c.bf16 %v2365, %v2365
      %v2419 = vpack.c.bf16 %v2411, %v2411
      %v2420 = vld [vmem:[%s4] sm:$0xf]
      %v2421 = vld [vmem:[%s4 + $0x4] sm:$0xf]
      %v2422 = vld [vmem:[%s4 + $0x8] sm:$0xf]
      %v2423 = vld [vmem:[%s4 + $0xc] sm:$0xf]
      %v2424 = vld [vmem:[%s4 + $0x10] sm:$0xf]
      %v2425 = vld [vmem:[%s4 + $0x14] sm:$0xf]
      %v2426 = vld [vmem:[%s4 + $0x18] sm:$0xf]
      %v2427 = vld [vmem:[%s4 + $0x1c] sm:$0xf]
      %v2428 = vld [vmem:[%s4 + $0x20] sm:$0xf]
      %v2429 = vld [vmem:[%s4 + $0x24] sm:$0xf]
      %v2430 = vld [vmem:[%s4 + $0x28] sm:$0xf]
      %v2431 = vld [vmem:[%s4 + $0x2c] sm:$0xf]
      %v2432 = vld [vmem:[%s4 + $0x30] sm:$0xf]
      %v2433 = vld [vmem:[%s4 + $0x34] sm:$0xf]
      %v2434 = vld [vmem:[%s4 + $0x38] sm:$0xf]
      %v2435 = vld [vmem:[%s4 + $0x3c] sm:$0xf]
      %v2440 = vunpack.c.l.b16 %v2420
      %v2441 = vunpack.c.l.b16 %v2421
      %v2442 = vunpack.c.l.b16 %v2422
      %v2443 = vunpack.c.l.b16 %v2423
      %v2444 = vpack.c.b16 %v2441, %v2440
      %v2445 = vpack.c.b16 %v2443, %v2442
      %v2449 = vsel %vm1993, %v2416, 0
      %2451 = vmatprep.subr.bf16.mxu0 0
      %2452 = vmatpush1.bf16.msra.mxu0 0
      %2453 = vmatprep.subr.bf16.mxu0 0
      %2454 = vmatpush1.bf16.msra.mxu0 0
      %2455 = vmatprep.subr.bf16.mxu0 0
      %2456 = vmatpush1.bf16.msra.mxu0 0
      %2457 = vmatprep.subr.bf16.mxu0 0
      %2458 = vmatpush1.bf16.msra.mxu0 0
      %2459 = vmatprep.subr.bf16.mxu0 0
      %2460 = vmatpush1.bf16.msra.mxu0 0
      %2461 = vmatprep.subr.bf16.mxu0 0
      %2462 = vmatpush1.bf16.msra.mxu0 0
      %2463 = vmatprep.subr.bf16.mxu0 0
      %2464 = vmatpush1.bf16.msra.mxu0 %v2445
      %2465 = vmatprep.subr.bf16.mxu0 0
      %2466 = vmatpush1.bf16.msra.mxu0 %v2444
      %2467 = vmatprep.subr.bf16.mxu0 0
      %2468 = vmatpush2.bf16.msra.mxu0 0
      %2469 = vmatprep.subr.bf16.mxu0 0
      %2470 = vmatpush2.bf16.msra.mxu0 0
      %2471 = vmatprep.subr.bf16.mxu0 0
      %2472 = vmatpush2.bf16.msra.mxu0 0
      %2473 = vmatprep.subr.bf16.mxu0 0
      %2474 = vmatpush2.bf16.msra.mxu0 0
      %2475 = vmatprep.subr.bf16.mxu0 0
      %2476 = vmatpush2.bf16.msra.mxu0 0
      %2477 = vmatprep.subr.bf16.mxu0 0
      %2478 = vmatpush2.bf16.msra.mxu0 0
      %2479 = vmatprep.subr.bf16.mxu0 0
      %2480 = vmatpush2.bf16.msra.mxu0 0
      %2481 = vmatprep.subr.bf16.mxu0 0
      %2482 = vmatpush2.bf16.msra.mxu0 0
      %2483 = vmatprep.mubr.bf16.mxu0 0
      %2484 = vmatmul.mubr.bf16.gmra.mxu0 %v2449
      %v2485 = vpop.f32.mrf.mxu0
      %v2486 = vadd.f32 0.0, %v2485
      %v2487 = vpop.f32.mrf.mxu0
      %v2488 = vpop.f32.mrf.mxu0
      %v2489 = vpop.f32.mrf.mxu0
      %2490 = vdwg.mxu0
      %v2495 = vunpack.c.l.b16 %v2424
      %v2496 = vunpack.c.l.b16 %v2425
      %v2497 = vunpack.c.l.b16 %v2426
      %v2498 = vunpack.c.l.b16 %v2427
      %v2499 = vpack.c.b16 %v2496, %v2495
      %v2500 = vpack.c.b16 %v2498, %v2497
      %v2504 = vsel %vm1993, %v2417, 0
      %2506 = vmatprep.subr.bf16.mxu0 0
      %2507 = vmatpush1.bf16.msra.mxu0 0
      %2508 = vmatprep.subr.bf16.mxu0 0
      %2509 = vmatpush1.bf16.msra.mxu0 0
      %2510 = vmatprep.subr.bf16.mxu0 0
      %2511 = vmatpush1.bf16.msra.mxu0 0
      %2512 = vmatprep.subr.bf16.mxu0 0
      %2513 = vmatpush1.bf16.msra.mxu0 0
      %2514 = vmatprep.subr.bf16.mxu0 0
      %2515 = vmatpush1.bf16.msra.mxu0 0
      %2516 = vmatprep.subr.bf16.mxu0 0
      %2517 = vmatpush1.bf16.msra.mxu0 0
      %2518 = vmatprep.subr.bf16.mxu0 0
      %2519 = vmatpush1.bf16.msra.mxu0 %v2500
      %2520 = vmatprep.subr.bf16.mxu0 0
      %2521 = vmatpush1.bf16.msra.mxu0 %v2499
      %2522 = vmatprep.subr.bf16.mxu0 0
      %2523 = vmatpush2.bf16.msra.mxu0 0
      %2524 = vmatprep.subr.bf16.mxu0 0
      %2525 = vmatpush2.bf16.msra.mxu0 0
      %2526 = vmatprep.subr.bf16.mxu0 0
      %2527 = vmatpush2.bf16.msra.mxu0 0
      %2528 = vmatprep.subr.bf16.mxu0 0
      %2529 = vmatpush2.bf16.msra.mxu0 0
      %2530 = vmatprep.subr.bf16.mxu0 0
      %2531 = vmatpush2.bf16.msra.mxu0 0
      %2532 = vmatprep.subr.bf16.mxu0 0
      %2533 = vmatpush2.bf16.msra.mxu0 0
      %2534 = vmatprep.subr.bf16.mxu0 0
      %2535 = vmatpush2.bf16.msra.mxu0 0
      %2536 = vmatprep.subr.bf16.mxu0 0
      %2537 = vmatpush2.bf16.msra.mxu0 0
      %2538 = vmatprep.mubr.bf16.mxu0 0
      %2539 = vmatmul.mubr.bf16.gmra.mxu0 %v2504
      %v2540 = vpop.f32.mrf.mxu0
      %v2541 = vadd.f32 0.0, %v2540
      %v2542 = vpop.f32.mrf.mxu0
      %v2543 = vpop.f32.mrf.mxu0
      %v2544 = vpop.f32.mrf.mxu0
      %2545 = vdwg.mxu0
      %v2550 = vunpack.c.l.b16 %v2428
      %v2551 = vunpack.c.l.b16 %v2429
      %v2552 = vunpack.c.l.b16 %v2430
      %v2553 = vunpack.c.l.b16 %v2431
      %v2554 = vpack.c.b16 %v2551, %v2550
      %v2555 = vpack.c.b16 %v2553, %v2552
      %v2559 = vsel %vm1993, %v2418, 0
      %2561 = vmatprep.subr.bf16.mxu0 0
      %2562 = vmatpush1.bf16.msra.mxu0 0
      %2563 = vmatprep.subr.bf16.mxu0 0
      %2564 = vmatpush1.bf16.msra.mxu0 0
      %2565 = vmatprep.subr.bf16.mxu0 0
      %2566 = vmatpush1.bf16.msra.mxu0 0
      %2567 = vmatprep.subr.bf16.mxu0 0
      %2568 = vmatpush1.bf16.msra.mxu0 0
      %2569 = vmatprep.subr.bf16.mxu0 0
      %2570 = vmatpush1.bf16.msra.mxu0 0
      %2571 = vmatprep.subr.bf16.mxu0 0
      %2572 = vmatpush1.bf16.msra.mxu0 0
      %2573 = vmatprep.subr.bf16.mxu0 0
      %2574 = vmatpush1.bf16.msra.mxu0 %v2555
      %2575 = vmatprep.subr.bf16.mxu0 0
      %2576 = vmatpush1.bf16.msra.mxu0 %v2554
      %2577 = vmatprep.subr.bf16.mxu0 0
      %2578 = vmatpush2.bf16.msra.mxu0 0
      %2579 = vmatprep.subr.bf16.mxu0 0
      %2580 = vmatpush2.bf16.msra.mxu0 0
      %2581 = vmatprep.subr.bf16.mxu0 0
      %2582 = vmatpush2.bf16.msra.mxu0 0
      %2583 = vmatprep.subr.bf16.mxu0 0
      %2584 = vmatpush2.bf16.msra.mxu0 0
      %2585 = vmatprep.subr.bf16.mxu0 0
      %2586 = vmatpush2.bf16.msra.mxu0 0
      %2587 = vmatprep.subr.bf16.mxu0 0
      %2588 = vmatpush2.bf16.msra.mxu0 0
      %2589 = vmatprep.subr.bf16.mxu0 0
      %2590 = vmatpush2.bf16.msra.mxu0 0
      %2591 = vmatprep.subr.bf16.mxu0 0
      %2592 = vmatpush2.bf16.msra.mxu0 0
      %2593 = vmatprep.mubr.bf16.mxu0 0
      %2594 = vmatmul.mubr.bf16.gmra.mxu0 %v2559
      %v2595 = vpop.f32.mrf.mxu0
      %v2596 = vadd.f32 0.0, %v2595
      %v2597 = vpop.f32.mrf.mxu0
      %v2598 = vpop.f32.mrf.mxu0
      %v2599 = vpop.f32.mrf.mxu0
      %2600 = vdwg.mxu0
      %v2605 = vunpack.c.l.b16 %v2432
      %v2606 = vunpack.c.l.b16 %v2433
      %v2607 = vunpack.c.l.b16 %v2434
      %v2608 = vunpack.c.l.b16 %v2435
      %v2609 = vpack.c.b16 %v2606, %v2605
      %v2610 = vpack.c.b16 %v2608, %v2607
      %v2614 = vsel %vm1993, %v2419, 0
      %2616 = vmatprep.subr.bf16.mxu0 0
      %2617 = vmatpush1.bf16.msra.mxu0 0
      %2618 = vmatprep.subr.bf16.mxu0 0
      %2619 = vmatpush1.bf16.msra.mxu0 0
      %2620 = vmatprep.subr.bf16.mxu0 0
      %2621 = vmatpush1.bf16.msra.mxu0 0
      %2622 = vmatprep.subr.bf16.mxu0 0
      %2623 = vmatpush1.bf16.msra.mxu0 0
      %2624 = vmatprep.subr.bf16.mxu0 0
      %2625 = vmatpush1.bf16.msra.mxu0 0
      %2626 = vmatprep.subr.bf16.mxu0 0
      %2627 = vmatpush1.bf16.msra.mxu0 0
      %2628 = vmatprep.subr.bf16.mxu0 0
      %2629 = vmatpush1.bf16.msra.mxu0 %v2610
      %2630 = vmatprep.subr.bf16.mxu0 0
      %2631 = vmatpush1.bf16.msra.mxu0 %v2609
      %2632 = vmatprep.subr.bf16.mxu0 0
      %2633 = vmatpush2.bf16.msra.mxu0 0
      %2634 = vmatprep.subr.bf16.mxu0 0
      %2635 = vmatpush2.bf16.msra.mxu0 0
      %2636 = vmatprep.subr.bf16.mxu0 0
      %2637 = vmatpush2.bf16.msra.mxu0 0
      %2638 = vmatprep.subr.bf16.mxu0 0
      %2639 = vmatpush2.bf16.msra.mxu0 0
      %2640 = vmatprep.subr.bf16.mxu0 0
      %2641 = vmatpush2.bf16.msra.mxu0 0
      %2642 = vmatprep.subr.bf16.mxu0 0
      %2643 = vmatpush2.bf16.msra.mxu0 0
      %2644 = vmatprep.subr.bf16.mxu0 0
      %2645 = vmatpush2.bf16.msra.mxu0 0
      %2646 = vmatprep.subr.bf16.mxu0 0
      %2647 = vmatpush2.bf16.msra.mxu0 0
      %2648 = vmatprep.mubr.bf16.mxu0 0
      %2649 = vmatmul.mubr.bf16.gmra.mxu0 %v2614
      %v2650 = vpop.f32.mrf.mxu0
      %v2651 = vadd.f32 0.0, %v2650
      %v2652 = vpop.f32.mrf.mxu0
      %v2653 = vpop.f32.mrf.mxu0
      %v2654 = vpop.f32.mrf.mxu0
      %2655 = vdwg.mxu0
      %v2656 = vadd.f32 %v2486, %v2541
      %v2657 = vadd.f32 %v2656, %v2596
      %v2658 = vadd.f32 %v2657, %v2651
      %v2659 = vld [vmem:[%s5] sm:$0x1]
      %v2661 = vlaneseq
      %v2662 = vshrl.u32 %v2661, 7
      %v2663 = vsub.s32 0, %v2662
      %v2664 = vrot.slane %v2659, %v2663
      %v2666 = vadd.f32 %v2658, %v2664
      %v2667 = vld [vmem:[%s6] sm:$0x1]
      %v2668 = vld [vmem:[%s7] sm:$0x1]
      %2669 = vadd.xlane.f32.xlu0 %v2666
      %v2670 = vpop.xlane.xlu0 %2669
      %v2671 = vrcp.pop 128.0
      %v2672 = vmul.f32 %v2670, %v2671
      %v2673 = vsub.f32 %v2666, %v2672
      %v2674 = vmul.f32 %v2673, %v2673
      %2675 = vadd.xlane.f32.xlu0 %v2674
      %v2676 = vpop.xlane.xlu0 %2675
      %v2677 = vmul.f32 %v2676, %v2671
      %v2678 = vadd.f32 %v2677, 1e-05
      %v2679 = vrsqrt.pop %v2678
      %v2680 = vmul.f32 %v2673, %v2679
      %v2682 = vlaneseq
      %v2683 = vshrl.u32 %v2682, 7
      %v2684 = vsub.s32 0, %v2683
      %v2685 = vrot.slane %v2667, %v2684
      %v2687 = vmul.f32 %v2680, %v2685
      %v2689 = vlaneseq
      %v2690 = vshrl.u32 %v2689, 7
      %v2691 = vsub.s32 0, %v2690
      %v2692 = vrot.slane %v2668, %v2691
      %v2694 = vadd.f32 %v2687, %v2692
      %v2695 = vadd.f32 %v644, %v2694
      %v2696 = vld [vmem:[%s637] sm:$0xf]
      %v2697 = vld [vmem:[%s8] sm:$0xf]
      %v2698 = vld [vmem:[%s8 + $0x4] sm:$0xf]
      %v2699 = vld [vmem:[%s8 + $0x8] sm:$0xf]
      %v2700 = vld [vmem:[%s8 + $0xc] sm:$0xf]
      %v2701 = vld [vmem:[%s8 + $0x10] sm:$0xf]
      %v2702 = vld [vmem:[%s8 + $0x14] sm:$0xf]
      %v2703 = vld [vmem:[%s8 + $0x18] sm:$0xf]
      %v2704 = vld [vmem:[%s8 + $0x1c] sm:$0xf]
      %v2705 = vld [vmem:[%s8 + $0x20] sm:$0xf]
      %v2706 = vld [vmem:[%s8 + $0x24] sm:$0xf]
      %v2707 = vld [vmem:[%s8 + $0x28] sm:$0xf]
      %v2708 = vld [vmem:[%s8 + $0x2c] sm:$0xf]
      %v2709 = vld [vmem:[%s8 + $0x30] sm:$0xf]
      %v2710 = vld [vmem:[%s8 + $0x34] sm:$0xf]
      %v2711 = vld [vmem:[%s8 + $0x38] sm:$0xf]
      %v2712 = vld [vmem:[%s8 + $0x3c] sm:$0xf]
      %v2713 = vld [vmem:[%s8 + $0x40] sm:$0xf]
      %v2714 = vld [vmem:[%s8 + $0x44] sm:$0xf]
      %v2715 = vld [vmem:[%s8 + $0x48] sm:$0xf]
      %v2716 = vld [vmem:[%s8 + $0x4c] sm:$0xf]
      %v2717 = vld [vmem:[%s8 + $0x50] sm:$0xf]
      %v2718 = vld [vmem:[%s8 + $0x54] sm:$0xf]
      %v2719 = vld [vmem:[%s8 + $0x58] sm:$0xf]
      %v2720 = vld [vmem:[%s8 + $0x5c] sm:$0xf]
      %v2721 = vld [vmem:[%s8 + $0x60] sm:$0xf]
      %v2722 = vld [vmem:[%s8 + $0x64] sm:$0xf]
      %v2723 = vld [vmem:[%s8 + $0x68] sm:$0xf]
      %v2724 = vld [vmem:[%s8 + $0x6c] sm:$0xf]
      %v2725 = vld [vmem:[%s8 + $0x70] sm:$0xf]
      %v2726 = vld [vmem:[%s8 + $0x74] sm:$0xf]
      %v2727 = vld [vmem:[%s8 + $0x78] sm:$0xf]
      %v2728 = vld [vmem:[%s8 + $0x7c] sm:$0xf]
      %v2729 = vld [vmem:[%s8 + $0x80] sm:$0xf]
      %v2730 = vld [vmem:[%s8 + $0x84] sm:$0xf]
      %v2731 = vld [vmem:[%s8 + $0x88] sm:$0xf]
      %v2732 = vld [vmem:[%s8 + $0x8c] sm:$0xf]
      %v2733 = vld [vmem:[%s8 + $0x90] sm:$0xf]
      %v2734 = vld [vmem:[%s8 + $0x94] sm:$0xf]
      %v2735 = vld [vmem:[%s8 + $0x98] sm:$0xf]
      %v2736 = vld [vmem:[%s8 + $0x9c] sm:$0xf]
      %v2737 = vld [vmem:[%s8 + $0xa0] sm:$0xf]
      %v2738 = vld [vmem:[%s8 + $0xa4] sm:$0xf]
      %v2739 = vld [vmem:[%s8 + $0xa8] sm:$0xf]
      %v2740 = vld [vmem:[%s8 + $0xac] sm:$0xf]
      %v2741 = vld [vmem:[%s8 + $0xb0] sm:$0xf]
      %v2742 = vld [vmem:[%s8 + $0xb4] sm:$0xf]
      %v2743 = vld [vmem:[%s8 + $0xb8] sm:$0xf]
      %v2744 = vld [vmem:[%s8 + $0xbc] sm:$0xf]
      %v2745 = vld [vmem:[%s8 + $0xc0] sm:$0xf]
      %v2746 = vld [vmem:[%s8 + $0xc4] sm:$0xf]
      %v2747 = vld [vmem:[%s8 + $0xc8] sm:$0xf]
      %v2748 = vld [vmem:[%s8 + $0xcc] sm:$0xf]
      %v2749 = vld [vmem:[%s8 + $0xd0] sm:$0xf]
      %v2750 = vld [vmem:[%s8 + $0xd4] sm:$0xf]
      %v2751 = vld [vmem:[%s8 + $0xd8] sm:$0xf]
      %v2752 = vld [vmem:[%s8 + $0xdc] sm:$0xf]
      %v2753 = vld [vmem:[%s8 + $0xe0] sm:$0xf]
      %v2754 = vld [vmem:[%s8 + $0xe4] sm:$0xf]
      %v2755 = vld [vmem:[%s8 + $0xe8] sm:$0xf]
      %v2756 = vld [vmem:[%s8 + $0xec] sm:$0xf]
      %v2757 = vld [vmem:[%s8 + $0xf0] sm:$0xf]
      %v2758 = vld [vmem:[%s8 + $0xf4] sm:$0xf]
      %v2759 = vld [vmem:[%s8 + $0xf8] sm:$0xf]
      %v2760 = vld [vmem:[%s8 + $0xfc] sm:$0xf]
      %v2761 = vld [vmem:[%s9] sm:$0x1]
      %v2762 = vld [vmem:[%s9 + $0x1] sm:$0x1]
      %v2763 = vld [vmem:[%s9 + $0x2] sm:$0x1]
      %v2764 = vld [vmem:[%s9 + $0x3] sm:$0x1]
      %v2769 = vlaneseq
      %v2770 = vshrl.u32 %v2769, 7
      %v2771 = vsub.s32 0, %v2770
      %v2772 = vrot.slane %v2761, %v2771
      %v2773 = vlaneseq
      %v2774 = vshrl.u32 %v2773, 7
      %v2775 = vsub.s32 0, %v2774
      %v2776 = vrot.slane %v2762, %v2775
      %v2777 = vlaneseq
      %v2778 = vshrl.u32 %v2777, 7
      %v2779 = vsub.s32 0, %v2778
      %v2780 = vrot.slane %v2763, %v2779
      %v2781 = vlaneseq
      %v2782 = vshrl.u32 %v2781, 7
      %v2783 = vsub.s32 0, %v2782
      %v2784 = vrot.slane %v2764, %v2783
      %v2805 = vunpack.c.l.b16 %v2697
      %v2806 = vunpack.c.l.b16 %v2698
      %v2807 = vunpack.c.l.b16 %v2699
      %v2808 = vunpack.c.l.b16 %v2700
      %v2809 = vunpack.c.l.b16 %v2701
      %v2810 = vunpack.c.l.b16 %v2702
      %v2811 = vunpack.c.l.b16 %v2703
      %v2812 = vunpack.c.l.b16 %v2704
      %v2813 = vunpack.c.l.b16 %v2705
      %v2814 = vunpack.c.l.b16 %v2706
      %v2815 = vunpack.c.l.b16 %v2707
      %v2816 = vunpack.c.l.b16 %v2708
      %v2817 = vunpack.c.l.b16 %v2709
      %v2818 = vunpack.c.l.b16 %v2710
      %v2819 = vunpack.c.l.b16 %v2711
      %v2820 = vunpack.c.l.b16 %v2712
      %v2821 = vpack.c.b16 %v2806, %v2805
      %v2822 = vpack.c.b16 %v2808, %v2807
      %v2823 = vpack.c.b16 %v2810, %v2809
      %v2824 = vpack.c.b16 %v2812, %v2811
      %v2825 = vpack.c.b16 %v2814, %v2813
      %v2826 = vpack.c.b16 %v2816, %v2815
      %v2827 = vpack.c.b16 %v2818, %v2817
      %v2828 = vpack.c.b16 %v2820, %v2819
      %2837 = vmatprep.subr.bf16.mxu0 0
      %2838 = vmatpush1.bf16.msra.mxu0 %v2828
      %2839 = vmatprep.subr.bf16.mxu0 0
      %2840 = vmatpush1.bf16.msra.mxu0 %v2827
      %2841 = vmatprep.subr.bf16.mxu0 0
      %2842 = vmatpush1.bf16.msra.mxu0 %v2826
      %2843 = vmatprep.subr.bf16.mxu0 0
      %2844 = vmatpush1.bf16.msra.mxu0 %v2825
      %2845 = vmatprep.subr.bf16.mxu0 0
      %2846 = vmatpush1.bf16.msra.mxu0 %v2824
      %2847 = vmatprep.subr.bf16.mxu0 0
      %2848 = vmatpush1.bf16.msra.mxu0 %v2823
      %2849 = vmatprep.subr.bf16.mxu0 0
      %2850 = vmatpush1.bf16.msra.mxu0 %v2822
      %2851 = vmatprep.subr.bf16.mxu0 0
      %2852 = vmatpush1.bf16.msra.mxu0 %v2821
      %2853 = vmatprep.subr.bf16.mxu0 0
      %2854 = vmatpush2.bf16.msra.mxu0 0
      %2855 = vmatprep.subr.bf16.mxu0 0
      %2856 = vmatpush2.bf16.msra.mxu0 0
      %2857 = vmatprep.subr.bf16.mxu0 0
      %2858 = vmatpush2.bf16.msra.mxu0 0
      %2859 = vmatprep.subr.bf16.mxu0 0
      %2860 = vmatpush2.bf16.msra.mxu0 0
      %2861 = vmatprep.subr.bf16.mxu0 0
      %2862 = vmatpush2.bf16.msra.mxu0 0
      %2863 = vmatprep.subr.bf16.mxu0 0
      %2864 = vmatpush2.bf16.msra.mxu0 0
      %2865 = vmatprep.subr.bf16.mxu0 0
      %2866 = vmatpush2.bf16.msra.mxu0 0
      %2867 = vmatprep.subr.bf16.mxu0 0
      %2868 = vmatpush2.bf16.msra.mxu0 0
      %2869 = vmatprep.mubr.bf16.mxu0 0
      %2870 = vmatmul.mubr.bf16.gmra.mxu0 %v2696
      %v2871 = vpop.f32.mrf.mxu0
      %v2872 = vadd.f32 %v2772, %v2871
      %v2873 = vpop.f32.mrf.mxu0
      %v2874 = vpop.f32.mrf.mxu0
      %v2875 = vpop.f32.mrf.mxu0
      %2876 = vdwg.mxu0
      %v2893 = vunpack.c.l.b16 %v2713
      %v2894 = vunpack.c.l.b16 %v2714
      %v2895 = vunpack.c.l.b16 %v2715
      %v2896 = vunpack.c.l.b16 %v2716
      %v2897 = vunpack.c.l.b16 %v2717
      %v2898 = vunpack.c.l.b16 %v2718
      %v2899 = vunpack.c.l.b16 %v2719
      %v2900 = vunpack.c.l.b16 %v2720
      %v2901 = vunpack.c.l.b16 %v2721
      %v2902 = vunpack.c.l.b16 %v2722
      %v2903 = vunpack.c.l.b16 %v2723
      %v2904 = vunpack.c.l.b16 %v2724
      %v2905 = vunpack.c.l.b16 %v2725
      %v2906 = vunpack.c.l.b16 %v2726
      %v2907 = vunpack.c.l.b16 %v2727
      %v2908 = vunpack.c.l.b16 %v2728
      %v2909 = vpack.c.b16 %v2894, %v2893
      %v2910 = vpack.c.b16 %v2896, %v2895
      %v2911 = vpack.c.b16 %v2898, %v2897
      %v2912 = vpack.c.b16 %v2900, %v2899
      %v2913 = vpack.c.b16 %v2902, %v2901
      %v2914 = vpack.c.b16 %v2904, %v2903
      %v2915 = vpack.c.b16 %v2906, %v2905
      %v2916 = vpack.c.b16 %v2908, %v2907
      %2925 = vmatprep.subr.bf16.mxu0 0
      %2926 = vmatpush1.bf16.msra.mxu0 %v2916
      %2927 = vmatprep.subr.bf16.mxu0 0
      %2928 = vmatpush1.bf16.msra.mxu0 %v2915
      %2929 = vmatprep.subr.bf16.mxu0 0
      %2930 = vmatpush1.bf16.msra.mxu0 %v2914
      %2931 = vmatprep.subr.bf16.mxu0 0
      %2932 = vmatpush1.bf16.msra.mxu0 %v2913
      %2933 = vmatprep.subr.bf16.mxu0 0
      %2934 = vmatpush1.bf16.msra.mxu0 %v2912
      %2935 = vmatprep.subr.bf16.mxu0 0
      %2936 = vmatpush1.bf16.msra.mxu0 %v2911
      %2937 = vmatprep.subr.bf16.mxu0 0
      %2938 = vmatpush1.bf16.msra.mxu0 %v2910
      %2939 = vmatprep.subr.bf16.mxu0 0
      %2940 = vmatpush1.bf16.msra.mxu0 %v2909
      %2941 = vmatprep.subr.bf16.mxu0 0
      %2942 = vmatpush2.bf16.msra.mxu0 0
      %2943 = vmatprep.subr.bf16.mxu0 0
      %2944 = vmatpush2.bf16.msra.mxu0 0
      %2945 = vmatprep.subr.bf16.mxu0 0
      %2946 = vmatpush2.bf16.msra.mxu0 0
      %2947 = vmatprep.subr.bf16.mxu0 0
      %2948 = vmatpush2.bf16.msra.mxu0 0
      %2949 = vmatprep.subr.bf16.mxu0 0
      %2950 = vmatpush2.bf16.msra.mxu0 0
      %2951 = vmatprep.subr.bf16.mxu0 0
      %2952 = vmatpush2.bf16.msra.mxu0 0
      %2953 = vmatprep.subr.bf16.mxu0 0
      %2954 = vmatpush2.bf16.msra.mxu0 0
      %2955 = vmatprep.subr.bf16.mxu0 0
      %2956 = vmatpush2.bf16.msra.mxu0 0
      %2957 = vmatprep.mubr.bf16.mxu0 0
      %2958 = vmatmul.mubr.bf16.gmra.mxu0 %v2696
      %v2959 = vpop.f32.mrf.mxu0
      %v2960 = vadd.f32 %v2776, %v2959
      %v2961 = vpop.f32.mrf.mxu0
      %v2962 = vpop.f32.mrf.mxu0
      %v2963 = vpop.f32.mrf.mxu0
      %2964 = vdwg.mxu0
      %v2981 = vunpack.c.l.b16 %v2729
      %v2982 = vunpack.c.l.b16 %v2730
      %v2983 = vunpack.c.l.b16 %v2731
      %v2984 = vunpack.c.l.b16 %v2732
      %v2985 = vunpack.c.l.b16 %v2733
      %v2986 = vunpack.c.l.b16 %v2734
      %v2987 = vunpack.c.l.b16 %v2735
      %v2988 = vunpack.c.l.b16 %v2736
      %v2989 = vunpack.c.l.b16 %v2737
      %v2990 = vunpack.c.l.b16 %v2738
      %v2991 = vunpack.c.l.b16 %v2739
      %v2992 = vunpack.c.l.b16 %v2740
      %v2993 = vunpack.c.l.b16 %v2741
      %v2994 = vunpack.c.l.b16 %v2742
      %v2995 = vunpack.c.l.b16 %v2743
      %v2996 = vunpack.c.l.b16 %v2744
      %v2997 = vpack.c.b16 %v2982, %v2981
      %v2998 = vpack.c.b16 %v2984, %v2983
      %v2999 = vpack.c.b16 %v2986, %v2985
      %v3000 = vpack.c.b16 %v2988, %v2987
      %v3001 = vpack.c.b16 %v2990, %v2989
      %v3002 = vpack.c.b16 %v2992, %v2991
      %v3003 = vpack.c.b16 %v2994, %v2993
      %v3004 = vpack.c.b16 %v2996, %v2995
      %3013 = vmatprep.subr.bf16.mxu0 0
      %3014 = vmatpush1.bf16.msra.mxu0 %v3004
      %3015 = vmatprep.subr.bf16.mxu0 0
      %3016 = vmatpush1.bf16.msra.mxu0 %v3003
      %3017 = vmatprep.subr.bf16.mxu0 0
      %3018 = vmatpush1.bf16.msra.mxu0 %v3002
      %3019 = vmatprep.subr.bf16.mxu0 0
      %3020 = vmatpush1.bf16.msra.mxu0 %v3001
      %3021 = vmatprep.subr.bf16.mxu0 0
      %3022 = vmatpush1.bf16.msra.mxu0 %v3000
      %3023 = vmatprep.subr.bf16.mxu0 0
      %3024 = vmatpush1.bf16.msra.mxu0 %v2999
      %3025 = vmatprep.subr.bf16.mxu0 0
      %3026 = vmatpush1.bf16.msra.mxu0 %v2998
      %3027 = vmatprep.subr.bf16.mxu0 0
      %3028 = vmatpush1.bf16.msra.mxu0 %v2997
      %3029 = vmatprep.subr.bf16.mxu0 0
      %3030 = vmatpush2.bf16.msra.mxu0 0
      %3031 = vmatprep.subr.bf16.mxu0 0
      %3032 = vmatpush2.bf16.msra.mxu0 0
      %3033 = vmatprep.subr.bf16.mxu0 0
      %3034 = vmatpush2.bf16.msra.mxu0 0
      %3035 = vmatprep.subr.bf16.mxu0 0
      %3036 = vmatpush2.bf16.msra.mxu0 0
      %3037 = vmatprep.subr.bf16.mxu0 0
      %3038 = vmatpush2.bf16.msra.mxu0 0
      %3039 = vmatprep.subr.bf16.mxu0 0
      %3040 = vmatpush2.bf16.msra.mxu0 0
      %3041 = vmatprep.subr.bf16.mxu0 0
      %3042 = vmatpush2.bf16.msra.mxu0 0
      %3043 = vmatprep.subr.bf16.mxu0 0
      %3044 = vmatpush2.bf16.msra.mxu0 0
      %3045 = vmatprep.mubr.bf16.mxu0 0
      %3046 = vmatmul.mubr.bf16.gmra.mxu0 %v2696
      %v3047 = vpop.f32.mrf.mxu0
      %v3048 = vadd.f32 %v2780, %v3047
      %v3049 = vpop.f32.mrf.mxu0
      %v3050 = vpop.f32.mrf.mxu0
      %v3051 = vpop.f32.mrf.mxu0
      %3052 = vdwg.mxu0
      %v3069 = vunpack.c.l.b16 %v2745
      %v3070 = vunpack.c.l.b16 %v2746
      %v3071 = vunpack.c.l.b16 %v2747
      %v3072 = vunpack.c.l.b16 %v2748
      %v3073 = vunpack.c.l.b16 %v2749
      %v3074 = vunpack.c.l.b16 %v2750
      %v3075 = vunpack.c.l.b16 %v2751
      %v3076 = vunpack.c.l.b16 %v2752
      %v3077 = vunpack.c.l.b16 %v2753
      %v3078 = vunpack.c.l.b16 %v2754
      %v3079 = vunpack.c.l.b16 %v2755
      %v3080 = vunpack.c.l.b16 %v2756
      %v3081 = vunpack.c.l.b16 %v2757
      %v3082 = vunpack.c.l.b16 %v2758
      %v3083 = vunpack.c.l.b16 %v2759
      %v3084 = vunpack.c.l.b16 %v2760
      %v3085 = vpack.c.b16 %v3070, %v3069
      %v3086 = vpack.c.b16 %v3072, %v3071
      %v3087 = vpack.c.b16 %v3074, %v3073
      %v3088 = vpack.c.b16 %v3076, %v3075
      %v3089 = vpack.c.b16 %v3078, %v3077
      %v3090 = vpack.c.b16 %v3080, %v3079
      %v3091 = vpack.c.b16 %v3082, %v3081
      %v3092 = vpack.c.b16 %v3084, %v3083
      %3101 = vmatprep.subr.bf16.mxu0 0
      %3102 = vmatpush1.bf16.msra.mxu0 %v3092
      %3103 = vmatprep.subr.bf16.mxu0 0
      %3104 = vmatpush1.bf16.msra.mxu0 %v3091
      %3105 = vmatprep.subr.bf16.mxu0 0
      %3106 = vmatpush1.bf16.msra.mxu0 %v3090
      %3107 = vmatprep.subr.bf16.mxu0 0
      %3108 = vmatpush1.bf16.msra.mxu0 %v3089
      %3109 = vmatprep.subr.bf16.mxu0 0
      %3110 = vmatpush1.bf16.msra.mxu0 %v3088
      %3111 = vmatprep.subr.bf16.mxu0 0
      %3112 = vmatpush1.bf16.msra.mxu0 %v3087
      %3113 = vmatprep.subr.bf16.mxu0 0
      %3114 = vmatpush1.bf16.msra.mxu0 %v3086
      %3115 = vmatprep.subr.bf16.mxu0 0
      %3116 = vmatpush1.bf16.msra.mxu0 %v3085
      %3117 = vmatprep.subr.bf16.mxu0 0
      %3118 = vmatpush2.bf16.msra.mxu0 0
      %3119 = vmatprep.subr.bf16.mxu0 0
      %3120 = vmatpush2.bf16.msra.mxu0 0
      %3121 = vmatprep.subr.bf16.mxu0 0
      %3122 = vmatpush2.bf16.msra.mxu0 0
      %3123 = vmatprep.subr.bf16.mxu0 0
      %3124 = vmatpush2.bf16.msra.mxu0 0
      %3125 = vmatprep.subr.bf16.mxu0 0
      %3126 = vmatpush2.bf16.msra.mxu0 0
      %3127 = vmatprep.subr.bf16.mxu0 0
      %3128 = vmatpush2.bf16.msra.mxu0 0
      %3129 = vmatprep.subr.bf16.mxu0 0
      %3130 = vmatpush2.bf16.msra.mxu0 0
      %3131 = vmatprep.subr.bf16.mxu0 0
      %3132 = vmatpush2.bf16.msra.mxu0 0
      %3133 = vmatprep.mubr.bf16.mxu0 0
      %3134 = vmatmul.mubr.bf16.gmra.mxu0 %v2696
      %v3135 = vpop.f32.mrf.mxu0
      %v3136 = vadd.f32 %v2784, %v3135
      %v3137 = vpop.f32.mrf.mxu0
      %v3138 = vpop.f32.mrf.mxu0
      %v3139 = vpop.f32.mrf.mxu0
      %3140 = vdwg.mxu0
      %s3141 = scalar_lea.vmem %s8, 256
      %v3142 = vld [vmem:[%s3141] sm:$0xf]
      %v3143 = vld [vmem:[%s3141 + $0x4] sm:$0xf]
      %v3144 = vld [vmem:[%s3141 + $0x8] sm:$0xf]
      %v3145 = vld [vmem:[%s3141 + $0xc] sm:$0xf]
      %v3146 = vld [vmem:[%s3141 + $0x10] sm:$0xf]
      %v3147 = vld [vmem:[%s3141 + $0x14] sm:$0xf]
      %v3148 = vld [vmem:[%s3141 + $0x18] sm:$0xf]
      %v3149 = vld [vmem:[%s3141 + $0x1c] sm:$0xf]
      %v3150 = vld [vmem:[%s3141 + $0x20] sm:$0xf]
      %v3151 = vld [vmem:[%s3141 + $0x24] sm:$0xf]
      %v3152 = vld [vmem:[%s3141 + $0x28] sm:$0xf]
      %v3153 = vld [vmem:[%s3141 + $0x2c] sm:$0xf]
      %v3154 = vld [vmem:[%s3141 + $0x30] sm:$0xf]
      %v3155 = vld [vmem:[%s3141 + $0x34] sm:$0xf]
      %v3156 = vld [vmem:[%s3141 + $0x38] sm:$0xf]
      %v3157 = vld [vmem:[%s3141 + $0x3c] sm:$0xf]
      %v3158 = vld [vmem:[%s3141 + $0x40] sm:$0xf]
      %v3159 = vld [vmem:[%s3141 + $0x44] sm:$0xf]
      %v3160 = vld [vmem:[%s3141 + $0x48] sm:$0xf]
      %v3161 = vld [vmem:[%s3141 + $0x4c] sm:$0xf]
      %v3162 = vld [vmem:[%s3141 + $0x50] sm:$0xf]
      %v3163 = vld [vmem:[%s3141 + $0x54] sm:$0xf]
      %v3164 = vld [vmem:[%s3141 + $0x58] sm:$0xf]
      %v3165 = vld [vmem:[%s3141 + $0x5c] sm:$0xf]
      %v3166 = vld [vmem:[%s3141 + $0x60] sm:$0xf]
      %v3167 = vld [vmem:[%s3141 + $0x64] sm:$0xf]
      %v3168 = vld [vmem:[%s3141 + $0x68] sm:$0xf]
      %v3169 = vld [vmem:[%s3141 + $0x6c] sm:$0xf]
      %v3170 = vld [vmem:[%s3141 + $0x70] sm:$0xf]
      %v3171 = vld [vmem:[%s3141 + $0x74] sm:$0xf]
      %v3172 = vld [vmem:[%s3141 + $0x78] sm:$0xf]
      %v3173 = vld [vmem:[%s3141 + $0x7c] sm:$0xf]
      %v3174 = vld [vmem:[%s3141 + $0x80] sm:$0xf]
      %v3175 = vld [vmem:[%s3141 + $0x84] sm:$0xf]
      %v3176 = vld [vmem:[%s3141 + $0x88] sm:$0xf]
      %v3177 = vld [vmem:[%s3141 + $0x8c] sm:$0xf]
      %v3178 = vld [vmem:[%s3141 + $0x90] sm:$0xf]
      %v3179 = vld [vmem:[%s3141 + $0x94] sm:$0xf]
      %v3180 = vld [vmem:[%s3141 + $0x98] sm:$0xf]
      %v3181 = vld [vmem:[%s3141 + $0x9c] sm:$0xf]
      %v3182 = vld [vmem:[%s3141 + $0xa0] sm:$0xf]
      %v3183 = vld [vmem:[%s3141 + $0xa4] sm:$0xf]
      %v3184 = vld [vmem:[%s3141 + $0xa8] sm:$0xf]
      %v3185 = vld [vmem:[%s3141 + $0xac] sm:$0xf]
      %v3186 = vld [vmem:[%s3141 + $0xb0] sm:$0xf]
      %v3187 = vld [vmem:[%s3141 + $0xb4] sm:$0xf]
      %v3188 = vld [vmem:[%s3141 + $0xb8] sm:$0xf]
      %v3189 = vld [vmem:[%s3141 + $0xbc] sm:$0xf]
      %v3190 = vld [vmem:[%s3141 + $0xc0] sm:$0xf]
      %v3191 = vld [vmem:[%s3141 + $0xc4] sm:$0xf]
      %v3192 = vld [vmem:[%s3141 + $0xc8] sm:$0xf]
      %v3193 = vld [vmem:[%s3141 + $0xcc] sm:$0xf]
      %v3194 = vld [vmem:[%s3141 + $0xd0] sm:$0xf]
      %v3195 = vld [vmem:[%s3141 + $0xd4] sm:$0xf]
      %v3196 = vld [vmem:[%s3141 + $0xd8] sm:$0xf]
      %v3197 = vld [vmem:[%s3141 + $0xdc] sm:$0xf]
      %v3198 = vld [vmem:[%s3141 + $0xe0] sm:$0xf]
      %v3199 = vld [vmem:[%s3141 + $0xe4] sm:$0xf]
      %v3200 = vld [vmem:[%s3141 + $0xe8] sm:$0xf]
      %v3201 = vld [vmem:[%s3141 + $0xec] sm:$0xf]
      %v3202 = vld [vmem:[%s3141 + $0xf0] sm:$0xf]
      %v3203 = vld [vmem:[%s3141 + $0xf4] sm:$0xf]
      %v3204 = vld [vmem:[%s3141 + $0xf8] sm:$0xf]
      %v3205 = vld [vmem:[%s3141 + $0xfc] sm:$0xf]
      %s3206 = scalar_lea.vmem %s9, 4
      %v3207 = vld [vmem:[%s3206] sm:$0x1]
      %v3208 = vld [vmem:[%s3206 + $0x1] sm:$0x1]
      %v3209 = vld [vmem:[%s3206 + $0x2] sm:$0x1]
      %v3210 = vld [vmem:[%s3206 + $0x3] sm:$0x1]
      %v3215 = vlaneseq
      %v3216 = vshrl.u32 %v3215, 7
      %v3217 = vsub.s32 0, %v3216
      %v3218 = vrot.slane %v3207, %v3217
      %v3219 = vlaneseq
      %v3220 = vshrl.u32 %v3219, 7
      %v3221 = vsub.s32 0, %v3220
      %v3222 = vrot.slane %v3208, %v3221
      %v3223 = vlaneseq
      %v3224 = vshrl.u32 %v3223, 7
      %v3225 = vsub.s32 0, %v3224
      %v3226 = vrot.slane %v3209, %v3225
      %v3227 = vlaneseq
      %v3228 = vshrl.u32 %v3227, 7
      %v3229 = vsub.s32 0, %v3228
      %v3230 = vrot.slane %v3210, %v3229
      %v3251 = vunpack.c.l.b16 %v3142
      %v3252 = vunpack.c.l.b16 %v3143
      %v3253 = vunpack.c.l.b16 %v3144
      %v3254 = vunpack.c.l.b16 %v3145
      %v3255 = vunpack.c.l.b16 %v3146
      %v3256 = vunpack.c.l.b16 %v3147
      %v3257 = vunpack.c.l.b16 %v3148
      %v3258 = vunpack.c.l.b16 %v3149
      %v3259 = vunpack.c.l.b16 %v3150
      %v3260 = vunpack.c.l.b16 %v3151
      %v3261 = vunpack.c.l.b16 %v3152
      %v3262 = vunpack.c.l.b16 %v3153
      %v3263 = vunpack.c.l.b16 %v3154
      %v3264 = vunpack.c.l.b16 %v3155
      %v3265 = vunpack.c.l.b16 %v3156
      %v3266 = vunpack.c.l.b16 %v3157
      %v3267 = vpack.c.b16 %v3252, %v3251
      %v3268 = vpack.c.b16 %v3254, %v3253
      %v3269 = vpack.c.b16 %v3256, %v3255
      %v3270 = vpack.c.b16 %v3258, %v3257
      %v3271 = vpack.c.b16 %v3260, %v3259
      %v3272 = vpack.c.b16 %v3262, %v3261
      %v3273 = vpack.c.b16 %v3264, %v3263
      %v3274 = vpack.c.b16 %v3266, %v3265
      %3283 = vmatprep.subr.bf16.mxu0 0
      %3284 = vmatpush1.bf16.msra.mxu0 %v3274
      %3285 = vmatprep.subr.bf16.mxu0 0
      %3286 = vmatpush1.bf16.msra.mxu0 %v3273
      %3287 = vmatprep.subr.bf16.mxu0 0
      %3288 = vmatpush1.bf16.msra.mxu0 %v3272
      %3289 = vmatprep.subr.bf16.mxu0 0
      %3290 = vmatpush1.bf16.msra.mxu0 %v3271
      %3291 = vmatprep.subr.bf16.mxu0 0
      %3292 = vmatpush1.bf16.msra.mxu0 %v3270
      %3293 = vmatprep.subr.bf16.mxu0 0
      %3294 = vmatpush1.bf16.msra.mxu0 %v3269
      %3295 = vmatprep.subr.bf16.mxu0 0
      %3296 = vmatpush1.bf16.msra.mxu0 %v3268
      %3297 = vmatprep.subr.bf16.mxu0 0
      %3298 = vmatpush1.bf16.msra.mxu0 %v3267
      %3299 = vmatprep.subr.bf16.mxu0 0
      %3300 = vmatpush2.bf16.msra.mxu0 0
      %3301 = vmatprep.subr.bf16.mxu0 0
      %3302 = vmatpush2.bf16.msra.mxu0 0
      %3303 = vmatprep.subr.bf16.mxu0 0
      %3304 = vmatpush2.bf16.msra.mxu0 0
      %3305 = vmatprep.subr.bf16.mxu0 0
      %3306 = vmatpush2.bf16.msra.mxu0 0
      %3307 = vmatprep.subr.bf16.mxu0 0
      %3308 = vmatpush2.bf16.msra.mxu0 0
      %3309 = vmatprep.subr.bf16.mxu0 0
      %3310 = vmatpush2.bf16.msra.mxu0 0
      %3311 = vmatprep.subr.bf16.mxu0 0
      %3312 = vmatpush2.bf16.msra.mxu0 0
      %3313 = vmatprep.subr.bf16.mxu0 0
      %3314 = vmatpush2.bf16.msra.mxu0 0
      %3315 = vmatprep.mubr.bf16.mxu0 0
      %3316 = vmatmul.mubr.bf16.gmra.mxu0 %v2696
      %v3317 = vpop.f32.mrf.mxu0
      %v3318 = vadd.f32 %v3218, %v3317
      %v3319 = vpop.f32.mrf.mxu0
      %v3320 = vpop.f32.mrf.mxu0
      %v3321 = vpop.f32.mrf.mxu0
      %3322 = vdwg.mxu0
      %v3339 = vunpack.c.l.b16 %v3158
      %v3340 = vunpack.c.l.b16 %v3159
      %v3341 = vunpack.c.l.b16 %v3160
      %v3342 = vunpack.c.l.b16 %v3161
      %v3343 = vunpack.c.l.b16 %v3162
      %v3344 = vunpack.c.l.b16 %v3163
      %v3345 = vunpack.c.l.b16 %v3164
      %v3346 = vunpack.c.l.b16 %v3165
      %v3347 = vunpack.c.l.b16 %v3166
      %v3348 = vunpack.c.l.b16 %v3167
      %v3349 = vunpack.c.l.b16 %v3168
      %v3350 = vunpack.c.l.b16 %v3169
      %v3351 = vunpack.c.l.b16 %v3170
      %v3352 = vunpack.c.l.b16 %v3171
      %v3353 = vunpack.c.l.b16 %v3172
      %v3354 = vunpack.c.l.b16 %v3173
      %v3355 = vpack.c.b16 %v3340, %v3339
      %v3356 = vpack.c.b16 %v3342, %v3341
      %v3357 = vpack.c.b16 %v3344, %v3343
      %v3358 = vpack.c.b16 %v3346, %v3345
      %v3359 = vpack.c.b16 %v3348, %v3347
      %v3360 = vpack.c.b16 %v3350, %v3349
      %v3361 = vpack.c.b16 %v3352, %v3351
      %v3362 = vpack.c.b16 %v3354, %v3353
      %3371 = vmatprep.subr.bf16.mxu0 0
      %3372 = vmatpush1.bf16.msra.mxu0 %v3362
      %3373 = vmatprep.subr.bf16.mxu0 0
      %3374 = vmatpush1.bf16.msra.mxu0 %v3361
      %3375 = vmatprep.subr.bf16.mxu0 0
      %3376 = vmatpush1.bf16.msra.mxu0 %v3360
      %3377 = vmatprep.subr.bf16.mxu0 0
      %3378 = vmatpush1.bf16.msra.mxu0 %v3359
      %3379 = vmatprep.subr.bf16.mxu0 0
      %3380 = vmatpush1.bf16.msra.mxu0 %v3358
      %3381 = vmatprep.subr.bf16.mxu0 0
      %3382 = vmatpush1.bf16.msra.mxu0 %v3357
      %3383 = vmatprep.subr.bf16.mxu0 0
      %3384 = vmatpush1.bf16.msra.mxu0 %v3356
      %3385 = vmatprep.subr.bf16.mxu0 0
      %3386 = vmatpush1.bf16.msra.mxu0 %v3355
      %3387 = vmatprep.subr.bf16.mxu0 0
      %3388 = vmatpush2.bf16.msra.mxu0 0
      %3389 = vmatprep.subr.bf16.mxu0 0
      %3390 = vmatpush2.bf16.msra.mxu0 0
      %3391 = vmatprep.subr.bf16.mxu0 0
      %3392 = vmatpush2.bf16.msra.mxu0 0
      %3393 = vmatprep.subr.bf16.mxu0 0
      %3394 = vmatpush2.bf16.msra.mxu0 0
      %3395 = vmatprep.subr.bf16.mxu0 0
      %3396 = vmatpush2.bf16.msra.mxu0 0
      %3397 = vmatprep.subr.bf16.mxu0 0
      %3398 = vmatpush2.bf16.msra.mxu0 0
      %3399 = vmatprep.subr.bf16.mxu0 0
      %3400 = vmatpush2.bf16.msra.mxu0 0
      %3401 = vmatprep.subr.bf16.mxu0 0
      %3402 = vmatpush2.bf16.msra.mxu0 0
      %3403 = vmatprep.mubr.bf16.mxu0 0
      %3404 = vmatmul.mubr.bf16.gmra.mxu0 %v2696
      %v3405 = vpop.f32.mrf.mxu0
      %v3406 = vadd.f32 %v3222, %v3405
      %v3407 = vpop.f32.mrf.mxu0
      %v3408 = vpop.f32.mrf.mxu0
      %v3409 = vpop.f32.mrf.mxu0
      %3410 = vdwg.mxu0
      %v3427 = vunpack.c.l.b16 %v3174
      %v3428 = vunpack.c.l.b16 %v3175
      %v3429 = vunpack.c.l.b16 %v3176
      %v3430 = vunpack.c.l.b16 %v3177
      %v3431 = vunpack.c.l.b16 %v3178
      %v3432 = vunpack.c.l.b16 %v3179
      %v3433 = vunpack.c.l.b16 %v3180
      %v3434 = vunpack.c.l.b16 %v3181
      %v3435 = vunpack.c.l.b16 %v3182
      %v3436 = vunpack.c.l.b16 %v3183
      %v3437 = vunpack.c.l.b16 %v3184
      %v3438 = vunpack.c.l.b16 %v3185
      %v3439 = vunpack.c.l.b16 %v3186
      %v3440 = vunpack.c.l.b16 %v3187
      %v3441 = vunpack.c.l.b16 %v3188
      %v3442 = vunpack.c.l.b16 %v3189
      %v3443 = vpack.c.b16 %v3428, %v3427
      %v3444 = vpack.c.b16 %v3430, %v3429
      %v3445 = vpack.c.b16 %v3432, %v3431
      %v3446 = vpack.c.b16 %v3434, %v3433
      %v3447 = vpack.c.b16 %v3436, %v3435
      %v3448 = vpack.c.b16 %v3438, %v3437
      %v3449 = vpack.c.b16 %v3440, %v3439
      %v3450 = vpack.c.b16 %v3442, %v3441
      %3459 = vmatprep.subr.bf16.mxu0 0
      %3460 = vmatpush1.bf16.msra.mxu0 %v3450
      %3461 = vmatprep.subr.bf16.mxu0 0
      %3462 = vmatpush1.bf16.msra.mxu0 %v3449
      %3463 = vmatprep.subr.bf16.mxu0 0
      %3464 = vmatpush1.bf16.msra.mxu0 %v3448
      %3465 = vmatprep.subr.bf16.mxu0 0
      %3466 = vmatpush1.bf16.msra.mxu0 %v3447
      %3467 = vmatprep.subr.bf16.mxu0 0
      %3468 = vmatpush1.bf16.msra.mxu0 %v3446
      %3469 = vmatprep.subr.bf16.mxu0 0
      %3470 = vmatpush1.bf16.msra.mxu0 %v3445
      %3471 = vmatprep.subr.bf16.mxu0 0
      %3472 = vmatpush1.bf16.msra.mxu0 %v3444
      %3473 = vmatprep.subr.bf16.mxu0 0
      %3474 = vmatpush1.bf16.msra.mxu0 %v3443
      %3475 = vmatprep.subr.bf16.mxu0 0
      %3476 = vmatpush2.bf16.msra.mxu0 0
      %3477 = vmatprep.subr.bf16.mxu0 0
      %3478 = vmatpush2.bf16.msra.mxu0 0
      %3479 = vmatprep.subr.bf16.mxu0 0
      %3480 = vmatpush2.bf16.msra.mxu0 0
      %3481 = vmatprep.subr.bf16.mxu0 0
      %3482 = vmatpush2.bf16.msra.mxu0 0
      %3483 = vmatprep.subr.bf16.mxu0 0
      %3484 = vmatpush2.bf16.msra.mxu0 0
      %3485 = vmatprep.subr.bf16.mxu0 0
      %3486 = vmatpush2.bf16.msra.mxu0 0
      %3487 = vmatprep.subr.bf16.mxu0 0
      %3488 = vmatpush2.bf16.msra.mxu0 0
      %3489 = vmatprep.subr.bf16.mxu0 0
      %3490 = vmatpush2.bf16.msra.mxu0 0
      %3491 = vmatprep.mubr.bf16.mxu0 0
      %3492 = vmatmul.mubr.bf16.gmra.mxu0 %v2696
      %v3493 = vpop.f32.mrf.mxu0
      %v3494 = vadd.f32 %v3226, %v3493
      %v3495 = vpop.f32.mrf.mxu0
      %v3496 = vpop.f32.mrf.mxu0
      %v3497 = vpop.f32.mrf.mxu0
      %3498 = vdwg.mxu0
      %v3515 = vunpack.c.l.b16 %v3190
      %v3516 = vunpack.c.l.b16 %v3191
      %v3517 = vunpack.c.l.b16 %v3192
      %v3518 = vunpack.c.l.b16 %v3193
      %v3519 = vunpack.c.l.b16 %v3194
      %v3520 = vunpack.c.l.b16 %v3195
      %v3521 = vunpack.c.l.b16 %v3196
      %v3522 = vunpack.c.l.b16 %v3197
      %v3523 = vunpack.c.l.b16 %v3198
      %v3524 = vunpack.c.l.b16 %v3199
      %v3525 = vunpack.c.l.b16 %v3200
      %v3526 = vunpack.c.l.b16 %v3201
      %v3527 = vunpack.c.l.b16 %v3202
      %v3528 = vunpack.c.l.b16 %v3203
      %v3529 = vunpack.c.l.b16 %v3204
      %v3530 = vunpack.c.l.b16 %v3205
      %v3531 = vpack.c.b16 %v3516, %v3515
      %v3532 = vpack.c.b16 %v3518, %v3517
      %v3533 = vpack.c.b16 %v3520, %v3519
      %v3534 = vpack.c.b16 %v3522, %v3521
      %v3535 = vpack.c.b16 %v3524, %v3523
      %v3536 = vpack.c.b16 %v3526, %v3525
      %v3537 = vpack.c.b16 %v3528, %v3527
      %v3538 = vpack.c.b16 %v3530, %v3529
      %3547 = vmatprep.subr.bf16.mxu0 0
      %3548 = vmatpush1.bf16.msra.mxu0 %v3538
      %3549 = vmatprep.subr.bf16.mxu0 0
      %3550 = vmatpush1.bf16.msra.mxu0 %v3537
      %3551 = vmatprep.subr.bf16.mxu0 0
      %3552 = vmatpush1.bf16.msra.mxu0 %v3536
      %3553 = vmatprep.subr.bf16.mxu0 0
      %3554 = vmatpush1.bf16.msra.mxu0 %v3535
      %3555 = vmatprep.subr.bf16.mxu0 0
      %3556 = vmatpush1.bf16.msra.mxu0 %v3534
      %3557 = vmatprep.subr.bf16.mxu0 0
      %3558 = vmatpush1.bf16.msra.mxu0 %v3533
      %3559 = vmatprep.subr.bf16.mxu0 0
      %3560 = vmatpush1.bf16.msra.mxu0 %v3532
      %3561 = vmatprep.subr.bf16.mxu0 0
      %3562 = vmatpush1.bf16.msra.mxu0 %v3531
      %3563 = vmatprep.subr.bf16.mxu0 0
      %3564 = vmatpush2.bf16.msra.mxu0 0
      %3565 = vmatprep.subr.bf16.mxu0 0
      %3566 = vmatpush2.bf16.msra.mxu0 0
      %3567 = vmatprep.subr.bf16.mxu0 0
      %3568 = vmatpush2.bf16.msra.mxu0 0
      %3569 = vmatprep.subr.bf16.mxu0 0
      %3570 = vmatpush2.bf16.msra.mxu0 0
      %3571 = vmatprep.subr.bf16.mxu0 0
      %3572 = vmatpush2.bf16.msra.mxu0 0
      %3573 = vmatprep.subr.bf16.mxu0 0
      %3574 = vmatpush2.bf16.msra.mxu0 0
      %3575 = vmatprep.subr.bf16.mxu0 0
      %3576 = vmatpush2.bf16.msra.mxu0 0
      %3577 = vmatprep.subr.bf16.mxu0 0
      %3578 = vmatpush2.bf16.msra.mxu0 0
      %3579 = vmatprep.mubr.bf16.mxu0 0
      %3580 = vmatmul.mubr.bf16.gmra.mxu0 %v2696
      %v3581 = vpop.f32.mrf.mxu0
      %v3582 = vadd.f32 %v3230, %v3581
      %v3583 = vpop.f32.mrf.mxu0
      %v3584 = vpop.f32.mrf.mxu0
      %v3585 = vpop.f32.mrf.mxu0
      %3586 = vdwg.mxu0
      %s3587 = scalar_lea.vmem %s8, 512
      %v3588 = vld [vmem:[%s3587] sm:$0xf]
      %v3589 = vld [vmem:[%s3587 + $0x4] sm:$0xf]
      %v3590 = vld [vmem:[%s3587 + $0x8] sm:$0xf]
      %v3591 = vld [vmem:[%s3587 + $0xc] sm:$0xf]
      %v3592 = vld [vmem:[%s3587 + $0x10] sm:$0xf]
      %v3593 = vld [vmem:[%s3587 + $0x14] sm:$0xf]
      %v3594 = vld [vmem:[%s3587 + $0x18] sm:$0xf]
      %v3595 = vld [vmem:[%s3587 + $0x1c] sm:$0xf]
      %v3596 = vld [vmem:[%s3587 + $0x20] sm:$0xf]
      %v3597 = vld [vmem:[%s3587 + $0x24] sm:$0xf]
      %v3598 = vld [vmem:[%s3587 + $0x28] sm:$0xf]
      %v3599 = vld [vmem:[%s3587 + $0x2c] sm:$0xf]
      %v3600 = vld [vmem:[%s3587 + $0x30] sm:$0xf]
      %v3601 = vld [vmem:[%s3587 + $0x34] sm:$0xf]
      %v3602 = vld [vmem:[%s3587 + $0x38] sm:$0xf]
      %v3603 = vld [vmem:[%s3587 + $0x3c] sm:$0xf]
      %v3604 = vld [vmem:[%s3587 + $0x40] sm:$0xf]
      %v3605 = vld [vmem:[%s3587 + $0x44] sm:$0xf]
      %v3606 = vld [vmem:[%s3587 + $0x48] sm:$0xf]
      %v3607 = vld [vmem:[%s3587 + $0x4c] sm:$0xf]
      %v3608 = vld [vmem:[%s3587 + $0x50] sm:$0xf]
      %v3609 = vld [vmem:[%s3587 + $0x54] sm:$0xf]
      %v3610 = vld [vmem:[%s3587 + $0x58] sm:$0xf]
      %v3611 = vld [vmem:[%s3587 + $0x5c] sm:$0xf]
      %v3612 = vld [vmem:[%s3587 + $0x60] sm:$0xf]
      %v3613 = vld [vmem:[%s3587 + $0x64] sm:$0xf]
      %v3614 = vld [vmem:[%s3587 + $0x68] sm:$0xf]
      %v3615 = vld [vmem:[%s3587 + $0x6c] sm:$0xf]
      %v3616 = vld [vmem:[%s3587 + $0x70] sm:$0xf]
      %v3617 = vld [vmem:[%s3587 + $0x74] sm:$0xf]
      %v3618 = vld [vmem:[%s3587 + $0x78] sm:$0xf]
      %v3619 = vld [vmem:[%s3587 + $0x7c] sm:$0xf]
      %v3620 = vld [vmem:[%s3587 + $0x80] sm:$0xf]
      %v3621 = vld [vmem:[%s3587 + $0x84] sm:$0xf]
      %v3622 = vld [vmem:[%s3587 + $0x88] sm:$0xf]
      %v3623 = vld [vmem:[%s3587 + $0x8c] sm:$0xf]
      %v3624 = vld [vmem:[%s3587 + $0x90] sm:$0xf]
      %v3625 = vld [vmem:[%s3587 + $0x94] sm:$0xf]
      %v3626 = vld [vmem:[%s3587 + $0x98] sm:$0xf]
      %v3627 = vld [vmem:[%s3587 + $0x9c] sm:$0xf]
      %v3628 = vld [vmem:[%s3587 + $0xa0] sm:$0xf]
      %v3629 = vld [vmem:[%s3587 + $0xa4] sm:$0xf]
      %v3630 = vld [vmem:[%s3587 + $0xa8] sm:$0xf]
      %v3631 = vld [vmem:[%s3587 + $0xac] sm:$0xf]
      %v3632 = vld [vmem:[%s3587 + $0xb0] sm:$0xf]
      %v3633 = vld [vmem:[%s3587 + $0xb4] sm:$0xf]
      %v3634 = vld [vmem:[%s3587 + $0xb8] sm:$0xf]
      %v3635 = vld [vmem:[%s3587 + $0xbc] sm:$0xf]
      %v3636 = vld [vmem:[%s3587 + $0xc0] sm:$0xf]
      %v3637 = vld [vmem:[%s3587 + $0xc4] sm:$0xf]
      %v3638 = vld [vmem:[%s3587 + $0xc8] sm:$0xf]
      %v3639 = vld [vmem:[%s3587 + $0xcc] sm:$0xf]
      %v3640 = vld [vmem:[%s3587 + $0xd0] sm:$0xf]
      %v3641 = vld [vmem:[%s3587 + $0xd4] sm:$0xf]
      %v3642 = vld [vmem:[%s3587 + $0xd8] sm:$0xf]
      %v3643 = vld [vmem:[%s3587 + $0xdc] sm:$0xf]
      %v3644 = vld [vmem:[%s3587 + $0xe0] sm:$0xf]
      %v3645 = vld [vmem:[%s3587 + $0xe4] sm:$0xf]
      %v3646 = vld [vmem:[%s3587 + $0xe8] sm:$0xf]
      %v3647 = vld [vmem:[%s3587 + $0xec] sm:$0xf]
      %v3648 = vld [vmem:[%s3587 + $0xf0] sm:$0xf]
      %v3649 = vld [vmem:[%s3587 + $0xf4] sm:$0xf]
      %v3650 = vld [vmem:[%s3587 + $0xf8] sm:$0xf]
      %v3651 = vld [vmem:[%s3587 + $0xfc] sm:$0xf]
      %s3652 = scalar_lea.vmem %s9, 8
      %v3653 = vld [vmem:[%s3652] sm:$0x1]
      %v3654 = vld [vmem:[%s3652 + $0x1] sm:$0x1]
      %v3655 = vld [vmem:[%s3652 + $0x2] sm:$0x1]
      %v3656 = vld [vmem:[%s3652 + $0x3] sm:$0x1]
      %v3661 = vlaneseq
      %v3662 = vshrl.u32 %v3661, 7
      %v3663 = vsub.s32 0, %v3662
      %v3664 = vrot.slane %v3653, %v3663
      %v3665 = vlaneseq
      %v3666 = vshrl.u32 %v3665, 7
      %v3667 = vsub.s32 0, %v3666
      %v3668 = vrot.slane %v3654, %v3667
      %v3669 = vlaneseq
      %v3670 = vshrl.u32 %v3669, 7
      %v3671 = vsub.s32 0, %v3670
      %v3672 = vrot.slane %v3655, %v3671
      %v3673 = vlaneseq
      %v3674 = vshrl.u32 %v3673, 7
      %v3675 = vsub.s32 0, %v3674
      %v3676 = vrot.slane %v3656, %v3675
      %v3697 = vunpack.c.l.b16 %v3588
      %v3698 = vunpack.c.l.b16 %v3589
      %v3699 = vunpack.c.l.b16 %v3590
      %v3700 = vunpack.c.l.b16 %v3591
      %v3701 = vunpack.c.l.b16 %v3592
      %v3702 = vunpack.c.l.b16 %v3593
      %v3703 = vunpack.c.l.b16 %v3594
      %v3704 = vunpack.c.l.b16 %v3595
      %v3705 = vunpack.c.l.b16 %v3596
      %v3706 = vunpack.c.l.b16 %v3597
      %v3707 = vunpack.c.l.b16 %v3598
      %v3708 = vunpack.c.l.b16 %v3599
      %v3709 = vunpack.c.l.b16 %v3600
      %v3710 = vunpack.c.l.b16 %v3601
      %v3711 = vunpack.c.l.b16 %v3602
      %v3712 = vunpack.c.l.b16 %v3603
      %v3713 = vpack.c.b16 %v3698, %v3697
      %v3714 = vpack.c.b16 %v3700, %v3699
      %v3715 = vpack.c.b16 %v3702, %v3701
      %v3716 = vpack.c.b16 %v3704, %v3703
      %v3717 = vpack.c.b16 %v3706, %v3705
      %v3718 = vpack.c.b16 %v3708, %v3707
      %v3719 = vpack.c.b16 %v3710, %v3709
      %v3720 = vpack.c.b16 %v3712, %v3711
      %3729 = vmatprep.subr.bf16.mxu0 0
      %3730 = vmatpush1.bf16.msra.mxu0 %v3720
      %3731 = vmatprep.subr.bf16.mxu0 0
      %3732 = vmatpush1.bf16.msra.mxu0 %v3719
      %3733 = vmatprep.subr.bf16.mxu0 0
      %3734 = vmatpush1.bf16.msra.mxu0 %v3718
      %3735 = vmatprep.subr.bf16.mxu0 0
      %3736 = vmatpush1.bf16.msra.mxu0 %v3717
      %3737 = vmatprep.subr.bf16.mxu0 0
      %3738 = vmatpush1.bf16.msra.mxu0 %v3716
      %3739 = vmatprep.subr.bf16.mxu0 0
      %3740 = vmatpush1.bf16.msra.mxu0 %v3715
      %3741 = vmatprep.subr.bf16.mxu0 0
      %3742 = vmatpush1.bf16.msra.mxu0 %v3714
      %3743 = vmatprep.subr.bf16.mxu0 0
      %3744 = vmatpush1.bf16.msra.mxu0 %v3713
      %3745 = vmatprep.subr.bf16.mxu0 0
      %3746 = vmatpush2.bf16.msra.mxu0 0
      %3747 = vmatprep.subr.bf16.mxu0 0
      %3748 = vmatpush2.bf16.msra.mxu0 0
      %3749 = vmatprep.subr.bf16.mxu0 0
      %3750 = vmatpush2.bf16.msra.mxu0 0
      %3751 = vmatprep.subr.bf16.mxu0 0
      %3752 = vmatpush2.bf16.msra.mxu0 0
      %3753 = vmatprep.subr.bf16.mxu0 0
      %3754 = vmatpush2.bf16.msra.mxu0 0
      %3755 = vmatprep.subr.bf16.mxu0 0
      %3756 = vmatpush2.bf16.msra.mxu0 0
      %3757 = vmatprep.subr.bf16.mxu0 0
      %3758 = vmatpush2.bf16.msra.mxu0 0
      %3759 = vmatprep.subr.bf16.mxu0 0
      %3760 = vmatpush2.bf16.msra.mxu0 0
      %3761 = vmatprep.mubr.bf16.mxu0 0
      %3762 = vmatmul.mubr.bf16.gmra.mxu0 %v2696
      %v3763 = vpop.f32.mrf.mxu0
      %v3764 = vadd.f32 %v3664, %v3763
      %v3765 = vpop.f32.mrf.mxu0
      %v3766 = vpop.f32.mrf.mxu0
      %v3767 = vpop.f32.mrf.mxu0
      %3768 = vdwg.mxu0
      %v3785 = vunpack.c.l.b16 %v3604
      %v3786 = vunpack.c.l.b16 %v3605
      %v3787 = vunpack.c.l.b16 %v3606
      %v3788 = vunpack.c.l.b16 %v3607
      %v3789 = vunpack.c.l.b16 %v3608
      %v3790 = vunpack.c.l.b16 %v3609
      %v3791 = vunpack.c.l.b16 %v3610
      %v3792 = vunpack.c.l.b16 %v3611
      %v3793 = vunpack.c.l.b16 %v3612
      %v3794 = vunpack.c.l.b16 %v3613
      %v3795 = vunpack.c.l.b16 %v3614
      %v3796 = vunpack.c.l.b16 %v3615
      %v3797 = vunpack.c.l.b16 %v3616
      %v3798 = vunpack.c.l.b16 %v3617
      %v3799 = vunpack.c.l.b16 %v3618
      %v3800 = vunpack.c.l.b16 %v3619
      %v3801 = vpack.c.b16 %v3786, %v3785
      %v3802 = vpack.c.b16 %v3788, %v3787
      %v3803 = vpack.c.b16 %v3790, %v3789
      %v3804 = vpack.c.b16 %v3792, %v3791
      %v3805 = vpack.c.b16 %v3794, %v3793
      %v3806 = vpack.c.b16 %v3796, %v3795
      %v3807 = vpack.c.b16 %v3798, %v3797
      %v3808 = vpack.c.b16 %v3800, %v3799
      %3817 = vmatprep.subr.bf16.mxu0 0
      %3818 = vmatpush1.bf16.msra.mxu0 %v3808
      %3819 = vmatprep.subr.bf16.mxu0 0
      %3820 = vmatpush1.bf16.msra.mxu0 %v3807
      %3821 = vmatprep.subr.bf16.mxu0 0
      %3822 = vmatpush1.bf16.msra.mxu0 %v3806
      %3823 = vmatprep.subr.bf16.mxu0 0
      %3824 = vmatpush1.bf16.msra.mxu0 %v3805
      %3825 = vmatprep.subr.bf16.mxu0 0
      %3826 = vmatpush1.bf16.msra.mxu0 %v3804
      %3827 = vmatprep.subr.bf16.mxu0 0
      %3828 = vmatpush1.bf16.msra.mxu0 %v3803
      %3829 = vmatprep.subr.bf16.mxu0 0
      %3830 = vmatpush1.bf16.msra.mxu0 %v3802
      %3831 = vmatprep.subr.bf16.mxu0 0
      %3832 = vmatpush1.bf16.msra.mxu0 %v3801
      %3833 = vmatprep.subr.bf16.mxu0 0
      %3834 = vmatpush2.bf16.msra.mxu0 0
      %3835 = vmatprep.subr.bf16.mxu0 0
      %3836 = vmatpush2.bf16.msra.mxu0 0
      %3837 = vmatprep.subr.bf16.mxu0 0
      %3838 = vmatpush2.bf16.msra.mxu0 0
      %3839 = vmatprep.subr.bf16.mxu0 0
      %3840 = vmatpush2.bf16.msra.mxu0 0
      %3841 = vmatprep.subr.bf16.mxu0 0
      %3842 = vmatpush2.bf16.msra.mxu0 0
      %3843 = vmatprep.subr.bf16.mxu0 0
      %3844 = vmatpush2.bf16.msra.mxu0 0
      %3845 = vmatprep.subr.bf16.mxu0 0
      %3846 = vmatpush2.bf16.msra.mxu0 0
      %3847 = vmatprep.subr.bf16.mxu0 0
      %3848 = vmatpush2.bf16.msra.mxu0 0
      %3849 = vmatprep.mubr.bf16.mxu0 0
      %3850 = vmatmul.mubr.bf16.gmra.mxu0 %v2696
      %v3851 = vpop.f32.mrf.mxu0
      %v3852 = vadd.f32 %v3668, %v3851
      %v3853 = vpop.f32.mrf.mxu0
      %v3854 = vpop.f32.mrf.mxu0
      %v3855 = vpop.f32.mrf.mxu0
      %3856 = vdwg.mxu0
      %v3873 = vunpack.c.l.b16 %v3620
      %v3874 = vunpack.c.l.b16 %v3621
      %v3875 = vunpack.c.l.b16 %v3622
      %v3876 = vunpack.c.l.b16 %v3623
      %v3877 = vunpack.c.l.b16 %v3624
      %v3878 = vunpack.c.l.b16 %v3625
      %v3879 = vunpack.c.l.b16 %v3626
      %v3880 = vunpack.c.l.b16 %v3627
      %v3881 = vunpack.c.l.b16 %v3628
      %v3882 = vunpack.c.l.b16 %v3629
      %v3883 = vunpack.c.l.b16 %v3630
      %v3884 = vunpack.c.l.b16 %v3631
      %v3885 = vunpack.c.l.b16 %v3632
      %v3886 = vunpack.c.l.b16 %v3633
      %v3887 = vunpack.c.l.b16 %v3634
      %v3888 = vunpack.c.l.b16 %v3635
      %v3889 = vpack.c.b16 %v3874, %v3873
      %v3890 = vpack.c.b16 %v3876, %v3875
      %v3891 = vpack.c.b16 %v3878, %v3877
      %v3892 = vpack.c.b16 %v3880, %v3879
      %v3893 = vpack.c.b16 %v3882, %v3881
      %v3894 = vpack.c.b16 %v3884, %v3883
      %v3895 = vpack.c.b16 %v3886, %v3885
      %v3896 = vpack.c.b16 %v3888, %v3887
      %3905 = vmatprep.subr.bf16.mxu0 0
      %3906 = vmatpush1.bf16.msra.mxu0 %v3896
      %3907 = vmatprep.subr.bf16.mxu0 0
      %3908 = vmatpush1.bf16.msra.mxu0 %v3895
      %3909 = vmatprep.subr.bf16.mxu0 0
      %3910 = vmatpush1.bf16.msra.mxu0 %v3894
      %3911 = vmatprep.subr.bf16.mxu0 0
      %3912 = vmatpush1.bf16.msra.mxu0 %v3893
      %3913 = vmatprep.subr.bf16.mxu0 0
      %3914 = vmatpush1.bf16.msra.mxu0 %v3892
      %3915 = vmatprep.subr.bf16.mxu0 0
      %3916 = vmatpush1.bf16.msra.mxu0 %v3891
      %3917 = vmatprep.subr.bf16.mxu0 0
      %3918 = vmatpush1.bf16.msra.mxu0 %v3890
      %3919 = vmatprep.subr.bf16.mxu0 0
      %3920 = vmatpush1.bf16.msra.mxu0 %v3889
      %3921 = vmatprep.subr.bf16.mxu0 0
      %3922 = vmatpush2.bf16.msra.mxu0 0
      %3923 = vmatprep.subr.bf16.mxu0 0
      %3924 = vmatpush2.bf16.msra.mxu0 0
      %3925 = vmatprep.subr.bf16.mxu0 0
      %3926 = vmatpush2.bf16.msra.mxu0 0
      %3927 = vmatprep.subr.bf16.mxu0 0
      %3928 = vmatpush2.bf16.msra.mxu0 0
      %3929 = vmatprep.subr.bf16.mxu0 0
      %3930 = vmatpush2.bf16.msra.mxu0 0
      %3931 = vmatprep.subr.bf16.mxu0 0
      %3932 = vmatpush2.bf16.msra.mxu0 0
      %3933 = vmatprep.subr.bf16.mxu0 0
      %3934 = vmatpush2.bf16.msra.mxu0 0
      %3935 = vmatprep.subr.bf16.mxu0 0
      %3936 = vmatpush2.bf16.msra.mxu0 0
      %3937 = vmatprep.mubr.bf16.mxu0 0
      %3938 = vmatmul.mubr.bf16.gmra.mxu0 %v2696
      %v3939 = vpop.f32.mrf.mxu0
      %v3940 = vadd.f32 %v3672, %v3939
      %v3941 = vpop.f32.mrf.mxu0
      %v3942 = vpop.f32.mrf.mxu0
      %v3943 = vpop.f32.mrf.mxu0
      %3944 = vdwg.mxu0
      %v3961 = vunpack.c.l.b16 %v3636
      %v3962 = vunpack.c.l.b16 %v3637
      %v3963 = vunpack.c.l.b16 %v3638
      %v3964 = vunpack.c.l.b16 %v3639
      %v3965 = vunpack.c.l.b16 %v3640
      %v3966 = vunpack.c.l.b16 %v3641
      %v3967 = vunpack.c.l.b16 %v3642
      %v3968 = vunpack.c.l.b16 %v3643
      %v3969 = vunpack.c.l.b16 %v3644
      %v3970 = vunpack.c.l.b16 %v3645
      %v3971 = vunpack.c.l.b16 %v3646
      %v3972 = vunpack.c.l.b16 %v3647
      %v3973 = vunpack.c.l.b16 %v3648
      %v3974 = vunpack.c.l.b16 %v3649
      %v3975 = vunpack.c.l.b16 %v3650
      %v3976 = vunpack.c.l.b16 %v3651
      %v3977 = vpack.c.b16 %v3962, %v3961
      %v3978 = vpack.c.b16 %v3964, %v3963
      %v3979 = vpack.c.b16 %v3966, %v3965
      %v3980 = vpack.c.b16 %v3968, %v3967
      %v3981 = vpack.c.b16 %v3970, %v3969
      %v3982 = vpack.c.b16 %v3972, %v3971
      %v3983 = vpack.c.b16 %v3974, %v3973
      %v3984 = vpack.c.b16 %v3976, %v3975
      %3993 = vmatprep.subr.bf16.mxu0 0
      %3994 = vmatpush1.bf16.msra.mxu0 %v3984
      %3995 = vmatprep.subr.bf16.mxu0 0
      %3996 = vmatpush1.bf16.msra.mxu0 %v3983
      %3997 = vmatprep.subr.bf16.mxu0 0
      %3998 = vmatpush1.bf16.msra.mxu0 %v3982
      %3999 = vmatprep.subr.bf16.mxu0 0
      %4000 = vmatpush1.bf16.msra.mxu0 %v3981
      %4001 = vmatprep.subr.bf16.mxu0 0
      %4002 = vmatpush1.bf16.msra.mxu0 %v3980
      %4003 = vmatprep.subr.bf16.mxu0 0
      %4004 = vmatpush1.bf16.msra.mxu0 %v3979
      %4005 = vmatprep.subr.bf16.mxu0 0
      %4006 = vmatpush1.bf16.msra.mxu0 %v3978
      %4007 = vmatprep.subr.bf16.mxu0 0
      %4008 = vmatpush1.bf16.msra.mxu0 %v3977
      %4009 = vmatprep.subr.bf16.mxu0 0
      %4010 = vmatpush2.bf16.msra.mxu0 0
      %4011 = vmatprep.subr.bf16.mxu0 0
      %4012 = vmatpush2.bf16.msra.mxu0 0
      %4013 = vmatprep.subr.bf16.mxu0 0
      %4014 = vmatpush2.bf16.msra.mxu0 0
      %4015 = vmatprep.subr.bf16.mxu0 0
      %4016 = vmatpush2.bf16.msra.mxu0 0
      %4017 = vmatprep.subr.bf16.mxu0 0
      %4018 = vmatpush2.bf16.msra.mxu0 0
      %4019 = vmatprep.subr.bf16.mxu0 0
      %4020 = vmatpush2.bf16.msra.mxu0 0
      %4021 = vmatprep.subr.bf16.mxu0 0
      %4022 = vmatpush2.bf16.msra.mxu0 0
      %4023 = vmatprep.subr.bf16.mxu0 0
      %4024 = vmatpush2.bf16.msra.mxu0 0
      %4025 = vmatprep.mubr.bf16.mxu0 0
      %4026 = vmatmul.mubr.bf16.gmra.mxu0 %v2696
      %v4027 = vpop.f32.mrf.mxu0
      %v4028 = vadd.f32 %v3676, %v4027
      %v4029 = vpop.f32.mrf.mxu0
      %v4030 = vpop.f32.mrf.mxu0
      %v4031 = vpop.f32.mrf.mxu0
      %4032 = vdwg.mxu0
      %v4033 = vmul.f32 %v2872, 0.17677669
      %v4034 = vmul.f32 %v2960, 0.17677669
      %v4035 = vmul.f32 %v3048, 0.17677669
      %v4036 = vmul.f32 %v3136, 0.17677669
      %v4037 = vpack.c.bf16 %v4033, %v4033
      %v4038 = vpack.c.bf16 %v4034, %v4034
      %v4039 = vpack.c.bf16 %v4035, %v4035
      %v4040 = vpack.c.bf16 %v4036, %v4036
      %v4041 = vpack.c.bf16 %v3318, %v3318
      %v4042 = vpack.c.bf16 %v3406, %v3406
      %v4043 = vpack.c.bf16 %v3494, %v3494
      %v4044 = vpack.c.bf16 %v3582, %v3582
      %v4046 = vsel %vm1993, %v4037, 0
      %v4049 = vsel %vm1993, %v4041, 0
      %4051 = vmatprep.subr.bf16.mxu0 0
      %4052 = vmatpush1.bf16.xpose.msra.mxu0 0
      %4053 = vmatprep.subr.bf16.mxu0 0
      %4054 = vmatpush1.bf16.xpose.msra.mxu0 0
      %4055 = vmatprep.subr.bf16.mxu0 0
      %4056 = vmatpush1.bf16.xpose.msra.mxu0 0
      %4057 = vmatprep.subr.bf16.mxu0 0
      %4058 = vmatpush1.bf16.xpose.msra.mxu0 0
      %4059 = vmatprep.subr.bf16.mxu0 0
      %4060 = vmatpush1.bf16.xpose.msra.mxu0 0
      %4061 = vmatprep.subr.bf16.mxu0 0
      %4062 = vmatpush1.bf16.xpose.msra.mxu0 0
      %4063 = vmatprep.subr.bf16.mxu0 0
      %4064 = vmatpush1.bf16.xpose.msra.mxu0 0
      %4065 = vmatprep.subr.bf16.mxu0 0
      %4066 = vmatpush1.bf16.xpose.msra.mxu0 %v4049
      %4067 = vmatprep.subr.bf16.mxu0 0
      %4068 = vmatpush2.bf16.xpose.msra.mxu0 0
      %4069 = vmatprep.subr.bf16.mxu0 0
      %4070 = vmatpush2.bf16.xpose.msra.mxu0 0
      %4071 = vmatprep.subr.bf16.mxu0 0
      %4072 = vmatpush2.bf16.xpose.msra.mxu0 0
      %4073 = vmatprep.subr.bf16.mxu0 0
      %4074 = vmatpush2.bf16.xpose.msra.mxu0 0
      %4075 = vmatprep.subr.bf16.mxu0 0
      %4076 = vmatpush2.bf16.xpose.msra.mxu0 0
      %4077 = vmatprep.subr.bf16.mxu0 0
      %4078 = vmatpush2.bf16.xpose.msra.mxu0 0
      %4079 = vmatprep.subr.bf16.mxu0 0
      %4080 = vmatpush2.bf16.xpose.msra.mxu0 0
      %4081 = vmatprep.subr.bf16.mxu0 0
      %4082 = vmatpush2.bf16.xpose.msra.mxu0 0
      %4083 = vmatprep.mubr.bf16.mxu0 0
      %4084 = vmatmul.mubr.bf16.gmra.mxu0 %v4046
      %v4085 = vpop.f32.mrf.mxu0
      %v4086 = vadd.f32 0.0, %v4085
      %v4087 = vpop.f32.mrf.mxu0
      %v4088 = vpop.f32.mrf.mxu0
      %v4089 = vpop.f32.mrf.mxu0
      %4090 = vdwg.mxu0
      %v4092 = vsel %vm1993, %v4038, 0
      %v4095 = vsel %vm1993, %v4042, 0
      %4097 = vmatprep.subr.bf16.mxu0 0
      %4098 = vmatpush1.bf16.xpose.msra.mxu0 0
      %4099 = vmatprep.subr.bf16.mxu0 0
      %4100 = vmatpush1.bf16.xpose.msra.mxu0 0
      %4101 = vmatprep.subr.bf16.mxu0 0
      %4102 = vmatpush1.bf16.xpose.msra.mxu0 0
      %4103 = vmatprep.subr.bf16.mxu0 0
      %4104 = vmatpush1.bf16.xpose.msra.mxu0 0
      %4105 = vmatprep.subr.bf16.mxu0 0
      %4106 = vmatpush1.bf16.xpose.msra.mxu0 0
      %4107 = vmatprep.subr.bf16.mxu0 0
      %4108 = vmatpush1.bf16.xpose.msra.mxu0 0
      %4109 = vmatprep.subr.bf16.mxu0 0
      %4110 = vmatpush1.bf16.xpose.msra.mxu0 0
      %4111 = vmatprep.subr.bf16.mxu0 0
      %4112 = vmatpush1.bf16.xpose.msra.mxu0 %v4095
      %4113 = vmatprep.subr.bf16.mxu0 0
      %4114 = vmatpush2.bf16.xpose.msra.mxu0 0
      %4115 = vmatprep.subr.bf16.mxu0 0
      %4116 = vmatpush2.bf16.xpose.msra.mxu0 0
      %4117 = vmatprep.subr.bf16.mxu0 0
      %4118 = vmatpush2.bf16.xpose.msra.mxu0 0
      %4119 = vmatprep.subr.bf16.mxu0 0
      %4120 = vmatpush2.bf16.xpose.msra.mxu0 0
      %4121 = vmatprep.subr.bf16.mxu0 0
      %4122 = vmatpush2.bf16.xpose.msra.mxu0 0
      %4123 = vmatprep.subr.bf16.mxu0 0
      %4124 = vmatpush2.bf16.xpose.msra.mxu0 0
      %4125 = vmatprep.subr.bf16.mxu0 0
      %4126 = vmatpush2.bf16.xpose.msra.mxu0 0
      %4127 = vmatprep.subr.bf16.mxu0 0
      %4128 = vmatpush2.bf16.xpose.msra.mxu0 0
      %4129 = vmatprep.mubr.bf16.mxu0 0
      %4130 = vmatmul.mubr.bf16.gmra.mxu0 %v4092
      %v4131 = vpop.f32.mrf.mxu0
      %v4132 = vadd.f32 0.0, %v4131
      %v4133 = vpop.f32.mrf.mxu0
      %v4134 = vpop.f32.mrf.mxu0
      %v4135 = vpop.f32.mrf.mxu0
      %4136 = vdwg.mxu0
      %v4138 = vsel %vm1993, %v4039, 0
      %v4141 = vsel %vm1993, %v4043, 0
      %4143 = vmatprep.subr.bf16.mxu0 0
      %4144 = vmatpush1.bf16.xpose.msra.mxu0 0
      %4145 = vmatprep.subr.bf16.mxu0 0
      %4146 = vmatpush1.bf16.xpose.msra.mxu0 0
      %4147 = vmatprep.subr.bf16.mxu0 0
      %4148 = vmatpush1.bf16.xpose.msra.mxu0 0
      %4149 = vmatprep.subr.bf16.mxu0 0
      %4150 = vmatpush1.bf16.xpose.msra.mxu0 0
      %4151 = vmatprep.subr.bf16.mxu0 0
      %4152 = vmatpush1.bf16.xpose.msra.mxu0 0
      %4153 = vmatprep.subr.bf16.mxu0 0
      %4154 = vmatpush1.bf16.xpose.msra.mxu0 0
      %4155 = vmatprep.subr.bf16.mxu0 0
      %4156 = vmatpush1.bf16.xpose.msra.mxu0 0
      %4157 = vmatprep.subr.bf16.mxu0 0
      %4158 = vmatpush1.bf16.xpose.msra.mxu0 %v4141
      %4159 = vmatprep.subr.bf16.mxu0 0
      %4160 = vmatpush2.bf16.xpose.msra.mxu0 0
      %4161 = vmatprep.subr.bf16.mxu0 0
      %4162 = vmatpush2.bf16.xpose.msra.mxu0 0
      %4163 = vmatprep.subr.bf16.mxu0 0
      %4164 = vmatpush2.bf16.xpose.msra.mxu0 0
      %4165 = vmatprep.subr.bf16.mxu0 0
      %4166 = vmatpush2.bf16.xpose.msra.mxu0 0
      %4167 = vmatprep.subr.bf16.mxu0 0
      %4168 = vmatpush2.bf16.xpose.msra.mxu0 0
      %4169 = vmatprep.subr.bf16.mxu0 0
      %4170 = vmatpush2.bf16.xpose.msra.mxu0 0
      %4171 = vmatprep.subr.bf16.mxu0 0
      %4172 = vmatpush2.bf16.xpose.msra.mxu0 0
      %4173 = vmatprep.subr.bf16.mxu0 0
      %4174 = vmatpush2.bf16.xpose.msra.mxu0 0
      %4175 = vmatprep.mubr.bf16.mxu0 0
      %4176 = vmatmul.mubr.bf16.gmra.mxu0 %v4138
      %v4177 = vpop.f32.mrf.mxu0
      %v4178 = vadd.f32 0.0, %v4177
      %v4179 = vpop.f32.mrf.mxu0
      %v4180 = vpop.f32.mrf.mxu0
      %v4181 = vpop.f32.mrf.mxu0
      %4182 = vdwg.mxu0
      %v4184 = vsel %vm1993, %v4040, 0
      %v4187 = vsel %vm1993, %v4044, 0
      %4189 = vmatprep.subr.bf16.mxu0 0
      %4190 = vmatpush1.bf16.xpose.msra.mxu0 0
      %4191 = vmatprep.subr.bf16.mxu0 0
      %4192 = vmatpush1.bf16.xpose.msra.mxu0 0
      %4193 = vmatprep.subr.bf16.mxu0 0
      %4194 = vmatpush1.bf16.xpose.msra.mxu0 0
      %4195 = vmatprep.subr.bf16.mxu0 0
      %4196 = vmatpush1.bf16.xpose.msra.mxu0 0
      %4197 = vmatprep.subr.bf16.mxu0 0
      %4198 = vmatpush1.bf16.xpose.msra.mxu0 0
      %4199 = vmatprep.subr.bf16.mxu0 0
      %4200 = vmatpush1.bf16.xpose.msra.mxu0 0
      %4201 = vmatprep.subr.bf16.mxu0 0
      %4202 = vmatpush1.bf16.xpose.msra.mxu0 0
      %4203 = vmatprep.subr.bf16.mxu0 0
      %4204 = vmatpush1.bf16.xpose.msra.mxu0 %v4187
      %4205 = vmatprep.subr.bf16.mxu0 0
      %4206 = vmatpush2.bf16.xpose.msra.mxu0 0
      %4207 = vmatprep.subr.bf16.mxu0 0
      %4208 = vmatpush2.bf16.xpose.msra.mxu0 0
      %4209 = vmatprep.subr.bf16.mxu0 0
      %4210 = vmatpush2.bf16.xpose.msra.mxu0 0
      %4211 = vmatprep.subr.bf16.mxu0 0
      %4212 = vmatpush2.bf16.xpose.msra.mxu0 0
      %4213 = vmatprep.subr.bf16.mxu0 0
      %4214 = vmatpush2.bf16.xpose.msra.mxu0 0
      %4215 = vmatprep.subr.bf16.mxu0 0
      %4216 = vmatpush2.bf16.xpose.msra.mxu0 0
      %4217 = vmatprep.subr.bf16.mxu0 0
      %4218 = vmatpush2.bf16.xpose.msra.mxu0 0
      %4219 = vmatprep.subr.bf16.mxu0 0
      %4220 = vmatpush2.bf16.xpose.msra.mxu0 0
      %4221 = vmatprep.mubr.bf16.mxu0 0
      %4222 = vmatmul.mubr.bf16.gmra.mxu0 %v4184
      %v4223 = vpop.f32.mrf.mxu0
      %v4224 = vadd.f32 0.0, %v4223
      %v4225 = vpop.f32.mrf.mxu0
      %v4226 = vpop.f32.mrf.mxu0
      %v4227 = vpop.f32.mrf.mxu0
      %4228 = vdwg.mxu0
      %v4229 = vsel %vm2178, %v4086, -inf
      %4230 = vmax.xlane.f32.xlu0 %v4229
      %v4231 = vpop.xlane.xlu0 %4230
      %v4232 = vsel %vm2178, %v4132, -inf
      %4233 = vmax.xlane.f32.xlu0 %v4232
      %v4234 = vpop.xlane.xlu0 %4233
      %v4235 = vsel %vm2178, %v4178, -inf
      %4236 = vmax.xlane.f32.xlu0 %v4235
      %v4237 = vpop.xlane.xlu0 %4236
      %v4238 = vsel %vm2178, %v4224, -inf
      %4239 = vmax.xlane.f32.xlu0 %v4238
      %v4240 = vpop.xlane.xlu0 %4239
      %v4241 = vsub.f32 %v4086, %v4231
      %v4242 = vsub.f32 %v4132, %v4234
      %v4243 = vsub.f32 %v4178, %v4237
      %v4244 = vsub.f32 %v4224, %v4240
      %v4245 = vmul.f32 %v4241, 1.442695
      %v4246 = vpow.pop %v4245
      %v4247 = vmul.f32 %v4242, 1.442695
      %v4248 = vpow.pop %v4247
      %v4249 = vmul.f32 %v4243, 1.442695
      %v4250 = vpow.pop %v4249
      %v4251 = vmul.f32 %v4244, 1.442695
      %v4252 = vpow.pop %v4251
      %v4253 = vsel %vm2178, %v4246, 0.0
      %4254 = vadd.xlane.f32.xlu0 %v4253
      %v4255 = vpop.xlane.xlu0 %4254
      %v4256 = vsel %vm2178, %v4248, 0.0
      %4257 = vadd.xlane.f32.xlu0 %v4256
      %v4258 = vpop.xlane.xlu0 %4257
      %v4259 = vsel %vm2178, %v4250, 0.0
      %4260 = vadd.xlane.f32.xlu0 %v4259
      %v4261 = vpop.xlane.xlu0 %4260
      %v4262 = vsel %vm2178, %v4252, 0.0
      %4263 = vadd.xlane.f32.xlu0 %v4262
      %v4264 = vpop.xlane.xlu0 %4263
      %v4265 = vrcp.pop %v4255
      %v4266 = vmul.f32 %v4246, %v4265
      %v4267 = vrcp.pop %v4258
      %v4268 = vmul.f32 %v4248, %v4267
      %v4269 = vrcp.pop %v4261
      %v4270 = vmul.f32 %v4250, %v4269
      %v4271 = vrcp.pop %v4264
      %v4272 = vmul.f32 %v4252, %v4271
      %v4273 = vpack.c.bf16 %v4266, %v4266
      %v4274 = vpack.c.bf16 %v4268, %v4268
      %v4275 = vpack.c.bf16 %v4270, %v4270
      %v4276 = vpack.c.bf16 %v4272, %v4272
      %v4277 = vpack.c.bf16 %v3764, %v3764
      %v4278 = vpack.c.bf16 %v3852, %v3852
      %v4279 = vpack.c.bf16 %v3940, %v3940
      %v4280 = vpack.c.bf16 %v4028, %v4028
      %v4282 = vsel %vm2178, %v4273, 0
      %v4285 = vsel %vm2234, %v4277, 0
      %4287 = vmatprep.subr.bf16.mxu0 0
      %4288 = vmatpush1.bf16.msra.mxu0 0
      %4289 = vmatprep.subr.bf16.mxu0 0
      %4290 = vmatpush1.bf16.msra.mxu0 0
      %4291 = vmatprep.subr.bf16.mxu0 0
      %4292 = vmatpush1.bf16.msra.mxu0 0
      %4293 = vmatprep.subr.bf16.mxu0 0
      %4294 = vmatpush1.bf16.msra.mxu0 0
      %4295 = vmatprep.subr.bf16.mxu0 0
      %4296 = vmatpush1.bf16.msra.mxu0 0
      %4297 = vmatprep.subr.bf16.mxu0 0
      %4298 = vmatpush1.bf16.msra.mxu0 0
      %4299 = vmatprep.subr.bf16.mxu0 0
      %4300 = vmatpush1.bf16.msra.mxu0 0
      %4301 = vmatprep.subr.bf16.mxu0 0
      %4302 = vmatpush1.bf16.msra.mxu0 %v4285
      %4303 = vmatprep.subr.bf16.mxu0 0
      %4304 = vmatpush2.bf16.msra.mxu0 0
      %4305 = vmatprep.subr.bf16.mxu0 0
      %4306 = vmatpush2.bf16.msra.mxu0 0
      %4307 = vmatprep.subr.bf16.mxu0 0
      %4308 = vmatpush2.bf16.msra.mxu0 0
      %4309 = vmatprep.subr.bf16.mxu0 0
      %4310 = vmatpush2.bf16.msra.mxu0 0
      %4311 = vmatprep.subr.bf16.mxu0 0
      %4312 = vmatpush2.bf16.msra.mxu0 0
      %4313 = vmatprep.subr.bf16.mxu0 0
      %4314 = vmatpush2.bf16.msra.mxu0 0
      %4315 = vmatprep.subr.bf16.mxu0 0
      %4316 = vmatpush2.bf16.msra.mxu0 0
      %4317 = vmatprep.subr.bf16.mxu0 0
      %4318 = vmatpush2.bf16.msra.mxu0 0
      %4319 = vmatprep.mubr.bf16.mxu0 0
      %4320 = vmatmul.mubr.bf16.gmra.mxu0 %v4282
      %v4321 = vpop.f32.mrf.mxu0
      %v4322 = vadd.f32 0.0, %v4321
      %v4323 = vpop.f32.mrf.mxu0
      %v4324 = vpop.f32.mrf.mxu0
      %v4325 = vpop.f32.mrf.mxu0
      %4326 = vdwg.mxu0
      %v4328 = vsel %vm2178, %v4274, 0
      %v4331 = vsel %vm2234, %v4278, 0
      %4333 = vmatprep.subr.bf16.mxu0 0
      %4334 = vmatpush1.bf16.msra.mxu0 0
      %4335 = vmatprep.subr.bf16.mxu0 0
      %4336 = vmatpush1.bf16.msra.mxu0 0
      %4337 = vmatprep.subr.bf16.mxu0 0
      %4338 = vmatpush1.bf16.msra.mxu0 0
      %4339 = vmatprep.subr.bf16.mxu0 0
      %4340 = vmatpush1.bf16.msra.mxu0 0
      %4341 = vmatprep.subr.bf16.mxu0 0
      %4342 = vmatpush1.bf16.msra.mxu0 0
      %4343 = vmatprep.subr.bf16.mxu0 0
      %4344 = vmatpush1.bf16.msra.mxu0 0
      %4345 = vmatprep.subr.bf16.mxu0 0
      %4346 = vmatpush1.bf16.msra.mxu0 0
      %4347 = vmatprep.subr.bf16.mxu0 0
      %4348 = vmatpush1.bf16.msra.mxu0 %v4331
      %4349 = vmatprep.subr.bf16.mxu0 0
      %4350 = vmatpush2.bf16.msra.mxu0 0
      %4351 = vmatprep.subr.bf16.mxu0 0
      %4352 = vmatpush2.bf16.msra.mxu0 0
      %4353 = vmatprep.subr.bf16.mxu0 0
      %4354 = vmatpush2.bf16.msra.mxu0 0
      %4355 = vmatprep.subr.bf16.mxu0 0
      %4356 = vmatpush2.bf16.msra.mxu0 0
      %4357 = vmatprep.subr.bf16.mxu0 0
      %4358 = vmatpush2.bf16.msra.mxu0 0
      %4359 = vmatprep.subr.bf16.mxu0 0
      %4360 = vmatpush2.bf16.msra.mxu0 0
      %4361 = vmatprep.subr.bf16.mxu0 0
      %4362 = vmatpush2.bf16.msra.mxu0 0
      %4363 = vmatprep.subr.bf16.mxu0 0
      %4364 = vmatpush2.bf16.msra.mxu0 0
      %4365 = vmatprep.mubr.bf16.mxu0 0
      %4366 = vmatmul.mubr.bf16.gmra.mxu0 %v4328
      %v4367 = vpop.f32.mrf.mxu0
      %v4368 = vadd.f32 0.0, %v4367
      %v4369 = vpop.f32.mrf.mxu0
      %v4370 = vpop.f32.mrf.mxu0
      %v4371 = vpop.f32.mrf.mxu0
      %4372 = vdwg.mxu0
      %v4374 = vsel %vm2178, %v4275, 0
      %v4377 = vsel %vm2234, %v4279, 0
      %4379 = vmatprep.subr.bf16.mxu0 0
      %4380 = vmatpush1.bf16.msra.mxu0 0
      %4381 = vmatprep.subr.bf16.mxu0 0
      %4382 = vmatpush1.bf16.msra.mxu0 0
      %4383 = vmatprep.subr.bf16.mxu0 0
      %4384 = vmatpush1.bf16.msra.mxu0 0
      %4385 = vmatprep.subr.bf16.mxu0 0
      %4386 = vmatpush1.bf16.msra.mxu0 0
      %4387 = vmatprep.subr.bf16.mxu0 0
      %4388 = vmatpush1.bf16.msra.mxu0 0
      %4389 = vmatprep.subr.bf16.mxu0 0
      %4390 = vmatpush1.bf16.msra.mxu0 0
      %4391 = vmatprep.subr.bf16.mxu0 0
      %4392 = vmatpush1.bf16.msra.mxu0 0
      %4393 = vmatprep.subr.bf16.mxu0 0
      %4394 = vmatpush1.bf16.msra.mxu0 %v4377
      %4395 = vmatprep.subr.bf16.mxu0 0
      %4396 = vmatpush2.bf16.msra.mxu0 0
      %4397 = vmatprep.subr.bf16.mxu0 0
      %4398 = vmatpush2.bf16.msra.mxu0 0
      %4399 = vmatprep.subr.bf16.mxu0 0
      %4400 = vmatpush2.bf16.msra.mxu0 0
      %4401 = vmatprep.subr.bf16.mxu0 0
      %4402 = vmatpush2.bf16.msra.mxu0 0
      %4403 = vmatprep.subr.bf16.mxu0 0
      %4404 = vmatpush2.bf16.msra.mxu0 0
      %4405 = vmatprep.subr.bf16.mxu0 0
      %4406 = vmatpush2.bf16.msra.mxu0 0
      %4407 = vmatprep.subr.bf16.mxu0 0
      %4408 = vmatpush2.bf16.msra.mxu0 0
      %4409 = vmatprep.subr.bf16.mxu0 0
      %4410 = vmatpush2.bf16.msra.mxu0 0
      %4411 = vmatprep.mubr.bf16.mxu0 0
      %4412 = vmatmul.mubr.bf16.gmra.mxu0 %v4374
      %v4413 = vpop.f32.mrf.mxu0
      %v4414 = vadd.f32 0.0, %v4413
      %v4415 = vpop.f32.mrf.mxu0
      %v4416 = vpop.f32.mrf.mxu0
      %v4417 = vpop.f32.mrf.mxu0
      %4418 = vdwg.mxu0
      %v4420 = vsel %vm2178, %v4276, 0
      %v4423 = vsel %vm2234, %v4280, 0
      %4425 = vmatprep.subr.bf16.mxu0 0
      %4426 = vmatpush1.bf16.msra.mxu0 0
      %4427 = vmatprep.subr.bf16.mxu0 0
      %4428 = vmatpush1.bf16.msra.mxu0 0
      %4429 = vmatprep.subr.bf16.mxu0 0
      %4430 = vmatpush1.bf16.msra.mxu0 0
      %4431 = vmatprep.subr.bf16.mxu0 0
      %4432 = vmatpush1.bf16.msra.mxu0 0
      %4433 = vmatprep.subr.bf16.mxu0 0
      %4434 = vmatpush1.bf16.msra.mxu0 0
      %4435 = vmatprep.subr.bf16.mxu0 0
      %4436 = vmatpush1.bf16.msra.mxu0 0
      %4437 = vmatprep.subr.bf16.mxu0 0
      %4438 = vmatpush1.bf16.msra.mxu0 0
      %4439 = vmatprep.subr.bf16.mxu0 0
      %4440 = vmatpush1.bf16.msra.mxu0 %v4423
      %4441 = vmatprep.subr.bf16.mxu0 0
      %4442 = vmatpush2.bf16.msra.mxu0 0
      %4443 = vmatprep.subr.bf16.mxu0 0
      %4444 = vmatpush2.bf16.msra.mxu0 0
      %4445 = vmatprep.subr.bf16.mxu0 0
      %4446 = vmatpush2.bf16.msra.mxu0 0
      %4447 = vmatprep.subr.bf16.mxu0 0
      %4448 = vmatpush2.bf16.msra.mxu0 0
      %4449 = vmatprep.subr.bf16.mxu0 0
      %4450 = vmatpush2.bf16.msra.mxu0 0
      %4451 = vmatprep.subr.bf16.mxu0 0
      %4452 = vmatpush2.bf16.msra.mxu0 0
      %4453 = vmatprep.subr.bf16.mxu0 0
      %4454 = vmatpush2.bf16.msra.mxu0 0
      %4455 = vmatprep.subr.bf16.mxu0 0
      %4456 = vmatpush2.bf16.msra.mxu0 0
      %4457 = vmatprep.mubr.bf16.mxu0 0
      %4458 = vmatmul.mubr.bf16.gmra.mxu0 %v4420
      %v4459 = vpop.f32.mrf.mxu0
      %v4460 = vadd.f32 0.0, %v4459
      %v4461 = vpop.f32.mrf.mxu0
      %v4462 = vpop.f32.mrf.mxu0
      %v4463 = vpop.f32.mrf.mxu0
      %4464 = vdwg.mxu0
      %v4465 = vpack.c.bf16 %v4322, %v4322
      %v4466 = vpack.c.bf16 %v4368, %v4368
      %v4467 = vpack.c.bf16 %v4414, %v4414
      %v4468 = vpack.c.bf16 %v4460, %v4460
      %v4469 = vld [vmem:[%s10] sm:$0xf]
      %v4470 = vld [vmem:[%s10 + $0x4] sm:$0xf]
      %v4471 = vld [vmem:[%s10 + $0x8] sm:$0xf]
      %v4472 = vld [vmem:[%s10 + $0xc] sm:$0xf]
      %v4473 = vld [vmem:[%s10 + $0x10] sm:$0xf]
      %v4474 = vld [vmem:[%s10 + $0x14] sm:$0xf]
      %v4475 = vld [vmem:[%s10 + $0x18] sm:$0xf]
      %v4476 = vld [vmem:[%s10 + $0x1c] sm:$0xf]
      %v4477 = vld [vmem:[%s10 + $0x20] sm:$0xf]
      %v4478 = vld [vmem:[%s10 + $0x24] sm:$0xf]
      %v4479 = vld [vmem:[%s10 + $0x28] sm:$0xf]
      %v4480 = vld [vmem:[%s10 + $0x2c] sm:$0xf]
      %v4481 = vld [vmem:[%s10 + $0x30] sm:$0xf]
      %v4482 = vld [vmem:[%s10 + $0x34] sm:$0xf]
      %v4483 = vld [vmem:[%s10 + $0x38] sm:$0xf]
      %v4484 = vld [vmem:[%s10 + $0x3c] sm:$0xf]
      %v4489 = vunpack.c.l.b16 %v4469
      %v4490 = vunpack.c.l.b16 %v4470
      %v4491 = vunpack.c.l.b16 %v4471
      %v4492 = vunpack.c.l.b16 %v4472
      %v4493 = vpack.c.b16 %v4490, %v4489
      %v4494 = vpack.c.b16 %v4492, %v4491
      %v4498 = vsel %vm1993, %v4465, 0
      %4500 = vmatprep.subr.bf16.mxu0 0
      %4501 = vmatpush1.bf16.msra.mxu0 0
      %4502 = vmatprep.subr.bf16.mxu0 0
      %4503 = vmatpush1.bf16.msra.mxu0 0
      %4504 = vmatprep.subr.bf16.mxu0 0
      %4505 = vmatpush1.bf16.msra.mxu0 0
      %4506 = vmatprep.subr.bf16.mxu0 0
      %4507 = vmatpush1.bf16.msra.mxu0 0
      %4508 = vmatprep.subr.bf16.mxu0 0
      %4509 = vmatpush1.bf16.msra.mxu0 0
      %4510 = vmatprep.subr.bf16.mxu0 0
      %4511 = vmatpush1.bf16.msra.mxu0 0
      %4512 = vmatprep.subr.bf16.mxu0 0
      %4513 = vmatpush1.bf16.msra.mxu0 %v4494
      %4514 = vmatprep.subr.bf16.mxu0 0
      %4515 = vmatpush1.bf16.msra.mxu0 %v4493
      %4516 = vmatprep.subr.bf16.mxu0 0
      %4517 = vmatpush2.bf16.msra.mxu0 0
      %4518 = vmatprep.subr.bf16.mxu0 0
      %4519 = vmatpush2.bf16.msra.mxu0 0
      %4520 = vmatprep.subr.bf16.mxu0 0
      %4521 = vmatpush2.bf16.msra.mxu0 0
      %4522 = vmatprep.subr.bf16.mxu0 0
      %4523 = vmatpush2.bf16.msra.mxu0 0
      %4524 = vmatprep.subr.bf16.mxu0 0
      %4525 = vmatpush2.bf16.msra.mxu0 0
      %4526 = vmatprep.subr.bf16.mxu0 0
      %4527 = vmatpush2.bf16.msra.mxu0 0
      %4528 = vmatprep.subr.bf16.mxu0 0
      %4529 = vmatpush2.bf16.msra.mxu0 0
      %4530 = vmatprep.subr.bf16.mxu0 0
      %4531 = vmatpush2.bf16.msra.mxu0 0
      %4532 = vmatprep.mubr.bf16.mxu0 0
      %4533 = vmatmul.mubr.bf16.gmra.mxu0 %v4498
      %v4534 = vpop.f32.mrf.mxu0
      %v4535 = vadd.f32 0.0, %v4534
      %v4536 = vpop.f32.mrf.mxu0
      %v4537 = vpop.f32.mrf.mxu0
      %v4538 = vpop.f32.mrf.mxu0
      %4539 = vdwg.mxu0
      %v4544 = vunpack.c.l.b16 %v4473
      %v4545 = vunpack.c.l.b16 %v4474
      %v4546 = vunpack.c.l.b16 %v4475
      %v4547 = vunpack.c.l.b16 %v4476
      %v4548 = vpack.c.b16 %v4545, %v4544
      %v4549 = vpack.c.b16 %v4547, %v4546
      %v4553 = vsel %vm1993, %v4466, 0
      %4555 = vmatprep.subr.bf16.mxu0 0
      %4556 = vmatpush1.bf16.msra.mxu0 0
      %4557 = vmatprep.subr.bf16.mxu0 0
      %4558 = vmatpush1.bf16.msra.mxu0 0
      %4559 = vmatprep.subr.bf16.mxu0 0
      %4560 = vmatpush1.bf16.msra.mxu0 0
      %4561 = vmatprep.subr.bf16.mxu0 0
      %4562 = vmatpush1.bf16.msra.mxu0 0
      %4563 = vmatprep.subr.bf16.mxu0 0
      %4564 = vmatpush1.bf16.msra.mxu0 0
      %4565 = vmatprep.subr.bf16.mxu0 0
      %4566 = vmatpush1.bf16.msra.mxu0 0
      %4567 = vmatprep.subr.bf16.mxu0 0
      %4568 = vmatpush1.bf16.msra.mxu0 %v4549
      %4569 = vmatprep.subr.bf16.mxu0 0
      %4570 = vmatpush1.bf16.msra.mxu0 %v4548
      %4571 = vmatprep.subr.bf16.mxu0 0
      %4572 = vmatpush2.bf16.msra.mxu0 0
      %4573 = vmatprep.subr.bf16.mxu0 0
      %4574 = vmatpush2.bf16.msra.mxu0 0
      %4575 = vmatprep.subr.bf16.mxu0 0
      %4576 = vmatpush2.bf16.msra.mxu0 0
      %4577 = vmatprep.subr.bf16.mxu0 0
      %4578 = vmatpush2.bf16.msra.mxu0 0
      %4579 = vmatprep.subr.bf16.mxu0 0
      %4580 = vmatpush2.bf16.msra.mxu0 0
      %4581 = vmatprep.subr.bf16.mxu0 0
      %4582 = vmatpush2.bf16.msra.mxu0 0
      %4583 = vmatprep.subr.bf16.mxu0 0
      %4584 = vmatpush2.bf16.msra.mxu0 0
      %4585 = vmatprep.subr.bf16.mxu0 0
      %4586 = vmatpush2.bf16.msra.mxu0 0
      %4587 = vmatprep.mubr.bf16.mxu0 0
      %4588 = vmatmul.mubr.bf16.gmra.mxu0 %v4553
      %v4589 = vpop.f32.mrf.mxu0
      %v4590 = vadd.f32 0.0, %v4589
      %v4591 = vpop.f32.mrf.mxu0
      %v4592 = vpop.f32.mrf.mxu0
      %v4593 = vpop.f32.mrf.mxu0
      %4594 = vdwg.mxu0
      %v4599 = vunpack.c.l.b16 %v4477
      %v4600 = vunpack.c.l.b16 %v4478
      %v4601 = vunpack.c.l.b16 %v4479
      %v4602 = vunpack.c.l.b16 %v4480
      %v4603 = vpack.c.b16 %v4600, %v4599
      %v4604 = vpack.c.b16 %v4602, %v4601
      %v4608 = vsel %vm1993, %v4467, 0
      %4610 = vmatprep.subr.bf16.mxu0 0
      %4611 = vmatpush1.bf16.msra.mxu0 0
      %4612 = vmatprep.subr.bf16.mxu0 0
      %4613 = vmatpush1.bf16.msra.mxu0 0
      %4614 = vmatprep.subr.bf16.mxu0 0
      %4615 = vmatpush1.bf16.msra.mxu0 0
      %4616 = vmatprep.subr.bf16.mxu0 0
      %4617 = vmatpush1.bf16.msra.mxu0 0
      %4618 = vmatprep.subr.bf16.mxu0 0
      %4619 = vmatpush1.bf16.msra.mxu0 0
      %4620 = vmatprep.subr.bf16.mxu0 0
      %4621 = vmatpush1.bf16.msra.mxu0 0
      %4622 = vmatprep.subr.bf16.mxu0 0
      %4623 = vmatpush1.bf16.msra.mxu0 %v4604
      %4624 = vmatprep.subr.bf16.mxu0 0
      %4625 = vmatpush1.bf16.msra.mxu0 %v4603
      %4626 = vmatprep.subr.bf16.mxu0 0
      %4627 = vmatpush2.bf16.msra.mxu0 0
      %4628 = vmatprep.subr.bf16.mxu0 0
      %4629 = vmatpush2.bf16.msra.mxu0 0
      %4630 = vmatprep.subr.bf16.mxu0 0
      %4631 = vmatpush2.bf16.msra.mxu0 0
      %4632 = vmatprep.subr.bf16.mxu0 0
      %4633 = vmatpush2.bf16.msra.mxu0 0
      %4634 = vmatprep.subr.bf16.mxu0 0
      %4635 = vmatpush2.bf16.msra.mxu0 0
      %4636 = vmatprep.subr.bf16.mxu0 0
      %4637 = vmatpush2.bf16.msra.mxu0 0
      %4638 = vmatprep.subr.bf16.mxu0 0
      %4639 = vmatpush2.bf16.msra.mxu0 0
      %4640 = vmatprep.subr.bf16.mxu0 0
      %4641 = vmatpush2.bf16.msra.mxu0 0
      %4642 = vmatprep.mubr.bf16.mxu0 0
      %4643 = vmatmul.mubr.bf16.gmra.mxu0 %v4608
      %v4644 = vpop.f32.mrf.mxu0
      %v4645 = vadd.f32 0.0, %v4644
      %v4646 = vpop.f32.mrf.mxu0
      %v4647 = vpop.f32.mrf.mxu0
      %v4648 = vpop.f32.mrf.mxu0
      %4649 = vdwg.mxu0
      %v4654 = vunpack.c.l.b16 %v4481
      %v4655 = vunpack.c.l.b16 %v4482
      %v4656 = vunpack.c.l.b16 %v4483
      %v4657 = vunpack.c.l.b16 %v4484
      %v4658 = vpack.c.b16 %v4655, %v4654
      %v4659 = vpack.c.b16 %v4657, %v4656
      %v4663 = vsel %vm1993, %v4468, 0
      %4665 = vmatprep.subr.bf16.mxu0 0
      %4666 = vmatpush1.bf16.msra.mxu0 0
      %4667 = vmatprep.subr.bf16.mxu0 0
      %4668 = vmatpush1.bf16.msra.mxu0 0
      %4669 = vmatprep.subr.bf16.mxu0 0
      %4670 = vmatpush1.bf16.msra.mxu0 0
      %4671 = vmatprep.subr.bf16.mxu0 0
      %4672 = vmatpush1.bf16.msra.mxu0 0
      %4673 = vmatprep.subr.bf16.mxu0 0
      %4674 = vmatpush1.bf16.msra.mxu0 0
      %4675 = vmatprep.subr.bf16.mxu0 0
      %4676 = vmatpush1.bf16.msra.mxu0 0
      %4677 = vmatprep.subr.bf16.mxu0 0
      %4678 = vmatpush1.bf16.msra.mxu0 %v4659
      %4679 = vmatprep.subr.bf16.mxu0 0
      %4680 = vmatpush1.bf16.msra.mxu0 %v4658
      %4681 = vmatprep.subr.bf16.mxu0 0
      %4682 = vmatpush2.bf16.msra.mxu0 0
      %4683 = vmatprep.subr.bf16.mxu0 0
      %4684 = vmatpush2.bf16.msra.mxu0 0
      %4685 = vmatprep.subr.bf16.mxu0 0
      %4686 = vmatpush2.bf16.msra.mxu0 0
      %4687 = vmatprep.subr.bf16.mxu0 0
      %4688 = vmatpush2.bf16.msra.mxu0 0
      %4689 = vmatprep.subr.bf16.mxu0 0
      %4690 = vmatpush2.bf16.msra.mxu0 0
      %4691 = vmatprep.subr.bf16.mxu0 0
      %4692 = vmatpush2.bf16.msra.mxu0 0
      %4693 = vmatprep.subr.bf16.mxu0 0
      %4694 = vmatpush2.bf16.msra.mxu0 0
      %4695 = vmatprep.subr.bf16.mxu0 0
      %4696 = vmatpush2.bf16.msra.mxu0 0
      %4697 = vmatprep.mubr.bf16.mxu0 0
      %4698 = vmatmul.mubr.bf16.gmra.mxu0 %v4663
      %v4699 = vpop.f32.mrf.mxu0
      %v4700 = vadd.f32 0.0, %v4699
      %v4701 = vpop.f32.mrf.mxu0
      %v4702 = vpop.f32.mrf.mxu0
      %v4703 = vpop.f32.mrf.mxu0
      %4704 = vdwg.mxu0
      %v4705 = vadd.f32 %v4535, %v4590
      %v4706 = vadd.f32 %v4705, %v4645
      %v4707 = vadd.f32 %v4706, %v4700
      %v4708 = vld [vmem:[%s11] sm:$0x1]
      %v4710 = vlaneseq
      %v4711 = vshrl.u32 %v4710, 7
      %v4712 = vsub.s32 0, %v4711
      %v4713 = vrot.slane %v4708, %v4712
      %v4715 = vadd.f32 %v4707, %v4713
      %v4716 = vld [vmem:[%s12] sm:$0x1]
      %v4717 = vld [vmem:[%s13] sm:$0x1]
      %4718 = vadd.xlane.f32.xlu0 %v4715
      %v4719 = vpop.xlane.xlu0 %4718
      %v4720 = vmul.f32 %v4719, %v2671
      %v4721 = vsub.f32 %v4715, %v4720
      %v4722 = vmul.f32 %v4721, %v4721
      %4723 = vadd.xlane.f32.xlu0 %v4722
      %v4724 = vpop.xlane.xlu0 %4723
      %v4725 = vmul.f32 %v4724, %v2671
      %v4726 = vadd.f32 %v4725, 1e-05
      %v4727 = vrsqrt.pop %v4726
      %v4728 = vmul.f32 %v4721, %v4727
      %v4730 = vlaneseq
      %v4731 = vshrl.u32 %v4730, 7
      %v4732 = vsub.s32 0, %v4731
      %v4733 = vrot.slane %v4716, %v4732
      %v4735 = vmul.f32 %v4728, %v4733
      %v4737 = vlaneseq
      %v4738 = vshrl.u32 %v4737, 7
      %v4739 = vsub.s32 0, %v4738
      %v4740 = vrot.slane %v4717, %v4739
      %v4742 = vadd.f32 %v4735, %v4740
      %v4743 = vadd.f32 %v2695, %v4742
      %v4744 = vpack.c.bf16 %v4743, %v4743
      %v4745 = vld [vmem:[%s14] sm:$0xff]
      %v4746 = vld [vmem:[%s14 + $0x8] sm:$0xff]
      %v4747 = vld [vmem:[%s14 + $0x10] sm:$0xff]
      %v4748 = vld [vmem:[%s14 + $0x18] sm:$0xff]
      %v4749 = vld [vmem:[%s14 + $0x20] sm:$0xff]
      %v4750 = vld [vmem:[%s14 + $0x28] sm:$0xff]
      %v4751 = vld [vmem:[%s14 + $0x30] sm:$0xff]
      %v4752 = vld [vmem:[%s14 + $0x38] sm:$0xff]
      %v4753 = vld [vmem:[%s14 + $0x40] sm:$0xff]
      %v4754 = vld [vmem:[%s14 + $0x48] sm:$0xff]
      %v4755 = vld [vmem:[%s14 + $0x50] sm:$0xff]
      %v4756 = vld [vmem:[%s14 + $0x58] sm:$0xff]
      %v4757 = vld [vmem:[%s14 + $0x60] sm:$0xff]
      %v4758 = vld [vmem:[%s14 + $0x68] sm:$0xff]
      %v4759 = vld [vmem:[%s14 + $0x70] sm:$0xff]
      %v4760 = vld [vmem:[%s14 + $0x78] sm:$0xff]
      %v4761 = vld [vmem:[%s15] sm:$0x3]
      %v4763 = vlaneseq
      %v4764 = vshrl.u32 %v4763, 7
      %v4765 = vsub.s32 0, %v4764
      %v4766 = vrot.slane %v4761, %v4765
      %v4767 = vlaneseq
      %v4768 = vshrl.u32 %v4767, 7
      %v4769 = vsub.s32 1, %v4768
      %v4770 = vrot.slane %v4761, %v4769
      %v4789 = vunpack.c.l.b16 %v4745
      %v4790 = vunpack.c.h.b16 %v4745
      %v4791 = vunpack.c.l.b16 %v4746
      %v4792 = vunpack.c.h.b16 %v4746
      %v4793 = vunpack.c.l.b16 %v4747
      %v4794 = vunpack.c.h.b16 %v4747
      %v4795 = vunpack.c.l.b16 %v4748
      %v4796 = vunpack.c.h.b16 %v4748
      %v4797 = vunpack.c.l.b16 %v4749
      %v4798 = vunpack.c.h.b16 %v4749
      %v4799 = vunpack.c.l.b16 %v4750
      %v4800 = vunpack.c.h.b16 %v4750
      %v4801 = vunpack.c.l.b16 %v4751
      %v4802 = vunpack.c.h.b16 %v4751
      %v4803 = vunpack.c.l.b16 %v4752
      %v4804 = vunpack.c.h.b16 %v4752
      %v4805 = vunpack.c.l.b16 %v4753
      %v4806 = vunpack.c.h.b16 %v4753
      %v4807 = vunpack.c.l.b16 %v4754
      %v4808 = vunpack.c.h.b16 %v4754
      %v4809 = vunpack.c.l.b16 %v4755
      %v4810 = vunpack.c.h.b16 %v4755
      %v4811 = vunpack.c.l.b16 %v4756
      %v4812 = vunpack.c.h.b16 %v4756
      %v4813 = vunpack.c.l.b16 %v4757
      %v4814 = vunpack.c.h.b16 %v4757
      %v4815 = vunpack.c.l.b16 %v4758
      %v4816 = vunpack.c.h.b16 %v4758
      %v4817 = vunpack.c.l.b16 %v4759
      %v4818 = vunpack.c.h.b16 %v4759
      %v4819 = vunpack.c.l.b16 %v4760
      %v4820 = vunpack.c.h.b16 %v4760
      %v4821 = vpack.c.b16 %v4791, %v4789
      %v4822 = vpack.c.b16 %v4792, %v4790
      %v4823 = vpack.c.b16 %v4795, %v4793
      %v4824 = vpack.c.b16 %v4796, %v4794
      %v4825 = vpack.c.b16 %v4799, %v4797
      %v4826 = vpack.c.b16 %v4800, %v4798
      %v4827 = vpack.c.b16 %v4803, %v4801
      %v4828 = vpack.c.b16 %v4804, %v4802
      %v4829 = vpack.c.b16 %v4807, %v4805
      %v4830 = vpack.c.b16 %v4808, %v4806
      %v4831 = vpack.c.b16 %v4811, %v4809
      %v4832 = vpack.c.b16 %v4812, %v4810
      %v4833 = vpack.c.b16 %v4815, %v4813
      %v4834 = vpack.c.b16 %v4816, %v4814
      %v4835 = vpack.c.b16 %v4819, %v4817
      %v4836 = vpack.c.b16 %v4820, %v4818
      %4853 = vmatprep.subr.bf16.mxu0 %v4836
      %4854 = vmatpush1.bf16.msra.mxu0 %v4835
      %4855 = vmatprep.subr.bf16.mxu0 %v4834
      %4856 = vmatpush1.bf16.msra.mxu0 %v4833
      %4857 = vmatprep.subr.bf16.mxu0 %v4832
      %4858 = vmatpush1.bf16.msra.mxu0 %v4831
      %4859 = vmatprep.subr.bf16.mxu0 %v4830
      %4860 = vmatpush1.bf16.msra.mxu0 %v4829
      %4861 = vmatprep.subr.bf16.mxu0 %v4828
      %4862 = vmatpush1.bf16.msra.mxu0 %v4827
      %4863 = vmatprep.subr.bf16.mxu0 %v4826
      %4864 = vmatpush1.bf16.msra.mxu0 %v4825
      %4865 = vmatprep.subr.bf16.mxu0 %v4824
      %4866 = vmatpush1.bf16.msra.mxu0 %v4823
      %4867 = vmatprep.subr.bf16.mxu0 %v4822
      %4868 = vmatpush1.bf16.msra.mxu0 %v4821
      %4869 = vmatprep.subr.bf16.mxu0 0
      %4870 = vmatpush2.bf16.msra.mxu0 0
      %4871 = vmatprep.subr.bf16.mxu0 0
      %4872 = vmatpush2.bf16.msra.mxu0 0
      %4873 = vmatprep.subr.bf16.mxu0 0
      %4874 = vmatpush2.bf16.msra.mxu0 0
      %4875 = vmatprep.subr.bf16.mxu0 0
      %4876 = vmatpush2.bf16.msra.mxu0 0
      %4877 = vmatprep.subr.bf16.mxu0 0
      %4878 = vmatpush2.bf16.msra.mxu0 0
      %4879 = vmatprep.subr.bf16.mxu0 0
      %4880 = vmatpush2.bf16.msra.mxu0 0
      %4881 = vmatprep.subr.bf16.mxu0 0
      %4882 = vmatpush2.bf16.msra.mxu0 0
      %4883 = vmatprep.subr.bf16.mxu0 0
      %4884 = vmatpush2.bf16.msra.mxu0 0
      %4885 = vmatprep.mubr.bf16.mxu0 0
      %4886 = vmatmul.mubr.bf16.gmra.mxu0 %v4744
      %v4887 = vpop.f32.mrf.mxu0
      %v4888 = vadd.f32 %v4766, %v4887
      %v4889 = vpop.f32.mrf.mxu0
      %v4890 = vadd.f32 %v4770, %v4889
      %v4891 = vpop.f32.mrf.mxu0
      %v4892 = vpop.f32.mrf.mxu0
      %4893 = vdwg.mxu0
      %v4894 = vmax.f32 %v4888, 0.0
      %v4895 = vmax.f32 %v4890, 0.0
      %v4896 = vpack.c.bf16 %v4894, %v4894
      %v4897 = vpack.c.bf16 %v4895, %v4895
      %v4898 = vld [vmem:[%s16] sm:$0xf]
      %v4899 = vld [vmem:[%s16 + $0x4] sm:$0xf]
      %v4900 = vld [vmem:[%s16 + $0x8] sm:$0xf]
      %v4901 = vld [vmem:[%s16 + $0xc] sm:$0xf]
      %v4902 = vld [vmem:[%s16 + $0x10] sm:$0xf]
      %v4903 = vld [vmem:[%s16 + $0x14] sm:$0xf]
      %v4904 = vld [vmem:[%s16 + $0x18] sm:$0xf]
      %v4905 = vld [vmem:[%s16 + $0x1c] sm:$0xf]
      %v4906 = vld [vmem:[%s16 + $0x20] sm:$0xf]
      %v4907 = vld [vmem:[%s16 + $0x24] sm:$0xf]
      %v4908 = vld [vmem:[%s16 + $0x28] sm:$0xf]
      %v4909 = vld [vmem:[%s16 + $0x2c] sm:$0xf]
      %v4910 = vld [vmem:[%s16 + $0x30] sm:$0xf]
      %v4911 = vld [vmem:[%s16 + $0x34] sm:$0xf]
      %v4912 = vld [vmem:[%s16 + $0x38] sm:$0xf]
      %v4913 = vld [vmem:[%s16 + $0x3c] sm:$0xf]
      %v4914 = vld [vmem:[%s16 + $0x40] sm:$0xf]
      %v4915 = vld [vmem:[%s16 + $0x44] sm:$0xf]
      %v4916 = vld [vmem:[%s16 + $0x48] sm:$0xf]
      %v4917 = vld [vmem:[%s16 + $0x4c] sm:$0xf]
      %v4918 = vld [vmem:[%s16 + $0x50] sm:$0xf]
      %v4919 = vld [vmem:[%s16 + $0x54] sm:$0xf]
      %v4920 = vld [vmem:[%s16 + $0x58] sm:$0xf]
      %v4921 = vld [vmem:[%s16 + $0x5c] sm:$0xf]
      %v4922 = vld [vmem:[%s16 + $0x60] sm:$0xf]
      %v4923 = vld [vmem:[%s16 + $0x64] sm:$0xf]
      %v4924 = vld [vmem:[%s16 + $0x68] sm:$0xf]
      %v4925 = vld [vmem:[%s16 + $0x6c] sm:$0xf]
      %v4926 = vld [vmem:[%s16 + $0x70] sm:$0xf]
      %v4927 = vld [vmem:[%s16 + $0x74] sm:$0xf]
      %v4928 = vld [vmem:[%s16 + $0x78] sm:$0xf]
      %v4929 = vld [vmem:[%s16 + $0x7c] sm:$0xf]
      %v4930 = vld [vmem:[%s17] sm:$0x1]
      %v4932 = vlaneseq
      %v4933 = vshrl.u32 %v4932, 7
      %v4934 = vsub.s32 0, %v4933
      %v4935 = vrot.slane %v4930, %v4934
      %v4969 = vunpack.c.l.b16 %v4898
      %v4970 = vunpack.c.l.b16 %v4899
      %v4971 = vunpack.c.l.b16 %v4900
      %v4972 = vunpack.c.l.b16 %v4901
      %v4973 = vunpack.c.l.b16 %v4902
      %v4974 = vunpack.c.l.b16 %v4903
      %v4975 = vunpack.c.l.b16 %v4904
      %v4976 = vunpack.c.l.b16 %v4905
      %v4977 = vunpack.c.l.b16 %v4906
      %v4978 = vunpack.c.l.b16 %v4907
      %v4979 = vunpack.c.l.b16 %v4908
      %v4980 = vunpack.c.l.b16 %v4909
      %v4981 = vunpack.c.l.b16 %v4910
      %v4982 = vunpack.c.l.b16 %v4911
      %v4983 = vunpack.c.l.b16 %v4912
      %v4984 = vunpack.c.l.b16 %v4913
      %v4985 = vunpack.c.l.b16 %v4914
      %v4986 = vunpack.c.l.b16 %v4915
      %v4987 = vunpack.c.l.b16 %v4916
      %v4988 = vunpack.c.l.b16 %v4917
      %v4989 = vunpack.c.l.b16 %v4918
      %v4990 = vunpack.c.l.b16 %v4919
      %v4991 = vunpack.c.l.b16 %v4920
      %v4992 = vunpack.c.l.b16 %v4921
      %v4993 = vunpack.c.l.b16 %v4922
      %v4994 = vunpack.c.l.b16 %v4923
      %v4995 = vunpack.c.l.b16 %v4924
      %v4996 = vunpack.c.l.b16 %v4925
      %v4997 = vunpack.c.l.b16 %v4926
      %v4998 = vunpack.c.l.b16 %v4927
      %v4999 = vunpack.c.l.b16 %v4928
      %v5000 = vunpack.c.l.b16 %v4929
      %v5001 = vpack.c.b16 %v4970, %v4969
      %v5002 = vpack.c.b16 %v4972, %v4971
      %v5003 = vpack.c.b16 %v4974, %v4973
      %v5004 = vpack.c.b16 %v4976, %v4975
      %v5005 = vpack.c.b16 %v4978, %v4977
      %v5006 = vpack.c.b16 %v4980, %v4979
      %v5007 = vpack.c.b16 %v4982, %v4981
      %v5008 = vpack.c.b16 %v4984, %v4983
      %v5009 = vpack.c.b16 %v4986, %v4985
      %v5010 = vpack.c.b16 %v4988, %v4987
      %v5011 = vpack.c.b16 %v4990, %v4989
      %v5012 = vpack.c.b16 %v4992, %v4991
      %v5013 = vpack.c.b16 %v4994, %v4993
      %v5014 = vpack.c.b16 %v4996, %v4995
      %v5015 = vpack.c.b16 %v4998, %v4997
      %v5016 = vpack.c.b16 %v5000, %v4999
      %5033 = vmatprep.subr.bf16.mxu0 0
      %5034 = vmatpush1.bf16.msra.mxu0 %v5008
      %5035 = vmatprep.subr.bf16.mxu0 0
      %5036 = vmatpush1.bf16.msra.mxu0 %v5007
      %5037 = vmatprep.subr.bf16.mxu0 0
      %5038 = vmatpush1.bf16.msra.mxu0 %v5006
      %5039 = vmatprep.subr.bf16.mxu0 0
      %5040 = vmatpush1.bf16.msra.mxu0 %v5005
      %5041 = vmatprep.subr.bf16.mxu0 0
      %5042 = vmatpush1.bf16.msra.mxu0 %v5004
      %5043 = vmatprep.subr.bf16.mxu0 0
      %5044 = vmatpush1.bf16.msra.mxu0 %v5003
      %5045 = vmatprep.subr.bf16.mxu0 0
      %5046 = vmatpush1.bf16.msra.mxu0 %v5002
      %5047 = vmatprep.subr.bf16.mxu0 0
      %5048 = vmatpush1.bf16.msra.mxu0 %v5001
      %5049 = vmatprep.subr.bf16.mxu0 0
      %5050 = vmatpush2.bf16.msra.mxu0 %v5016
      %5051 = vmatprep.subr.bf16.mxu0 0
      %5052 = vmatpush2.bf16.msra.mxu0 %v5015
      %5053 = vmatprep.subr.bf16.mxu0 0
      %5054 = vmatpush2.bf16.msra.mxu0 %v5014
      %5055 = vmatprep.subr.bf16.mxu0 0
      %5056 = vmatpush2.bf16.msra.mxu0 %v5013
      %5057 = vmatprep.subr.bf16.mxu0 0
      %5058 = vmatpush2.bf16.msra.mxu0 %v5012
      %5059 = vmatprep.subr.bf16.mxu0 0
      %5060 = vmatpush2.bf16.msra.mxu0 %v5011
      %5061 = vmatprep.subr.bf16.mxu0 0
      %5062 = vmatpush2.bf16.msra.mxu0 %v5010
      %5063 = vmatprep.subr.bf16.mxu0 0
      %5064 = vmatpush2.bf16.msra.mxu0 %v5009
      %5065 = vmatprep.mubr.bf16.mxu0 %v4897
      %5066 = vmatmul.mubr.bf16.gmra.mxu0 %v4896
      %v5067 = vpop.f32.mrf.mxu0
      %v5068 = vadd.f32 %v4935, %v5067
      %v5069 = vpop.f32.mrf.mxu0
      %v5070 = vpop.f32.mrf.mxu0
      %v5071 = vpop.f32.mrf.mxu0
      %5072 = vdwg.mxu0
      %v5073 = vld [vmem:[%s18] sm:$0x1]
      %v5074 = vld [vmem:[%s19] sm:$0x1]
      %5075 = vadd.xlane.f32.xlu0 %v5068
      %v5076 = vpop.xlane.xlu0 %5075
      %v5077 = vmul.f32 %v5076, %v2671
      %v5078 = vsub.f32 %v5068, %v5077
      %v5079 = vmul.f32 %v5078, %v5078
      %5080 = vadd.xlane.f32.xlu0 %v5079
      %v5081 = vpop.xlane.xlu0 %5080
      %v5082 = vmul.f32 %v5081, %v2671
      %v5083 = vadd.f32 %v5082, 1e-05
      %v5084 = vrsqrt.pop %v5083
      %v5085 = vmul.f32 %v5078, %v5084
      %v5087 = vlaneseq
      %v5088 = vshrl.u32 %v5087, 7
      %v5089 = vsub.s32 0, %v5088
      %v5090 = vrot.slane %v5073, %v5089
      %v5092 = vmul.f32 %v5085, %v5090
      %v5094 = vlaneseq
      %v5095 = vshrl.u32 %v5094, 7
      %v5096 = vsub.s32 0, %v5095
      %v5097 = vrot.slane %v5074, %v5096
      %v5099 = vadd.f32 %v5092, %v5097
      %v5100 = vadd.f32 %v4743, %v5099
      %v5101 = vpack.c.bf16 %v5100, %v5100
      %5102 = vst [vmem:[%s641] sm:$0xf] %v5101
      %p5103 = scmp.lt.s32.totalorder %s31, 1
      %s5104 = scalar_select %p5103, %s31, 1
      %s5105 = smul.addr %s5104, 4
      %s5106 = scalar_lea.vmem %s20, %s5105
      // Predicated region
      $region101: #{decoder_forward.3} parent=99 // pred_check
        %p5107 = pneg %p479
      $region102: #{decoder_forward.3} parent=99 // pred_check_branch
        %5109 = sbr.rel (%p5107) target = $region104
      $region103: #{decoder_forward.3} parent=99 // pred_region
        _
      $region104: #{decoder_forward.3} parent=99 // pred_fallthru
        _
    $region100: #{decoder_forward.3} parent=5 // pred_fallthru
      _
    %p5110 = scmp.le.s32.totalorder 2, %s26
    // Predicated region
    $region105: #{decoder_forward.3} parent=5 // pred_check
      %p5111 = pneg %p5110
    $region106: #{decoder_forward.3} parent=5 // pred_check_branch
      %5113 = sbr.rel (%p5111) target = $region108
    $region107: #{decoder_forward.3} parent=5 // pred_region
      %s5114 = ssub.s32 %s26, 2
      // Predicated region
      $region109: #{decoder_forward.3} parent=107 // pred_check
        %p5115 = pneg %p485
      $region110: #{decoder_forward.3} parent=107 // pred_check_branch
        %5117 = sbr.rel (%p5115) target = $region112
      $region111: #{decoder_forward.3} parent=107 // pred_region
        %p5118 = scmp.lt.s32.totalorder %s32, 1
        %s5119 = scalar_select %p5118, %s32, 1
        %s5120 = smul.addr %s5119, 4
        %s5121 = scalar_lea.vmem %s20, %s5120
      $region112: #{decoder_forward.3} parent=107 // pred_fallthru
        _
    $region108: #{decoder_forward.3} parent=5 // pred_fallthru
      _
  $region6: #{decoder_forward.3} parent=0 // loop_footer
    %s30 = sadd.s32 1, %s26
  $region7: #{decoder_forward.3} parent=0 // loop_footer_branch
    %25 = sbr.rel target = $region3
  $region8: #{decoder_forward.3} parent=0 // loop_exit
    _

// kernel: decoder_forward.4
$region0: #{decoder_forward.4}
  #allocation0 [shape = 'u32[]', space=smem, size = 0x4, offset = 0x4, fixed_abs, tag = 'smem constant byte address 0x4 - core index']
  #allocation1 [shape = 'u32[144,128]{1,0:T(1,128)}', space=vmem, size = 0x12000, scoped, tag = 'internal scratch']
  %s0 = inlined_call_operand.vmem [shape: bf16[2,8,128], index: 0, kind: input, shape index: {}]
  %s1 = inlined_call_operand.vmem [shape: bf16[2,8,128], index: 1, kind: input, shape index: {}]
  %s2 = inlined_call_operand.vmem [shape: bf16[3,4,128,32], index: 2, kind: input, shape index: {}]
  %s3 = inlined_call_operand.vmem [shape: f32[3,4,1,32], index: 3, kind: input, shape index: {}]
  %s4 = inlined_call_operand.vmem [shape: bf16[4,32,128], index: 4, kind: input, shape index: {}]
  %s5 = inlined_call_operand.vmem [shape: f32[1,128], index: 5, kind: input, shape index: {}]
  %s6 = inlined_call_operand.vmem [shape: f32[1,128], index: 6, kind: input, shape index: {}]
  %s7 = inlined_call_operand.vmem [shape: f32[1,128], index: 7, kind: input, shape index: {}]
  %s8 = inlined_call_operand.vmem [shape: bf16[3,4,128,32], index: 8, kind: input, shape index: {}]
  %s9 = inlined_call_operand.vmem [shape: f32[3,4,1,32], index: 9, kind: input, shape index: {}]
  %s10 = inlined_call_operand.vmem [shape: bf16[4,32,128], index: 10, kind: input, shape index: {}]
  %s11 = inlined_call_operand.vmem [shape: f32[1,128], index: 11, kind: input, shape index: {}]
  %s12 = inlined_call_operand.vmem [shape: f32[1,128], index: 12, kind: input, shape index: {}]
  %s13 = inlined_call_operand.vmem [shape: f32[1,128], index: 13, kind: input, shape index: {}]
  %s14 = inlined_call_operand.vmem [shape: bf16[128,256], index: 14, kind: input, shape index: {}]
  %s15 = inlined_call_operand.vmem [shape: f32[1,256], index: 15, kind: input, shape index: {}]
  %s16 = inlined_call_operand.vmem [shape: bf16[256,128], index: 16, kind: input, shape index: {}]
  %s17 = inlined_call_operand.vmem [shape: f32[1,128], index: 17, kind: input, shape index: {}]
  %s18 = inlined_call_operand.vmem [shape: f32[1,128], index: 18, kind: input, shape index: {}]
  %s19 = inlined_call_operand.vmem [shape: f32[1,128], index: 19, kind: input, shape index: {}]
  %s20 = inlined_call_operand.vmem [shape: bf16[2,8,128], index: 20, kind: output, shape index: {0}]
  %s21 = inlined_call_operand.hbm [shape: f32[2,4,8,8], index: 21, kind: output, shape index: {1}]
  %s22 = inlined_call_operand.hbm [shape: f32[2,4,8,8], index: 22, kind: output, shape index: {2}]
  %23 = xla_tuple %s20, %s21, %s22
  %s24 = sld [smem:[#allocation0]]
  $region129: #{decoder_forward.4} parent=0
    _
  %s26 = ssub.s32 1, %s24
  %s27 = scalar_select 0, %s26, %s24
  $region1: #{decoder_forward.4} parent=0
    #allocation2 [shape = 'u8[32768]{0}', space=vmem, size = 0x8000, scoped, tag = 'output window, operand 1']
    #allocation3 [shape = 's32[2]{0}', space=sflag, size = 0x8, scoped, tag = 'scoped memory for decoder_forward.4']
    #allocation4 [shape = 'u8[32768]{0}', space=vmem, size = 0x8000, scoped, tag = 'output window, operand 2']
    #allocation5 [shape = 's32[2]{0}', space=sflag, size = 0x8, scoped, tag = 'scoped memory for decoder_forward.4']
    %28 = vsyncpa [#allocation3], 0
    %s29 = scalar_lea.sflag [#allocation3], 1
    %30 = vsyncpa %s29, 0
    %31 = vsyncpa [#allocation5], 0
    %s32 = scalar_lea.sflag [#allocation5], 1
    %33 = vsyncpa %s32, 0
    loop: start=0, step=1, limit=4
    $region2: #{decoder_forward.4} parent=1 // loop_pre_header
      _
    $region3: #{decoder_forward.4} parent=1 // loop_header
      %s35 = sphi 0, %s39
      %p36 = scmp.ge.s32.totalorder %s35, 4
      %s45 = sphi 0, %s47
      %s48 = sphi 0, %s45
      %s49 = sphi 0, %s48
      %s65 = sphi 0, %s49
      %s71 = sphi 0, %s73
      %s74 = sphi 0, %s71
      %s75 = sphi 0, %s74
      %s91 = sphi 0, %s75
      %s95 = sphi 0, %s95
      %s97 = sphi 0, %s95
      %s98 = sphi 0, %s97
      %s112 = sphi 0, %s98
      %s116 = sphi 0, %s116
      %s118 = sphi 0, %s116
      %s119 = sphi 0, %s118
      %s133 = sphi 0, %s119
      %s137 = sphi 0, %s137
      %s139 = sphi 0, %s137
      %s140 = sphi 0, %s139
      %s154 = sphi 0, %s140
      %s158 = sphi 0, %s158
      %s160 = sphi 0, %s158
      %s161 = sphi 0, %s160
      %s175 = sphi 0, %s161
      %s179 = sphi 0, %s179
      %s181 = sphi 0, %s179
      %s182 = sphi 0, %s181
      %s196 = sphi 0, %s182
      %s200 = sphi 0, %s200
      %s202 = sphi 0, %s200
      %s203 = sphi 0, %s202
      %s217 = sphi 0, %s203
      %s221 = sphi 0, %s221
      %s223 = sphi 0, %s221
      %s224 = sphi 0, %s223
      %s238 = sphi 0, %s224
      %s242 = sphi 0, %s242
      %s244 = sphi 0, %s242
      %s245 = sphi 0, %s244
      %s259 = sphi 0, %s245
      %s263 = sphi 0, %s263
      %s265 = sphi 0, %s263
      %s266 = sphi 0, %s265
      %s280 = sphi 0, %s266
      %s284 = sphi 0, %s284
      %s286 = sphi 0, %s284
      %s287 = sphi 0, %s286
      %s301 = sphi 0, %s287
      %s305 = sphi 0, %s305
      %s307 = sphi 0, %s305
      %s308 = sphi 0, %s307
      %s322 = sphi 0, %s308
      %s326 = sphi 0, %s326
      %s328 = sphi 0, %s326
      %s329 = sphi 0, %s328
      %s343 = sphi 0, %s329
      %s347 = sphi 0, %s347
      %s349 = sphi 0, %s347
      %s350 = sphi 0, %s349
      %s364 = sphi 0, %s350
      %s368 = sphi 0, %s368
      %s370 = sphi 0, %s368
      %s371 = sphi 0, %s370
      %s385 = sphi 0, %s371
      %s389 = sphi 0, %s389
      %s391 = sphi 0, %s389
      %s392 = sphi 0, %s391
      %s406 = sphi 0, %s392
      %s410 = sphi 0, %s410
      %s412 = sphi 0, %s410
      %s413 = sphi 0, %s412
      %s427 = sphi 0, %s413
      %s431 = sphi 0, %s431
      %s433 = sphi 0, %s431
      %s434 = sphi 0, %s433
      %s448 = sphi 0, %s434
      %s452 = sphi 0, %s452
      %s454 = sphi 0, %s452
      %s455 = sphi 0, %s454
      %s469 = sphi 0, %s455
      %s475 = sphi 0, %s477
      %s478 = sphi 0, %s475
      %s479 = sphi 0, %s478
      %s495 = sphi 0, %s479
      %s501 = sphi 0, %s503
      %s504 = sphi 0, %s501
      %s505 = sphi 0, %s504
      %s521 = sphi 0, %s505
      %s527 = sphi 0, %s529
      %s530 = sphi 0, %s527
      %s531 = sphi 0, %s530
      %s547 = sphi 0, %s531
    $region4: #{decoder_forward.4} parent=1 // loop_header_branch
      %38 = sbr.rel (%p36) target = $region8
    $region5: #{decoder_forward.4} parent=1 // loop_body
      %s40 = ssub.s32 %s35, 1
      %s41 = ssub.s32 %s35, 2
      %s42 = sadd.s32 %s35, 1
      %s43 = ssub.s32 %s35, %s42
      %p44 = scmp.eq.s32.totalorder %s43, 0
      %s46 = sadd.s32 %s45, 1
      %s47 = scalar_select %p44, %s45, %s46
      %p50 = pneg %p44
      %p51 = scmp.eq.s32.totalorder %s35, 1
      %p52 = por %p50, %p51
      %p53 = scmp.ne.s32.totalorder %s45, %s48
      %p54 = scmp.eq.s32.totalorder %s35, 0
      %p55 = por %p53, %p54
      %p56 = scmp.ne.s32.totalorder %s45, %s48
      %p57 = scmp.eq.s32.totalorder %s40, 1
      %p58 = por %p56, %p57
      %p59 = scmp.ne.s32.totalorder %s48, %s49
      %p60 = scmp.eq.s32.totalorder %s40, 0
      %p61 = por %p59, %p60
      %p62 = scmp.ne.s32.totalorder %s48, %s49
      %p63 = scmp.eq.s32.totalorder %s41, 1
      %p64 = por %p62, %p63
      %p66 = scmp.ne.s32.totalorder %s49, %s65
      %p67 = scmp.eq.s32.totalorder %s41, 0
      %p68 = por %p66, %p67
      %s69 = ssub.s32 %s35, %s42
      %p70 = scmp.eq.s32.totalorder %s69, 0
      %s72 = sadd.s32 %s71, 1
      %s73 = scalar_select %p70, %s71, %s72
      %p76 = pneg %p70
      %p77 = scmp.eq.s32.totalorder %s35, 1
      %p78 = por %p76, %p77
      %p79 = scmp.ne.s32.totalorder %s71, %s74
      %p80 = scmp.eq.s32.totalorder %s35, 0
      %p81 = por %p79, %p80
      %p82 = scmp.ne.s32.totalorder %s71, %s74
      %p83 = scmp.eq.s32.totalorder %s40, 1
      %p84 = por %p82, %p83
      %p85 = scmp.ne.s32.totalorder %s74, %s75
      %p86 = scmp.eq.s32.totalorder %s40, 0
      %p87 = por %p85, %p86
      %p88 = scmp.ne.s32.totalorder %s74, %s75
      %p89 = scmp.eq.s32.totalorder %s41, 1
      %p90 = por %p88, %p89
      %p92 = scmp.ne.s32.totalorder %s75, %s91
      %p93 = scmp.eq.s32.totalorder %s41, 0
      %p94 = por %p92, %p93
      %s96 = sadd.s32 %s95, 1
      %p99 = scmp.eq.s32.totalorder %s35, 1
      %p100 = scmp.ne.s32.totalorder %s95, %s97
      %p101 = scmp.eq.s32.totalorder %s35, 0
      %p102 = por %p100, %p101
      %p103 = scmp.ne.s32.totalorder %s95, %s97
      %p104 = scmp.eq.s32.totalorder %s40, 1
      %p105 = por %p103, %p104
      %p106 = scmp.ne.s32.totalorder %s97, %s98
      %p107 = scmp.eq.s32.totalorder %s40, 0
      %p108 = por %p106, %p107
      %p109 = scmp.ne.s32.totalorder %s97, %s98
      %p110 = scmp.eq.s32.totalorder %s41, 1
      %p111 = por %p109, %p110
      %p113 = scmp.ne.s32.totalorder %s98, %s112
      %p114 = scmp.eq.s32.totalorder %s41, 0
      %p115 = por %p113, %p114
      %s117 = sadd.s32 %s116, 1
      %p120 = scmp.eq.s32.totalorder %s35, 1
      %p121 = scmp.ne.s32.totalorder %s116, %s118
      %p122 = scmp.eq.s32.totalorder %s35, 0
      %p123 = por %p121, %p122
      %p124 = scmp.ne.s32.totalorder %s116, %s118
      %p125 = scmp.eq.s32.totalorder %s40, 1
      %p126 = por %p124, %p125
      %p127 = scmp.ne.s32.totalorder %s118, %s119
      %p128 = scmp.eq.s32.totalorder %s40, 0
      %p129 = por %p127, %p128
      %p130 = scmp.ne.s32.totalorder %s118, %s119
      %p131 = scmp.eq.s32.totalorder %s41, 1
      %p132 = por %p130, %p131
      %p134 = scmp.ne.s32.totalorder %s119, %s133
      %p135 = scmp.eq.s32.totalorder %s41, 0
      %p136 = por %p134, %p135
      %s138 = sadd.s32 %s137, 1
      %p141 = scmp.eq.s32.totalorder %s35, 1
      %p142 = scmp.ne.s32.totalorder %s137, %s139
      %p143 = scmp.eq.s32.totalorder %s35, 0
      %p144 = por %p142, %p143
      %p145 = scmp.ne.s32.totalorder %s137, %s139
      %p146 = scmp.eq.s32.totalorder %s40, 1
      %p147 = por %p145, %p146
      %p148 = scmp.ne.s32.totalorder %s139, %s140
      %p149 = scmp.eq.s32.totalorder %s40, 0
      %p150 = por %p148, %p149
      %p151 = scmp.ne.s32.totalorder %s139, %s140
      %p152 = scmp.eq.s32.totalorder %s41, 1
      %p153 = por %p151, %p152
      %p155 = scmp.ne.s32.totalorder %s140, %s154
      %p156 = scmp.eq.s32.totalorder %s41, 0
      %p157 = por %p155, %p156
      %s159 = sadd.s32 %s158, 1
      %p162 = scmp.eq.s32.totalorder %s35, 1
      %p163 = scmp.ne.s32.totalorder %s158, %s160
      %p164 = scmp.eq.s32.totalorder %s35, 0
      %p165 = por %p163, %p164
      %p166 = scmp.ne.s32.totalorder %s158, %s160
      %p167 = scmp.eq.s32.totalorder %s40, 1
      %p168 = por %p166, %p167
      %p169 = scmp.ne.s32.totalorder %s160, %s161
      %p170 = scmp.eq.s32.totalorder %s40, 0
      %p171 = por %p169, %p170
      %p172 = scmp.ne.s32.totalorder %s160, %s161
      %p173 = scmp.eq.s32.totalorder %s41, 1
      %p174 = por %p172, %p173
      %p176 = scmp.ne.s32.totalorder %s161, %s175
      %p177 = scmp.eq.s32.totalorder %s41, 0
      %p178 = por %p176, %p177
      %s180 = sadd.s32 %s179, 1
      %p183 = scmp.eq.s32.totalorder %s35, 1
      %p184 = scmp.ne.s32.totalorder %s179, %s181
      %p185 = scmp.eq.s32.totalorder %s35, 0
      %p186 = por %p184, %p185
      %p187 = scmp.ne.s32.totalorder %s179, %s181
      %p188 = scmp.eq.s32.totalorder %s40, 1
      %p189 = por %p187, %p188
      %p190 = scmp.ne.s32.totalorder %s181, %s182
      %p191 = scmp.eq.s32.totalorder %s40, 0
      %p192 = por %p190, %p191
      %p193 = scmp.ne.s32.totalorder %s181, %s182
      %p194 = scmp.eq.s32.totalorder %s41, 1
      %p195 = por %p193, %p194
      %p197 = scmp.ne.s32.totalorder %s182, %s196
      %p198 = scmp.eq.s32.totalorder %s41, 0
      %p199 = por %p197, %p198
      %s201 = sadd.s32 %s200, 1
      %p204 = scmp.eq.s32.totalorder %s35, 1
      %p205 = scmp.ne.s32.totalorder %s200, %s202
      %p206 = scmp.eq.s32.totalorder %s35, 0
      %p207 = por %p205, %p206
      %p208 = scmp.ne.s32.totalorder %s200, %s202
      %p209 = scmp.eq.s32.totalorder %s40, 1
      %p210 = por %p208, %p209
      %p211 = scmp.ne.s32.totalorder %s202, %s203
      %p212 = scmp.eq.s32.totalorder %s40, 0
      %p213 = por %p211, %p212
      %p214 = scmp.ne.s32.totalorder %s202, %s203
      %p215 = scmp.eq.s32.totalorder %s41, 1
      %p216 = por %p214, %p215
      %p218 = scmp.ne.s32.totalorder %s203, %s217
      %p219 = scmp.eq.s32.totalorder %s41, 0
      %p220 = por %p218, %p219
      %s222 = sadd.s32 %s221, 1
      %p225 = scmp.eq.s32.totalorder %s35, 1
      %p226 = scmp.ne.s32.totalorder %s221, %s223
      %p227 = scmp.eq.s32.totalorder %s35, 0
      %p228 = por %p226, %p227
      %p229 = scmp.ne.s32.totalorder %s221, %s223
      %p230 = scmp.eq.s32.totalorder %s40, 1
      %p231 = por %p229, %p230
      %p232 = scmp.ne.s32.totalorder %s223, %s224
      %p233 = scmp.eq.s32.totalorder %s40, 0
      %p234 = por %p232, %p233
      %p235 = scmp.ne.s32.totalorder %s223, %s224
      %p236 = scmp.eq.s32.totalorder %s41, 1
      %p237 = por %p235, %p236
      %p239 = scmp.ne.s32.totalorder %s224, %s238
      %p240 = scmp.eq.s32.totalorder %s41, 0
      %p241 = por %p239, %p240
      %s243 = sadd.s32 %s242, 1
      %p246 = scmp.eq.s32.totalorder %s35, 1
      %p247 = scmp.ne.s32.totalorder %s242, %s244
      %p248 = scmp.eq.s32.totalorder %s35, 0
      %p249 = por %p247, %p248
      %p250 = scmp.ne.s32.totalorder %s242, %s244
      %p251 = scmp.eq.s32.totalorder %s40, 1
      %p252 = por %p250, %p251
      %p253 = scmp.ne.s32.totalorder %s244, %s245
      %p254 = scmp.eq.s32.totalorder %s40, 0
      %p255 = por %p253, %p254
      %p256 = scmp.ne.s32.totalorder %s244, %s245
      %p257 = scmp.eq.s32.totalorder %s41, 1
      %p258 = por %p256, %p257
      %p260 = scmp.ne.s32.totalorder %s245, %s259
      %p261 = scmp.eq.s32.totalorder %s41, 0
      %p262 = por %p260, %p261
      %s264 = sadd.s32 %s263, 1
      %p267 = scmp.eq.s32.totalorder %s35, 1
      %p268 = scmp.ne.s32.totalorder %s263, %s265
      %p269 = scmp.eq.s32.totalorder %s35, 0
      %p270 = por %p268, %p269
      %p271 = scmp.ne.s32.totalorder %s263, %s265
      %p272 = scmp.eq.s32.totalorder %s40, 1
      %p273 = por %p271, %p272
      %p274 = scmp.ne.s32.totalorder %s265, %s266
      %p275 = scmp.eq.s32.totalorder %s40, 0
      %p276 = por %p274, %p275
      %p277 = scmp.ne.s32.totalorder %s265, %s266
      %p278 = scmp.eq.s32.totalorder %s41, 1
      %p279 = por %p277, %p278
      %p281 = scmp.ne.s32.totalorder %s266, %s280
      %p282 = scmp.eq.s32.totalorder %s41, 0
      %p283 = por %p281, %p282
      %s285 = sadd.s32 %s284, 1
      %p288 = scmp.eq.s32.totalorder %s35, 1
      %p289 = scmp.ne.s32.totalorder %s284, %s286
      %p290 = scmp.eq.s32.totalorder %s35, 0
      %p291 = por %p289, %p290
      %p292 = scmp.ne.s32.totalorder %s284, %s286
      %p293 = scmp.eq.s32.totalorder %s40, 1
      %p294 = por %p292, %p293
      %p295 = scmp.ne.s32.totalorder %s286, %s287
      %p296 = scmp.eq.s32.totalorder %s40, 0
      %p297 = por %p295, %p296
      %p298 = scmp.ne.s32.totalorder %s286, %s287
      %p299 = scmp.eq.s32.totalorder %s41, 1
      %p300 = por %p298, %p299
      %p302 = scmp.ne.s32.totalorder %s287, %s301
      %p303 = scmp.eq.s32.totalorder %s41, 0
      %p304 = por %p302, %p303
      %s306 = sadd.s32 %s305, 1
      %p309 = scmp.eq.s32.totalorder %s35, 1
      %p310 = scmp.ne.s32.totalorder %s305, %s307
      %p311 = scmp.eq.s32.totalorder %s35, 0
      %p312 = por %p310, %p311
      %p313 = scmp.ne.s32.totalorder %s305, %s307
      %p314 = scmp.eq.s32.totalorder %s40, 1
      %p315 = por %p313, %p314
      %p316 = scmp.ne.s32.totalorder %s307, %s308
      %p317 = scmp.eq.s32.totalorder %s40, 0
      %p318 = por %p316, %p317
      %p319 = scmp.ne.s32.totalorder %s307, %s308
      %p320 = scmp.eq.s32.totalorder %s41, 1
      %p321 = por %p319, %p320
      %p323 = scmp.ne.s32.totalorder %s308, %s322
      %p324 = scmp.eq.s32.totalorder %s41, 0
      %p325 = por %p323, %p324
      %s327 = sadd.s32 %s326, 1
      %p330 = scmp.eq.s32.totalorder %s35, 1
      %p331 = scmp.ne.s32.totalorder %s326, %s328
      %p332 = scmp.eq.s32.totalorder %s35, 0
      %p333 = por %p331, %p332
      %p334 = scmp.ne.s32.totalorder %s326, %s328
      %p335 = scmp.eq.s32.totalorder %s40, 1
      %p336 = por %p334, %p335
      %p337 = scmp.ne.s32.totalorder %s328, %s329
      %p338 = scmp.eq.s32.totalorder %s40, 0
      %p339 = por %p337, %p338
      %p340 = scmp.ne.s32.totalorder %s328, %s329
      %p341 = scmp.eq.s32.totalorder %s41, 1
      %p342 = por %p340, %p341
      %p344 = scmp.ne.s32.totalorder %s329, %s343
      %p345 = scmp.eq.s32.totalorder %s41, 0
      %p346 = por %p344, %p345
      %s348 = sadd.s32 %s347, 1
      %p351 = scmp.eq.s32.totalorder %s35, 1
      %p352 = scmp.ne.s32.totalorder %s347, %s349
      %p353 = scmp.eq.s32.totalorder %s35, 0
      %p354 = por %p352, %p353
      %p355 = scmp.ne.s32.totalorder %s347, %s349
      %p356 = scmp.eq.s32.totalorder %s40, 1
      %p357 = por %p355, %p356
      %p358 = scmp.ne.s32.totalorder %s349, %s350
      %p359 = scmp.eq.s32.totalorder %s40, 0
      %p360 = por %p358, %p359
      %p361 = scmp.ne.s32.totalorder %s349, %s350
      %p362 = scmp.eq.s32.totalorder %s41, 1
      %p363 = por %p361, %p362
      %p365 = scmp.ne.s32.totalorder %s350, %s364
      %p366 = scmp.eq.s32.totalorder %s41, 0
      %p367 = por %p365, %p366
      %s369 = sadd.s32 %s368, 1
      %p372 = scmp.eq.s32.totalorder %s35, 1
      %p373 = scmp.ne.s32.totalorder %s368, %s370
      %p374 = scmp.eq.s32.totalorder %s35, 0
      %p375 = por %p373, %p374
      %p376 = scmp.ne.s32.totalorder %s368, %s370
      %p377 = scmp.eq.s32.totalorder %s40, 1
      %p378 = por %p376, %p377
      %p379 = scmp.ne.s32.totalorder %s370, %s371
      %p380 = scmp.eq.s32.totalorder %s40, 0
      %p381 = por %p379, %p380
      %p382 = scmp.ne.s32.totalorder %s370, %s371
      %p383 = scmp.eq.s32.totalorder %s41, 1
      %p384 = por %p382, %p383
      %p386 = scmp.ne.s32.totalorder %s371, %s385
      %p387 = scmp.eq.s32.totalorder %s41, 0
      %p388 = por %p386, %p387
      %s390 = sadd.s32 %s389, 1
      %p393 = scmp.eq.s32.totalorder %s35, 1
      %p394 = scmp.ne.s32.totalorder %s389, %s391
      %p395 = scmp.eq.s32.totalorder %s35, 0
      %p396 = por %p394, %p395
      %p397 = scmp.ne.s32.totalorder %s389, %s391
      %p398 = scmp.eq.s32.totalorder %s40, 1
      %p399 = por %p397, %p398
      %p400 = scmp.ne.s32.totalorder %s391, %s392
      %p401 = scmp.eq.s32.totalorder %s40, 0
      %p402 = por %p400, %p401
      %p403 = scmp.ne.s32.totalorder %s391, %s392
      %p404 = scmp.eq.s32.totalorder %s41, 1
      %p405 = por %p403, %p404
      %p407 = scmp.ne.s32.totalorder %s392, %s406
      %p408 = scmp.eq.s32.totalorder %s41, 0
      %p409 = por %p407, %p408
      %s411 = sadd.s32 %s410, 1
      %p414 = scmp.eq.s32.totalorder %s35, 1
      %p415 = scmp.ne.s32.totalorder %s410, %s412
      %p416 = scmp.eq.s32.totalorder %s35, 0
      %p417 = por %p415, %p416
      %p418 = scmp.ne.s32.totalorder %s410, %s412
      %p419 = scmp.eq.s32.totalorder %s40, 1
      %p420 = por %p418, %p419
      %p421 = scmp.ne.s32.totalorder %s412, %s413
      %p422 = scmp.eq.s32.totalorder %s40, 0
      %p423 = por %p421, %p422
      %p424 = scmp.ne.s32.totalorder %s412, %s413
      %p425 = scmp.eq.s32.totalorder %s41, 1
      %p426 = por %p424, %p425
      %p428 = scmp.ne.s32.totalorder %s413, %s427
      %p429 = scmp.eq.s32.totalorder %s41, 0
      %p430 = por %p428, %p429
      %s432 = sadd.s32 %s431, 1
      %p435 = scmp.eq.s32.totalorder %s35, 1
      %p436 = scmp.ne.s32.totalorder %s431, %s433
      %p437 = scmp.eq.s32.totalorder %s35, 0
      %p438 = por %p436, %p437
      %p439 = scmp.ne.s32.totalorder %s431, %s433
      %p440 = scmp.eq.s32.totalorder %s40, 1
      %p441 = por %p439, %p440
      %p442 = scmp.ne.s32.totalorder %s433, %s434
      %p443 = scmp.eq.s32.totalorder %s40, 0
      %p444 = por %p442, %p443
      %p445 = scmp.ne.s32.totalorder %s433, %s434
      %p446 = scmp.eq.s32.totalorder %s41, 1
      %p447 = por %p445, %p446
      %p449 = scmp.ne.s32.totalorder %s434, %s448
      %p450 = scmp.eq.s32.totalorder %s41, 0
      %p451 = por %p449, %p450
      %s453 = sadd.s32 %s452, 1
      %p456 = scmp.eq.s32.totalorder %s35, 1
      %p457 = scmp.ne.s32.totalorder %s452, %s454
      %p458 = scmp.eq.s32.totalorder %s35, 0
      %p459 = por %p457, %p458
      %p460 = scmp.ne.s32.totalorder %s452, %s454
      %p461 = scmp.eq.s32.totalorder %s40, 1
      %p462 = por %p460, %p461
      %p463 = scmp.ne.s32.totalorder %s454, %s455
      %p464 = scmp.eq.s32.totalorder %s40, 0
      %p465 = por %p463, %p464
      %p466 = scmp.ne.s32.totalorder %s454, %s455
      %p467 = scmp.eq.s32.totalorder %s41, 1
      %p468 = por %p466, %p467
      %p470 = scmp.ne.s32.totalorder %s455, %s469
      %p471 = scmp.eq.s32.totalorder %s41, 0
      %p472 = por %p470, %p471
      %s473 = ssub.s32 %s35, %s42
      %p474 = scmp.eq.s32.totalorder %s473, 0
      %s476 = sadd.s32 %s475, 1
      %s477 = scalar_select %p474, %s475, %s476
      %p480 = pneg %p474
      %p481 = scmp.eq.s32.totalorder %s35, 1
      %p482 = por %p480, %p481
      %p483 = scmp.ne.s32.totalorder %s475, %s478
      %p484 = scmp.eq.s32.totalorder %s35, 0
      %p485 = por %p483, %p484
      %p486 = scmp.ne.s32.totalorder %s475, %s478
      %p487 = scmp.eq.s32.totalorder %s40, 1
      %p488 = por %p486, %p487
      %p489 = scmp.ne.s32.totalorder %s478, %s479
      %p490 = scmp.eq.s32.totalorder %s40, 0
      %p491 = por %p489, %p490
      %p492 = scmp.ne.s32.totalorder %s478, %s479
      %p493 = scmp.eq.s32.totalorder %s41, 1
      %p494 = por %p492, %p493
      %p496 = scmp.ne.s32.totalorder %s479, %s495
      %p497 = scmp.eq.s32.totalorder %s41, 0
      %p498 = por %p496, %p497
      %s499 = ssub.s32 %s35, %s42
      %p500 = scmp.eq.s32.totalorder %s499, 0
      %s502 = sadd.s32 %s501, 1
      %s503 = scalar_select %p500, %s501, %s502
      %p506 = pneg %p500
      %p507 = scmp.eq.s32.totalorder %s35, 1
      %p508 = por %p506, %p507
      %p509 = scmp.ne.s32.totalorder %s501, %s504
      %p510 = scmp.eq.s32.totalorder %s35, 0
      %p511 = por %p509, %p510
      %p512 = scmp.ne.s32.totalorder %s501, %s504
      %p513 = scmp.eq.s32.totalorder %s40, 1
      %p514 = por %p512, %p513
      %p515 = scmp.ne.s32.totalorder %s504, %s505
      %p516 = scmp.eq.s32.totalorder %s40, 0
      %p517 = por %p515, %p516
      %p518 = scmp.ne.s32.totalorder %s504, %s505
      %p519 = scmp.eq.s32.totalorder %s41, 1
      %p520 = por %p518, %p519
      %p522 = scmp.ne.s32.totalorder %s505, %s521
      %p523 = scmp.eq.s32.totalorder %s41, 0
      %p524 = por %p522, %p523
      %s525 = ssub.s32 %s35, %s42
      %p526 = scmp.eq.s32.totalorder %s525, 0
      %s528 = sadd.s32 %s527, 1
      %s529 = scalar_select %p526, %s527, %s528
      %p532 = pneg %p526
      %p533 = scmp.eq.s32.totalorder %s35, 1
      %p534 = por %p532, %p533
      %p535 = scmp.ne.s32.totalorder %s527, %s530
      %p536 = scmp.eq.s32.totalorder %s35, 0
      %p537 = por %p535, %p536
      %p538 = scmp.ne.s32.totalorder %s527, %s530
      %p539 = scmp.eq.s32.totalorder %s40, 1
      %p540 = por %p538, %p539
      %p541 = scmp.ne.s32.totalorder %s530, %s531
      %p542 = scmp.eq.s32.totalorder %s40, 0
      %p543 = por %p541, %p542
      %p544 = scmp.ne.s32.totalorder %s530, %s531
      %p545 = scmp.eq.s32.totalorder %s41, 1
      %p546 = por %p544, %p545
      %p548 = scmp.ne.s32.totalorder %s531, %s547
      %p549 = scmp.eq.s32.totalorder %s41, 0
      %p550 = por %p548, %p549
      %p551 = scmp.le.s32.totalorder 1, %s35
      %p552 = scmp.lt.s32.totalorder %s35, 3
      %p553 = pnand %p551, %p552
      %p554 = pneg %p553
      // Predicated region
      $region9: #{decoder_forward.4} parent=5 // pred_check
        _
      $region10: #{decoder_forward.4} parent=5 // pred_check_branch
        %556 = sbr.rel (%p553) target = $region12
      $region11: #{decoder_forward.4} parent=5 // pred_region
        %s557 = ssub.s32 %s35, 1
        // Predicated region
        $region13: #{decoder_forward.4} parent=11 // pred_check
          %p558 = pneg %p108
        $region14: #{decoder_forward.4} parent=11 // pred_check_branch
          %560 = sbr.rel (%p558) target = $region16
        $region15: #{decoder_forward.4} parent=11 // pred_region
          _
        $region16: #{decoder_forward.4} parent=11 // pred_fallthru
          _
        // Predicated region
        $region17: #{decoder_forward.4} parent=11 // pred_check
          %p561 = pneg %p129
        $region18: #{decoder_forward.4} parent=11 // pred_check_branch
          %563 = sbr.rel (%p561) target = $region20
        $region19: #{decoder_forward.4} parent=11 // pred_region
          _
        $region20: #{decoder_forward.4} parent=11 // pred_fallthru
          _
        // Predicated region
        $region21: #{decoder_forward.4} parent=11 // pred_check
          %p564 = pneg %p150
        $region22: #{decoder_forward.4} parent=11 // pred_check_branch
          %566 = sbr.rel (%p564) target = $region24
        $region23: #{decoder_forward.4} parent=11 // pred_region
          _
        $region24: #{decoder_forward.4} parent=11 // pred_fallthru
          _
        // Predicated region
        $region25: #{decoder_forward.4} parent=11 // pred_check
          %p567 = pneg %p171
        $region26: #{decoder_forward.4} parent=11 // pred_check_branch
          %569 = sbr.rel (%p567) target = $region28
        $region27: #{decoder_forward.4} parent=11 // pred_region
          _
        $region28: #{decoder_forward.4} parent=11 // pred_fallthru
          _
        // Predicated region
        $region29: #{decoder_forward.4} parent=11 // pred_check
          %p570 = pneg %p192
        $region30: #{decoder_forward.4} parent=11 // pred_check_branch
          %572 = sbr.rel (%p570) target = $region32
        $region31: #{decoder_forward.4} parent=11 // pred_region
          _
        $region32: #{decoder_forward.4} parent=11 // pred_fallthru
          _
        // Predicated region
        $region33: #{decoder_forward.4} parent=11 // pred_check
          %p573 = pneg %p213
        $region34: #{decoder_forward.4} parent=11 // pred_check_branch
          %575 = sbr.rel (%p573) target = $region36
        $region35: #{decoder_forward.4} parent=11 // pred_region
          _
        $region36: #{decoder_forward.4} parent=11 // pred_fallthru
          _
        // Predicated region
        $region37: #{decoder_forward.4} parent=11 // pred_check
          %p576 = pneg %p234
        $region38: #{decoder_forward.4} parent=11 // pred_check_branch
          %578 = sbr.rel (%p576) target = $region40
        $region39: #{decoder_forward.4} parent=11 // pred_region
          _
        $region40: #{decoder_forward.4} parent=11 // pred_fallthru
          _
        // Predicated region
        $region41: #{decoder_forward.4} parent=11 // pred_check
          %p579 = pneg %p255
        $region42: #{decoder_forward.4} parent=11 // pred_check_branch
          %581 = sbr.rel (%p579) target = $region44
        $region43: #{decoder_forward.4} parent=11 // pred_region
          _
        $region44: #{decoder_forward.4} parent=11 // pred_fallthru
          _
        // Predicated region
        $region45: #{decoder_forward.4} parent=11 // pred_check
          %p582 = pneg %p276
        $region46: #{decoder_forward.4} parent=11 // pred_check_branch
          %584 = sbr.rel (%p582) target = $region48
        $region47: #{decoder_forward.4} parent=11 // pred_region
          _
        $region48: #{decoder_forward.4} parent=11 // pred_fallthru
          _
        // Predicated region
        $region49: #{decoder_forward.4} parent=11 // pred_check
          %p585 = pneg %p297
        $region50: #{decoder_forward.4} parent=11 // pred_check_branch
          %587 = sbr.rel (%p585) target = $region52
        $region51: #{decoder_forward.4} parent=11 // pred_region
          _
        $region52: #{decoder_forward.4} parent=11 // pred_fallthru
          _
        // Predicated region
        $region53: #{decoder_forward.4} parent=11 // pred_check
          %p588 = pneg %p318
        $region54: #{decoder_forward.4} parent=11 // pred_check_branch
          %590 = sbr.rel (%p588) target = $region56
        $region55: #{decoder_forward.4} parent=11 // pred_region
          _
        $region56: #{decoder_forward.4} parent=11 // pred_fallthru
          _
        // Predicated region
        $region57: #{decoder_forward.4} parent=11 // pred_check
          %p591 = pneg %p339
        $region58: #{decoder_forward.4} parent=11 // pred_check_branch
          %593 = sbr.rel (%p591) target = $region60
        $region59: #{decoder_forward.4} parent=11 // pred_region
          _
        $region60: #{decoder_forward.4} parent=11 // pred_fallthru
          _
        // Predicated region
        $region61: #{decoder_forward.4} parent=11 // pred_check
          %p594 = pneg %p360
        $region62: #{decoder_forward.4} parent=11 // pred_check_branch
          %596 = sbr.rel (%p594) target = $region64
        $region63: #{decoder_forward.4} parent=11 // pred_region
          _
        $region64: #{decoder_forward.4} parent=11 // pred_fallthru
          _
        // Predicated region
        $region65: #{decoder_forward.4} parent=11 // pred_check
          %p597 = pneg %p381
        $region66: #{decoder_forward.4} parent=11 // pred_check_branch
          %599 = sbr.rel (%p597) target = $region68
        $region67: #{decoder_forward.4} parent=11 // pred_region
          _
        $region68: #{decoder_forward.4} parent=11 // pred_fallthru
          _
        // Predicated region
        $region69: #{decoder_forward.4} parent=11 // pred_check
          %p600 = pneg %p402
        $region70: #{decoder_forward.4} parent=11 // pred_check_branch
          %602 = sbr.rel (%p600) target = $region72
        $region71: #{decoder_forward.4} parent=11 // pred_region
          _
        $region72: #{decoder_forward.4} parent=11 // pred_fallthru
          _
        // Predicated region
        $region73: #{decoder_forward.4} parent=11 // pred_check
          %p603 = pneg %p423
        $region74: #{decoder_forward.4} parent=11 // pred_check_branch
          %605 = sbr.rel (%p603) target = $region76
        $region75: #{decoder_forward.4} parent=11 // pred_region
          _
        $region76: #{decoder_forward.4} parent=11 // pred_fallthru
          _
        // Predicated region
        $region77: #{decoder_forward.4} parent=11 // pred_check
          %p606 = pneg %p444
        $region78: #{decoder_forward.4} parent=11 // pred_check_branch
          %608 = sbr.rel (%p606) target = $region80
        $region79: #{decoder_forward.4} parent=11 // pred_region
          _
        $region80: #{decoder_forward.4} parent=11 // pred_fallthru
          _
        // Predicated region
        $region81: #{decoder_forward.4} parent=11 // pred_check
          %p609 = pneg %p465
        $region82: #{decoder_forward.4} parent=11 // pred_check_branch
          %611 = sbr.rel (%p609) target = $region84
        $region83: #{decoder_forward.4} parent=11 // pred_region
          _
        $region84: #{decoder_forward.4} parent=11 // pred_fallthru
          _
      $region12: #{decoder_forward.4} parent=5 // pred_fallthru
        _
      %p612 = scmp.lt.s32.totalorder %s35, 2
      // Predicated region
      $region85: #{decoder_forward.4} parent=5 // pred_check
        %p613 = pneg %p612
      $region86: #{decoder_forward.4} parent=5 // pred_check_branch
        %615 = sbr.rel (%p613) target = $region88
      $region87: #{decoder_forward.4} parent=5 // pred_region
        // Predicated region
        $region89: #{decoder_forward.4} parent=87 // pred_check
          %p616 = pneg %p55
        $region90: #{decoder_forward.4} parent=87 // pred_check_branch
          %618 = sbr.rel (%p616) target = $region92
        $region91: #{decoder_forward.4} parent=87 // pred_region
          %p619 = scmp.lt.s32.totalorder %s35, 1
          %s620 = scalar_select %p619, %s35, 1
          %s621 = smul.addr %s620, 4
          %s622 = scalar_lea.vmem %s0, %s621
        $region92: #{decoder_forward.4} parent=87 // pred_fallthru
          _
        // Predicated region
        $region93: #{decoder_forward.4} parent=87 // pred_check
          %p623 = pneg %p81
        $region94: #{decoder_forward.4} parent=87 // pred_check_branch
          %625 = sbr.rel (%p623) target = $region96
        $region95: #{decoder_forward.4} parent=87 // pred_region
          %p626 = scmp.lt.s32.totalorder %s35, 1
          %s627 = scalar_select %p626, %s35, 1
          %s628 = smul.addr %s627, 4
          %s629 = scalar_lea.vmem %s1, %s628
        $region96: #{decoder_forward.4} parent=87 // pred_fallthru
          _
      $region88: #{decoder_forward.4} parent=5 // pred_fallthru
        _
      %p630 = scmp.le.s32.totalorder 1, %s35
      %p631 = scmp.lt.s32.totalorder %s35, 3
      %p632 = pnand %p630, %p631
      %p633 = pneg %p632
      // Predicated region
      $region97: #{decoder_forward.4} parent=5 // pred_check
        _
      $region98: #{decoder_forward.4} parent=5 // pred_check_branch
        %635 = sbr.rel (%p632) target = $region100
      $region99: #{decoder_forward.4} parent=5 // pred_region
        %s636 = ssub.s32 %s35, 1
        %p637 = scmp.lt.s32.totalorder %s40, 1
        %s638 = scalar_select %p637, %s40, 1
        %s639 = smul.addr %s638, 4
        %s640 = scalar_lea.vmem %s0, %s639
        %p641 = pneg %p61
        %p642 = pneg %p58
        %p643 = scmp.lt.s32.totalorder %s40, 1
        %s644 = scalar_select %p643, %s40, 1
        %s645 = smul.addr %s644, 4
        %s646 = scalar_lea.vmem %s1, %s645
        %p647 = pneg %p87
        %p648 = pneg %p84
        %p649 = pneg %p108
        %p650 = pneg %p105
        %p651 = pneg %p129
        %p652 = pneg %p126
        %p653 = pneg %p150
        %p654 = pneg %p147
        %p655 = pneg %p171
        %p656 = pneg %p168
        %p657 = pneg %p192
        %p658 = pneg %p189
        %p659 = pneg %p213
        %p660 = pneg %p210
        %p661 = pneg %p234
        %p662 = pneg %p231
        %p663 = pneg %p255
        %p664 = pneg %p252
        %p665 = pneg %p276
        %p666 = pneg %p273
        %p667 = pneg %p297
        %p668 = pneg %p294
        %p669 = pneg %p318
        %p670 = pneg %p315
        %p671 = pneg %p339
        %p672 = pneg %p336
        %p673 = pneg %p360
        %p674 = pneg %p357
        %p675 = pneg %p381
        %p676 = pneg %p378
        %p677 = pneg %p402
        %p678 = pneg %p399
        %p679 = pneg %p423
        %p680 = pneg %p420
        %p681 = pneg %p444
        %p682 = pneg %p441
        %p683 = pneg %p465
        %p684 = pneg %p462
        %p685 = pneg %p491
        %p686 = pneg %p488
        %p687 = scmp.lt.s32.totalorder %s40, 1
        %s688 = scalar_select %p687, %s40, 1
        %s689 = smul.addr %s688, 4
        %s690 = scalar_lea.vmem %s20, %s689
        %p691 = pneg %p517
        %p692 = pneg %p514
        %s693 = sand.u32 %s504, 1
        %s694 = scalar_lea.sflag [#allocation3], %s693
        %s695 = sand.u32 %s504, 1
        %s696 = smul.addr %s695, 32
        %s697 = scalar_lea.vmem [#allocation2], %s696
        %p698 = pneg %p543
        %p699 = pneg %p540
        %s700 = sand.u32 %s530, 1
        %s701 = scalar_lea.sflag [#allocation5], %s700
        %s702 = sand.u32 %s530, 1
        %s703 = smul.addr %s702, 32
        %s704 = scalar_lea.vmem [#allocation4], %s703
        %p705 = scmp.lt.s32.totalorder %s40, 1
        %s706 = scalar_select %p705, %s40, 1
        %s707 = smul.addr %s706, 4
        %s708 = scalar_lea.vmem %s0, %s707
        %p709 = scmp.lt.s32.totalorder %s40, 1
        %s710 = scalar_select %p709, %s40, 1
        %s711 = smul.addr %s710, 4
        %s712 = scalar_lea.vmem %s1, %s711
        %p713 = scmp.lt.s32.totalorder %s40, 1
        %s714 = scalar_select %p713, %s40, 1
        %s715 = smul.addr %s714, 4
        %s716 = scalar_lea.vmem %s20, %s715
        %v718 = vld [vmem:[%s708] sm:$0xf]
        %v719 = vunpack.c.l.bf16 %v718
        %v720 = vld [vmem:[%s2] sm:$0xf]
        %v721 = vld [vmem:[%s2 + $0x4] sm:$0xf]
        %v722 = vld [vmem:[%s2 + $0x8] sm:$0xf]
        %v723 = vld [vmem:[%s2 + $0xc] sm:$0xf]
        %v724 = vld [vmem:[%s2 + $0x10] sm:$0xf]
        %v725 = vld [vmem:[%s2 + $0x14] sm:$0xf]
        %v726 = vld [vmem:[%s2 + $0x18] sm:$0xf]
        %v727 = vld [vmem:[%s2 + $0x1c] sm:$0xf]
        %v728 = vld [vmem:[%s2 + $0x20] sm:$0xf]
        %v729 = vld [vmem:[%s2 + $0x24] sm:$0xf]
        %v730 = vld [vmem:[%s2 + $0x28] sm:$0xf]
        %v731 = vld [vmem:[%s2 + $0x2c] sm:$0xf]
        %v732 = vld [vmem:[%s2 + $0x30] sm:$0xf]
        %v733 = vld [vmem:[%s2 + $0x34] sm:$0xf]
        %v734 = vld [vmem:[%s2 + $0x38] sm:$0xf]
        %v735 = vld [vmem:[%s2 + $0x3c] sm:$0xf]
        %v736 = vld [vmem:[%s2 + $0x40] sm:$0xf]
        %v737 = vld [vmem:[%s2 + $0x44] sm:$0xf]
        %v738 = vld [vmem:[%s2 + $0x48] sm:$0xf]
        %v739 = vld [vmem:[%s2 + $0x4c] sm:$0xf]
        %v740 = vld [vmem:[%s2 + $0x50] sm:$0xf]
        %v741 = vld [vmem:[%s2 + $0x54] sm:$0xf]
        %v742 = vld [vmem:[%s2 + $0x58] sm:$0xf]
        %v743 = vld [vmem:[%s2 + $0x5c] sm:$0xf]
        %v744 = vld [vmem:[%s2 + $0x60] sm:$0xf]
        %v745 = vld [vmem:[%s2 + $0x64] sm:$0xf]
        %v746 = vld [vmem:[%s2 + $0x68] sm:$0xf]
        %v747 = vld [vmem:[%s2 + $0x6c] sm:$0xf]
        %v748 = vld [vmem:[%s2 + $0x70] sm:$0xf]
        %v749 = vld [vmem:[%s2 + $0x74] sm:$0xf]
        %v750 = vld [vmem:[%s2 + $0x78] sm:$0xf]
        %v751 = vld [vmem:[%s2 + $0x7c] sm:$0xf]
        %v752 = vld [vmem:[%s2 + $0x80] sm:$0xf]
        %v753 = vld [vmem:[%s2 + $0x84] sm:$0xf]
        %v754 = vld [vmem:[%s2 + $0x88] sm:$0xf]
        %v755 = vld [vmem:[%s2 + $0x8c] sm:$0xf]
        %v756 = vld [vmem:[%s2 + $0x90] sm:$0xf]
        %v757 = vld [vmem:[%s2 + $0x94] sm:$0xf]
        %v758 = vld [vmem:[%s2 + $0x98] sm:$0xf]
        %v759 = vld [vmem:[%s2 + $0x9c] sm:$0xf]
        %v760 = vld [vmem:[%s2 + $0xa0] sm:$0xf]
        %v761 = vld [vmem:[%s2 + $0xa4] sm:$0xf]
        %v762 = vld [vmem:[%s2 + $0xa8] sm:$0xf]
        %v763 = vld [vmem:[%s2 + $0xac] sm:$0xf]
        %v764 = vld [vmem:[%s2 + $0xb0] sm:$0xf]
        %v765 = vld [vmem:[%s2 + $0xb4] sm:$0xf]
        %v766 = vld [vmem:[%s2 + $0xb8] sm:$0xf]
        %v767 = vld [vmem:[%s2 + $0xbc] sm:$0xf]
        %v768 = vld [vmem:[%s2 + $0xc0] sm:$0xf]
        %v769 = vld [vmem:[%s2 + $0xc4] sm:$0xf]
        %v770 = vld [vmem:[%s2 + $0xc8] sm:$0xf]
        %v771 = vld [vmem:[%s2 + $0xcc] sm:$0xf]
        %v772 = vld [vmem:[%s2 + $0xd0] sm:$0xf]
        %v773 = vld [vmem:[%s2 + $0xd4] sm:$0xf]
        %v774 = vld [vmem:[%s2 + $0xd8] sm:$0xf]
        %v775 = vld [vmem:[%s2 + $0xdc] sm:$0xf]
        %v776 = vld [vmem:[%s2 + $0xe0] sm:$0xf]
        %v777 = vld [vmem:[%s2 + $0xe4] sm:$0xf]
        %v778 = vld [vmem:[%s2 + $0xe8] sm:$0xf]
        %v779 = vld [vmem:[%s2 + $0xec] sm:$0xf]
        %v780 = vld [vmem:[%s2 + $0xf0] sm:$0xf]
        %v781 = vld [vmem:[%s2 + $0xf4] sm:$0xf]
        %v782 = vld [vmem:[%s2 + $0xf8] sm:$0xf]
        %v783 = vld [vmem:[%s2 + $0xfc] sm:$0xf]
        %v784 = vld [vmem:[%s3] sm:$0x1]
        %v785 = vld [vmem:[%s3 + $0x1] sm:$0x1]
        %v786 = vld [vmem:[%s3 + $0x2] sm:$0x1]
        %v787 = vld [vmem:[%s3 + $0x3] sm:$0x1]
        %v792 = vlaneseq
        %v793 = vshrl.u32 %v792, 7
        %v794 = vsub.s32 0, %v793
        %v795 = vrot.slane %v784, %v794
        %v796 = vlaneseq
        %v797 = vshrl.u32 %v796, 7
        %v798 = vsub.s32 0, %v797
        %v799 = vrot.slane %v785, %v798
        %v800 = vlaneseq
        %v801 = vshrl.u32 %v800, 7
        %v802 = vsub.s32 0, %v801
        %v803 = vrot.slane %v786, %v802
        %v804 = vlaneseq
        %v805 = vshrl.u32 %v804, 7
        %v806 = vsub.s32 0, %v805
        %v807 = vrot.slane %v787, %v806
        %v828 = vunpack.c.l.b16 %v720
        %v829 = vunpack.c.l.b16 %v721
        %v830 = vunpack.c.l.b16 %v722
        %v831 = vunpack.c.l.b16 %v723
        %v832 = vunpack.c.l.b16 %v724
        %v833 = vunpack.c.l.b16 %v725
        %v834 = vunpack.c.l.b16 %v726
        %v835 = vunpack.c.l.b16 %v727
        %v836 = vunpack.c.l.b16 %v728
        %v837 = vunpack.c.l.b16 %v729
        %v838 = vunpack.c.l.b16 %v730
        %v839 = vunpack.c.l.b16 %v731
        %v840 = vunpack.c.l.b16 %v732
        %v841 = vunpack.c.l.b16 %v733
        %v842 = vunpack.c.l.b16 %v734
        %v843 = vunpack.c.l.b16 %v735
        %v844 = vpack.c.b16 %v829, %v828
        %v845 = vpack.c.b16 %v831, %v830
        %v846 = vpack.c.b16 %v833, %v832
        %v847 = vpack.c.b16 %v835, %v834
        %v848 = vpack.c.b16 %v837, %v836
        %v849 = vpack.c.b16 %v839, %v838
        %v850 = vpack.c.b16 %v841, %v840
        %v851 = vpack.c.b16 %v843, %v842
        %860 = vmatprep.subr.bf16.mxu0 0
        %861 = vmatpush1.bf16.msra.mxu0 %v851
        %862 = vmatprep.subr.bf16.mxu0 0
        %863 = vmatpush1.bf16.msra.mxu0 %v850
        %864 = vmatprep.subr.bf16.mxu0 0
        %865 = vmatpush1.bf16.msra.mxu0 %v849
        %866 = vmatprep.subr.bf16.mxu0 0
        %867 = vmatpush1.bf16.msra.mxu0 %v848
        %868 = vmatprep.subr.bf16.mxu0 0
        %869 = vmatpush1.bf16.msra.mxu0 %v847
        %870 = vmatprep.subr.bf16.mxu0 0
        %871 = vmatpush1.bf16.msra.mxu0 %v846
        %872 = vmatprep.subr.bf16.mxu0 0
        %873 = vmatpush1.bf16.msra.mxu0 %v845
        %874 = vmatprep.subr.bf16.mxu0 0
        %875 = vmatpush1.bf16.msra.mxu0 %v844
        %876 = vmatprep.subr.bf16.mxu0 0
        %877 = vmatpush2.bf16.msra.mxu0 0
        %878 = vmatprep.subr.bf16.mxu0 0
        %879 = vmatpush2.bf16.msra.mxu0 0
        %880 = vmatprep.subr.bf16.mxu0 0
        %881 = vmatpush2.bf16.msra.mxu0 0
        %882 = vmatprep.subr.bf16.mxu0 0
        %883 = vmatpush2.bf16.msra.mxu0 0
        %884 = vmatprep.subr.bf16.mxu0 0
        %885 = vmatpush2.bf16.msra.mxu0 0
        %886 = vmatprep.subr.bf16.mxu0 0
        %887 = vmatpush2.bf16.msra.mxu0 0
        %888 = vmatprep.subr.bf16.mxu0 0
        %889 = vmatpush2.bf16.msra.mxu0 0
        %890 = vmatprep.subr.bf16.mxu0 0
        %891 = vmatpush2.bf16.msra.mxu0 0
        %892 = vmatprep.mubr.bf16.mxu0 0
        %893 = vmatmul.mubr.bf16.gmra.mxu0 %v718
        %v894 = vpop.f32.mrf.mxu0
        %v895 = vadd.f32 %v795, %v894
        %v896 = vpop.f32.mrf.mxu0
        %v897 = vpop.f32.mrf.mxu0
        %v898 = vpop.f32.mrf.mxu0
        %899 = vdwg.mxu0
        %v916 = vunpack.c.l.b16 %v736
        %v917 = vunpack.c.l.b16 %v737
        %v918 = vunpack.c.l.b16 %v738
        %v919 = vunpack.c.l.b16 %v739
        %v920 = vunpack.c.l.b16 %v740
        %v921 = vunpack.c.l.b16 %v741
        %v922 = vunpack.c.l.b16 %v742
        %v923 = vunpack.c.l.b16 %v743
        %v924 = vunpack.c.l.b16 %v744
        %v925 = vunpack.c.l.b16 %v745
        %v926 = vunpack.c.l.b16 %v746
        %v927 = vunpack.c.l.b16 %v747
        %v928 = vunpack.c.l.b16 %v748
        %v929 = vunpack.c.l.b16 %v749
        %v930 = vunpack.c.l.b16 %v750
        %v931 = vunpack.c.l.b16 %v751
        %v932 = vpack.c.b16 %v917, %v916
        %v933 = vpack.c.b16 %v919, %v918
        %v934 = vpack.c.b16 %v921, %v920
        %v935 = vpack.c.b16 %v923, %v922
        %v936 = vpack.c.b16 %v925, %v924
        %v937 = vpack.c.b16 %v927, %v926
        %v938 = vpack.c.b16 %v929, %v928
        %v939 = vpack.c.b16 %v931, %v930
        %948 = vmatprep.subr.bf16.mxu0 0
        %949 = vmatpush1.bf16.msra.mxu0 %v939
        %950 = vmatprep.subr.bf16.mxu0 0
        %951 = vmatpush1.bf16.msra.mxu0 %v938
        %952 = vmatprep.subr.bf16.mxu0 0
        %953 = vmatpush1.bf16.msra.mxu0 %v937
        %954 = vmatprep.subr.bf16.mxu0 0
        %955 = vmatpush1.bf16.msra.mxu0 %v936
        %956 = vmatprep.subr.bf16.mxu0 0
        %957 = vmatpush1.bf16.msra.mxu0 %v935
        %958 = vmatprep.subr.bf16.mxu0 0
        %959 = vmatpush1.bf16.msra.mxu0 %v934
        %960 = vmatprep.subr.bf16.mxu0 0
        %961 = vmatpush1.bf16.msra.mxu0 %v933
        %962 = vmatprep.subr.bf16.mxu0 0
        %963 = vmatpush1.bf16.msra.mxu0 %v932
        %964 = vmatprep.subr.bf16.mxu0 0
        %965 = vmatpush2.bf16.msra.mxu0 0
        %966 = vmatprep.subr.bf16.mxu0 0
        %967 = vmatpush2.bf16.msra.mxu0 0
        %968 = vmatprep.subr.bf16.mxu0 0
        %969 = vmatpush2.bf16.msra.mxu0 0
        %970 = vmatprep.subr.bf16.mxu0 0
        %971 = vmatpush2.bf16.msra.mxu0 0
        %972 = vmatprep.subr.bf16.mxu0 0
        %973 = vmatpush2.bf16.msra.mxu0 0
        %974 = vmatprep.subr.bf16.mxu0 0
        %975 = vmatpush2.bf16.msra.mxu0 0
        %976 = vmatprep.subr.bf16.mxu0 0
        %977 = vmatpush2.bf16.msra.mxu0 0
        %978 = vmatprep.subr.bf16.mxu0 0
        %979 = vmatpush2.bf16.msra.mxu0 0
        %980 = vmatprep.mubr.bf16.mxu0 0
        %981 = vmatmul.mubr.bf16.gmra.mxu0 %v718
        %v982 = vpop.f32.mrf.mxu0
        %v983 = vadd.f32 %v799, %v982
        %v984 = vpop.f32.mrf.mxu0
        %v985 = vpop.f32.mrf.mxu0
        %v986 = vpop.f32.mrf.mxu0
        %987 = vdwg.mxu0
        %v1004 = vunpack.c.l.b16 %v752
        %v1005 = vunpack.c.l.b16 %v753
        %v1006 = vunpack.c.l.b16 %v754
        %v1007 = vunpack.c.l.b16 %v755
        %v1008 = vunpack.c.l.b16 %v756
        %v1009 = vunpack.c.l.b16 %v757
        %v1010 = vunpack.c.l.b16 %v758
        %v1011 = vunpack.c.l.b16 %v759
        %v1012 = vunpack.c.l.b16 %v760
        %v1013 = vunpack.c.l.b16 %v761
        %v1014 = vunpack.c.l.b16 %v762
        %v1015 = vunpack.c.l.b16 %v763
        %v1016 = vunpack.c.l.b16 %v764
        %v1017 = vunpack.c.l.b16 %v765
        %v1018 = vunpack.c.l.b16 %v766
        %v1019 = vunpack.c.l.b16 %v767
        %v1020 = vpack.c.b16 %v1005, %v1004
        %v1021 = vpack.c.b16 %v1007, %v1006
        %v1022 = vpack.c.b16 %v1009, %v1008
        %v1023 = vpack.c.b16 %v1011, %v1010
        %v1024 = vpack.c.b16 %v1013, %v1012
        %v1025 = vpack.c.b16 %v1015, %v1014
        %v1026 = vpack.c.b16 %v1017, %v1016
        %v1027 = vpack.c.b16 %v1019, %v1018
        %1036 = vmatprep.subr.bf16.mxu0 0
        %1037 = vmatpush1.bf16.msra.mxu0 %v1027
        %1038 = vmatprep.subr.bf16.mxu0 0
        %1039 = vmatpush1.bf16.msra.mxu0 %v1026
        %1040 = vmatprep.subr.bf16.mxu0 0
        %1041 = vmatpush1.bf16.msra.mxu0 %v1025
        %1042 = vmatprep.subr.bf16.mxu0 0
        %1043 = vmatpush1.bf16.msra.mxu0 %v1024
        %1044 = vmatprep.subr.bf16.mxu0 0
        %1045 = vmatpush1.bf16.msra.mxu0 %v1023
        %1046 = vmatprep.subr.bf16.mxu0 0
        %1047 = vmatpush1.bf16.msra.mxu0 %v1022
        %1048 = vmatprep.subr.bf16.mxu0 0
        %1049 = vmatpush1.bf16.msra.mxu0 %v1021
        %1050 = vmatprep.subr.bf16.mxu0 0
        %1051 = vmatpush1.bf16.msra.mxu0 %v1020
        %1052 = vmatprep.subr.bf16.mxu0 0
        %1053 = vmatpush2.bf16.msra.mxu0 0
        %1054 = vmatprep.subr.bf16.mxu0 0
        %1055 = vmatpush2.bf16.msra.mxu0 0
        %1056 = vmatprep.subr.bf16.mxu0 0
        %1057 = vmatpush2.bf16.msra.mxu0 0
        %1058 = vmatprep.subr.bf16.mxu0 0
        %1059 = vmatpush2.bf16.msra.mxu0 0
        %1060 = vmatprep.subr.bf16.mxu0 0
        %1061 = vmatpush2.bf16.msra.mxu0 0
        %1062 = vmatprep.subr.bf16.mxu0 0
        %1063 = vmatpush2.bf16.msra.mxu0 0
        %1064 = vmatprep.subr.bf16.mxu0 0
        %1065 = vmatpush2.bf16.msra.mxu0 0
        %1066 = vmatprep.subr.bf16.mxu0 0
        %1067 = vmatpush2.bf16.msra.mxu0 0
        %1068 = vmatprep.mubr.bf16.mxu0 0
        %1069 = vmatmul.mubr.bf16.gmra.mxu0 %v718
        %v1070 = vpop.f32.mrf.mxu0
        %v1071 = vadd.f32 %v803, %v1070
        %v1072 = vpop.f32.mrf.mxu0
        %v1073 = vpop.f32.mrf.mxu0
        %v1074 = vpop.f32.mrf.mxu0
        %1075 = vdwg.mxu0
        %v1092 = vunpack.c.l.b16 %v768
        %v1093 = vunpack.c.l.b16 %v769
        %v1094 = vunpack.c.l.b16 %v770
        %v1095 = vunpack.c.l.b16 %v771
        %v1096 = vunpack.c.l.b16 %v772
        %v1097 = vunpack.c.l.b16 %v773
        %v1098 = vunpack.c.l.b16 %v774
        %v1099 = vunpack.c.l.b16 %v775
        %v1100 = vunpack.c.l.b16 %v776
        %v1101 = vunpack.c.l.b16 %v777
        %v1102 = vunpack.c.l.b16 %v778
        %v1103 = vunpack.c.l.b16 %v779
        %v1104 = vunpack.c.l.b16 %v780
        %v1105 = vunpack.c.l.b16 %v781
        %v1106 = vunpack.c.l.b16 %v782
        %v1107 = vunpack.c.l.b16 %v783
        %v1108 = vpack.c.b16 %v1093, %v1092
        %v1109 = vpack.c.b16 %v1095, %v1094
        %v1110 = vpack.c.b16 %v1097, %v1096
        %v1111 = vpack.c.b16 %v1099, %v1098
        %v1112 = vpack.c.b16 %v1101, %v1100
        %v1113 = vpack.c.b16 %v1103, %v1102
        %v1114 = vpack.c.b16 %v1105, %v1104
        %v1115 = vpack.c.b16 %v1107, %v1106
        %1124 = vmatprep.subr.bf16.mxu0 0
        %1125 = vmatpush1.bf16.msra.mxu0 %v1115
        %1126 = vmatprep.subr.bf16.mxu0 0
        %1127 = vmatpush1.bf16.msra.mxu0 %v1114
        %1128 = vmatprep.subr.bf16.mxu0 0
        %1129 = vmatpush1.bf16.msra.mxu0 %v1113
        %1130 = vmatprep.subr.bf16.mxu0 0
        %1131 = vmatpush1.bf16.msra.mxu0 %v1112
        %1132 = vmatprep.subr.bf16.mxu0 0
        %1133 = vmatpush1.bf16.msra.mxu0 %v1111
        %1134 = vmatprep.subr.bf16.mxu0 0
        %1135 = vmatpush1.bf16.msra.mxu0 %v1110
        %1136 = vmatprep.subr.bf16.mxu0 0
        %1137 = vmatpush1.bf16.msra.mxu0 %v1109
        %1138 = vmatprep.subr.bf16.mxu0 0
        %1139 = vmatpush1.bf16.msra.mxu0 %v1108
        %1140 = vmatprep.subr.bf16.mxu0 0
        %1141 = vmatpush2.bf16.msra.mxu0 0
        %1142 = vmatprep.subr.bf16.mxu0 0
        %1143 = vmatpush2.bf16.msra.mxu0 0
        %1144 = vmatprep.subr.bf16.mxu0 0
        %1145 = vmatpush2.bf16.msra.mxu0 0
        %1146 = vmatprep.subr.bf16.mxu0 0
        %1147 = vmatpush2.bf16.msra.mxu0 0
        %1148 = vmatprep.subr.bf16.mxu0 0
        %1149 = vmatpush2.bf16.msra.mxu0 0
        %1150 = vmatprep.subr.bf16.mxu0 0
        %1151 = vmatpush2.bf16.msra.mxu0 0
        %1152 = vmatprep.subr.bf16.mxu0 0
        %1153 = vmatpush2.bf16.msra.mxu0 0
        %1154 = vmatprep.subr.bf16.mxu0 0
        %1155 = vmatpush2.bf16.msra.mxu0 0
        %1156 = vmatprep.mubr.bf16.mxu0 0
        %1157 = vmatmul.mubr.bf16.gmra.mxu0 %v718
        %v1158 = vpop.f32.mrf.mxu0
        %v1159 = vadd.f32 %v807, %v1158
        %v1160 = vpop.f32.mrf.mxu0
        %v1161 = vpop.f32.mrf.mxu0
        %v1162 = vpop.f32.mrf.mxu0
        %1163 = vdwg.mxu0
        %s1164 = scalar_lea.vmem %s2, 256
        %v1165 = vld [vmem:[%s1164] sm:$0xf]
        %v1166 = vld [vmem:[%s1164 + $0x4] sm:$0xf]
        %v1167 = vld [vmem:[%s1164 + $0x8] sm:$0xf]
        %v1168 = vld [vmem:[%s1164 + $0xc] sm:$0xf]
        %v1169 = vld [vmem:[%s1164 + $0x10] sm:$0xf]
        %v1170 = vld [vmem:[%s1164 + $0x14] sm:$0xf]
        %v1171 = vld [vmem:[%s1164 + $0x18] sm:$0xf]
        %v1172 = vld [vmem:[%s1164 + $0x1c] sm:$0xf]
        %v1173 = vld [vmem:[%s1164 + $0x20] sm:$0xf]
        %v1174 = vld [vmem:[%s1164 + $0x24] sm:$0xf]
        %v1175 = vld [vmem:[%s1164 + $0x28] sm:$0xf]
        %v1176 = vld [vmem:[%s1164 + $0x2c] sm:$0xf]
        %v1177 = vld [vmem:[%s1164 + $0x30] sm:$0xf]
        %v1178 = vld [vmem:[%s1164 + $0x34] sm:$0xf]
        %v1179 = vld [vmem:[%s1164 + $0x38] sm:$0xf]
        %v1180 = vld [vmem:[%s1164 + $0x3c] sm:$0xf]
        %v1181 = vld [vmem:[%s1164 + $0x40] sm:$0xf]
        %v1182 = vld [vmem:[%s1164 + $0x44] sm:$0xf]
        %v1183 = vld [vmem:[%s1164 + $0x48] sm:$0xf]
        %v1184 = vld [vmem:[%s1164 + $0x4c] sm:$0xf]
        %v1185 = vld [vmem:[%s1164 + $0x50] sm:$0xf]
        %v1186 = vld [vmem:[%s1164 + $0x54] sm:$0xf]
        %v1187 = vld [vmem:[%s1164 + $0x58] sm:$0xf]
        %v1188 = vld [vmem:[%s1164 + $0x5c] sm:$0xf]
        %v1189 = vld [vmem:[%s1164 + $0x60] sm:$0xf]
        %v1190 = vld [vmem:[%s1164 + $0x64] sm:$0xf]
        %v1191 = vld [vmem:[%s1164 + $0x68] sm:$0xf]
        %v1192 = vld [vmem:[%s1164 + $0x6c] sm:$0xf]
        %v1193 = vld [vmem:[%s1164 + $0x70] sm:$0xf]
        %v1194 = vld [vmem:[%s1164 + $0x74] sm:$0xf]
        %v1195 = vld [vmem:[%s1164 + $0x78] sm:$0xf]
        %v1196 = vld [vmem:[%s1164 + $0x7c] sm:$0xf]
        %v1197 = vld [vmem:[%s1164 + $0x80] sm:$0xf]
        %v1198 = vld [vmem:[%s1164 + $0x84] sm:$0xf]
        %v1199 = vld [vmem:[%s1164 + $0x88] sm:$0xf]
        %v1200 = vld [vmem:[%s1164 + $0x8c] sm:$0xf]
        %v1201 = vld [vmem:[%s1164 + $0x90] sm:$0xf]
        %v1202 = vld [vmem:[%s1164 + $0x94] sm:$0xf]
        %v1203 = vld [vmem:[%s1164 + $0x98] sm:$0xf]
        %v1204 = vld [vmem:[%s1164 + $0x9c] sm:$0xf]
        %v1205 = vld [vmem:[%s1164 + $0xa0] sm:$0xf]
        %v1206 = vld [vmem:[%s1164 + $0xa4] sm:$0xf]
        %v1207 = vld [vmem:[%s1164 + $0xa8] sm:$0xf]
        %v1208 = vld [vmem:[%s1164 + $0xac] sm:$0xf]
        %v1209 = vld [vmem:[%s1164 + $0xb0] sm:$0xf]
        %v1210 = vld [vmem:[%s1164 + $0xb4] sm:$0xf]
        %v1211 = vld [vmem:[%s1164 + $0xb8] sm:$0xf]
        %v1212 = vld [vmem:[%s1164 + $0xbc] sm:$0xf]
        %v1213 = vld [vmem:[%s1164 + $0xc0] sm:$0xf]
        %v1214 = vld [vmem:[%s1164 + $0xc4] sm:$0xf]
        %v1215 = vld [vmem:[%s1164 + $0xc8] sm:$0xf]
        %v1216 = vld [vmem:[%s1164 + $0xcc] sm:$0xf]
        %v1217 = vld [vmem:[%s1164 + $0xd0] sm:$0xf]
        %v1218 = vld [vmem:[%s1164 + $0xd4] sm:$0xf]
        %v1219 = vld [vmem:[%s1164 + $0xd8] sm:$0xf]
        %v1220 = vld [vmem:[%s1164 + $0xdc] sm:$0xf]
        %v1221 = vld [vmem:[%s1164 + $0xe0] sm:$0xf]
        %v1222 = vld [vmem:[%s1164 + $0xe4] sm:$0xf]
        %v1223 = vld [vmem:[%s1164 + $0xe8] sm:$0xf]
        %v1224 = vld [vmem:[%s1164 + $0xec] sm:$0xf]
        %v1225 = vld [vmem:[%s1164 + $0xf0] sm:$0xf]
        %v1226 = vld [vmem:[%s1164 + $0xf4] sm:$0xf]
        %v1227 = vld [vmem:[%s1164 + $0xf8] sm:$0xf]
        %v1228 = vld [vmem:[%s1164 + $0xfc] sm:$0xf]
        %s1229 = scalar_lea.vmem %s3, 4
        %v1230 = vld [vmem:[%s1229] sm:$0x1]
        %v1231 = vld [vmem:[%s1229 + $0x1] sm:$0x1]
        %v1232 = vld [vmem:[%s1229 + $0x2] sm:$0x1]
        %v1233 = vld [vmem:[%s1229 + $0x3] sm:$0x1]
        %v1238 = vlaneseq
        %v1239 = vshrl.u32 %v1238, 7
        %v1240 = vsub.s32 0, %v1239
        %v1241 = vrot.slane %v1230, %v1240
        %v1242 = vlaneseq
        %v1243 = vshrl.u32 %v1242, 7
        %v1244 = vsub.s32 0, %v1243
        %v1245 = vrot.slane %v1231, %v1244
        %v1246 = vlaneseq
        %v1247 = vshrl.u32 %v1246, 7
        %v1248 = vsub.s32 0, %v1247
        %v1249 = vrot.slane %v1232, %v1248
        %v1250 = vlaneseq
        %v1251 = vshrl.u32 %v1250, 7
        %v1252 = vsub.s32 0, %v1251
        %v1253 = vrot.slane %v1233, %v1252
        %v1274 = vunpack.c.l.b16 %v1165
        %v1275 = vunpack.c.l.b16 %v1166
        %v1276 = vunpack.c.l.b16 %v1167
        %v1277 = vunpack.c.l.b16 %v1168
        %v1278 = vunpack.c.l.b16 %v1169
        %v1279 = vunpack.c.l.b16 %v1170
        %v1280 = vunpack.c.l.b16 %v1171
        %v1281 = vunpack.c.l.b16 %v1172
        %v1282 = vunpack.c.l.b16 %v1173
        %v1283 = vunpack.c.l.b16 %v1174
        %v1284 = vunpack.c.l.b16 %v1175
        %v1285 = vunpack.c.l.b16 %v1176
        %v1286 = vunpack.c.l.b16 %v1177
        %v1287 = vunpack.c.l.b16 %v1178
        %v1288 = vunpack.c.l.b16 %v1179
        %v1289 = vunpack.c.l.b16 %v1180
        %v1290 = vpack.c.b16 %v1275, %v1274
        %v1291 = vpack.c.b16 %v1277, %v1276
        %v1292 = vpack.c.b16 %v1279, %v1278
        %v1293 = vpack.c.b16 %v1281, %v1280
        %v1294 = vpack.c.b16 %v1283, %v1282
        %v1295 = vpack.c.b16 %v1285, %v1284
        %v1296 = vpack.c.b16 %v1287, %v1286
        %v1297 = vpack.c.b16 %v1289, %v1288
        %1306 = vmatprep.subr.bf16.mxu0 0
        %1307 = vmatpush1.bf16.msra.mxu0 %v1297
        %1308 = vmatprep.subr.bf16.mxu0 0
        %1309 = vmatpush1.bf16.msra.mxu0 %v1296
        %1310 = vmatprep.subr.bf16.mxu0 0
        %1311 = vmatpush1.bf16.msra.mxu0 %v1295
        %1312 = vmatprep.subr.bf16.mxu0 0
        %1313 = vmatpush1.bf16.msra.mxu0 %v1294
        %1314 = vmatprep.subr.bf16.mxu0 0
        %1315 = vmatpush1.bf16.msra.mxu0 %v1293
        %1316 = vmatprep.subr.bf16.mxu0 0
        %1317 = vmatpush1.bf16.msra.mxu0 %v1292
        %1318 = vmatprep.subr.bf16.mxu0 0
        %1319 = vmatpush1.bf16.msra.mxu0 %v1291
        %1320 = vmatprep.subr.bf16.mxu0 0
        %1321 = vmatpush1.bf16.msra.mxu0 %v1290
        %1322 = vmatprep.subr.bf16.mxu0 0
        %1323 = vmatpush2.bf16.msra.mxu0 0
        %1324 = vmatprep.subr.bf16.mxu0 0
        %1325 = vmatpush2.bf16.msra.mxu0 0
        %1326 = vmatprep.subr.bf16.mxu0 0
        %1327 = vmatpush2.bf16.msra.mxu0 0
        %1328 = vmatprep.subr.bf16.mxu0 0
        %1329 = vmatpush2.bf16.msra.mxu0 0
        %1330 = vmatprep.subr.bf16.mxu0 0
        %1331 = vmatpush2.bf16.msra.mxu0 0
        %1332 = vmatprep.subr.bf16.mxu0 0
        %1333 = vmatpush2.bf16.msra.mxu0 0
        %1334 = vmatprep.subr.bf16.mxu0 0
        %1335 = vmatpush2.bf16.msra.mxu0 0
        %1336 = vmatprep.subr.bf16.mxu0 0
        %1337 = vmatpush2.bf16.msra.mxu0 0
        %1338 = vmatprep.mubr.bf16.mxu0 0
        %1339 = vmatmul.mubr.bf16.gmra.mxu0 %v718
        %v1340 = vpop.f32.mrf.mxu0
        %v1341 = vadd.f32 %v1241, %v1340
        %v1342 = vpop.f32.mrf.mxu0
        %v1343 = vpop.f32.mrf.mxu0
        %v1344 = vpop.f32.mrf.mxu0
        %1345 = vdwg.mxu0
        %v1362 = vunpack.c.l.b16 %v1181
        %v1363 = vunpack.c.l.b16 %v1182
        %v1364 = vunpack.c.l.b16 %v1183
        %v1365 = vunpack.c.l.b16 %v1184
        %v1366 = vunpack.c.l.b16 %v1185
        %v1367 = vunpack.c.l.b16 %v1186
        %v1368 = vunpack.c.l.b16 %v1187
        %v1369 = vunpack.c.l.b16 %v1188
        %v1370 = vunpack.c.l.b16 %v1189
        %v1371 = vunpack.c.l.b16 %v1190
        %v1372 = vunpack.c.l.b16 %v1191
        %v1373 = vunpack.c.l.b16 %v1192
        %v1374 = vunpack.c.l.b16 %v1193
        %v1375 = vunpack.c.l.b16 %v1194
        %v1376 = vunpack.c.l.b16 %v1195
        %v1377 = vunpack.c.l.b16 %v1196
        %v1378 = vpack.c.b16 %v1363, %v1362
        %v1379 = vpack.c.b16 %v1365, %v1364
        %v1380 = vpack.c.b16 %v1367, %v1366
        %v1381 = vpack.c.b16 %v1369, %v1368
        %v1382 = vpack.c.b16 %v1371, %v1370
        %v1383 = vpack.c.b16 %v1373, %v1372
        %v1384 = vpack.c.b16 %v1375, %v1374
        %v1385 = vpack.c.b16 %v1377, %v1376
        %1394 = vmatprep.subr.bf16.mxu0 0
        %1395 = vmatpush1.bf16.msra.mxu0 %v1385
        %1396 = vmatprep.subr.bf16.mxu0 0
        %1397 = vmatpush1.bf16.msra.mxu0 %v1384
        %1398 = vmatprep.subr.bf16.mxu0 0
        %1399 = vmatpush1.bf16.msra.mxu0 %v1383
        %1400 = vmatprep.subr.bf16.mxu0 0
        %1401 = vmatpush1.bf16.msra.mxu0 %v1382
        %1402 = vmatprep.subr.bf16.mxu0 0
        %1403 = vmatpush1.bf16.msra.mxu0 %v1381
        %1404 = vmatprep.subr.bf16.mxu0 0
        %1405 = vmatpush1.bf16.msra.mxu0 %v1380
        %1406 = vmatprep.subr.bf16.mxu0 0
        %1407 = vmatpush1.bf16.msra.mxu0 %v1379
        %1408 = vmatprep.subr.bf16.mxu0 0
        %1409 = vmatpush1.bf16.msra.mxu0 %v1378
        %1410 = vmatprep.subr.bf16.mxu0 0
        %1411 = vmatpush2.bf16.msra.mxu0 0
        %1412 = vmatprep.subr.bf16.mxu0 0
        %1413 = vmatpush2.bf16.msra.mxu0 0
        %1414 = vmatprep.subr.bf16.mxu0 0
        %1415 = vmatpush2.bf16.msra.mxu0 0
        %1416 = vmatprep.subr.bf16.mxu0 0
        %1417 = vmatpush2.bf16.msra.mxu0 0
        %1418 = vmatprep.subr.bf16.mxu0 0
        %1419 = vmatpush2.bf16.msra.mxu0 0
        %1420 = vmatprep.subr.bf16.mxu0 0
        %1421 = vmatpush2.bf16.msra.mxu0 0
        %1422 = vmatprep.subr.bf16.mxu0 0
        %1423 = vmatpush2.bf16.msra.mxu0 0
        %1424 = vmatprep.subr.bf16.mxu0 0
        %1425 = vmatpush2.bf16.msra.mxu0 0
        %1426 = vmatprep.mubr.bf16.mxu0 0
        %1427 = vmatmul.mubr.bf16.gmra.mxu0 %v718
        %v1428 = vpop.f32.mrf.mxu0
        %v1429 = vadd.f32 %v1245, %v1428
        %v1430 = vpop.f32.mrf.mxu0
        %v1431 = vpop.f32.mrf.mxu0
        %v1432 = vpop.f32.mrf.mxu0
        %1433 = vdwg.mxu0
        %v1450 = vunpack.c.l.b16 %v1197
        %v1451 = vunpack.c.l.b16 %v1198
        %v1452 = vunpack.c.l.b16 %v1199
        %v1453 = vunpack.c.l.b16 %v1200
        %v1454 = vunpack.c.l.b16 %v1201
        %v1455 = vunpack.c.l.b16 %v1202
        %v1456 = vunpack.c.l.b16 %v1203
        %v1457 = vunpack.c.l.b16 %v1204
        %v1458 = vunpack.c.l.b16 %v1205
        %v1459 = vunpack.c.l.b16 %v1206
        %v1460 = vunpack.c.l.b16 %v1207
        %v1461 = vunpack.c.l.b16 %v1208
        %v1462 = vunpack.c.l.b16 %v1209
        %v1463 = vunpack.c.l.b16 %v1210
        %v1464 = vunpack.c.l.b16 %v1211
        %v1465 = vunpack.c.l.b16 %v1212
        %v1466 = vpack.c.b16 %v1451, %v1450
        %v1467 = vpack.c.b16 %v1453, %v1452
        %v1468 = vpack.c.b16 %v1455, %v1454
        %v1469 = vpack.c.b16 %v1457, %v1456
        %v1470 = vpack.c.b16 %v1459, %v1458
        %v1471 = vpack.c.b16 %v1461, %v1460
        %v1472 = vpack.c.b16 %v1463, %v1462
        %v1473 = vpack.c.b16 %v1465, %v1464
        %1482 = vmatprep.subr.bf16.mxu0 0
        %1483 = vmatpush1.bf16.msra.mxu0 %v1473
        %1484 = vmatprep.subr.bf16.mxu0 0
        %1485 = vmatpush1.bf16.msra.mxu0 %v1472
        %1486 = vmatprep.subr.bf16.mxu0 0
        %1487 = vmatpush1.bf16.msra.mxu0 %v1471
        %1488 = vmatprep.subr.bf16.mxu0 0
        %1489 = vmatpush1.bf16.msra.mxu0 %v1470
        %1490 = vmatprep.subr.bf16.mxu0 0
        %1491 = vmatpush1.bf16.msra.mxu0 %v1469
        %1492 = vmatprep.subr.bf16.mxu0 0
        %1493 = vmatpush1.bf16.msra.mxu0 %v1468
        %1494 = vmatprep.subr.bf16.mxu0 0
        %1495 = vmatpush1.bf16.msra.mxu0 %v1467
        %1496 = vmatprep.subr.bf16.mxu0 0
        %1497 = vmatpush1.bf16.msra.mxu0 %v1466
        %1498 = vmatprep.subr.bf16.mxu0 0
        %1499 = vmatpush2.bf16.msra.mxu0 0
        %1500 = vmatprep.subr.bf16.mxu0 0
        %1501 = vmatpush2.bf16.msra.mxu0 0
        %1502 = vmatprep.subr.bf16.mxu0 0
        %1503 = vmatpush2.bf16.msra.mxu0 0
        %1504 = vmatprep.subr.bf16.mxu0 0
        %1505 = vmatpush2.bf16.msra.mxu0 0
        %1506 = vmatprep.subr.bf16.mxu0 0
        %1507 = vmatpush2.bf16.msra.mxu0 0
        %1508 = vmatprep.subr.bf16.mxu0 0
        %1509 = vmatpush2.bf16.msra.mxu0 0
        %1510 = vmatprep.subr.bf16.mxu0 0
        %1511 = vmatpush2.bf16.msra.mxu0 0
        %1512 = vmatprep.subr.bf16.mxu0 0
        %1513 = vmatpush2.bf16.msra.mxu0 0
        %1514 = vmatprep.mubr.bf16.mxu0 0
        %1515 = vmatmul.mubr.bf16.gmra.mxu0 %v718
        %v1516 = vpop.f32.mrf.mxu0
        %v1517 = vadd.f32 %v1249, %v1516
        %v1518 = vpop.f32.mrf.mxu0
        %v1519 = vpop.f32.mrf.mxu0
        %v1520 = vpop.f32.mrf.mxu0
        %1521 = vdwg.mxu0
        %v1538 = vunpack.c.l.b16 %v1213
        %v1539 = vunpack.c.l.b16 %v1214
        %v1540 = vunpack.c.l.b16 %v1215
        %v1541 = vunpack.c.l.b16 %v1216
        %v1542 = vunpack.c.l.b16 %v1217
        %v1543 = vunpack.c.l.b16 %v1218
        %v1544 = vunpack.c.l.b16 %v1219
        %v1545 = vunpack.c.l.b16 %v1220
        %v1546 = vunpack.c.l.b16 %v1221
        %v1547 = vunpack.c.l.b16 %v1222
        %v1548 = vunpack.c.l.b16 %v1223
        %v1549 = vunpack.c.l.b16 %v1224
        %v1550 = vunpack.c.l.b16 %v1225
        %v1551 = vunpack.c.l.b16 %v1226
        %v1552 = vunpack.c.l.b16 %v1227
        %v1553 = vunpack.c.l.b16 %v1228
        %v1554 = vpack.c.b16 %v1539, %v1538
        %v1555 = vpack.c.b16 %v1541, %v1540
        %v1556 = vpack.c.b16 %v1543, %v1542
        %v1557 = vpack.c.b16 %v1545, %v1544
        %v1558 = vpack.c.b16 %v1547, %v1546
        %v1559 = vpack.c.b16 %v1549, %v1548
        %v1560 = vpack.c.b16 %v1551, %v1550
        %v1561 = vpack.c.b16 %v1553, %v1552
        %1570 = vmatprep.subr.bf16.mxu0 0
        %1571 = vmatpush1.bf16.msra.mxu0 %v1561
        %1572 = vmatprep.subr.bf16.mxu0 0
        %1573 = vmatpush1.bf16.msra.mxu0 %v1560
        %1574 = vmatprep.subr.bf16.mxu0 0
        %1575 = vmatpush1.bf16.msra.mxu0 %v1559
        %1576 = vmatprep.subr.bf16.mxu0 0
        %1577 = vmatpush1.bf16.msra.mxu0 %v1558
        %1578 = vmatprep.subr.bf16.mxu0 0
        %1579 = vmatpush1.bf16.msra.mxu0 %v1557
        %1580 = vmatprep.subr.bf16.mxu0 0
        %1581 = vmatpush1.bf16.msra.mxu0 %v1556
        %1582 = vmatprep.subr.bf16.mxu0 0
        %1583 = vmatpush1.bf16.msra.mxu0 %v1555
        %1584 = vmatprep.subr.bf16.mxu0 0
        %1585 = vmatpush1.bf16.msra.mxu0 %v1554
        %1586 = vmatprep.subr.bf16.mxu0 0
        %1587 = vmatpush2.bf16.msra.mxu0 0
        %1588 = vmatprep.subr.bf16.mxu0 0
        %1589 = vmatpush2.bf16.msra.mxu0 0
        %1590 = vmatprep.subr.bf16.mxu0 0
        %1591 = vmatpush2.bf16.msra.mxu0 0
        %1592 = vmatprep.subr.bf16.mxu0 0
        %1593 = vmatpush2.bf16.msra.mxu0 0
        %1594 = vmatprep.subr.bf16.mxu0 0
        %1595 = vmatpush2.bf16.msra.mxu0 0
        %1596 = vmatprep.subr.bf16.mxu0 0
        %1597 = vmatpush2.bf16.msra.mxu0 0
        %1598 = vmatprep.subr.bf16.mxu0 0
        %1599 = vmatpush2.bf16.msra.mxu0 0
        %1600 = vmatprep.subr.bf16.mxu0 0
        %1601 = vmatpush2.bf16.msra.mxu0 0
        %1602 = vmatprep.mubr.bf16.mxu0 0
        %1603 = vmatmul.mubr.bf16.gmra.mxu0 %v718
        %v1604 = vpop.f32.mrf.mxu0
        %v1605 = vadd.f32 %v1253, %v1604
        %v1606 = vpop.f32.mrf.mxu0
        %v1607 = vpop.f32.mrf.mxu0
        %v1608 = vpop.f32.mrf.mxu0
        %1609 = vdwg.mxu0
        %s1610 = scalar_lea.vmem %s2, 512
        %v1611 = vld [vmem:[%s1610] sm:$0xf]
        %v1612 = vld [vmem:[%s1610 + $0x4] sm:$0xf]
        %v1613 = vld [vmem:[%s1610 + $0x8] sm:$0xf]
        %v1614 = vld [vmem:[%s1610 + $0xc] sm:$0xf]
        %v1615 = vld [vmem:[%s1610 + $0x10] sm:$0xf]
        %v1616 = vld [vmem:[%s1610 + $0x14] sm:$0xf]
        %v1617 = vld [vmem:[%s1610 + $0x18] sm:$0xf]
        %v1618 = vld [vmem:[%s1610 + $0x1c] sm:$0xf]
        %v1619 = vld [vmem:[%s1610 + $0x20] sm:$0xf]
        %v1620 = vld [vmem:[%s1610 + $0x24] sm:$0xf]
        %v1621 = vld [vmem:[%s1610 + $0x28] sm:$0xf]
        %v1622 = vld [vmem:[%s1610 + $0x2c] sm:$0xf]
        %v1623 = vld [vmem:[%s1610 + $0x30] sm:$0xf]
        %v1624 = vld [vmem:[%s1610 + $0x34] sm:$0xf]
        %v1625 = vld [vmem:[%s1610 + $0x38] sm:$0xf]
        %v1626 = vld [vmem:[%s1610 + $0x3c] sm:$0xf]
        %v1627 = vld [vmem:[%s1610 + $0x40] sm:$0xf]
        %v1628 = vld [vmem:[%s1610 + $0x44] sm:$0xf]
        %v1629 = vld [vmem:[%s1610 + $0x48] sm:$0xf]
        %v1630 = vld [vmem:[%s1610 + $0x4c] sm:$0xf]
        %v1631 = vld [vmem:[%s1610 + $0x50] sm:$0xf]
        %v1632 = vld [vmem:[%s1610 + $0x54] sm:$0xf]
        %v1633 = vld [vmem:[%s1610 + $0x58] sm:$0xf]
        %v1634 = vld [vmem:[%s1610 + $0x5c] sm:$0xf]
        %v1635 = vld [vmem:[%s1610 + $0x60] sm:$0xf]
        %v1636 = vld [vmem:[%s1610 + $0x64] sm:$0xf]
        %v1637 = vld [vmem:[%s1610 + $0x68] sm:$0xf]
        %v1638 = vld [vmem:[%s1610 + $0x6c] sm:$0xf]
        %v1639 = vld [vmem:[%s1610 + $0x70] sm:$0xf]
        %v1640 = vld [vmem:[%s1610 + $0x74] sm:$0xf]
        %v1641 = vld [vmem:[%s1610 + $0x78] sm:$0xf]
        %v1642 = vld [vmem:[%s1610 + $0x7c] sm:$0xf]
        %v1643 = vld [vmem:[%s1610 + $0x80] sm:$0xf]
        %v1644 = vld [vmem:[%s1610 + $0x84] sm:$0xf]
        %v1645 = vld [vmem:[%s1610 + $0x88] sm:$0xf]
        %v1646 = vld [vmem:[%s1610 + $0x8c] sm:$0xf]
        %v1647 = vld [vmem:[%s1610 + $0x90] sm:$0xf]
        %v1648 = vld [vmem:[%s1610 + $0x94] sm:$0xf]
        %v1649 = vld [vmem:[%s1610 + $0x98] sm:$0xf]
        %v1650 = vld [vmem:[%s1610 + $0x9c] sm:$0xf]
        %v1651 = vld [vmem:[%s1610 + $0xa0] sm:$0xf]
        %v1652 = vld [vmem:[%s1610 + $0xa4] sm:$0xf]
        %v1653 = vld [vmem:[%s1610 + $0xa8] sm:$0xf]
        %v1654 = vld [vmem:[%s1610 + $0xac] sm:$0xf]
        %v1655 = vld [vmem:[%s1610 + $0xb0] sm:$0xf]
        %v1656 = vld [vmem:[%s1610 + $0xb4] sm:$0xf]
        %v1657 = vld [vmem:[%s1610 + $0xb8] sm:$0xf]
        %v1658 = vld [vmem:[%s1610 + $0xbc] sm:$0xf]
        %v1659 = vld [vmem:[%s1610 + $0xc0] sm:$0xf]
        %v1660 = vld [vmem:[%s1610 + $0xc4] sm:$0xf]
        %v1661 = vld [vmem:[%s1610 + $0xc8] sm:$0xf]
        %v1662 = vld [vmem:[%s1610 + $0xcc] sm:$0xf]
        %v1663 = vld [vmem:[%s1610 + $0xd0] sm:$0xf]
        %v1664 = vld [vmem:[%s1610 + $0xd4] sm:$0xf]
        %v1665 = vld [vmem:[%s1610 + $0xd8] sm:$0xf]
        %v1666 = vld [vmem:[%s1610 + $0xdc] sm:$0xf]
        %v1667 = vld [vmem:[%s1610 + $0xe0] sm:$0xf]
        %v1668 = vld [vmem:[%s1610 + $0xe4] sm:$0xf]
        %v1669 = vld [vmem:[%s1610 + $0xe8] sm:$0xf]
        %v1670 = vld [vmem:[%s1610 + $0xec] sm:$0xf]
        %v1671 = vld [vmem:[%s1610 + $0xf0] sm:$0xf]
        %v1672 = vld [vmem:[%s1610 + $0xf4] sm:$0xf]
        %v1673 = vld [vmem:[%s1610 + $0xf8] sm:$0xf]
        %v1674 = vld [vmem:[%s1610 + $0xfc] sm:$0xf]
        %s1675 = scalar_lea.vmem %s3, 8
        %v1676 = vld [vmem:[%s1675] sm:$0x1]
        %v1677 = vld [vmem:[%s1675 + $0x1] sm:$0x1]
        %v1678 = vld [vmem:[%s1675 + $0x2] sm:$0x1]
        %v1679 = vld [vmem:[%s1675 + $0x3] sm:$0x1]
        %v1684 = vlaneseq
        %v1685 = vshrl.u32 %v1684, 7
        %v1686 = vsub.s32 0, %v1685
        %v1687 = vrot.slane %v1676, %v1686
        %v1688 = vlaneseq
        %v1689 = vshrl.u32 %v1688, 7
        %v1690 = vsub.s32 0, %v1689
        %v1691 = vrot.slane %v1677, %v1690
        %v1692 = vlaneseq
        %v1693 = vshrl.u32 %v1692, 7
        %v1694 = vsub.s32 0, %v1693
        %v1695 = vrot.slane %v1678, %v1694
        %v1696 = vlaneseq
        %v1697 = vshrl.u32 %v1696, 7
        %v1698 = vsub.s32 0, %v1697
        %v1699 = vrot.slane %v1679, %v1698
        %v1720 = vunpack.c.l.b16 %v1611
        %v1721 = vunpack.c.l.b16 %v1612
        %v1722 = vunpack.c.l.b16 %v1613
        %v1723 = vunpack.c.l.b16 %v1614
        %v1724 = vunpack.c.l.b16 %v1615
        %v1725 = vunpack.c.l.b16 %v1616
        %v1726 = vunpack.c.l.b16 %v1617
        %v1727 = vunpack.c.l.b16 %v1618
        %v1728 = vunpack.c.l.b16 %v1619
        %v1729 = vunpack.c.l.b16 %v1620
        %v1730 = vunpack.c.l.b16 %v1621
        %v1731 = vunpack.c.l.b16 %v1622
        %v1732 = vunpack.c.l.b16 %v1623
        %v1733 = vunpack.c.l.b16 %v1624
        %v1734 = vunpack.c.l.b16 %v1625
        %v1735 = vunpack.c.l.b16 %v1626
        %v1736 = vpack.c.b16 %v1721, %v1720
        %v1737 = vpack.c.b16 %v1723, %v1722
        %v1738 = vpack.c.b16 %v1725, %v1724
        %v1739 = vpack.c.b16 %v1727, %v1726
        %v1740 = vpack.c.b16 %v1729, %v1728
        %v1741 = vpack.c.b16 %v1731, %v1730
        %v1742 = vpack.c.b16 %v1733, %v1732
        %v1743 = vpack.c.b16 %v1735, %v1734
        %1752 = vmatprep.subr.bf16.mxu0 0
        %1753 = vmatpush1.bf16.msra.mxu0 %v1743
        %1754 = vmatprep.subr.bf16.mxu0 0
        %1755 = vmatpush1.bf16.msra.mxu0 %v1742
        %1756 = vmatprep.subr.bf16.mxu0 0
        %1757 = vmatpush1.bf16.msra.mxu0 %v1741
        %1758 = vmatprep.subr.bf16.mxu0 0
        %1759 = vmatpush1.bf16.msra.mxu0 %v1740
        %1760 = vmatprep.subr.bf16.mxu0 0
        %1761 = vmatpush1.bf16.msra.mxu0 %v1739
        %1762 = vmatprep.subr.bf16.mxu0 0
        %1763 = vmatpush1.bf16.msra.mxu0 %v1738
        %1764 = vmatprep.subr.bf16.mxu0 0
        %1765 = vmatpush1.bf16.msra.mxu0 %v1737
        %1766 = vmatprep.subr.bf16.mxu0 0
        %1767 = vmatpush1.bf16.msra.mxu0 %v1736
        %1768 = vmatprep.subr.bf16.mxu0 0
        %1769 = vmatpush2.bf16.msra.mxu0 0
        %1770 = vmatprep.subr.bf16.mxu0 0
        %1771 = vmatpush2.bf16.msra.mxu0 0
        %1772 = vmatprep.subr.bf16.mxu0 0
        %1773 = vmatpush2.bf16.msra.mxu0 0
        %1774 = vmatprep.subr.bf16.mxu0 0
        %1775 = vmatpush2.bf16.msra.mxu0 0
        %1776 = vmatprep.subr.bf16.mxu0 0
        %1777 = vmatpush2.bf16.msra.mxu0 0
        %1778 = vmatprep.subr.bf16.mxu0 0
        %1779 = vmatpush2.bf16.msra.mxu0 0
        %1780 = vmatprep.subr.bf16.mxu0 0
        %1781 = vmatpush2.bf16.msra.mxu0 0
        %1782 = vmatprep.subr.bf16.mxu0 0
        %1783 = vmatpush2.bf16.msra.mxu0 0
        %1784 = vmatprep.mubr.bf16.mxu0 0
        %1785 = vmatmul.mubr.bf16.gmra.mxu0 %v718
        %v1786 = vpop.f32.mrf.mxu0
        %v1787 = vadd.f32 %v1687, %v1786
        %v1788 = vpop.f32.mrf.mxu0
        %v1789 = vpop.f32.mrf.mxu0
        %v1790 = vpop.f32.mrf.mxu0
        %1791 = vdwg.mxu0
        %v1808 = vunpack.c.l.b16 %v1627
        %v1809 = vunpack.c.l.b16 %v1628
        %v1810 = vunpack.c.l.b16 %v1629
        %v1811 = vunpack.c.l.b16 %v1630
        %v1812 = vunpack.c.l.b16 %v1631
        %v1813 = vunpack.c.l.b16 %v1632
        %v1814 = vunpack.c.l.b16 %v1633
        %v1815 = vunpack.c.l.b16 %v1634
        %v1816 = vunpack.c.l.b16 %v1635
        %v1817 = vunpack.c.l.b16 %v1636
        %v1818 = vunpack.c.l.b16 %v1637
        %v1819 = vunpack.c.l.b16 %v1638
        %v1820 = vunpack.c.l.b16 %v1639
        %v1821 = vunpack.c.l.b16 %v1640
        %v1822 = vunpack.c.l.b16 %v1641
        %v1823 = vunpack.c.l.b16 %v1642
        %v1824 = vpack.c.b16 %v1809, %v1808
        %v1825 = vpack.c.b16 %v1811, %v1810
        %v1826 = vpack.c.b16 %v1813, %v1812
        %v1827 = vpack.c.b16 %v1815, %v1814
        %v1828 = vpack.c.b16 %v1817, %v1816
        %v1829 = vpack.c.b16 %v1819, %v1818
        %v1830 = vpack.c.b16 %v1821, %v1820
        %v1831 = vpack.c.b16 %v1823, %v1822
        %1840 = vmatprep.subr.bf16.mxu0 0
        %1841 = vmatpush1.bf16.msra.mxu0 %v1831
        %1842 = vmatprep.subr.bf16.mxu0 0
        %1843 = vmatpush1.bf16.msra.mxu0 %v1830
        %1844 = vmatprep.subr.bf16.mxu0 0
        %1845 = vmatpush1.bf16.msra.mxu0 %v1829
        %1846 = vmatprep.subr.bf16.mxu0 0
        %1847 = vmatpush1.bf16.msra.mxu0 %v1828
        %1848 = vmatprep.subr.bf16.mxu0 0
        %1849 = vmatpush1.bf16.msra.mxu0 %v1827
        %1850 = vmatprep.subr.bf16.mxu0 0
        %1851 = vmatpush1.bf16.msra.mxu0 %v1826
        %1852 = vmatprep.subr.bf16.mxu0 0
        %1853 = vmatpush1.bf16.msra.mxu0 %v1825
        %1854 = vmatprep.subr.bf16.mxu0 0
        %1855 = vmatpush1.bf16.msra.mxu0 %v1824
        %1856 = vmatprep.subr.bf16.mxu0 0
        %1857 = vmatpush2.bf16.msra.mxu0 0
        %1858 = vmatprep.subr.bf16.mxu0 0
        %1859 = vmatpush2.bf16.msra.mxu0 0
        %1860 = vmatprep.subr.bf16.mxu0 0
        %1861 = vmatpush2.bf16.msra.mxu0 0
        %1862 = vmatprep.subr.bf16.mxu0 0
        %1863 = vmatpush2.bf16.msra.mxu0 0
        %1864 = vmatprep.subr.bf16.mxu0 0
        %1865 = vmatpush2.bf16.msra.mxu0 0
        %1866 = vmatprep.subr.bf16.mxu0 0
        %1867 = vmatpush2.bf16.msra.mxu0 0
        %1868 = vmatprep.subr.bf16.mxu0 0
        %1869 = vmatpush2.bf16.msra.mxu0 0
        %1870 = vmatprep.subr.bf16.mxu0 0
        %1871 = vmatpush2.bf16.msra.mxu0 0
        %1872 = vmatprep.mubr.bf16.mxu0 0
        %1873 = vmatmul.mubr.bf16.gmra.mxu0 %v718
        %v1874 = vpop.f32.mrf.mxu0
        %v1875 = vadd.f32 %v1691, %v1874
        %v1876 = vpop.f32.mrf.mxu0
        %v1877 = vpop.f32.mrf.mxu0
        %v1878 = vpop.f32.mrf.mxu0
        %1879 = vdwg.mxu0
        %v1896 = vunpack.c.l.b16 %v1643
        %v1897 = vunpack.c.l.b16 %v1644
        %v1898 = vunpack.c.l.b16 %v1645
        %v1899 = vunpack.c.l.b16 %v1646
        %v1900 = vunpack.c.l.b16 %v1647
        %v1901 = vunpack.c.l.b16 %v1648
        %v1902 = vunpack.c.l.b16 %v1649
        %v1903 = vunpack.c.l.b16 %v1650
        %v1904 = vunpack.c.l.b16 %v1651
        %v1905 = vunpack.c.l.b16 %v1652
        %v1906 = vunpack.c.l.b16 %v1653
        %v1907 = vunpack.c.l.b16 %v1654
        %v1908 = vunpack.c.l.b16 %v1655
        %v1909 = vunpack.c.l.b16 %v1656
        %v1910 = vunpack.c.l.b16 %v1657
        %v1911 = vunpack.c.l.b16 %v1658
        %v1912 = vpack.c.b16 %v1897, %v1896
        %v1913 = vpack.c.b16 %v1899, %v1898
        %v1914 = vpack.c.b16 %v1901, %v1900
        %v1915 = vpack.c.b16 %v1903, %v1902
        %v1916 = vpack.c.b16 %v1905, %v1904
        %v1917 = vpack.c.b16 %v1907, %v1906
        %v1918 = vpack.c.b16 %v1909, %v1908
        %v1919 = vpack.c.b16 %v1911, %v1910
        %1928 = vmatprep.subr.bf16.mxu0 0
        %1929 = vmatpush1.bf16.msra.mxu0 %v1919
        %1930 = vmatprep.subr.bf16.mxu0 0
        %1931 = vmatpush1.bf16.msra.mxu0 %v1918
        %1932 = vmatprep.subr.bf16.mxu0 0
        %1933 = vmatpush1.bf16.msra.mxu0 %v1917
        %1934 = vmatprep.subr.bf16.mxu0 0
        %1935 = vmatpush1.bf16.msra.mxu0 %v1916
        %1936 = vmatprep.subr.bf16.mxu0 0
        %1937 = vmatpush1.bf16.msra.mxu0 %v1915
        %1938 = vmatprep.subr.bf16.mxu0 0
        %1939 = vmatpush1.bf16.msra.mxu0 %v1914
        %1940 = vmatprep.subr.bf16.mxu0 0
        %1941 = vmatpush1.bf16.msra.mxu0 %v1913
        %1942 = vmatprep.subr.bf16.mxu0 0
        %1943 = vmatpush1.bf16.msra.mxu0 %v1912
        %1944 = vmatprep.subr.bf16.mxu0 0
        %1945 = vmatpush2.bf16.msra.mxu0 0
        %1946 = vmatprep.subr.bf16.mxu0 0
        %1947 = vmatpush2.bf16.msra.mxu0 0
        %1948 = vmatprep.subr.bf16.mxu0 0
        %1949 = vmatpush2.bf16.msra.mxu0 0
        %1950 = vmatprep.subr.bf16.mxu0 0
        %1951 = vmatpush2.bf16.msra.mxu0 0
        %1952 = vmatprep.subr.bf16.mxu0 0
        %1953 = vmatpush2.bf16.msra.mxu0 0
        %1954 = vmatprep.subr.bf16.mxu0 0
        %1955 = vmatpush2.bf16.msra.mxu0 0
        %1956 = vmatprep.subr.bf16.mxu0 0
        %1957 = vmatpush2.bf16.msra.mxu0 0
        %1958 = vmatprep.subr.bf16.mxu0 0
        %1959 = vmatpush2.bf16.msra.mxu0 0
        %1960 = vmatprep.mubr.bf16.mxu0 0
        %1961 = vmatmul.mubr.bf16.gmra.mxu0 %v718
        %v1962 = vpop.f32.mrf.mxu0
        %v1963 = vadd.f32 %v1695, %v1962
        %v1964 = vpop.f32.mrf.mxu0
        %v1965 = vpop.f32.mrf.mxu0
        %v1966 = vpop.f32.mrf.mxu0
        %1967 = vdwg.mxu0
        %v1984 = vunpack.c.l.b16 %v1659
        %v1985 = vunpack.c.l.b16 %v1660
        %v1986 = vunpack.c.l.b16 %v1661
        %v1987 = vunpack.c.l.b16 %v1662
        %v1988 = vunpack.c.l.b16 %v1663
        %v1989 = vunpack.c.l.b16 %v1664
        %v1990 = vunpack.c.l.b16 %v1665
        %v1991 = vunpack.c.l.b16 %v1666
        %v1992 = vunpack.c.l.b16 %v1667
        %v1993 = vunpack.c.l.b16 %v1668
        %v1994 = vunpack.c.l.b16 %v1669
        %v1995 = vunpack.c.l.b16 %v1670
        %v1996 = vunpack.c.l.b16 %v1671
        %v1997 = vunpack.c.l.b16 %v1672
        %v1998 = vunpack.c.l.b16 %v1673
        %v1999 = vunpack.c.l.b16 %v1674
        %v2000 = vpack.c.b16 %v1985, %v1984
        %v2001 = vpack.c.b16 %v1987, %v1986
        %v2002 = vpack.c.b16 %v1989, %v1988
        %v2003 = vpack.c.b16 %v1991, %v1990
        %v2004 = vpack.c.b16 %v1993, %v1992
        %v2005 = vpack.c.b16 %v1995, %v1994
        %v2006 = vpack.c.b16 %v1997, %v1996
        %v2007 = vpack.c.b16 %v1999, %v1998
        %2016 = vmatprep.subr.bf16.mxu0 0
        %2017 = vmatpush1.bf16.msra.mxu0 %v2007
        %2018 = vmatprep.subr.bf16.mxu0 0
        %2019 = vmatpush1.bf16.msra.mxu0 %v2006
        %2020 = vmatprep.subr.bf16.mxu0 0
        %2021 = vmatpush1.bf16.msra.mxu0 %v2005
        %2022 = vmatprep.subr.bf16.mxu0 0
        %2023 = vmatpush1.bf16.msra.mxu0 %v2004
        %2024 = vmatprep.subr.bf16.mxu0 0
        %2025 = vmatpush1.bf16.msra.mxu0 %v2003
        %2026 = vmatprep.subr.bf16.mxu0 0
        %2027 = vmatpush1.bf16.msra.mxu0 %v2002
        %2028 = vmatprep.subr.bf16.mxu0 0
        %2029 = vmatpush1.bf16.msra.mxu0 %v2001
        %2030 = vmatprep.subr.bf16.mxu0 0
        %2031 = vmatpush1.bf16.msra.mxu0 %v2000
        %2032 = vmatprep.subr.bf16.mxu0 0
        %2033 = vmatpush2.bf16.msra.mxu0 0
        %2034 = vmatprep.subr.bf16.mxu0 0
        %2035 = vmatpush2.bf16.msra.mxu0 0
        %2036 = vmatprep.subr.bf16.mxu0 0
        %2037 = vmatpush2.bf16.msra.mxu0 0
        %2038 = vmatprep.subr.bf16.mxu0 0
        %2039 = vmatpush2.bf16.msra.mxu0 0
        %2040 = vmatprep.subr.bf16.mxu0 0
        %2041 = vmatpush2.bf16.msra.mxu0 0
        %2042 = vmatprep.subr.bf16.mxu0 0
        %2043 = vmatpush2.bf16.msra.mxu0 0
        %2044 = vmatprep.subr.bf16.mxu0 0
        %2045 = vmatpush2.bf16.msra.mxu0 0
        %2046 = vmatprep.subr.bf16.mxu0 0
        %2047 = vmatpush2.bf16.msra.mxu0 0
        %2048 = vmatprep.mubr.bf16.mxu0 0
        %2049 = vmatmul.mubr.bf16.gmra.mxu0 %v718
        %v2050 = vpop.f32.mrf.mxu0
        %v2051 = vadd.f32 %v1699, %v2050
        %v2052 = vpop.f32.mrf.mxu0
        %v2053 = vpop.f32.mrf.mxu0
        %v2054 = vpop.f32.mrf.mxu0
        %2055 = vdwg.mxu0
        %v2056 = vmul.f32 %v895, 0.17677669
        %v2057 = vmul.f32 %v983, 0.17677669
        %v2058 = vmul.f32 %v1071, 0.17677669
        %v2059 = vmul.f32 %v1159, 0.17677669
        %v2060 = vpack.c.bf16 %v2056, %v2056
        %v2061 = vpack.c.bf16 %v2057, %v2057
        %v2062 = vpack.c.bf16 %v2058, %v2058
        %v2063 = vpack.c.bf16 %v2059, %v2059
        %v2064 = vpack.c.bf16 %v1341, %v1341
        %v2065 = vpack.c.bf16 %v1429, %v1429
        %v2066 = vpack.c.bf16 %v1517, %v1517
        %v2067 = vpack.c.bf16 %v1605, %v1605
        %vm2068 = vcmask 261120
        %v2070 = vsel %vm2068, %v2060, 0
        %v2073 = vsel %vm2068, %v2064, 0
        %2075 = vmatprep.subr.bf16.mxu0 0
        %2076 = vmatpush1.bf16.xpose.msra.mxu0 0
        %2077 = vmatprep.subr.bf16.mxu0 0
        %2078 = vmatpush1.bf16.xpose.msra.mxu0 0
        %2079 = vmatprep.subr.bf16.mxu0 0
        %2080 = vmatpush1.bf16.xpose.msra.mxu0 0
        %2081 = vmatprep.subr.bf16.mxu0 0
        %2082 = vmatpush1.bf16.xpose.msra.mxu0 0
        %2083 = vmatprep.subr.bf16.mxu0 0
        %2084 = vmatpush1.bf16.xpose.msra.mxu0 0
        %2085 = vmatprep.subr.bf16.mxu0 0
        %2086 = vmatpush1.bf16.xpose.msra.mxu0 0
        %2087 = vmatprep.subr.bf16.mxu0 0
        %2088 = vmatpush1.bf16.xpose.msra.mxu0 0
        %2089 = vmatprep.subr.bf16.mxu0 0
        %2090 = vmatpush1.bf16.xpose.msra.mxu0 %v2073
        %2091 = vmatprep.subr.bf16.mxu0 0
        %2092 = vmatpush2.bf16.xpose.msra.mxu0 0
        %2093 = vmatprep.subr.bf16.mxu0 0
        %2094 = vmatpush2.bf16.xpose.msra.mxu0 0
        %2095 = vmatprep.subr.bf16.mxu0 0
        %2096 = vmatpush2.bf16.xpose.msra.mxu0 0
        %2097 = vmatprep.subr.bf16.mxu0 0
        %2098 = vmatpush2.bf16.xpose.msra.mxu0 0
        %2099 = vmatprep.subr.bf16.mxu0 0
        %2100 = vmatpush2.bf16.xpose.msra.mxu0 0
        %2101 = vmatprep.subr.bf16.mxu0 0
        %2102 = vmatpush2.bf16.xpose.msra.mxu0 0
        %2103 = vmatprep.subr.bf16.mxu0 0
        %2104 = vmatpush2.bf16.xpose.msra.mxu0 0
        %2105 = vmatprep.subr.bf16.mxu0 0
        %2106 = vmatpush2.bf16.xpose.msra.mxu0 0
        %2107 = vmatprep.mubr.bf16.mxu0 0
        %2108 = vmatmul.mubr.bf16.gmra.mxu0 %v2070
        %v2109 = vpop.f32.mrf.mxu0
        %v2110 = vadd.f32 0.0, %v2109
        %v2111 = vpop.f32.mrf.mxu0
        %v2112 = vpop.f32.mrf.mxu0
        %v2113 = vpop.f32.mrf.mxu0
        %2114 = vdwg.mxu0
        %v2116 = vsel %vm2068, %v2061, 0
        %v2119 = vsel %vm2068, %v2065, 0
        %2121 = vmatprep.subr.bf16.mxu0 0
        %2122 = vmatpush1.bf16.xpose.msra.mxu0 0
        %2123 = vmatprep.subr.bf16.mxu0 0
        %2124 = vmatpush1.bf16.xpose.msra.mxu0 0
        %2125 = vmatprep.subr.bf16.mxu0 0
        %2126 = vmatpush1.bf16.xpose.msra.mxu0 0
        %2127 = vmatprep.subr.bf16.mxu0 0
        %2128 = vmatpush1.bf16.xpose.msra.mxu0 0
        %2129 = vmatprep.subr.bf16.mxu0 0
        %2130 = vmatpush1.bf16.xpose.msra.mxu0 0
        %2131 = vmatprep.subr.bf16.mxu0 0
        %2132 = vmatpush1.bf16.xpose.msra.mxu0 0
        %2133 = vmatprep.subr.bf16.mxu0 0
        %2134 = vmatpush1.bf16.xpose.msra.mxu0 0
        %2135 = vmatprep.subr.bf16.mxu0 0
        %2136 = vmatpush1.bf16.xpose.msra.mxu0 %v2119
        %2137 = vmatprep.subr.bf16.mxu0 0
        %2138 = vmatpush2.bf16.xpose.msra.mxu0 0
        %2139 = vmatprep.subr.bf16.mxu0 0
        %2140 = vmatpush2.bf16.xpose.msra.mxu0 0
        %2141 = vmatprep.subr.bf16.mxu0 0
        %2142 = vmatpush2.bf16.xpose.msra.mxu0 0
        %2143 = vmatprep.subr.bf16.mxu0 0
        %2144 = vmatpush2.bf16.xpose.msra.mxu0 0
        %2145 = vmatprep.subr.bf16.mxu0 0
        %2146 = vmatpush2.bf16.xpose.msra.mxu0 0
        %2147 = vmatprep.subr.bf16.mxu0 0
        %2148 = vmatpush2.bf16.xpose.msra.mxu0 0
        %2149 = vmatprep.subr.bf16.mxu0 0
        %2150 = vmatpush2.bf16.xpose.msra.mxu0 0
        %2151 = vmatprep.subr.bf16.mxu0 0
        %2152 = vmatpush2.bf16.xpose.msra.mxu0 0
        %2153 = vmatprep.mubr.bf16.mxu0 0
        %2154 = vmatmul.mubr.bf16.gmra.mxu0 %v2116
        %v2155 = vpop.f32.mrf.mxu0
        %v2156 = vadd.f32 0.0, %v2155
        %v2157 = vpop.f32.mrf.mxu0
        %v2158 = vpop.f32.mrf.mxu0
        %v2159 = vpop.f32.mrf.mxu0
        %2160 = vdwg.mxu0
        %v2162 = vsel %vm2068, %v2062, 0
        %v2165 = vsel %vm2068, %v2066, 0
        %2167 = vmatprep.subr.bf16.mxu0 0
        %2168 = vmatpush1.bf16.xpose.msra.mxu0 0
        %2169 = vmatprep.subr.bf16.mxu0 0
        %2170 = vmatpush1.bf16.xpose.msra.mxu0 0
        %2171 = vmatprep.subr.bf16.mxu0 0
        %2172 = vmatpush1.bf16.xpose.msra.mxu0 0
        %2173 = vmatprep.subr.bf16.mxu0 0
        %2174 = vmatpush1.bf16.xpose.msra.mxu0 0
        %2175 = vmatprep.subr.bf16.mxu0 0
        %2176 = vmatpush1.bf16.xpose.msra.mxu0 0
        %2177 = vmatprep.subr.bf16.mxu0 0
        %2178 = vmatpush1.bf16.xpose.msra.mxu0 0
        %2179 = vmatprep.subr.bf16.mxu0 0
        %2180 = vmatpush1.bf16.xpose.msra.mxu0 0
        %2181 = vmatprep.subr.bf16.mxu0 0
        %2182 = vmatpush1.bf16.xpose.msra.mxu0 %v2165
        %2183 = vmatprep.subr.bf16.mxu0 0
        %2184 = vmatpush2.bf16.xpose.msra.mxu0 0
        %2185 = vmatprep.subr.bf16.mxu0 0
        %2186 = vmatpush2.bf16.xpose.msra.mxu0 0
        %2187 = vmatprep.subr.bf16.mxu0 0
        %2188 = vmatpush2.bf16.xpose.msra.mxu0 0
        %2189 = vmatprep.subr.bf16.mxu0 0
        %2190 = vmatpush2.bf16.xpose.msra.mxu0 0
        %2191 = vmatprep.subr.bf16.mxu0 0
        %2192 = vmatpush2.bf16.xpose.msra.mxu0 0
        %2193 = vmatprep.subr.bf16.mxu0 0
        %2194 = vmatpush2.bf16.xpose.msra.mxu0 0
        %2195 = vmatprep.subr.bf16.mxu0 0
        %2196 = vmatpush2.bf16.xpose.msra.mxu0 0
        %2197 = vmatprep.subr.bf16.mxu0 0
        %2198 = vmatpush2.bf16.xpose.msra.mxu0 0
        %2199 = vmatprep.mubr.bf16.mxu0 0
        %2200 = vmatmul.mubr.bf16.gmra.mxu0 %v2162
        %v2201 = vpop.f32.mrf.mxu0
        %v2202 = vadd.f32 0.0, %v2201
        %v2203 = vpop.f32.mrf.mxu0
        %v2204 = vpop.f32.mrf.mxu0
        %v2205 = vpop.f32.mrf.mxu0
        %2206 = vdwg.mxu0
        %v2208 = vsel %vm2068, %v2063, 0
        %v2211 = vsel %vm2068, %v2067, 0
        %2213 = vmatprep.subr.bf16.mxu0 0
        %2214 = vmatpush1.bf16.xpose.msra.mxu0 0
        %2215 = vmatprep.subr.bf16.mxu0 0
        %2216 = vmatpush1.bf16.xpose.msra.mxu0 0
        %2217 = vmatprep.subr.bf16.mxu0 0
        %2218 = vmatpush1.bf16.xpose.msra.mxu0 0
        %2219 = vmatprep.subr.bf16.mxu0 0
        %2220 = vmatpush1.bf16.xpose.msra.mxu0 0
        %2221 = vmatprep.subr.bf16.mxu0 0
        %2222 = vmatpush1.bf16.xpose.msra.mxu0 0
        %2223 = vmatprep.subr.bf16.mxu0 0
        %2224 = vmatpush1.bf16.xpose.msra.mxu0 0
        %2225 = vmatprep.subr.bf16.mxu0 0
        %2226 = vmatpush1.bf16.xpose.msra.mxu0 0
        %2227 = vmatprep.subr.bf16.mxu0 0
        %2228 = vmatpush1.bf16.xpose.msra.mxu0 %v2211
        %2229 = vmatprep.subr.bf16.mxu0 0
        %2230 = vmatpush2.bf16.xpose.msra.mxu0 0
        %2231 = vmatprep.subr.bf16.mxu0 0
        %2232 = vmatpush2.bf16.xpose.msra.mxu0 0
        %2233 = vmatprep.subr.bf16.mxu0 0
        %2234 = vmatpush2.bf16.xpose.msra.mxu0 0
        %2235 = vmatprep.subr.bf16.mxu0 0
        %2236 = vmatpush2.bf16.xpose.msra.mxu0 0
        %2237 = vmatprep.subr.bf16.mxu0 0
        %2238 = vmatpush2.bf16.xpose.msra.mxu0 0
        %2239 = vmatprep.subr.bf16.mxu0 0
        %2240 = vmatpush2.bf16.xpose.msra.mxu0 0
        %2241 = vmatprep.subr.bf16.mxu0 0
        %2242 = vmatpush2.bf16.xpose.msra.mxu0 0
        %2243 = vmatprep.subr.bf16.mxu0 0
        %2244 = vmatpush2.bf16.xpose.msra.mxu0 0
        %2245 = vmatprep.mubr.bf16.mxu0 0
        %2246 = vmatmul.mubr.bf16.gmra.mxu0 %v2208
        %v2247 = vpop.f32.mrf.mxu0
        %v2248 = vadd.f32 0.0, %v2247
        %v2249 = vpop.f32.mrf.mxu0
        %v2250 = vpop.f32.mrf.mxu0
        %v2251 = vpop.f32.mrf.mxu0
        %2252 = vdwg.mxu0
        %vm2253 = vcmask 64512
        %v2254 = vsel %vm2253, %v2110, -inf
        %2255 = vmax.xlane.f32.xlu0 %v2254
        %v2256 = vpop.xlane.xlu0 %2255
        %v2257 = vsel %vm2253, %v2156, -inf
        %2258 = vmax.xlane.f32.xlu0 %v2257
        %v2259 = vpop.xlane.xlu0 %2258
        %v2260 = vsel %vm2253, %v2202, -inf
        %2261 = vmax.xlane.f32.xlu0 %v2260
        %v2262 = vpop.xlane.xlu0 %2261
        %v2263 = vsel %vm2253, %v2248, -inf
        %2264 = vmax.xlane.f32.xlu0 %v2263
        %v2265 = vpop.xlane.xlu0 %2264
        %v2266 = vsub.f32 %v2110, %v2256
        %v2267 = vsub.f32 %v2156, %v2259
        %v2268 = vsub.f32 %v2202, %v2262
        %v2269 = vsub.f32 %v2248, %v2265
        %v2270 = vmul.f32 %v2266, 1.442695
        %v2271 = vpow.pop %v2270
        %v2272 = vmul.f32 %v2267, 1.442695
        %v2273 = vpow.pop %v2272
        %v2274 = vmul.f32 %v2268, 1.442695
        %v2275 = vpow.pop %v2274
        %v2276 = vmul.f32 %v2269, 1.442695
        %v2277 = vpow.pop %v2276
        %v2278 = vsel %vm2253, %v2271, 0.0
        %2279 = vadd.xlane.f32.xlu0 %v2278
        %v2280 = vpop.xlane.xlu0 %2279
        %v2281 = vsel %vm2253, %v2273, 0.0
        %2282 = vadd.xlane.f32.xlu0 %v2281
        %v2283 = vpop.xlane.xlu0 %2282
        %v2284 = vsel %vm2253, %v2275, 0.0
        %2285 = vadd.xlane.f32.xlu0 %v2284
        %v2286 = vpop.xlane.xlu0 %2285
        %v2287 = vsel %vm2253, %v2277, 0.0
        %2288 = vadd.xlane.f32.xlu0 %v2287
        %v2289 = vpop.xlane.xlu0 %2288
        %v2290 = vrcp.pop %v2280
        %v2291 = vmul.f32 %v2271, %v2290
        %v2292 = vrcp.pop %v2283
        %v2293 = vmul.f32 %v2273, %v2292
        %v2294 = vrcp.pop %v2286
        %v2295 = vmul.f32 %v2275, %v2294
        %v2296 = vrcp.pop %v2289
        %v2297 = vmul.f32 %v2277, %v2296
        %v2298 = vpack.c.bf16 %v2291, %v2291
        %v2299 = vpack.c.bf16 %v2293, %v2293
        %v2300 = vpack.c.bf16 %v2295, %v2295
        %v2301 = vpack.c.bf16 %v2297, %v2297
        %v2302 = vpack.c.bf16 %v1787, %v1787
        %v2303 = vpack.c.bf16 %v1875, %v1875
        %v2304 = vpack.c.bf16 %v1963, %v1963
        %v2305 = vpack.c.bf16 %v2051, %v2051
        %v2307 = vsel %vm2253, %v2298, 0
        %vm2309 = vcmask 1043456
        %v2311 = vsel %vm2309, %v2302, 0
        %2313 = vmatprep.subr.bf16.mxu0 0
        %2314 = vmatpush1.bf16.msra.mxu0 0
        %2315 = vmatprep.subr.bf16.mxu0 0
        %2316 = vmatpush1.bf16.msra.mxu0 0
        %2317 = vmatprep.subr.bf16.mxu0 0
        %2318 = vmatpush1.bf16.msra.mxu0 0
        %2319 = vmatprep.subr.bf16.mxu0 0
        %2320 = vmatpush1.bf16.msra.mxu0 0
        %2321 = vmatprep.subr.bf16.mxu0 0
        %2322 = vmatpush1.bf16.msra.mxu0 0
        %2323 = vmatprep.subr.bf16.mxu0 0
        %2324 = vmatpush1.bf16.msra.mxu0 0
        %2325 = vmatprep.subr.bf16.mxu0 0
        %2326 = vmatpush1.bf16.msra.mxu0 0
        %2327 = vmatprep.subr.bf16.mxu0 0
        %2328 = vmatpush1.bf16.msra.mxu0 %v2311
        %2329 = vmatprep.subr.bf16.mxu0 0
        %2330 = vmatpush2.bf16.msra.mxu0 0
        %2331 = vmatprep.subr.bf16.mxu0 0
        %2332 = vmatpush2.bf16.msra.mxu0 0
        %2333 = vmatprep.subr.bf16.mxu0 0
        %2334 = vmatpush2.bf16.msra.mxu0 0
        %2335 = vmatprep.subr.bf16.mxu0 0
        %2336 = vmatpush2.bf16.msra.mxu0 0
        %2337 = vmatprep.subr.bf16.mxu0 0
        %2338 = vmatpush2.bf16.msra.mxu0 0
        %2339 = vmatprep.subr.bf16.mxu0 0
        %2340 = vmatpush2.bf16.msra.mxu0 0
        %2341 = vmatprep.subr.bf16.mxu0 0
        %2342 = vmatpush2.bf16.msra.mxu0 0
        %2343 = vmatprep.subr.bf16.mxu0 0
        %2344 = vmatpush2.bf16.msra.mxu0 0
        %2345 = vmatprep.mubr.bf16.mxu0 0
        %2346 = vmatmul.mubr.bf16.gmra.mxu0 %v2307
        %v2347 = vpop.f32.mrf.mxu0
        %v2348 = vadd.f32 0.0, %v2347
        %v2349 = vpop.f32.mrf.mxu0
        %v2350 = vpop.f32.mrf.mxu0
        %v2351 = vpop.f32.mrf.mxu0
        %2352 = vdwg.mxu0
        %v2354 = vsel %vm2253, %v2299, 0
        %v2357 = vsel %vm2309, %v2303, 0
        %2359 = vmatprep.subr.bf16.mxu0 0
        %2360 = vmatpush1.bf16.msra.mxu0 0
        %2361 = vmatprep.subr.bf16.mxu0 0
        %2362 = vmatpush1.bf16.msra.mxu0 0
        %2363 = vmatprep.subr.bf16.mxu0 0
        %2364 = vmatpush1.bf16.msra.mxu0 0
        %2365 = vmatprep.subr.bf16.mxu0 0
        %2366 = vmatpush1.bf16.msra.mxu0 0
        %2367 = vmatprep.subr.bf16.mxu0 0
        %2368 = vmatpush1.bf16.msra.mxu0 0
        %2369 = vmatprep.subr.bf16.mxu0 0
        %2370 = vmatpush1.bf16.msra.mxu0 0
        %2371 = vmatprep.subr.bf16.mxu0 0
        %2372 = vmatpush1.bf16.msra.mxu0 0
        %2373 = vmatprep.subr.bf16.mxu0 0
        %2374 = vmatpush1.bf16.msra.mxu0 %v2357
        %2375 = vmatprep.subr.bf16.mxu0 0
        %2376 = vmatpush2.bf16.msra.mxu0 0
        %2377 = vmatprep.subr.bf16.mxu0 0
        %2378 = vmatpush2.bf16.msra.mxu0 0
        %2379 = vmatprep.subr.bf16.mxu0 0
        %2380 = vmatpush2.bf16.msra.mxu0 0
        %2381 = vmatprep.subr.bf16.mxu0 0
        %2382 = vmatpush2.bf16.msra.mxu0 0
        %2383 = vmatprep.subr.bf16.mxu0 0
        %2384 = vmatpush2.bf16.msra.mxu0 0
        %2385 = vmatprep.subr.bf16.mxu0 0
        %2386 = vmatpush2.bf16.msra.mxu0 0
        %2387 = vmatprep.subr.bf16.mxu0 0
        %2388 = vmatpush2.bf16.msra.mxu0 0
        %2389 = vmatprep.subr.bf16.mxu0 0
        %2390 = vmatpush2.bf16.msra.mxu0 0
        %2391 = vmatprep.mubr.bf16.mxu0 0
        %2392 = vmatmul.mubr.bf16.gmra.mxu0 %v2354
        %v2393 = vpop.f32.mrf.mxu0
        %v2394 = vadd.f32 0.0, %v2393
        %v2395 = vpop.f32.mrf.mxu0
        %v2396 = vpop.f32.mrf.mxu0
        %v2397 = vpop.f32.mrf.mxu0
        %2398 = vdwg.mxu0
        %v2400 = vsel %vm2253, %v2300, 0
        %v2403 = vsel %vm2309, %v2304, 0
        %2405 = vmatprep.subr.bf16.mxu0 0
        %2406 = vmatpush1.bf16.msra.mxu0 0
        %2407 = vmatprep.subr.bf16.mxu0 0
        %2408 = vmatpush1.bf16.msra.mxu0 0
        %2409 = vmatprep.subr.bf16.mxu0 0
        %2410 = vmatpush1.bf16.msra.mxu0 0
        %2411 = vmatprep.subr.bf16.mxu0 0
        %2412 = vmatpush1.bf16.msra.mxu0 0
        %2413 = vmatprep.subr.bf16.mxu0 0
        %2414 = vmatpush1.bf16.msra.mxu0 0
        %2415 = vmatprep.subr.bf16.mxu0 0
        %2416 = vmatpush1.bf16.msra.mxu0 0
        %2417 = vmatprep.subr.bf16.mxu0 0
        %2418 = vmatpush1.bf16.msra.mxu0 0
        %2419 = vmatprep.subr.bf16.mxu0 0
        %2420 = vmatpush1.bf16.msra.mxu0 %v2403
        %2421 = vmatprep.subr.bf16.mxu0 0
        %2422 = vmatpush2.bf16.msra.mxu0 0
        %2423 = vmatprep.subr.bf16.mxu0 0
        %2424 = vmatpush2.bf16.msra.mxu0 0
        %2425 = vmatprep.subr.bf16.mxu0 0
        %2426 = vmatpush2.bf16.msra.mxu0 0
        %2427 = vmatprep.subr.bf16.mxu0 0
        %2428 = vmatpush2.bf16.msra.mxu0 0
        %2429 = vmatprep.subr.bf16.mxu0 0
        %2430 = vmatpush2.bf16.msra.mxu0 0
        %2431 = vmatprep.subr.bf16.mxu0 0
        %2432 = vmatpush2.bf16.msra.mxu0 0
        %2433 = vmatprep.subr.bf16.mxu0 0
        %2434 = vmatpush2.bf16.msra.mxu0 0
        %2435 = vmatprep.subr.bf16.mxu0 0
        %2436 = vmatpush2.bf16.msra.mxu0 0
        %2437 = vmatprep.mubr.bf16.mxu0 0
        %2438 = vmatmul.mubr.bf16.gmra.mxu0 %v2400
        %v2439 = vpop.f32.mrf.mxu0
        %v2440 = vadd.f32 0.0, %v2439
        %v2441 = vpop.f32.mrf.mxu0
        %v2442 = vpop.f32.mrf.mxu0
        %v2443 = vpop.f32.mrf.mxu0
        %2444 = vdwg.mxu0
        %v2446 = vsel %vm2253, %v2301, 0
        %v2449 = vsel %vm2309, %v2305, 0
        %2451 = vmatprep.subr.bf16.mxu0 0
        %2452 = vmatpush1.bf16.msra.mxu0 0
        %2453 = vmatprep.subr.bf16.mxu0 0
        %2454 = vmatpush1.bf16.msra.mxu0 0
        %2455 = vmatprep.subr.bf16.mxu0 0
        %2456 = vmatpush1.bf16.msra.mxu0 0
        %2457 = vmatprep.subr.bf16.mxu0 0
        %2458 = vmatpush1.bf16.msra.mxu0 0
        %2459 = vmatprep.subr.bf16.mxu0 0
        %2460 = vmatpush1.bf16.msra.mxu0 0
        %2461 = vmatprep.subr.bf16.mxu0 0
        %2462 = vmatpush1.bf16.msra.mxu0 0
        %2463 = vmatprep.subr.bf16.mxu0 0
        %2464 = vmatpush1.bf16.msra.mxu0 0
        %2465 = vmatprep.subr.bf16.mxu0 0
        %2466 = vmatpush1.bf16.msra.mxu0 %v2449
        %2467 = vmatprep.subr.bf16.mxu0 0
        %2468 = vmatpush2.bf16.msra.mxu0 0
        %2469 = vmatprep.subr.bf16.mxu0 0
        %2470 = vmatpush2.bf16.msra.mxu0 0
        %2471 = vmatprep.subr.bf16.mxu0 0
        %2472 = vmatpush2.bf16.msra.mxu0 0
        %2473 = vmatprep.subr.bf16.mxu0 0
        %2474 = vmatpush2.bf16.msra.mxu0 0
        %2475 = vmatprep.subr.bf16.mxu0 0
        %2476 = vmatpush2.bf16.msra.mxu0 0
        %2477 = vmatprep.subr.bf16.mxu0 0
        %2478 = vmatpush2.bf16.msra.mxu0 0
        %2479 = vmatprep.subr.bf16.mxu0 0
        %2480 = vmatpush2.bf16.msra.mxu0 0
        %2481 = vmatprep.subr.bf16.mxu0 0
        %2482 = vmatpush2.bf16.msra.mxu0 0
        %2483 = vmatprep.mubr.bf16.mxu0 0
        %2484 = vmatmul.mubr.bf16.gmra.mxu0 %v2446
        %v2485 = vpop.f32.mrf.mxu0
        %v2486 = vadd.f32 0.0, %v2485
        %v2487 = vpop.f32.mrf.mxu0
        %v2488 = vpop.f32.mrf.mxu0
        %v2489 = vpop.f32.mrf.mxu0
        %2490 = vdwg.mxu0
        %v2491 = vpack.c.bf16 %v2348, %v2348
        %v2492 = vpack.c.bf16 %v2394, %v2394
        %v2493 = vpack.c.bf16 %v2440, %v2440
        %v2494 = vpack.c.bf16 %v2486, %v2486
        %v2495 = vld [vmem:[%s4] sm:$0xf]
        %v2496 = vld [vmem:[%s4 + $0x4] sm:$0xf]
        %v2497 = vld [vmem:[%s4 + $0x8] sm:$0xf]
        %v2498 = vld [vmem:[%s4 + $0xc] sm:$0xf]
        %v2499 = vld [vmem:[%s4 + $0x10] sm:$0xf]
        %v2500 = vld [vmem:[%s4 + $0x14] sm:$0xf]
        %v2501 = vld [vmem:[%s4 + $0x18] sm:$0xf]
        %v2502 = vld [vmem:[%s4 + $0x1c] sm:$0xf]
        %v2503 = vld [vmem:[%s4 + $0x20] sm:$0xf]
        %v2504 = vld [vmem:[%s4 + $0x24] sm:$0xf]
        %v2505 = vld [vmem:[%s4 + $0x28] sm:$0xf]
        %v2506 = vld [vmem:[%s4 + $0x2c] sm:$0xf]
        %v2507 = vld [vmem:[%s4 + $0x30] sm:$0xf]
        %v2508 = vld [vmem:[%s4 + $0x34] sm:$0xf]
        %v2509 = vld [vmem:[%s4 + $0x38] sm:$0xf]
        %v2510 = vld [vmem:[%s4 + $0x3c] sm:$0xf]
        %v2515 = vunpack.c.l.b16 %v2495
        %v2516 = vunpack.c.l.b16 %v2496
        %v2517 = vunpack.c.l.b16 %v2497
        %v2518 = vunpack.c.l.b16 %v2498
        %v2519 = vpack.c.b16 %v2516, %v2515
        %v2520 = vpack.c.b16 %v2518, %v2517
        %v2524 = vsel %vm2068, %v2491, 0
        %2526 = vmatprep.subr.bf16.mxu0 0
        %2527 = vmatpush1.bf16.msra.mxu0 0
        %2528 = vmatprep.subr.bf16.mxu0 0
        %2529 = vmatpush1.bf16.msra.mxu0 0
        %2530 = vmatprep.subr.bf16.mxu0 0
        %2531 = vmatpush1.bf16.msra.mxu0 0
        %2532 = vmatprep.subr.bf16.mxu0 0
        %2533 = vmatpush1.bf16.msra.mxu0 0
        %2534 = vmatprep.subr.bf16.mxu0 0
        %2535 = vmatpush1.bf16.msra.mxu0 0
        %2536 = vmatprep.subr.bf16.mxu0 0
        %2537 = vmatpush1.bf16.msra.mxu0 0
        %2538 = vmatprep.subr.bf16.mxu0 0
        %2539 = vmatpush1.bf16.msra.mxu0 %v2520
        %2540 = vmatprep.subr.bf16.mxu0 0
        %2541 = vmatpush1.bf16.msra.mxu0 %v2519
        %2542 = vmatprep.subr.bf16.mxu0 0
        %2543 = vmatpush2.bf16.msra.mxu0 0
        %2544 = vmatprep.subr.bf16.mxu0 0
        %2545 = vmatpush2.bf16.msra.mxu0 0
        %2546 = vmatprep.subr.bf16.mxu0 0
        %2547 = vmatpush2.bf16.msra.mxu0 0
        %2548 = vmatprep.subr.bf16.mxu0 0
        %2549 = vmatpush2.bf16.msra.mxu0 0
        %2550 = vmatprep.subr.bf16.mxu0 0
        %2551 = vmatpush2.bf16.msra.mxu0 0
        %2552 = vmatprep.subr.bf16.mxu0 0
        %2553 = vmatpush2.bf16.msra.mxu0 0
        %2554 = vmatprep.subr.bf16.mxu0 0
        %2555 = vmatpush2.bf16.msra.mxu0 0
        %2556 = vmatprep.subr.bf16.mxu0 0
        %2557 = vmatpush2.bf16.msra.mxu0 0
        %2558 = vmatprep.mubr.bf16.mxu0 0
        %2559 = vmatmul.mubr.bf16.gmra.mxu0 %v2524
        %v2560 = vpop.f32.mrf.mxu0
        %v2561 = vadd.f32 0.0, %v2560
        %v2562 = vpop.f32.mrf.mxu0
        %v2563 = vpop.f32.mrf.mxu0
        %v2564 = vpop.f32.mrf.mxu0
        %2565 = vdwg.mxu0
        %v2570 = vunpack.c.l.b16 %v2499
        %v2571 = vunpack.c.l.b16 %v2500
        %v2572 = vunpack.c.l.b16 %v2501
        %v2573 = vunpack.c.l.b16 %v2502
        %v2574 = vpack.c.b16 %v2571, %v2570
        %v2575 = vpack.c.b16 %v2573, %v2572
        %v2579 = vsel %vm2068, %v2492, 0
        %2581 = vmatprep.subr.bf16.mxu0 0
        %2582 = vmatpush1.bf16.msra.mxu0 0
        %2583 = vmatprep.subr.bf16.mxu0 0
        %2584 = vmatpush1.bf16.msra.mxu0 0
        %2585 = vmatprep.subr.bf16.mxu0 0
        %2586 = vmatpush1.bf16.msra.mxu0 0
        %2587 = vmatprep.subr.bf16.mxu0 0
        %2588 = vmatpush1.bf16.msra.mxu0 0
        %2589 = vmatprep.subr.bf16.mxu0 0
        %2590 = vmatpush1.bf16.msra.mxu0 0
        %2591 = vmatprep.subr.bf16.mxu0 0
        %2592 = vmatpush1.bf16.msra.mxu0 0
        %2593 = vmatprep.subr.bf16.mxu0 0
        %2594 = vmatpush1.bf16.msra.mxu0 %v2575
        %2595 = vmatprep.subr.bf16.mxu0 0
        %2596 = vmatpush1.bf16.msra.mxu0 %v2574
        %2597 = vmatprep.subr.bf16.mxu0 0
        %2598 = vmatpush2.bf16.msra.mxu0 0
        %2599 = vmatprep.subr.bf16.mxu0 0
        %2600 = vmatpush2.bf16.msra.mxu0 0
        %2601 = vmatprep.subr.bf16.mxu0 0
        %2602 = vmatpush2.bf16.msra.mxu0 0
        %2603 = vmatprep.subr.bf16.mxu0 0
        %2604 = vmatpush2.bf16.msra.mxu0 0
        %2605 = vmatprep.subr.bf16.mxu0 0
        %2606 = vmatpush2.bf16.msra.mxu0 0
        %2607 = vmatprep.subr.bf16.mxu0 0
        %2608 = vmatpush2.bf16.msra.mxu0 0
        %2609 = vmatprep.subr.bf16.mxu0 0
        %2610 = vmatpush2.bf16.msra.mxu0 0
        %2611 = vmatprep.subr.bf16.mxu0 0
        %2612 = vmatpush2.bf16.msra.mxu0 0
        %2613 = vmatprep.mubr.bf16.mxu0 0
        %2614 = vmatmul.mubr.bf16.gmra.mxu0 %v2579
        %v2615 = vpop.f32.mrf.mxu0
        %v2616 = vadd.f32 0.0, %v2615
        %v2617 = vpop.f32.mrf.mxu0
        %v2618 = vpop.f32.mrf.mxu0
        %v2619 = vpop.f32.mrf.mxu0
        %2620 = vdwg.mxu0
        %v2625 = vunpack.c.l.b16 %v2503
        %v2626 = vunpack.c.l.b16 %v2504
        %v2627 = vunpack.c.l.b16 %v2505
        %v2628 = vunpack.c.l.b16 %v2506
        %v2629 = vpack.c.b16 %v2626, %v2625
        %v2630 = vpack.c.b16 %v2628, %v2627
        %v2634 = vsel %vm2068, %v2493, 0
        %2636 = vmatprep.subr.bf16.mxu0 0
        %2637 = vmatpush1.bf16.msra.mxu0 0
        %2638 = vmatprep.subr.bf16.mxu0 0
        %2639 = vmatpush1.bf16.msra.mxu0 0
        %2640 = vmatprep.subr.bf16.mxu0 0
        %2641 = vmatpush1.bf16.msra.mxu0 0
        %2642 = vmatprep.subr.bf16.mxu0 0
        %2643 = vmatpush1.bf16.msra.mxu0 0
        %2644 = vmatprep.subr.bf16.mxu0 0
        %2645 = vmatpush1.bf16.msra.mxu0 0
        %2646 = vmatprep.subr.bf16.mxu0 0
        %2647 = vmatpush1.bf16.msra.mxu0 0
        %2648 = vmatprep.subr.bf16.mxu0 0
        %2649 = vmatpush1.bf16.msra.mxu0 %v2630
        %2650 = vmatprep.subr.bf16.mxu0 0
        %2651 = vmatpush1.bf16.msra.mxu0 %v2629
        %2652 = vmatprep.subr.bf16.mxu0 0
        %2653 = vmatpush2.bf16.msra.mxu0 0
        %2654 = vmatprep.subr.bf16.mxu0 0
        %2655 = vmatpush2.bf16.msra.mxu0 0
        %2656 = vmatprep.subr.bf16.mxu0 0
        %2657 = vmatpush2.bf16.msra.mxu0 0
        %2658 = vmatprep.subr.bf16.mxu0 0
        %2659 = vmatpush2.bf16.msra.mxu0 0
        %2660 = vmatprep.subr.bf16.mxu0 0
        %2661 = vmatpush2.bf16.msra.mxu0 0
        %2662 = vmatprep.subr.bf16.mxu0 0
        %2663 = vmatpush2.bf16.msra.mxu0 0
        %2664 = vmatprep.subr.bf16.mxu0 0
        %2665 = vmatpush2.bf16.msra.mxu0 0
        %2666 = vmatprep.subr.bf16.mxu0 0
        %2667 = vmatpush2.bf16.msra.mxu0 0
        %2668 = vmatprep.mubr.bf16.mxu0 0
        %2669 = vmatmul.mubr.bf16.gmra.mxu0 %v2634
        %v2670 = vpop.f32.mrf.mxu0
        %v2671 = vadd.f32 0.0, %v2670
        %v2672 = vpop.f32.mrf.mxu0
        %v2673 = vpop.f32.mrf.mxu0
        %v2674 = vpop.f32.mrf.mxu0
        %2675 = vdwg.mxu0
        %v2680 = vunpack.c.l.b16 %v2507
        %v2681 = vunpack.c.l.b16 %v2508
        %v2682 = vunpack.c.l.b16 %v2509
        %v2683 = vunpack.c.l.b16 %v2510
        %v2684 = vpack.c.b16 %v2681, %v2680
        %v2685 = vpack.c.b16 %v2683, %v2682
        %v2689 = vsel %vm2068, %v2494, 0
        %2691 = vmatprep.subr.bf16.mxu0 0
        %2692 = vmatpush1.bf16.msra.mxu0 0
        %2693 = vmatprep.subr.bf16.mxu0 0
        %2694 = vmatpush1.bf16.msra.mxu0 0
        %2695 = vmatprep.subr.bf16.mxu0 0
        %2696 = vmatpush1.bf16.msra.mxu0 0
        %2697 = vmatprep.subr.bf16.mxu0 0
        %2698 = vmatpush1.bf16.msra.mxu0 0
        %2699 = vmatprep.subr.bf16.mxu0 0
        %2700 = vmatpush1.bf16.msra.mxu0 0
        %2701 = vmatprep.subr.bf16.mxu0 0
        %2702 = vmatpush1.bf16.msra.mxu0 0
        %2703 = vmatprep.subr.bf16.mxu0 0
        %2704 = vmatpush1.bf16.msra.mxu0 %v2685
        %2705 = vmatprep.subr.bf16.mxu0 0
        %2706 = vmatpush1.bf16.msra.mxu0 %v2684
        %2707 = vmatprep.subr.bf16.mxu0 0
        %2708 = vmatpush2.bf16.msra.mxu0 0
        %2709 = vmatprep.subr.bf16.mxu0 0
        %2710 = vmatpush2.bf16.msra.mxu0 0
        %2711 = vmatprep.subr.bf16.mxu0 0
        %2712 = vmatpush2.bf16.msra.mxu0 0
        %2713 = vmatprep.subr.bf16.mxu0 0
        %2714 = vmatpush2.bf16.msra.mxu0 0
        %2715 = vmatprep.subr.bf16.mxu0 0
        %2716 = vmatpush2.bf16.msra.mxu0 0
        %2717 = vmatprep.subr.bf16.mxu0 0
        %2718 = vmatpush2.bf16.msra.mxu0 0
        %2719 = vmatprep.subr.bf16.mxu0 0
        %2720 = vmatpush2.bf16.msra.mxu0 0
        %2721 = vmatprep.subr.bf16.mxu0 0
        %2722 = vmatpush2.bf16.msra.mxu0 0
        %2723 = vmatprep.mubr.bf16.mxu0 0
        %2724 = vmatmul.mubr.bf16.gmra.mxu0 %v2689
        %v2725 = vpop.f32.mrf.mxu0
        %v2726 = vadd.f32 0.0, %v2725
        %v2727 = vpop.f32.mrf.mxu0
        %v2728 = vpop.f32.mrf.mxu0
        %v2729 = vpop.f32.mrf.mxu0
        %2730 = vdwg.mxu0
        %v2731 = vadd.f32 %v2561, %v2616
        %v2732 = vadd.f32 %v2731, %v2671
        %v2733 = vadd.f32 %v2732, %v2726
        %v2734 = vld [vmem:[%s5] sm:$0x1]
        %v2736 = vlaneseq
        %v2737 = vshrl.u32 %v2736, 7
        %v2738 = vsub.s32 0, %v2737
        %v2739 = vrot.slane %v2734, %v2738
        %v2741 = vadd.f32 %v2733, %v2739
        %v2742 = vld [vmem:[%s6] sm:$0x1]
        %v2743 = vld [vmem:[%s7] sm:$0x1]
        %2744 = vadd.xlane.f32.xlu0 %v2741
        %v2745 = vpop.xlane.xlu0 %2744
        %v2746 = vrcp.pop 128.0
        %v2747 = vmul.f32 %v2745, %v2746
        %v2748 = vsub.f32 %v2741, %v2747
        %v2749 = vmul.f32 %v2748, %v2748
        %2750 = vadd.xlane.f32.xlu0 %v2749
        %v2751 = vpop.xlane.xlu0 %2750
        %v2752 = vmul.f32 %v2751, %v2746
        %v2753 = vadd.f32 %v2752, 1e-05
        %v2754 = vrsqrt.pop %v2753
        %v2755 = vmul.f32 %v2748, %v2754
        %v2757 = vlaneseq
        %v2758 = vshrl.u32 %v2757, 7
        %v2759 = vsub.s32 0, %v2758
        %v2760 = vrot.slane %v2742, %v2759
        %v2762 = vmul.f32 %v2755, %v2760
        %v2764 = vlaneseq
        %v2765 = vshrl.u32 %v2764, 7
        %v2766 = vsub.s32 0, %v2765
        %v2767 = vrot.slane %v2743, %v2766
        %v2769 = vadd.f32 %v2762, %v2767
        %v2770 = vadd.f32 %v719, %v2769
        %v2771 = vld [vmem:[%s712] sm:$0xf]
        %v2772 = vld [vmem:[%s8] sm:$0xf]
        %v2773 = vld [vmem:[%s8 + $0x4] sm:$0xf]
        %v2774 = vld [vmem:[%s8 + $0x8] sm:$0xf]
        %v2775 = vld [vmem:[%s8 + $0xc] sm:$0xf]
        %v2776 = vld [vmem:[%s8 + $0x10] sm:$0xf]
        %v2777 = vld [vmem:[%s8 + $0x14] sm:$0xf]
        %v2778 = vld [vmem:[%s8 + $0x18] sm:$0xf]
        %v2779 = vld [vmem:[%s8 + $0x1c] sm:$0xf]
        %v2780 = vld [vmem:[%s8 + $0x20] sm:$0xf]
        %v2781 = vld [vmem:[%s8 + $0x24] sm:$0xf]
        %v2782 = vld [vmem:[%s8 + $0x28] sm:$0xf]
        %v2783 = vld [vmem:[%s8 + $0x2c] sm:$0xf]
        %v2784 = vld [vmem:[%s8 + $0x30] sm:$0xf]
        %v2785 = vld [vmem:[%s8 + $0x34] sm:$0xf]
        %v2786 = vld [vmem:[%s8 + $0x38] sm:$0xf]
        %v2787 = vld [vmem:[%s8 + $0x3c] sm:$0xf]
        %v2788 = vld [vmem:[%s8 + $0x40] sm:$0xf]
        %v2789 = vld [vmem:[%s8 + $0x44] sm:$0xf]
        %v2790 = vld [vmem:[%s8 + $0x48] sm:$0xf]
        %v2791 = vld [vmem:[%s8 + $0x4c] sm:$0xf]
        %v2792 = vld [vmem:[%s8 + $0x50] sm:$0xf]
        %v2793 = vld [vmem:[%s8 + $0x54] sm:$0xf]
        %v2794 = vld [vmem:[%s8 + $0x58] sm:$0xf]
        %v2795 = vld [vmem:[%s8 + $0x5c] sm:$0xf]
        %v2796 = vld [vmem:[%s8 + $0x60] sm:$0xf]
        %v2797 = vld [vmem:[%s8 + $0x64] sm:$0xf]
        %v2798 = vld [vmem:[%s8 + $0x68] sm:$0xf]
        %v2799 = vld [vmem:[%s8 + $0x6c] sm:$0xf]
        %v2800 = vld [vmem:[%s8 + $0x70] sm:$0xf]
        %v2801 = vld [vmem:[%s8 + $0x74] sm:$0xf]
        %v2802 = vld [vmem:[%s8 + $0x78] sm:$0xf]
        %v2803 = vld [vmem:[%s8 + $0x7c] sm:$0xf]
        %v2804 = vld [vmem:[%s8 + $0x80] sm:$0xf]
        %v2805 = vld [vmem:[%s8 + $0x84] sm:$0xf]
        %v2806 = vld [vmem:[%s8 + $0x88] sm:$0xf]
        %v2807 = vld [vmem:[%s8 + $0x8c] sm:$0xf]
        %v2808 = vld [vmem:[%s8 + $0x90] sm:$0xf]
        %v2809 = vld [vmem:[%s8 + $0x94] sm:$0xf]
        %v2810 = vld [vmem:[%s8 + $0x98] sm:$0xf]
        %v2811 = vld [vmem:[%s8 + $0x9c] sm:$0xf]
        %v2812 = vld [vmem:[%s8 + $0xa0] sm:$0xf]
        %v2813 = vld [vmem:[%s8 + $0xa4] sm:$0xf]
        %v2814 = vld [vmem:[%s8 + $0xa8] sm:$0xf]
        %v2815 = vld [vmem:[%s8 + $0xac] sm:$0xf]
        %v2816 = vld [vmem:[%s8 + $0xb0] sm:$0xf]
        %v2817 = vld [vmem:[%s8 + $0xb4] sm:$0xf]
        %v2818 = vld [vmem:[%s8 + $0xb8] sm:$0xf]
        %v2819 = vld [vmem:[%s8 + $0xbc] sm:$0xf]
        %v2820 = vld [vmem:[%s8 + $0xc0] sm:$0xf]
        %v2821 = vld [vmem:[%s8 + $0xc4] sm:$0xf]
        %v2822 = vld [vmem:[%s8 + $0xc8] sm:$0xf]
        %v2823 = vld [vmem:[%s8 + $0xcc] sm:$0xf]
        %v2824 = vld [vmem:[%s8 + $0xd0] sm:$0xf]
        %v2825 = vld [vmem:[%s8 + $0xd4] sm:$0xf]
        %v2826 = vld [vmem:[%s8 + $0xd8] sm:$0xf]
        %v2827 = vld [vmem:[%s8 + $0xdc] sm:$0xf]
        %v2828 = vld [vmem:[%s8 + $0xe0] sm:$0xf]
        %v2829 = vld [vmem:[%s8 + $0xe4] sm:$0xf]
        %v2830 = vld [vmem:[%s8 + $0xe8] sm:$0xf]
        %v2831 = vld [vmem:[%s8 + $0xec] sm:$0xf]
        %v2832 = vld [vmem:[%s8 + $0xf0] sm:$0xf]
        %v2833 = vld [vmem:[%s8 + $0xf4] sm:$0xf]
        %v2834 = vld [vmem:[%s8 + $0xf8] sm:$0xf]
        %v2835 = vld [vmem:[%s8 + $0xfc] sm:$0xf]
        %v2836 = vld [vmem:[%s9] sm:$0x1]
        %v2837 = vld [vmem:[%s9 + $0x1] sm:$0x1]
        %v2838 = vld [vmem:[%s9 + $0x2] sm:$0x1]
        %v2839 = vld [vmem:[%s9 + $0x3] sm:$0x1]
        %v2844 = vlaneseq
        %v2845 = vshrl.u32 %v2844, 7
        %v2846 = vsub.s32 0, %v2845
        %v2847 = vrot.slane %v2836, %v2846
        %v2848 = vlaneseq
        %v2849 = vshrl.u32 %v2848, 7
        %v2850 = vsub.s32 0, %v2849
        %v2851 = vrot.slane %v2837, %v2850
        %v2852 = vlaneseq
        %v2853 = vshrl.u32 %v2852, 7
        %v2854 = vsub.s32 0, %v2853
        %v2855 = vrot.slane %v2838, %v2854
        %v2856 = vlaneseq
        %v2857 = vshrl.u32 %v2856, 7
        %v2858 = vsub.s32 0, %v2857
        %v2859 = vrot.slane %v2839, %v2858
        %v2880 = vunpack.c.l.b16 %v2772
        %v2881 = vunpack.c.l.b16 %v2773
        %v2882 = vunpack.c.l.b16 %v2774
        %v2883 = vunpack.c.l.b16 %v2775
        %v2884 = vunpack.c.l.b16 %v2776
        %v2885 = vunpack.c.l.b16 %v2777
        %v2886 = vunpack.c.l.b16 %v2778
        %v2887 = vunpack.c.l.b16 %v2779
        %v2888 = vunpack.c.l.b16 %v2780
        %v2889 = vunpack.c.l.b16 %v2781
        %v2890 = vunpack.c.l.b16 %v2782
        %v2891 = vunpack.c.l.b16 %v2783
        %v2892 = vunpack.c.l.b16 %v2784
        %v2893 = vunpack.c.l.b16 %v2785
        %v2894 = vunpack.c.l.b16 %v2786
        %v2895 = vunpack.c.l.b16 %v2787
        %v2896 = vpack.c.b16 %v2881, %v2880
        %v2897 = vpack.c.b16 %v2883, %v2882
        %v2898 = vpack.c.b16 %v2885, %v2884
        %v2899 = vpack.c.b16 %v2887, %v2886
        %v2900 = vpack.c.b16 %v2889, %v2888
        %v2901 = vpack.c.b16 %v2891, %v2890
        %v2902 = vpack.c.b16 %v2893, %v2892
        %v2903 = vpack.c.b16 %v2895, %v2894
        %2912 = vmatprep.subr.bf16.mxu0 0
        %2913 = vmatpush1.bf16.msra.mxu0 %v2903
        %2914 = vmatprep.subr.bf16.mxu0 0
        %2915 = vmatpush1.bf16.msra.mxu0 %v2902
        %2916 = vmatprep.subr.bf16.mxu0 0
        %2917 = vmatpush1.bf16.msra.mxu0 %v2901
        %2918 = vmatprep.subr.bf16.mxu0 0
        %2919 = vmatpush1.bf16.msra.mxu0 %v2900
        %2920 = vmatprep.subr.bf16.mxu0 0
        %2921 = vmatpush1.bf16.msra.mxu0 %v2899
        %2922 = vmatprep.subr.bf16.mxu0 0
        %2923 = vmatpush1.bf16.msra.mxu0 %v2898
        %2924 = vmatprep.subr.bf16.mxu0 0
        %2925 = vmatpush1.bf16.msra.mxu0 %v2897
        %2926 = vmatprep.subr.bf16.mxu0 0
        %2927 = vmatpush1.bf16.msra.mxu0 %v2896
        %2928 = vmatprep.subr.bf16.mxu0 0
        %2929 = vmatpush2.bf16.msra.mxu0 0
        %2930 = vmatprep.subr.bf16.mxu0 0
        %2931 = vmatpush2.bf16.msra.mxu0 0
        %2932 = vmatprep.subr.bf16.mxu0 0
        %2933 = vmatpush2.bf16.msra.mxu0 0
        %2934 = vmatprep.subr.bf16.mxu0 0
        %2935 = vmatpush2.bf16.msra.mxu0 0
        %2936 = vmatprep.subr.bf16.mxu0 0
        %2937 = vmatpush2.bf16.msra.mxu0 0
        %2938 = vmatprep.subr.bf16.mxu0 0
        %2939 = vmatpush2.bf16.msra.mxu0 0
        %2940 = vmatprep.subr.bf16.mxu0 0
        %2941 = vmatpush2.bf16.msra.mxu0 0
        %2942 = vmatprep.subr.bf16.mxu0 0
        %2943 = vmatpush2.bf16.msra.mxu0 0
        %2944 = vmatprep.mubr.bf16.mxu0 0
        %2945 = vmatmul.mubr.bf16.gmra.mxu0 %v2771
        %v2946 = vpop.f32.mrf.mxu0
        %v2947 = vadd.f32 %v2847, %v2946
        %v2948 = vpop.f32.mrf.mxu0
        %v2949 = vpop.f32.mrf.mxu0
        %v2950 = vpop.f32.mrf.mxu0
        %2951 = vdwg.mxu0
        %v2968 = vunpack.c.l.b16 %v2788
        %v2969 = vunpack.c.l.b16 %v2789
        %v2970 = vunpack.c.l.b16 %v2790
        %v2971 = vunpack.c.l.b16 %v2791
        %v2972 = vunpack.c.l.b16 %v2792
        %v2973 = vunpack.c.l.b16 %v2793
        %v2974 = vunpack.c.l.b16 %v2794
        %v2975 = vunpack.c.l.b16 %v2795
        %v2976 = vunpack.c.l.b16 %v2796
        %v2977 = vunpack.c.l.b16 %v2797
        %v2978 = vunpack.c.l.b16 %v2798
        %v2979 = vunpack.c.l.b16 %v2799
        %v2980 = vunpack.c.l.b16 %v2800
        %v2981 = vunpack.c.l.b16 %v2801
        %v2982 = vunpack.c.l.b16 %v2802
        %v2983 = vunpack.c.l.b16 %v2803
        %v2984 = vpack.c.b16 %v2969, %v2968
        %v2985 = vpack.c.b16 %v2971, %v2970
        %v2986 = vpack.c.b16 %v2973, %v2972
        %v2987 = vpack.c.b16 %v2975, %v2974
        %v2988 = vpack.c.b16 %v2977, %v2976
        %v2989 = vpack.c.b16 %v2979, %v2978
        %v2990 = vpack.c.b16 %v2981, %v2980
        %v2991 = vpack.c.b16 %v2983, %v2982
        %3000 = vmatprep.subr.bf16.mxu0 0
        %3001 = vmatpush1.bf16.msra.mxu0 %v2991
        %3002 = vmatprep.subr.bf16.mxu0 0
        %3003 = vmatpush1.bf16.msra.mxu0 %v2990
        %3004 = vmatprep.subr.bf16.mxu0 0
        %3005 = vmatpush1.bf16.msra.mxu0 %v2989
        %3006 = vmatprep.subr.bf16.mxu0 0
        %3007 = vmatpush1.bf16.msra.mxu0 %v2988
        %3008 = vmatprep.subr.bf16.mxu0 0
        %3009 = vmatpush1.bf16.msra.mxu0 %v2987
        %3010 = vmatprep.subr.bf16.mxu0 0
        %3011 = vmatpush1.bf16.msra.mxu0 %v2986
        %3012 = vmatprep.subr.bf16.mxu0 0
        %3013 = vmatpush1.bf16.msra.mxu0 %v2985
        %3014 = vmatprep.subr.bf16.mxu0 0
        %3015 = vmatpush1.bf16.msra.mxu0 %v2984
        %3016 = vmatprep.subr.bf16.mxu0 0
        %3017 = vmatpush2.bf16.msra.mxu0 0
        %3018 = vmatprep.subr.bf16.mxu0 0
        %3019 = vmatpush2.bf16.msra.mxu0 0
        %3020 = vmatprep.subr.bf16.mxu0 0
        %3021 = vmatpush2.bf16.msra.mxu0 0
        %3022 = vmatprep.subr.bf16.mxu0 0
        %3023 = vmatpush2.bf16.msra.mxu0 0
        %3024 = vmatprep.subr.bf16.mxu0 0
        %3025 = vmatpush2.bf16.msra.mxu0 0
        %3026 = vmatprep.subr.bf16.mxu0 0
        %3027 = vmatpush2.bf16.msra.mxu0 0
        %3028 = vmatprep.subr.bf16.mxu0 0
        %3029 = vmatpush2.bf16.msra.mxu0 0
        %3030 = vmatprep.subr.bf16.mxu0 0
        %3031 = vmatpush2.bf16.msra.mxu0 0
        %3032 = vmatprep.mubr.bf16.mxu0 0
        %3033 = vmatmul.mubr.bf16.gmra.mxu0 %v2771
        %v3034 = vpop.f32.mrf.mxu0
        %v3035 = vadd.f32 %v2851, %v3034
        %v3036 = vpop.f32.mrf.mxu0
        %v3037 = vpop.f32.mrf.mxu0
        %v3038 = vpop.f32.mrf.mxu0
        %3039 = vdwg.mxu0
        %v3056 = vunpack.c.l.b16 %v2804
        %v3057 = vunpack.c.l.b16 %v2805
        %v3058 = vunpack.c.l.b16 %v2806
        %v3059 = vunpack.c.l.b16 %v2807
        %v3060 = vunpack.c.l.b16 %v2808
        %v3061 = vunpack.c.l.b16 %v2809
        %v3062 = vunpack.c.l.b16 %v2810
        %v3063 = vunpack.c.l.b16 %v2811
        %v3064 = vunpack.c.l.b16 %v2812
        %v3065 = vunpack.c.l.b16 %v2813
        %v3066 = vunpack.c.l.b16 %v2814
        %v3067 = vunpack.c.l.b16 %v2815
        %v3068 = vunpack.c.l.b16 %v2816
        %v3069 = vunpack.c.l.b16 %v2817
        %v3070 = vunpack.c.l.b16 %v2818
        %v3071 = vunpack.c.l.b16 %v2819
        %v3072 = vpack.c.b16 %v3057, %v3056
        %v3073 = vpack.c.b16 %v3059, %v3058
        %v3074 = vpack.c.b16 %v3061, %v3060
        %v3075 = vpack.c.b16 %v3063, %v3062
        %v3076 = vpack.c.b16 %v3065, %v3064
        %v3077 = vpack.c.b16 %v3067, %v3066
        %v3078 = vpack.c.b16 %v3069, %v3068
        %v3079 = vpack.c.b16 %v3071, %v3070
        %3088 = vmatprep.subr.bf16.mxu0 0
        %3089 = vmatpush1.bf16.msra.mxu0 %v3079
        %3090 = vmatprep.subr.bf16.mxu0 0
        %3091 = vmatpush1.bf16.msra.mxu0 %v3078
        %3092 = vmatprep.subr.bf16.mxu0 0
        %3093 = vmatpush1.bf16.msra.mxu0 %v3077
        %3094 = vmatprep.subr.bf16.mxu0 0
        %3095 = vmatpush1.bf16.msra.mxu0 %v3076
        %3096 = vmatprep.subr.bf16.mxu0 0
        %3097 = vmatpush1.bf16.msra.mxu0 %v3075
        %3098 = vmatprep.subr.bf16.mxu0 0
        %3099 = vmatpush1.bf16.msra.mxu0 %v3074
        %3100 = vmatprep.subr.bf16.mxu0 0
        %3101 = vmatpush1.bf16.msra.mxu0 %v3073
        %3102 = vmatprep.subr.bf16.mxu0 0
        %3103 = vmatpush1.bf16.msra.mxu0 %v3072
        %3104 = vmatprep.subr.bf16.mxu0 0
        %3105 = vmatpush2.bf16.msra.mxu0 0
        %3106 = vmatprep.subr.bf16.mxu0 0
        %3107 = vmatpush2.bf16.msra.mxu0 0
        %3108 = vmatprep.subr.bf16.mxu0 0
        %3109 = vmatpush2.bf16.msra.mxu0 0
        %3110 = vmatprep.subr.bf16.mxu0 0
        %3111 = vmatpush2.bf16.msra.mxu0 0
        %3112 = vmatprep.subr.bf16.mxu0 0
        %3113 = vmatpush2.bf16.msra.mxu0 0
        %3114 = vmatprep.subr.bf16.mxu0 0
        %3115 = vmatpush2.bf16.msra.mxu0 0
        %3116 = vmatprep.subr.bf16.mxu0 0
        %3117 = vmatpush2.bf16.msra.mxu0 0
        %3118 = vmatprep.subr.bf16.mxu0 0
        %3119 = vmatpush2.bf16.msra.mxu0 0
        %3120 = vmatprep.mubr.bf16.mxu0 0
        %3121 = vmatmul.mubr.bf16.gmra.mxu0 %v2771
        %v3122 = vpop.f32.mrf.mxu0
        %v3123 = vadd.f32 %v2855, %v3122
        %v3124 = vpop.f32.mrf.mxu0
        %v3125 = vpop.f32.mrf.mxu0
        %v3126 = vpop.f32.mrf.mxu0
        %3127 = vdwg.mxu0
        %v3144 = vunpack.c.l.b16 %v2820
        %v3145 = vunpack.c.l.b16 %v2821
        %v3146 = vunpack.c.l.b16 %v2822
        %v3147 = vunpack.c.l.b16 %v2823
        %v3148 = vunpack.c.l.b16 %v2824
        %v3149 = vunpack.c.l.b16 %v2825
        %v3150 = vunpack.c.l.b16 %v2826
        %v3151 = vunpack.c.l.b16 %v2827
        %v3152 = vunpack.c.l.b16 %v2828
        %v3153 = vunpack.c.l.b16 %v2829
        %v3154 = vunpack.c.l.b16 %v2830
        %v3155 = vunpack.c.l.b16 %v2831
        %v3156 = vunpack.c.l.b16 %v2832
        %v3157 = vunpack.c.l.b16 %v2833
        %v3158 = vunpack.c.l.b16 %v2834
        %v3159 = vunpack.c.l.b16 %v2835
        %v3160 = vpack.c.b16 %v3145, %v3144
        %v3161 = vpack.c.b16 %v3147, %v3146
        %v3162 = vpack.c.b16 %v3149, %v3148
        %v3163 = vpack.c.b16 %v3151, %v3150
        %v3164 = vpack.c.b16 %v3153, %v3152
        %v3165 = vpack.c.b16 %v3155, %v3154
        %v3166 = vpack.c.b16 %v3157, %v3156
        %v3167 = vpack.c.b16 %v3159, %v3158
        %3176 = vmatprep.subr.bf16.mxu0 0
        %3177 = vmatpush1.bf16.msra.mxu0 %v3167
        %3178 = vmatprep.subr.bf16.mxu0 0
        %3179 = vmatpush1.bf16.msra.mxu0 %v3166
        %3180 = vmatprep.subr.bf16.mxu0 0
        %3181 = vmatpush1.bf16.msra.mxu0 %v3165
        %3182 = vmatprep.subr.bf16.mxu0 0
        %3183 = vmatpush1.bf16.msra.mxu0 %v3164
        %3184 = vmatprep.subr.bf16.mxu0 0
        %3185 = vmatpush1.bf16.msra.mxu0 %v3163
        %3186 = vmatprep.subr.bf16.mxu0 0
        %3187 = vmatpush1.bf16.msra.mxu0 %v3162
        %3188 = vmatprep.subr.bf16.mxu0 0
        %3189 = vmatpush1.bf16.msra.mxu0 %v3161
        %3190 = vmatprep.subr.bf16.mxu0 0
        %3191 = vmatpush1.bf16.msra.mxu0 %v3160
        %3192 = vmatprep.subr.bf16.mxu0 0
        %3193 = vmatpush2.bf16.msra.mxu0 0
        %3194 = vmatprep.subr.bf16.mxu0 0
        %3195 = vmatpush2.bf16.msra.mxu0 0
        %3196 = vmatprep.subr.bf16.mxu0 0
        %3197 = vmatpush2.bf16.msra.mxu0 0
        %3198 = vmatprep.subr.bf16.mxu0 0
        %3199 = vmatpush2.bf16.msra.mxu0 0
        %3200 = vmatprep.subr.bf16.mxu0 0
        %3201 = vmatpush2.bf16.msra.mxu0 0
        %3202 = vmatprep.subr.bf16.mxu0 0
        %3203 = vmatpush2.bf16.msra.mxu0 0
        %3204 = vmatprep.subr.bf16.mxu0 0
        %3205 = vmatpush2.bf16.msra.mxu0 0
        %3206 = vmatprep.subr.bf16.mxu0 0
        %3207 = vmatpush2.bf16.msra.mxu0 0
        %3208 = vmatprep.mubr.bf16.mxu0 0
        %3209 = vmatmul.mubr.bf16.gmra.mxu0 %v2771
        %v3210 = vpop.f32.mrf.mxu0
        %v3211 = vadd.f32 %v2859, %v3210
        %v3212 = vpop.f32.mrf.mxu0
        %v3213 = vpop.f32.mrf.mxu0
        %v3214 = vpop.f32.mrf.mxu0
        %3215 = vdwg.mxu0
        %s3216 = scalar_lea.vmem %s8, 256
        %v3217 = vld [vmem:[%s3216] sm:$0xf]
        %v3218 = vld [vmem:[%s3216 + $0x4] sm:$0xf]
        %v3219 = vld [vmem:[%s3216 + $0x8] sm:$0xf]
        %v3220 = vld [vmem:[%s3216 + $0xc] sm:$0xf]
        %v3221 = vld [vmem:[%s3216 + $0x10] sm:$0xf]
        %v3222 = vld [vmem:[%s3216 + $0x14] sm:$0xf]
        %v3223 = vld [vmem:[%s3216 + $0x18] sm:$0xf]
        %v3224 = vld [vmem:[%s3216 + $0x1c] sm:$0xf]
        %v3225 = vld [vmem:[%s3216 + $0x20] sm:$0xf]
        %v3226 = vld [vmem:[%s3216 + $0x24] sm:$0xf]
        %v3227 = vld [vmem:[%s3216 + $0x28] sm:$0xf]
        %v3228 = vld [vmem:[%s3216 + $0x2c] sm:$0xf]
        %v3229 = vld [vmem:[%s3216 + $0x30] sm:$0xf]
        %v3230 = vld [vmem:[%s3216 + $0x34] sm:$0xf]
        %v3231 = vld [vmem:[%s3216 + $0x38] sm:$0xf]
        %v3232 = vld [vmem:[%s3216 + $0x3c] sm:$0xf]
        %v3233 = vld [vmem:[%s3216 + $0x40] sm:$0xf]
        %v3234 = vld [vmem:[%s3216 + $0x44] sm:$0xf]
        %v3235 = vld [vmem:[%s3216 + $0x48] sm:$0xf]
        %v3236 = vld [vmem:[%s3216 + $0x4c] sm:$0xf]
        %v3237 = vld [vmem:[%s3216 + $0x50] sm:$0xf]
        %v3238 = vld [vmem:[%s3216 + $0x54] sm:$0xf]
        %v3239 = vld [vmem:[%s3216 + $0x58] sm:$0xf]
        %v3240 = vld [vmem:[%s3216 + $0x5c] sm:$0xf]
        %v3241 = vld [vmem:[%s3216 + $0x60] sm:$0xf]
        %v3242 = vld [vmem:[%s3216 + $0x64] sm:$0xf]
        %v3243 = vld [vmem:[%s3216 + $0x68] sm:$0xf]
        %v3244 = vld [vmem:[%s3216 + $0x6c] sm:$0xf]
        %v3245 = vld [vmem:[%s3216 + $0x70] sm:$0xf]
        %v3246 = vld [vmem:[%s3216 + $0x74] sm:$0xf]
        %v3247 = vld [vmem:[%s3216 + $0x78] sm:$0xf]
        %v3248 = vld [vmem:[%s3216 + $0x7c] sm:$0xf]
        %v3249 = vld [vmem:[%s3216 + $0x80] sm:$0xf]
        %v3250 = vld [vmem:[%s3216 + $0x84] sm:$0xf]
        %v3251 = vld [vmem:[%s3216 + $0x88] sm:$0xf]
        %v3252 = vld [vmem:[%s3216 + $0x8c] sm:$0xf]
        %v3253 = vld [vmem:[%s3216 + $0x90] sm:$0xf]
        %v3254 = vld [vmem:[%s3216 + $0x94] sm:$0xf]
        %v3255 = vld [vmem:[%s3216 + $0x98] sm:$0xf]
        %v3256 = vld [vmem:[%s3216 + $0x9c] sm:$0xf]
        %v3257 = vld [vmem:[%s3216 + $0xa0] sm:$0xf]
        %v3258 = vld [vmem:[%s3216 + $0xa4] sm:$0xf]
        %v3259 = vld [vmem:[%s3216 + $0xa8] sm:$0xf]
        %v3260 = vld [vmem:[%s3216 + $0xac] sm:$0xf]
        %v3261 = vld [vmem:[%s3216 + $0xb0] sm:$0xf]
        %v3262 = vld [vmem:[%s3216 + $0xb4] sm:$0xf]
        %v3263 = vld [vmem:[%s3216 + $0xb8] sm:$0xf]
        %v3264 = vld [vmem:[%s3216 + $0xbc] sm:$0xf]
        %v3265 = vld [vmem:[%s3216 + $0xc0] sm:$0xf]
        %v3266 = vld [vmem:[%s3216 + $0xc4] sm:$0xf]
        %v3267 = vld [vmem:[%s3216 + $0xc8] sm:$0xf]
        %v3268 = vld [vmem:[%s3216 + $0xcc] sm:$0xf]
        %v3269 = vld [vmem:[%s3216 + $0xd0] sm:$0xf]
        %v3270 = vld [vmem:[%s3216 + $0xd4] sm:$0xf]
        %v3271 = vld [vmem:[%s3216 + $0xd8] sm:$0xf]
        %v3272 = vld [vmem:[%s3216 + $0xdc] sm:$0xf]
        %v3273 = vld [vmem:[%s3216 + $0xe0] sm:$0xf]
        %v3274 = vld [vmem:[%s3216 + $0xe4] sm:$0xf]
        %v3275 = vld [vmem:[%s3216 + $0xe8] sm:$0xf]
        %v3276 = vld [vmem:[%s3216 + $0xec] sm:$0xf]
        %v3277 = vld [vmem:[%s3216 + $0xf0] sm:$0xf]
        %v3278 = vld [vmem:[%s3216 + $0xf4] sm:$0xf]
        %v3279 = vld [vmem:[%s3216 + $0xf8] sm:$0xf]
        %v3280 = vld [vmem:[%s3216 + $0xfc] sm:$0xf]
        %s3281 = scalar_lea.vmem %s9, 4
        %v3282 = vld [vmem:[%s3281] sm:$0x1]
        %v3283 = vld [vmem:[%s3281 + $0x1] sm:$0x1]
        %v3284 = vld [vmem:[%s3281 + $0x2] sm:$0x1]
        %v3285 = vld [vmem:[%s3281 + $0x3] sm:$0x1]
        %v3290 = vlaneseq
        %v3291 = vshrl.u32 %v3290, 7
        %v3292 = vsub.s32 0, %v3291
        %v3293 = vrot.slane %v3282, %v3292
        %v3294 = vlaneseq
        %v3295 = vshrl.u32 %v3294, 7
        %v3296 = vsub.s32 0, %v3295
        %v3297 = vrot.slane %v3283, %v3296
        %v3298 = vlaneseq
        %v3299 = vshrl.u32 %v3298, 7
        %v3300 = vsub.s32 0, %v3299
        %v3301 = vrot.slane %v3284, %v3300
        %v3302 = vlaneseq
        %v3303 = vshrl.u32 %v3302, 7
        %v3304 = vsub.s32 0, %v3303
        %v3305 = vrot.slane %v3285, %v3304
        %v3326 = vunpack.c.l.b16 %v3217
        %v3327 = vunpack.c.l.b16 %v3218
        %v3328 = vunpack.c.l.b16 %v3219
        %v3329 = vunpack.c.l.b16 %v3220
        %v3330 = vunpack.c.l.b16 %v3221
        %v3331 = vunpack.c.l.b16 %v3222
        %v3332 = vunpack.c.l.b16 %v3223
        %v3333 = vunpack.c.l.b16 %v3224
        %v3334 = vunpack.c.l.b16 %v3225
        %v3335 = vunpack.c.l.b16 %v3226
        %v3336 = vunpack.c.l.b16 %v3227
        %v3337 = vunpack.c.l.b16 %v3228
        %v3338 = vunpack.c.l.b16 %v3229
        %v3339 = vunpack.c.l.b16 %v3230
        %v3340 = vunpack.c.l.b16 %v3231
        %v3341 = vunpack.c.l.b16 %v3232
        %v3342 = vpack.c.b16 %v3327, %v3326
        %v3343 = vpack.c.b16 %v3329, %v3328
        %v3344 = vpack.c.b16 %v3331, %v3330
        %v3345 = vpack.c.b16 %v3333, %v3332
        %v3346 = vpack.c.b16 %v3335, %v3334
        %v3347 = vpack.c.b16 %v3337, %v3336
        %v3348 = vpack.c.b16 %v3339, %v3338
        %v3349 = vpack.c.b16 %v3341, %v3340
        %3358 = vmatprep.subr.bf16.mxu0 0
        %3359 = vmatpush1.bf16.msra.mxu0 %v3349
        %3360 = vmatprep.subr.bf16.mxu0 0
        %3361 = vmatpush1.bf16.msra.mxu0 %v3348
        %3362 = vmatprep.subr.bf16.mxu0 0
        %3363 = vmatpush1.bf16.msra.mxu0 %v3347
        %3364 = vmatprep.subr.bf16.mxu0 0
        %3365 = vmatpush1.bf16.msra.mxu0 %v3346
        %3366 = vmatprep.subr.bf16.mxu0 0
        %3367 = vmatpush1.bf16.msra.mxu0 %v3345
        %3368 = vmatprep.subr.bf16.mxu0 0
        %3369 = vmatpush1.bf16.msra.mxu0 %v3344
        %3370 = vmatprep.subr.bf16.mxu0 0
        %3371 = vmatpush1.bf16.msra.mxu0 %v3343
        %3372 = vmatprep.subr.bf16.mxu0 0
        %3373 = vmatpush1.bf16.msra.mxu0 %v3342
        %3374 = vmatprep.subr.bf16.mxu0 0
        %3375 = vmatpush2.bf16.msra.mxu0 0
        %3376 = vmatprep.subr.bf16.mxu0 0
        %3377 = vmatpush2.bf16.msra.mxu0 0
        %3378 = vmatprep.subr.bf16.mxu0 0
        %3379 = vmatpush2.bf16.msra.mxu0 0
        %3380 = vmatprep.subr.bf16.mxu0 0
        %3381 = vmatpush2.bf16.msra.mxu0 0
        %3382 = vmatprep.subr.bf16.mxu0 0
        %3383 = vmatpush2.bf16.msra.mxu0 0
        %3384 = vmatprep.subr.bf16.mxu0 0
        %3385 = vmatpush2.bf16.msra.mxu0 0
        %3386 = vmatprep.subr.bf16.mxu0 0
        %3387 = vmatpush2.bf16.msra.mxu0 0
        %3388 = vmatprep.subr.bf16.mxu0 0
        %3389 = vmatpush2.bf16.msra.mxu0 0
        %3390 = vmatprep.mubr.bf16.mxu0 0
        %3391 = vmatmul.mubr.bf16.gmra.mxu0 %v2771
        %v3392 = vpop.f32.mrf.mxu0
        %v3393 = vadd.f32 %v3293, %v3392
        %v3394 = vpop.f32.mrf.mxu0
        %v3395 = vpop.f32.mrf.mxu0
        %v3396 = vpop.f32.mrf.mxu0
        %3397 = vdwg.mxu0
        %v3414 = vunpack.c.l.b16 %v3233
        %v3415 = vunpack.c.l.b16 %v3234
        %v3416 = vunpack.c.l.b16 %v3235
        %v3417 = vunpack.c.l.b16 %v3236
        %v3418 = vunpack.c.l.b16 %v3237
        %v3419 = vunpack.c.l.b16 %v3238
        %v3420 = vunpack.c.l.b16 %v3239
        %v3421 = vunpack.c.l.b16 %v3240
        %v3422 = vunpack.c.l.b16 %v3241
        %v3423 = vunpack.c.l.b16 %v3242
        %v3424 = vunpack.c.l.b16 %v3243
        %v3425 = vunpack.c.l.b16 %v3244
        %v3426 = vunpack.c.l.b16 %v3245
        %v3427 = vunpack.c.l.b16 %v3246
        %v3428 = vunpack.c.l.b16 %v3247
        %v3429 = vunpack.c.l.b16 %v3248
        %v3430 = vpack.c.b16 %v3415, %v3414
        %v3431 = vpack.c.b16 %v3417, %v3416
        %v3432 = vpack.c.b16 %v3419, %v3418
        %v3433 = vpack.c.b16 %v3421, %v3420
        %v3434 = vpack.c.b16 %v3423, %v3422
        %v3435 = vpack.c.b16 %v3425, %v3424
        %v3436 = vpack.c.b16 %v3427, %v3426
        %v3437 = vpack.c.b16 %v3429, %v3428
        %3446 = vmatprep.subr.bf16.mxu0 0
        %3447 = vmatpush1.bf16.msra.mxu0 %v3437
        %3448 = vmatprep.subr.bf16.mxu0 0
        %3449 = vmatpush1.bf16.msra.mxu0 %v3436
        %3450 = vmatprep.subr.bf16.mxu0 0
        %3451 = vmatpush1.bf16.msra.mxu0 %v3435
        %3452 = vmatprep.subr.bf16.mxu0 0
        %3453 = vmatpush1.bf16.msra.mxu0 %v3434
        %3454 = vmatprep.subr.bf16.mxu0 0
        %3455 = vmatpush1.bf16.msra.mxu0 %v3433
        %3456 = vmatprep.subr.bf16.mxu0 0
        %3457 = vmatpush1.bf16.msra.mxu0 %v3432
        %3458 = vmatprep.subr.bf16.mxu0 0
        %3459 = vmatpush1.bf16.msra.mxu0 %v3431
        %3460 = vmatprep.subr.bf16.mxu0 0
        %3461 = vmatpush1.bf16.msra.mxu0 %v3430
        %3462 = vmatprep.subr.bf16.mxu0 0
        %3463 = vmatpush2.bf16.msra.mxu0 0
        %3464 = vmatprep.subr.bf16.mxu0 0
        %3465 = vmatpush2.bf16.msra.mxu0 0
        %3466 = vmatprep.subr.bf16.mxu0 0
        %3467 = vmatpush2.bf16.msra.mxu0 0
        %3468 = vmatprep.subr.bf16.mxu0 0
        %3469 = vmatpush2.bf16.msra.mxu0 0
        %3470 = vmatprep.subr.bf16.mxu0 0
        %3471 = vmatpush2.bf16.msra.mxu0 0
        %3472 = vmatprep.subr.bf16.mxu0 0
        %3473 = vmatpush2.bf16.msra.mxu0 0
        %3474 = vmatprep.subr.bf16.mxu0 0
        %3475 = vmatpush2.bf16.msra.mxu0 0
        %3476 = vmatprep.subr.bf16.mxu0 0
        %3477 = vmatpush2.bf16.msra.mxu0 0
        %3478 = vmatprep.mubr.bf16.mxu0 0
        %3479 = vmatmul.mubr.bf16.gmra.mxu0 %v2771
        %v3480 = vpop.f32.mrf.mxu0
        %v3481 = vadd.f32 %v3297, %v3480
        %v3482 = vpop.f32.mrf.mxu0
        %v3483 = vpop.f32.mrf.mxu0
        %v3484 = vpop.f32.mrf.mxu0
        %3485 = vdwg.mxu0
        %v3502 = vunpack.c.l.b16 %v3249
        %v3503 = vunpack.c.l.b16 %v3250
        %v3504 = vunpack.c.l.b16 %v3251
        %v3505 = vunpack.c.l.b16 %v3252
        %v3506 = vunpack.c.l.b16 %v3253
        %v3507 = vunpack.c.l.b16 %v3254
        %v3508 = vunpack.c.l.b16 %v3255
        %v3509 = vunpack.c.l.b16 %v3256
        %v3510 = vunpack.c.l.b16 %v3257
        %v3511 = vunpack.c.l.b16 %v3258
        %v3512 = vunpack.c.l.b16 %v3259
        %v3513 = vunpack.c.l.b16 %v3260
        %v3514 = vunpack.c.l.b16 %v3261
        %v3515 = vunpack.c.l.b16 %v3262
        %v3516 = vunpack.c.l.b16 %v3263
        %v3517 = vunpack.c.l.b16 %v3264
        %v3518 = vpack.c.b16 %v3503, %v3502
        %v3519 = vpack.c.b16 %v3505, %v3504
        %v3520 = vpack.c.b16 %v3507, %v3506
        %v3521 = vpack.c.b16 %v3509, %v3508
        %v3522 = vpack.c.b16 %v3511, %v3510
        %v3523 = vpack.c.b16 %v3513, %v3512
        %v3524 = vpack.c.b16 %v3515, %v3514
        %v3525 = vpack.c.b16 %v3517, %v3516
        %3534 = vmatprep.subr.bf16.mxu0 0
        %3535 = vmatpush1.bf16.msra.mxu0 %v3525
        %3536 = vmatprep.subr.bf16.mxu0 0
        %3537 = vmatpush1.bf16.msra.mxu0 %v3524
        %3538 = vmatprep.subr.bf16.mxu0 0
        %3539 = vmatpush1.bf16.msra.mxu0 %v3523
        %3540 = vmatprep.subr.bf16.mxu0 0
        %3541 = vmatpush1.bf16.msra.mxu0 %v3522
        %3542 = vmatprep.subr.bf16.mxu0 0
        %3543 = vmatpush1.bf16.msra.mxu0 %v3521
        %3544 = vmatprep.subr.bf16.mxu0 0
        %3545 = vmatpush1.bf16.msra.mxu0 %v3520
        %3546 = vmatprep.subr.bf16.mxu0 0
        %3547 = vmatpush1.bf16.msra.mxu0 %v3519
        %3548 = vmatprep.subr.bf16.mxu0 0
        %3549 = vmatpush1.bf16.msra.mxu0 %v3518
        %3550 = vmatprep.subr.bf16.mxu0 0
        %3551 = vmatpush2.bf16.msra.mxu0 0
        %3552 = vmatprep.subr.bf16.mxu0 0
        %3553 = vmatpush2.bf16.msra.mxu0 0
        %3554 = vmatprep.subr.bf16.mxu0 0
        %3555 = vmatpush2.bf16.msra.mxu0 0
        %3556 = vmatprep.subr.bf16.mxu0 0
        %3557 = vmatpush2.bf16.msra.mxu0 0
        %3558 = vmatprep.subr.bf16.mxu0 0
        %3559 = vmatpush2.bf16.msra.mxu0 0
        %3560 = vmatprep.subr.bf16.mxu0 0
        %3561 = vmatpush2.bf16.msra.mxu0 0
        %3562 = vmatprep.subr.bf16.mxu0 0
        %3563 = vmatpush2.bf16.msra.mxu0 0
        %3564 = vmatprep.subr.bf16.mxu0 0
        %3565 = vmatpush2.bf16.msra.mxu0 0
        %3566 = vmatprep.mubr.bf16.mxu0 0
        %3567 = vmatmul.mubr.bf16.gmra.mxu0 %v2771
        %v3568 = vpop.f32.mrf.mxu0
        %v3569 = vadd.f32 %v3301, %v3568
        %v3570 = vpop.f32.mrf.mxu0
        %v3571 = vpop.f32.mrf.mxu0
        %v3572 = vpop.f32.mrf.mxu0
        %3573 = vdwg.mxu0
        %v3590 = vunpack.c.l.b16 %v3265
        %v3591 = vunpack.c.l.b16 %v3266
        %v3592 = vunpack.c.l.b16 %v3267
        %v3593 = vunpack.c.l.b16 %v3268
        %v3594 = vunpack.c.l.b16 %v3269
        %v3595 = vunpack.c.l.b16 %v3270
        %v3596 = vunpack.c.l.b16 %v3271
        %v3597 = vunpack.c.l.b16 %v3272
        %v3598 = vunpack.c.l.b16 %v3273
        %v3599 = vunpack.c.l.b16 %v3274
        %v3600 = vunpack.c.l.b16 %v3275
        %v3601 = vunpack.c.l.b16 %v3276
        %v3602 = vunpack.c.l.b16 %v3277
        %v3603 = vunpack.c.l.b16 %v3278
        %v3604 = vunpack.c.l.b16 %v3279
        %v3605 = vunpack.c.l.b16 %v3280
        %v3606 = vpack.c.b16 %v3591, %v3590
        %v3607 = vpack.c.b16 %v3593, %v3592
        %v3608 = vpack.c.b16 %v3595, %v3594
        %v3609 = vpack.c.b16 %v3597, %v3596
        %v3610 = vpack.c.b16 %v3599, %v3598
        %v3611 = vpack.c.b16 %v3601, %v3600
        %v3612 = vpack.c.b16 %v3603, %v3602
        %v3613 = vpack.c.b16 %v3605, %v3604
        %3622 = vmatprep.subr.bf16.mxu0 0
        %3623 = vmatpush1.bf16.msra.mxu0 %v3613
        %3624 = vmatprep.subr.bf16.mxu0 0
        %3625 = vmatpush1.bf16.msra.mxu0 %v3612
        %3626 = vmatprep.subr.bf16.mxu0 0
        %3627 = vmatpush1.bf16.msra.mxu0 %v3611
        %3628 = vmatprep.subr.bf16.mxu0 0
        %3629 = vmatpush1.bf16.msra.mxu0 %v3610
        %3630 = vmatprep.subr.bf16.mxu0 0
        %3631 = vmatpush1.bf16.msra.mxu0 %v3609
        %3632 = vmatprep.subr.bf16.mxu0 0
        %3633 = vmatpush1.bf16.msra.mxu0 %v3608
        %3634 = vmatprep.subr.bf16.mxu0 0
        %3635 = vmatpush1.bf16.msra.mxu0 %v3607
        %3636 = vmatprep.subr.bf16.mxu0 0
        %3637 = vmatpush1.bf16.msra.mxu0 %v3606
        %3638 = vmatprep.subr.bf16.mxu0 0
        %3639 = vmatpush2.bf16.msra.mxu0 0
        %3640 = vmatprep.subr.bf16.mxu0 0
        %3641 = vmatpush2.bf16.msra.mxu0 0
        %3642 = vmatprep.subr.bf16.mxu0 0
        %3643 = vmatpush2.bf16.msra.mxu0 0
        %3644 = vmatprep.subr.bf16.mxu0 0
        %3645 = vmatpush2.bf16.msra.mxu0 0
        %3646 = vmatprep.subr.bf16.mxu0 0
        %3647 = vmatpush2.bf16.msra.mxu0 0
        %3648 = vmatprep.subr.bf16.mxu0 0
        %3649 = vmatpush2.bf16.msra.mxu0 0
        %3650 = vmatprep.subr.bf16.mxu0 0
        %3651 = vmatpush2.bf16.msra.mxu0 0
        %3652 = vmatprep.subr.bf16.mxu0 0
        %3653 = vmatpush2.bf16.msra.mxu0 0
        %3654 = vmatprep.mubr.bf16.mxu0 0
        %3655 = vmatmul.mubr.bf16.gmra.mxu0 %v2771
        %v3656 = vpop.f32.mrf.mxu0
        %v3657 = vadd.f32 %v3305, %v3656
        %v3658 = vpop.f32.mrf.mxu0
        %v3659 = vpop.f32.mrf.mxu0
        %v3660 = vpop.f32.mrf.mxu0
        %3661 = vdwg.mxu0
        %s3662 = scalar_lea.vmem %s8, 512
        %v3663 = vld [vmem:[%s3662] sm:$0xf]
        %v3664 = vld [vmem:[%s3662 + $0x4] sm:$0xf]
        %v3665 = vld [vmem:[%s3662 + $0x8] sm:$0xf]
        %v3666 = vld [vmem:[%s3662 + $0xc] sm:$0xf]
        %v3667 = vld [vmem:[%s3662 + $0x10] sm:$0xf]
        %v3668 = vld [vmem:[%s3662 + $0x14] sm:$0xf]
        %v3669 = vld [vmem:[%s3662 + $0x18] sm:$0xf]
        %v3670 = vld [vmem:[%s3662 + $0x1c] sm:$0xf]
        %v3671 = vld [vmem:[%s3662 + $0x20] sm:$0xf]
        %v3672 = vld [vmem:[%s3662 + $0x24] sm:$0xf]
        %v3673 = vld [vmem:[%s3662 + $0x28] sm:$0xf]
        %v3674 = vld [vmem:[%s3662 + $0x2c] sm:$0xf]
        %v3675 = vld [vmem:[%s3662 + $0x30] sm:$0xf]
        %v3676 = vld [vmem:[%s3662 + $0x34] sm:$0xf]
        %v3677 = vld [vmem:[%s3662 + $0x38] sm:$0xf]
        %v3678 = vld [vmem:[%s3662 + $0x3c] sm:$0xf]
        %v3679 = vld [vmem:[%s3662 + $0x40] sm:$0xf]
        %v3680 = vld [vmem:[%s3662 + $0x44] sm:$0xf]
        %v3681 = vld [vmem:[%s3662 + $0x48] sm:$0xf]
        %v3682 = vld [vmem:[%s3662 + $0x4c] sm:$0xf]
        %v3683 = vld [vmem:[%s3662 + $0x50] sm:$0xf]
        %v3684 = vld [vmem:[%s3662 + $0x54] sm:$0xf]
        %v3685 = vld [vmem:[%s3662 + $0x58] sm:$0xf]
        %v3686 = vld [vmem:[%s3662 + $0x5c] sm:$0xf]
        %v3687 = vld [vmem:[%s3662 + $0x60] sm:$0xf]
        %v3688 = vld [vmem:[%s3662 + $0x64] sm:$0xf]
        %v3689 = vld [vmem:[%s3662 + $0x68] sm:$0xf]
        %v3690 = vld [vmem:[%s3662 + $0x6c] sm:$0xf]
        %v3691 = vld [vmem:[%s3662 + $0x70] sm:$0xf]
        %v3692 = vld [vmem:[%s3662 + $0x74] sm:$0xf]
        %v3693 = vld [vmem:[%s3662 + $0x78] sm:$0xf]
        %v3694 = vld [vmem:[%s3662 + $0x7c] sm:$0xf]
        %v3695 = vld [vmem:[%s3662 + $0x80] sm:$0xf]
        %v3696 = vld [vmem:[%s3662 + $0x84] sm:$0xf]
        %v3697 = vld [vmem:[%s3662 + $0x88] sm:$0xf]
        %v3698 = vld [vmem:[%s3662 + $0x8c] sm:$0xf]
        %v3699 = vld [vmem:[%s3662 + $0x90] sm:$0xf]
        %v3700 = vld [vmem:[%s3662 + $0x94] sm:$0xf]
        %v3701 = vld [vmem:[%s3662 + $0x98] sm:$0xf]
        %v3702 = vld [vmem:[%s3662 + $0x9c] sm:$0xf]
        %v3703 = vld [vmem:[%s3662 + $0xa0] sm:$0xf]
        %v3704 = vld [vmem:[%s3662 + $0xa4] sm:$0xf]
        %v3705 = vld [vmem:[%s3662 + $0xa8] sm:$0xf]
        %v3706 = vld [vmem:[%s3662 + $0xac] sm:$0xf]
        %v3707 = vld [vmem:[%s3662 + $0xb0] sm:$0xf]
        %v3708 = vld [vmem:[%s3662 + $0xb4] sm:$0xf]
        %v3709 = vld [vmem:[%s3662 + $0xb8] sm:$0xf]
        %v3710 = vld [vmem:[%s3662 + $0xbc] sm:$0xf]
        %v3711 = vld [vmem:[%s3662 + $0xc0] sm:$0xf]
        %v3712 = vld [vmem:[%s3662 + $0xc4] sm:$0xf]
        %v3713 = vld [vmem:[%s3662 + $0xc8] sm:$0xf]
        %v3714 = vld [vmem:[%s3662 + $0xcc] sm:$0xf]
        %v3715 = vld [vmem:[%s3662 + $0xd0] sm:$0xf]
        %v3716 = vld [vmem:[%s3662 + $0xd4] sm:$0xf]
        %v3717 = vld [vmem:[%s3662 + $0xd8] sm:$0xf]
        %v3718 = vld [vmem:[%s3662 + $0xdc] sm:$0xf]
        %v3719 = vld [vmem:[%s3662 + $0xe0] sm:$0xf]
        %v3720 = vld [vmem:[%s3662 + $0xe4] sm:$0xf]
        %v3721 = vld [vmem:[%s3662 + $0xe8] sm:$0xf]
        %v3722 = vld [vmem:[%s3662 + $0xec] sm:$0xf]
        %v3723 = vld [vmem:[%s3662 + $0xf0] sm:$0xf]
        %v3724 = vld [vmem:[%s3662 + $0xf4] sm:$0xf]
        %v3725 = vld [vmem:[%s3662 + $0xf8] sm:$0xf]
        %v3726 = vld [vmem:[%s3662 + $0xfc] sm:$0xf]
        %s3727 = scalar_lea.vmem %s9, 8
        %v3728 = vld [vmem:[%s3727] sm:$0x1]
        %v3729 = vld [vmem:[%s3727 + $0x1] sm:$0x1]
        %v3730 = vld [vmem:[%s3727 + $0x2] sm:$0x1]
        %v3731 = vld [vmem:[%s3727 + $0x3] sm:$0x1]
        %v3736 = vlaneseq
        %v3737 = vshrl.u32 %v3736, 7
        %v3738 = vsub.s32 0, %v3737
        %v3739 = vrot.slane %v3728, %v3738
        %v3740 = vlaneseq
        %v3741 = vshrl.u32 %v3740, 7
        %v3742 = vsub.s32 0, %v3741
        %v3743 = vrot.slane %v3729, %v3742
        %v3744 = vlaneseq
        %v3745 = vshrl.u32 %v3744, 7
        %v3746 = vsub.s32 0, %v3745
        %v3747 = vrot.slane %v3730, %v3746
        %v3748 = vlaneseq
        %v3749 = vshrl.u32 %v3748, 7
        %v3750 = vsub.s32 0, %v3749
        %v3751 = vrot.slane %v3731, %v3750
        %v3772 = vunpack.c.l.b16 %v3663
        %v3773 = vunpack.c.l.b16 %v3664
        %v3774 = vunpack.c.l.b16 %v3665
        %v3775 = vunpack.c.l.b16 %v3666
        %v3776 = vunpack.c.l.b16 %v3667
        %v3777 = vunpack.c.l.b16 %v3668
        %v3778 = vunpack.c.l.b16 %v3669
        %v3779 = vunpack.c.l.b16 %v3670
        %v3780 = vunpack.c.l.b16 %v3671
        %v3781 = vunpack.c.l.b16 %v3672
        %v3782 = vunpack.c.l.b16 %v3673
        %v3783 = vunpack.c.l.b16 %v3674
        %v3784 = vunpack.c.l.b16 %v3675
        %v3785 = vunpack.c.l.b16 %v3676
        %v3786 = vunpack.c.l.b16 %v3677
        %v3787 = vunpack.c.l.b16 %v3678
        %v3788 = vpack.c.b16 %v3773, %v3772
        %v3789 = vpack.c.b16 %v3775, %v3774
        %v3790 = vpack.c.b16 %v3777, %v3776
        %v3791 = vpack.c.b16 %v3779, %v3778
        %v3792 = vpack.c.b16 %v3781, %v3780
        %v3793 = vpack.c.b16 %v3783, %v3782
        %v3794 = vpack.c.b16 %v3785, %v3784
        %v3795 = vpack.c.b16 %v3787, %v3786
        %3804 = vmatprep.subr.bf16.mxu0 0
        %3805 = vmatpush1.bf16.msra.mxu0 %v3795
        %3806 = vmatprep.subr.bf16.mxu0 0
        %3807 = vmatpush1.bf16.msra.mxu0 %v3794
        %3808 = vmatprep.subr.bf16.mxu0 0
        %3809 = vmatpush1.bf16.msra.mxu0 %v3793
        %3810 = vmatprep.subr.bf16.mxu0 0
        %3811 = vmatpush1.bf16.msra.mxu0 %v3792
        %3812 = vmatprep.subr.bf16.mxu0 0
        %3813 = vmatpush1.bf16.msra.mxu0 %v3791
        %3814 = vmatprep.subr.bf16.mxu0 0
        %3815 = vmatpush1.bf16.msra.mxu0 %v3790
        %3816 = vmatprep.subr.bf16.mxu0 0
        %3817 = vmatpush1.bf16.msra.mxu0 %v3789
        %3818 = vmatprep.subr.bf16.mxu0 0
        %3819 = vmatpush1.bf16.msra.mxu0 %v3788
        %3820 = vmatprep.subr.bf16.mxu0 0
        %3821 = vmatpush2.bf16.msra.mxu0 0
        %3822 = vmatprep.subr.bf16.mxu0 0
        %3823 = vmatpush2.bf16.msra.mxu0 0
        %3824 = vmatprep.subr.bf16.mxu0 0
        %3825 = vmatpush2.bf16.msra.mxu0 0
        %3826 = vmatprep.subr.bf16.mxu0 0
        %3827 = vmatpush2.bf16.msra.mxu0 0
        %3828 = vmatprep.subr.bf16.mxu0 0
        %3829 = vmatpush2.bf16.msra.mxu0 0
        %3830 = vmatprep.subr.bf16.mxu0 0
        %3831 = vmatpush2.bf16.msra.mxu0 0
        %3832 = vmatprep.subr.bf16.mxu0 0
        %3833 = vmatpush2.bf16.msra.mxu0 0
        %3834 = vmatprep.subr.bf16.mxu0 0
        %3835 = vmatpush2.bf16.msra.mxu0 0
        %3836 = vmatprep.mubr.bf16.mxu0 0
        %3837 = vmatmul.mubr.bf16.gmra.mxu0 %v2771
        %v3838 = vpop.f32.mrf.mxu0
        %v3839 = vadd.f32 %v3739, %v3838
        %v3840 = vpop.f32.mrf.mxu0
        %v3841 = vpop.f32.mrf.mxu0
        %v3842 = vpop.f32.mrf.mxu0
        %3843 = vdwg.mxu0
        %v3860 = vunpack.c.l.b16 %v3679
        %v3861 = vunpack.c.l.b16 %v3680
        %v3862 = vunpack.c.l.b16 %v3681
        %v3863 = vunpack.c.l.b16 %v3682
        %v3864 = vunpack.c.l.b16 %v3683
        %v3865 = vunpack.c.l.b16 %v3684
        %v3866 = vunpack.c.l.b16 %v3685
        %v3867 = vunpack.c.l.b16 %v3686
        %v3868 = vunpack.c.l.b16 %v3687
        %v3869 = vunpack.c.l.b16 %v3688
        %v3870 = vunpack.c.l.b16 %v3689
        %v3871 = vunpack.c.l.b16 %v3690
        %v3872 = vunpack.c.l.b16 %v3691
        %v3873 = vunpack.c.l.b16 %v3692
        %v3874 = vunpack.c.l.b16 %v3693
        %v3875 = vunpack.c.l.b16 %v3694
        %v3876 = vpack.c.b16 %v3861, %v3860
        %v3877 = vpack.c.b16 %v3863, %v3862
        %v3878 = vpack.c.b16 %v3865, %v3864
        %v3879 = vpack.c.b16 %v3867, %v3866
        %v3880 = vpack.c.b16 %v3869, %v3868
        %v3881 = vpack.c.b16 %v3871, %v3870
        %v3882 = vpack.c.b16 %v3873, %v3872
        %v3883 = vpack.c.b16 %v3875, %v3874
        %3892 = vmatprep.subr.bf16.mxu0 0
        %3893 = vmatpush1.bf16.msra.mxu0 %v3883
        %3894 = vmatprep.subr.bf16.mxu0 0
        %3895 = vmatpush1.bf16.msra.mxu0 %v3882
        %3896 = vmatprep.subr.bf16.mxu0 0
        %3897 = vmatpush1.bf16.msra.mxu0 %v3881
        %3898 = vmatprep.subr.bf16.mxu0 0
        %3899 = vmatpush1.bf16.msra.mxu0 %v3880
        %3900 = vmatprep.subr.bf16.mxu0 0
        %3901 = vmatpush1.bf16.msra.mxu0 %v3879
        %3902 = vmatprep.subr.bf16.mxu0 0
        %3903 = vmatpush1.bf16.msra.mxu0 %v3878
        %3904 = vmatprep.subr.bf16.mxu0 0
        %3905 = vmatpush1.bf16.msra.mxu0 %v3877
        %3906 = vmatprep.subr.bf16.mxu0 0
        %3907 = vmatpush1.bf16.msra.mxu0 %v3876
        %3908 = vmatprep.subr.bf16.mxu0 0
        %3909 = vmatpush2.bf16.msra.mxu0 0
        %3910 = vmatprep.subr.bf16.mxu0 0
        %3911 = vmatpush2.bf16.msra.mxu0 0
        %3912 = vmatprep.subr.bf16.mxu0 0
        %3913 = vmatpush2.bf16.msra.mxu0 0
        %3914 = vmatprep.subr.bf16.mxu0 0
        %3915 = vmatpush2.bf16.msra.mxu0 0
        %3916 = vmatprep.subr.bf16.mxu0 0
        %3917 = vmatpush2.bf16.msra.mxu0 0
        %3918 = vmatprep.subr.bf16.mxu0 0
        %3919 = vmatpush2.bf16.msra.mxu0 0
        %3920 = vmatprep.subr.bf16.mxu0 0
        %3921 = vmatpush2.bf16.msra.mxu0 0
        %3922 = vmatprep.subr.bf16.mxu0 0
        %3923 = vmatpush2.bf16.msra.mxu0 0
        %3924 = vmatprep.mubr.bf16.mxu0 0
        %3925 = vmatmul.mubr.bf16.gmra.mxu0 %v2771
        %v3926 = vpop.f32.mrf.mxu0
        %v3927 = vadd.f32 %v3743, %v3926
        %v3928 = vpop.f32.mrf.mxu0
        %v3929 = vpop.f32.mrf.mxu0
        %v3930 = vpop.f32.mrf.mxu0
        %3931 = vdwg.mxu0
        %v3948 = vunpack.c.l.b16 %v3695
        %v3949 = vunpack.c.l.b16 %v3696
        %v3950 = vunpack.c.l.b16 %v3697
        %v3951 = vunpack.c.l.b16 %v3698
        %v3952 = vunpack.c.l.b16 %v3699
        %v3953 = vunpack.c.l.b16 %v3700
        %v3954 = vunpack.c.l.b16 %v3701
        %v3955 = vunpack.c.l.b16 %v3702
        %v3956 = vunpack.c.l.b16 %v3703
        %v3957 = vunpack.c.l.b16 %v3704
        %v3958 = vunpack.c.l.b16 %v3705
        %v3959 = vunpack.c.l.b16 %v3706
        %v3960 = vunpack.c.l.b16 %v3707
        %v3961 = vunpack.c.l.b16 %v3708
        %v3962 = vunpack.c.l.b16 %v3709
        %v3963 = vunpack.c.l.b16 %v3710
        %v3964 = vpack.c.b16 %v3949, %v3948
        %v3965 = vpack.c.b16 %v3951, %v3950
        %v3966 = vpack.c.b16 %v3953, %v3952
        %v3967 = vpack.c.b16 %v3955, %v3954
        %v3968 = vpack.c.b16 %v3957, %v3956
        %v3969 = vpack.c.b16 %v3959, %v3958
        %v3970 = vpack.c.b16 %v3961, %v3960
        %v3971 = vpack.c.b16 %v3963, %v3962
        %3980 = vmatprep.subr.bf16.mxu0 0
        %3981 = vmatpush1.bf16.msra.mxu0 %v3971
        %3982 = vmatprep.subr.bf16.mxu0 0
        %3983 = vmatpush1.bf16.msra.mxu0 %v3970
        %3984 = vmatprep.subr.bf16.mxu0 0
        %3985 = vmatpush1.bf16.msra.mxu0 %v3969
        %3986 = vmatprep.subr.bf16.mxu0 0
        %3987 = vmatpush1.bf16.msra.mxu0 %v3968
        %3988 = vmatprep.subr.bf16.mxu0 0
        %3989 = vmatpush1.bf16.msra.mxu0 %v3967
        %3990 = vmatprep.subr.bf16.mxu0 0
        %3991 = vmatpush1.bf16.msra.mxu0 %v3966
        %3992 = vmatprep.subr.bf16.mxu0 0
        %3993 = vmatpush1.bf16.msra.mxu0 %v3965
        %3994 = vmatprep.subr.bf16.mxu0 0
        %3995 = vmatpush1.bf16.msra.mxu0 %v3964
        %3996 = vmatprep.subr.bf16.mxu0 0
        %3997 = vmatpush2.bf16.msra.mxu0 0
        %3998 = vmatprep.subr.bf16.mxu0 0
        %3999 = vmatpush2.bf16.msra.mxu0 0
        %4000 = vmatprep.subr.bf16.mxu0 0
        %4001 = vmatpush2.bf16.msra.mxu0 0
        %4002 = vmatprep.subr.bf16.mxu0 0
        %4003 = vmatpush2.bf16.msra.mxu0 0
        %4004 = vmatprep.subr.bf16.mxu0 0
        %4005 = vmatpush2.bf16.msra.mxu0 0
        %4006 = vmatprep.subr.bf16.mxu0 0
        %4007 = vmatpush2.bf16.msra.mxu0 0
        %4008 = vmatprep.subr.bf16.mxu0 0
        %4009 = vmatpush2.bf16.msra.mxu0 0
        %4010 = vmatprep.subr.bf16.mxu0 0
        %4011 = vmatpush2.bf16.msra.mxu0 0
        %4012 = vmatprep.mubr.bf16.mxu0 0
        %4013 = vmatmul.mubr.bf16.gmra.mxu0 %v2771
        %v4014 = vpop.f32.mrf.mxu0
        %v4015 = vadd.f32 %v3747, %v4014
        %v4016 = vpop.f32.mrf.mxu0
        %v4017 = vpop.f32.mrf.mxu0
        %v4018 = vpop.f32.mrf.mxu0
        %4019 = vdwg.mxu0
        %v4036 = vunpack.c.l.b16 %v3711
        %v4037 = vunpack.c.l.b16 %v3712
        %v4038 = vunpack.c.l.b16 %v3713
        %v4039 = vunpack.c.l.b16 %v3714
        %v4040 = vunpack.c.l.b16 %v3715
        %v4041 = vunpack.c.l.b16 %v3716
        %v4042 = vunpack.c.l.b16 %v3717
        %v4043 = vunpack.c.l.b16 %v3718
        %v4044 = vunpack.c.l.b16 %v3719
        %v4045 = vunpack.c.l.b16 %v3720
        %v4046 = vunpack.c.l.b16 %v3721
        %v4047 = vunpack.c.l.b16 %v3722
        %v4048 = vunpack.c.l.b16 %v3723
        %v4049 = vunpack.c.l.b16 %v3724
        %v4050 = vunpack.c.l.b16 %v3725
        %v4051 = vunpack.c.l.b16 %v3726
        %v4052 = vpack.c.b16 %v4037, %v4036
        %v4053 = vpack.c.b16 %v4039, %v4038
        %v4054 = vpack.c.b16 %v4041, %v4040
        %v4055 = vpack.c.b16 %v4043, %v4042
        %v4056 = vpack.c.b16 %v4045, %v4044
        %v4057 = vpack.c.b16 %v4047, %v4046
        %v4058 = vpack.c.b16 %v4049, %v4048
        %v4059 = vpack.c.b16 %v4051, %v4050
        %4068 = vmatprep.subr.bf16.mxu0 0
        %4069 = vmatpush1.bf16.msra.mxu0 %v4059
        %4070 = vmatprep.subr.bf16.mxu0 0
        %4071 = vmatpush1.bf16.msra.mxu0 %v4058
        %4072 = vmatprep.subr.bf16.mxu0 0
        %4073 = vmatpush1.bf16.msra.mxu0 %v4057
        %4074 = vmatprep.subr.bf16.mxu0 0
        %4075 = vmatpush1.bf16.msra.mxu0 %v4056
        %4076 = vmatprep.subr.bf16.mxu0 0
        %4077 = vmatpush1.bf16.msra.mxu0 %v4055
        %4078 = vmatprep.subr.bf16.mxu0 0
        %4079 = vmatpush1.bf16.msra.mxu0 %v4054
        %4080 = vmatprep.subr.bf16.mxu0 0
        %4081 = vmatpush1.bf16.msra.mxu0 %v4053
        %4082 = vmatprep.subr.bf16.mxu0 0
        %4083 = vmatpush1.bf16.msra.mxu0 %v4052
        %4084 = vmatprep.subr.bf16.mxu0 0
        %4085 = vmatpush2.bf16.msra.mxu0 0
        %4086 = vmatprep.subr.bf16.mxu0 0
        %4087 = vmatpush2.bf16.msra.mxu0 0
        %4088 = vmatprep.subr.bf16.mxu0 0
        %4089 = vmatpush2.bf16.msra.mxu0 0
        %4090 = vmatprep.subr.bf16.mxu0 0
        %4091 = vmatpush2.bf16.msra.mxu0 0
        %4092 = vmatprep.subr.bf16.mxu0 0
        %4093 = vmatpush2.bf16.msra.mxu0 0
        %4094 = vmatprep.subr.bf16.mxu0 0
        %4095 = vmatpush2.bf16.msra.mxu0 0
        %4096 = vmatprep.subr.bf16.mxu0 0
        %4097 = vmatpush2.bf16.msra.mxu0 0
        %4098 = vmatprep.subr.bf16.mxu0 0
        %4099 = vmatpush2.bf16.msra.mxu0 0
        %4100 = vmatprep.mubr.bf16.mxu0 0
        %4101 = vmatmul.mubr.bf16.gmra.mxu0 %v2771
        %v4102 = vpop.f32.mrf.mxu0
        %v4103 = vadd.f32 %v3751, %v4102
        %v4104 = vpop.f32.mrf.mxu0
        %v4105 = vpop.f32.mrf.mxu0
        %v4106 = vpop.f32.mrf.mxu0
        %4107 = vdwg.mxu0
        %v4108 = vmul.f32 %v2947, 0.17677669
        %v4109 = vmul.f32 %v3035, 0.17677669
        %v4110 = vmul.f32 %v3123, 0.17677669
        %v4111 = vmul.f32 %v3211, 0.17677669
        %v4112 = vpack.c.bf16 %v4108, %v4108
        %v4113 = vpack.c.bf16 %v4109, %v4109
        %v4114 = vpack.c.bf16 %v4110, %v4110
        %v4115 = vpack.c.bf16 %v4111, %v4111
        %v4116 = vpack.c.bf16 %v3393, %v3393
        %v4117 = vpack.c.bf16 %v3481, %v3481
        %v4118 = vpack.c.bf16 %v3569, %v3569
        %v4119 = vpack.c.bf16 %v3657, %v3657
        %v4121 = vsel %vm2068, %v4112, 0
        %v4124 = vsel %vm2068, %v4116, 0
        %4126 = vmatprep.subr.bf16.mxu0 0
        %4127 = vmatpush1.bf16.xpose.msra.mxu0 0
        %4128 = vmatprep.subr.bf16.mxu0 0
        %4129 = vmatpush1.bf16.xpose.msra.mxu0 0
        %4130 = vmatprep.subr.bf16.mxu0 0
        %4131 = vmatpush1.bf16.xpose.msra.mxu0 0
        %4132 = vmatprep.subr.bf16.mxu0 0
        %4133 = vmatpush1.bf16.xpose.msra.mxu0 0
        %4134 = vmatprep.subr.bf16.mxu0 0
        %4135 = vmatpush1.bf16.xpose.msra.mxu0 0
        %4136 = vmatprep.subr.bf16.mxu0 0
        %4137 = vmatpush1.bf16.xpose.msra.mxu0 0
        %4138 = vmatprep.subr.bf16.mxu0 0
        %4139 = vmatpush1.bf16.xpose.msra.mxu0 0
        %4140 = vmatprep.subr.bf16.mxu0 0
        %4141 = vmatpush1.bf16.xpose.msra.mxu0 %v4124
        %4142 = vmatprep.subr.bf16.mxu0 0
        %4143 = vmatpush2.bf16.xpose.msra.mxu0 0
        %4144 = vmatprep.subr.bf16.mxu0 0
        %4145 = vmatpush2.bf16.xpose.msra.mxu0 0
        %4146 = vmatprep.subr.bf16.mxu0 0
        %4147 = vmatpush2.bf16.xpose.msra.mxu0 0
        %4148 = vmatprep.subr.bf16.mxu0 0
        %4149 = vmatpush2.bf16.xpose.msra.mxu0 0
        %4150 = vmatprep.subr.bf16.mxu0 0
        %4151 = vmatpush2.bf16.xpose.msra.mxu0 0
        %4152 = vmatprep.subr.bf16.mxu0 0
        %4153 = vmatpush2.bf16.xpose.msra.mxu0 0
        %4154 = vmatprep.subr.bf16.mxu0 0
        %4155 = vmatpush2.bf16.xpose.msra.mxu0 0
        %4156 = vmatprep.subr.bf16.mxu0 0
        %4157 = vmatpush2.bf16.xpose.msra.mxu0 0
        %4158 = vmatprep.mubr.bf16.mxu0 0
        %4159 = vmatmul.mubr.bf16.gmra.mxu0 %v4121
        %v4160 = vpop.f32.mrf.mxu0
        %v4161 = vadd.f32 0.0, %v4160
        %v4162 = vpop.f32.mrf.mxu0
        %v4163 = vpop.f32.mrf.mxu0
        %v4164 = vpop.f32.mrf.mxu0
        %4165 = vdwg.mxu0
        %v4167 = vsel %vm2068, %v4113, 0
        %v4170 = vsel %vm2068, %v4117, 0
        %4172 = vmatprep.subr.bf16.mxu0 0
        %4173 = vmatpush1.bf16.xpose.msra.mxu0 0
        %4174 = vmatprep.subr.bf16.mxu0 0
        %4175 = vmatpush1.bf16.xpose.msra.mxu0 0
        %4176 = vmatprep.subr.bf16.mxu0 0
        %4177 = vmatpush1.bf16.xpose.msra.mxu0 0
        %4178 = vmatprep.subr.bf16.mxu0 0
        %4179 = vmatpush1.bf16.xpose.msra.mxu0 0
        %4180 = vmatprep.subr.bf16.mxu0 0
        %4181 = vmatpush1.bf16.xpose.msra.mxu0 0
        %4182 = vmatprep.subr.bf16.mxu0 0
        %4183 = vmatpush1.bf16.xpose.msra.mxu0 0
        %4184 = vmatprep.subr.bf16.mxu0 0
        %4185 = vmatpush1.bf16.xpose.msra.mxu0 0
        %4186 = vmatprep.subr.bf16.mxu0 0
        %4187 = vmatpush1.bf16.xpose.msra.mxu0 %v4170
        %4188 = vmatprep.subr.bf16.mxu0 0
        %4189 = vmatpush2.bf16.xpose.msra.mxu0 0
        %4190 = vmatprep.subr.bf16.mxu0 0
        %4191 = vmatpush2.bf16.xpose.msra.mxu0 0
        %4192 = vmatprep.subr.bf16.mxu0 0
        %4193 = vmatpush2.bf16.xpose.msra.mxu0 0
        %4194 = vmatprep.subr.bf16.mxu0 0
        %4195 = vmatpush2.bf16.xpose.msra.mxu0 0
        %4196 = vmatprep.subr.bf16.mxu0 0
        %4197 = vmatpush2.bf16.xpose.msra.mxu0 0
        %4198 = vmatprep.subr.bf16.mxu0 0
        %4199 = vmatpush2.bf16.xpose.msra.mxu0 0
        %4200 = vmatprep.subr.bf16.mxu0 0
        %4201 = vmatpush2.bf16.xpose.msra.mxu0 0
        %4202 = vmatprep.subr.bf16.mxu0 0
        %4203 = vmatpush2.bf16.xpose.msra.mxu0 0
        %4204 = vmatprep.mubr.bf16.mxu0 0
        %4205 = vmatmul.mubr.bf16.gmra.mxu0 %v4167
        %v4206 = vpop.f32.mrf.mxu0
        %v4207 = vadd.f32 0.0, %v4206
        %v4208 = vpop.f32.mrf.mxu0
        %v4209 = vpop.f32.mrf.mxu0
        %v4210 = vpop.f32.mrf.mxu0
        %4211 = vdwg.mxu0
        %v4213 = vsel %vm2068, %v4114, 0
        %v4216 = vsel %vm2068, %v4118, 0
        %4218 = vmatprep.subr.bf16.mxu0 0
        %4219 = vmatpush1.bf16.xpose.msra.mxu0 0
        %4220 = vmatprep.subr.bf16.mxu0 0
        %4221 = vmatpush1.bf16.xpose.msra.mxu0 0
        %4222 = vmatprep.subr.bf16.mxu0 0
        %4223 = vmatpush1.bf16.xpose.msra.mxu0 0
        %4224 = vmatprep.subr.bf16.mxu0 0
        %4225 = vmatpush1.bf16.xpose.msra.mxu0 0
        %4226 = vmatprep.subr.bf16.mxu0 0
        %4227 = vmatpush1.bf16.xpose.msra.mxu0 0
        %4228 = vmatprep.subr.bf16.mxu0 0
        %4229 = vmatpush1.bf16.xpose.msra.mxu0 0
        %4230 = vmatprep.subr.bf16.mxu0 0
        %4231 = vmatpush1.bf16.xpose.msra.mxu0 0
        %4232 = vmatprep.subr.bf16.mxu0 0
        %4233 = vmatpush1.bf16.xpose.msra.mxu0 %v4216
        %4234 = vmatprep.subr.bf16.mxu0 0
        %4235 = vmatpush2.bf16.xpose.msra.mxu0 0
        %4236 = vmatprep.subr.bf16.mxu0 0
        %4237 = vmatpush2.bf16.xpose.msra.mxu0 0
        %4238 = vmatprep.subr.bf16.mxu0 0
        %4239 = vmatpush2.bf16.xpose.msra.mxu0 0
        %4240 = vmatprep.subr.bf16.mxu0 0
        %4241 = vmatpush2.bf16.xpose.msra.mxu0 0
        %4242 = vmatprep.subr.bf16.mxu0 0
        %4243 = vmatpush2.bf16.xpose.msra.mxu0 0
        %4244 = vmatprep.subr.bf16.mxu0 0
        %4245 = vmatpush2.bf16.xpose.msra.mxu0 0
        %4246 = vmatprep.subr.bf16.mxu0 0
        %4247 = vmatpush2.bf16.xpose.msra.mxu0 0
        %4248 = vmatprep.subr.bf16.mxu0 0
        %4249 = vmatpush2.bf16.xpose.msra.mxu0 0
        %4250 = vmatprep.mubr.bf16.mxu0 0
        %4251 = vmatmul.mubr.bf16.gmra.mxu0 %v4213
        %v4252 = vpop.f32.mrf.mxu0
        %v4253 = vadd.f32 0.0, %v4252
        %v4254 = vpop.f32.mrf.mxu0
        %v4255 = vpop.f32.mrf.mxu0
        %v4256 = vpop.f32.mrf.mxu0
        %4257 = vdwg.mxu0
        %v4259 = vsel %vm2068, %v4115, 0
        %v4262 = vsel %vm2068, %v4119, 0
        %4264 = vmatprep.subr.bf16.mxu0 0
        %4265 = vmatpush1.bf16.xpose.msra.mxu0 0
        %4266 = vmatprep.subr.bf16.mxu0 0
        %4267 = vmatpush1.bf16.xpose.msra.mxu0 0
        %4268 = vmatprep.subr.bf16.mxu0 0
        %4269 = vmatpush1.bf16.xpose.msra.mxu0 0
        %4270 = vmatprep.subr.bf16.mxu0 0
        %4271 = vmatpush1.bf16.xpose.msra.mxu0 0
        %4272 = vmatprep.subr.bf16.mxu0 0
        %4273 = vmatpush1.bf16.xpose.msra.mxu0 0
        %4274 = vmatprep.subr.bf16.mxu0 0
        %4275 = vmatpush1.bf16.xpose.msra.mxu0 0
        %4276 = vmatprep.subr.bf16.mxu0 0
        %4277 = vmatpush1.bf16.xpose.msra.mxu0 0
        %4278 = vmatprep.subr.bf16.mxu0 0
        %4279 = vmatpush1.bf16.xpose.msra.mxu0 %v4262
        %4280 = vmatprep.subr.bf16.mxu0 0
        %4281 = vmatpush2.bf16.xpose.msra.mxu0 0
        %4282 = vmatprep.subr.bf16.mxu0 0
        %4283 = vmatpush2.bf16.xpose.msra.mxu0 0
        %4284 = vmatprep.subr.bf16.mxu0 0
        %4285 = vmatpush2.bf16.xpose.msra.mxu0 0
        %4286 = vmatprep.subr.bf16.mxu0 0
        %4287 = vmatpush2.bf16.xpose.msra.mxu0 0
        %4288 = vmatprep.subr.bf16.mxu0 0
        %4289 = vmatpush2.bf16.xpose.msra.mxu0 0
        %4290 = vmatprep.subr.bf16.mxu0 0
        %4291 = vmatpush2.bf16.xpose.msra.mxu0 0
        %4292 = vmatprep.subr.bf16.mxu0 0
        %4293 = vmatpush2.bf16.xpose.msra.mxu0 0
        %4294 = vmatprep.subr.bf16.mxu0 0
        %4295 = vmatpush2.bf16.xpose.msra.mxu0 0
        %4296 = vmatprep.mubr.bf16.mxu0 0
        %4297 = vmatmul.mubr.bf16.gmra.mxu0 %v4259
        %v4298 = vpop.f32.mrf.mxu0
        %v4299 = vadd.f32 0.0, %v4298
        %v4300 = vpop.f32.mrf.mxu0
        %v4301 = vpop.f32.mrf.mxu0
        %v4302 = vpop.f32.mrf.mxu0
        %4303 = vdwg.mxu0
        %v4304 = vsel %vm2253, %v4161, -inf
        %4305 = vmax.xlane.f32.xlu0 %v4304
        %v4306 = vpop.xlane.xlu0 %4305
        %v4307 = vsel %vm2253, %v4207, -inf
        %4308 = vmax.xlane.f32.xlu0 %v4307
        %v4309 = vpop.xlane.xlu0 %4308
        %v4310 = vsel %vm2253, %v4253, -inf
        %4311 = vmax.xlane.f32.xlu0 %v4310
        %v4312 = vpop.xlane.xlu0 %4311
        %v4313 = vsel %vm2253, %v4299, -inf
        %4314 = vmax.xlane.f32.xlu0 %v4313
        %v4315 = vpop.xlane.xlu0 %4314
        %v4316 = vsub.f32 %v4161, %v4306
        %v4317 = vsub.f32 %v4207, %v4309
        %v4318 = vsub.f32 %v4253, %v4312
        %v4319 = vsub.f32 %v4299, %v4315
        %v4320 = vmul.f32 %v4316, 1.442695
        %v4321 = vpow.pop %v4320
        %v4322 = vmul.f32 %v4317, 1.442695
        %v4323 = vpow.pop %v4322
        %v4324 = vmul.f32 %v4318, 1.442695
        %v4325 = vpow.pop %v4324
        %v4326 = vmul.f32 %v4319, 1.442695
        %v4327 = vpow.pop %v4326
        %v4328 = vsel %vm2253, %v4321, 0.0
        %4329 = vadd.xlane.f32.xlu0 %v4328
        %v4330 = vpop.xlane.xlu0 %4329
        %v4331 = vsel %vm2253, %v4323, 0.0
        %4332 = vadd.xlane.f32.xlu0 %v4331
        %v4333 = vpop.xlane.xlu0 %4332
        %v4334 = vsel %vm2253, %v4325, 0.0
        %4335 = vadd.xlane.f32.xlu0 %v4334
        %v4336 = vpop.xlane.xlu0 %4335
        %v4337 = vsel %vm2253, %v4327, 0.0
        %4338 = vadd.xlane.f32.xlu0 %v4337
        %v4339 = vpop.xlane.xlu0 %4338
        %v4340 = vrcp.pop %v4330
        %v4341 = vmul.f32 %v4321, %v4340
        %v4342 = vrcp.pop %v4333
        %v4343 = vmul.f32 %v4323, %v4342
        %v4344 = vrcp.pop %v4336
        %v4345 = vmul.f32 %v4325, %v4344
        %v4346 = vrcp.pop %v4339
        %v4347 = vmul.f32 %v4327, %v4346
        %v4348 = vpack.c.bf16 %v4341, %v4341
        %v4349 = vpack.c.bf16 %v4343, %v4343
        %v4350 = vpack.c.bf16 %v4345, %v4345
        %v4351 = vpack.c.bf16 %v4347, %v4347
        %v4352 = vpack.c.bf16 %v3839, %v3839
        %v4353 = vpack.c.bf16 %v3927, %v3927
        %v4354 = vpack.c.bf16 %v4015, %v4015
        %v4355 = vpack.c.bf16 %v4103, %v4103
        %v4357 = vsel %vm2253, %v4348, 0
        %v4360 = vsel %vm2309, %v4352, 0
        %4362 = vmatprep.subr.bf16.mxu0 0
        %4363 = vmatpush1.bf16.msra.mxu0 0
        %4364 = vmatprep.subr.bf16.mxu0 0
        %4365 = vmatpush1.bf16.msra.mxu0 0
        %4366 = vmatprep.subr.bf16.mxu0 0
        %4367 = vmatpush1.bf16.msra.mxu0 0
        %4368 = vmatprep.subr.bf16.mxu0 0
        %4369 = vmatpush1.bf16.msra.mxu0 0
        %4370 = vmatprep.subr.bf16.mxu0 0
        %4371 = vmatpush1.bf16.msra.mxu0 0
        %4372 = vmatprep.subr.bf16.mxu0 0
        %4373 = vmatpush1.bf16.msra.mxu0 0
        %4374 = vmatprep.subr.bf16.mxu0 0
        %4375 = vmatpush1.bf16.msra.mxu0 0
        %4376 = vmatprep.subr.bf16.mxu0 0
        %4377 = vmatpush1.bf16.msra.mxu0 %v4360
        %4378 = vmatprep.subr.bf16.mxu0 0
        %4379 = vmatpush2.bf16.msra.mxu0 0
        %4380 = vmatprep.subr.bf16.mxu0 0
        %4381 = vmatpush2.bf16.msra.mxu0 0
        %4382 = vmatprep.subr.bf16.mxu0 0
        %4383 = vmatpush2.bf16.msra.mxu0 0
        %4384 = vmatprep.subr.bf16.mxu0 0
        %4385 = vmatpush2.bf16.msra.mxu0 0
        %4386 = vmatprep.subr.bf16.mxu0 0
        %4387 = vmatpush2.bf16.msra.mxu0 0
        %4388 = vmatprep.subr.bf16.mxu0 0
        %4389 = vmatpush2.bf16.msra.mxu0 0
        %4390 = vmatprep.subr.bf16.mxu0 0
        %4391 = vmatpush2.bf16.msra.mxu0 0
        %4392 = vmatprep.subr.bf16.mxu0 0
        %4393 = vmatpush2.bf16.msra.mxu0 0
        %4394 = vmatprep.mubr.bf16.mxu0 0
        %4395 = vmatmul.mubr.bf16.gmra.mxu0 %v4357
        %v4396 = vpop.f32.mrf.mxu0
        %v4397 = vadd.f32 0.0, %v4396
        %v4398 = vpop.f32.mrf.mxu0
        %v4399 = vpop.f32.mrf.mxu0
        %v4400 = vpop.f32.mrf.mxu0
        %4401 = vdwg.mxu0
        %v4403 = vsel %vm2253, %v4349, 0
        %v4406 = vsel %vm2309, %v4353, 0
        %4408 = vmatprep.subr.bf16.mxu0 0
        %4409 = vmatpush1.bf16.msra.mxu0 0
        %4410 = vmatprep.subr.bf16.mxu0 0
        %4411 = vmatpush1.bf16.msra.mxu0 0
        %4412 = vmatprep.subr.bf16.mxu0 0
        %4413 = vmatpush1.bf16.msra.mxu0 0
        %4414 = vmatprep.subr.bf16.mxu0 0
        %4415 = vmatpush1.bf16.msra.mxu0 0
        %4416 = vmatprep.subr.bf16.mxu0 0
        %4417 = vmatpush1.bf16.msra.mxu0 0
        %4418 = vmatprep.subr.bf16.mxu0 0
        %4419 = vmatpush1.bf16.msra.mxu0 0
        %4420 = vmatprep.subr.bf16.mxu0 0
        %4421 = vmatpush1.bf16.msra.mxu0 0
        %4422 = vmatprep.subr.bf16.mxu0 0
        %4423 = vmatpush1.bf16.msra.mxu0 %v4406
        %4424 = vmatprep.subr.bf16.mxu0 0
        %4425 = vmatpush2.bf16.msra.mxu0 0
        %4426 = vmatprep.subr.bf16.mxu0 0
        %4427 = vmatpush2.bf16.msra.mxu0 0
        %4428 = vmatprep.subr.bf16.mxu0 0
        %4429 = vmatpush2.bf16.msra.mxu0 0
        %4430 = vmatprep.subr.bf16.mxu0 0
        %4431 = vmatpush2.bf16.msra.mxu0 0
        %4432 = vmatprep.subr.bf16.mxu0 0
        %4433 = vmatpush2.bf16.msra.mxu0 0
        %4434 = vmatprep.subr.bf16.mxu0 0
        %4435 = vmatpush2.bf16.msra.mxu0 0
        %4436 = vmatprep.subr.bf16.mxu0 0
        %4437 = vmatpush2.bf16.msra.mxu0 0
        %4438 = vmatprep.subr.bf16.mxu0 0
        %4439 = vmatpush2.bf16.msra.mxu0 0
        %4440 = vmatprep.mubr.bf16.mxu0 0
        %4441 = vmatmul.mubr.bf16.gmra.mxu0 %v4403
        %v4442 = vpop.f32.mrf.mxu0
        %v4443 = vadd.f32 0.0, %v4442
        %v4444 = vpop.f32.mrf.mxu0
        %v4445 = vpop.f32.mrf.mxu0
        %v4446 = vpop.f32.mrf.mxu0
        %4447 = vdwg.mxu0
        %v4449 = vsel %vm2253, %v4350, 0
        %v4452 = vsel %vm2309, %v4354, 0
        %4454 = vmatprep.subr.bf16.mxu0 0
        %4455 = vmatpush1.bf16.msra.mxu0 0
        %4456 = vmatprep.subr.bf16.mxu0 0
        %4457 = vmatpush1.bf16.msra.mxu0 0
        %4458 = vmatprep.subr.bf16.mxu0 0
        %4459 = vmatpush1.bf16.msra.mxu0 0
        %4460 = vmatprep.subr.bf16.mxu0 0
        %4461 = vmatpush1.bf16.msra.mxu0 0
        %4462 = vmatprep.subr.bf16.mxu0 0
        %4463 = vmatpush1.bf16.msra.mxu0 0
        %4464 = vmatprep.subr.bf16.mxu0 0
        %4465 = vmatpush1.bf16.msra.mxu0 0
        %4466 = vmatprep.subr.bf16.mxu0 0
        %4467 = vmatpush1.bf16.msra.mxu0 0
        %4468 = vmatprep.subr.bf16.mxu0 0
        %4469 = vmatpush1.bf16.msra.mxu0 %v4452
        %4470 = vmatprep.subr.bf16.mxu0 0
        %4471 = vmatpush2.bf16.msra.mxu0 0
        %4472 = vmatprep.subr.bf16.mxu0 0
        %4473 = vmatpush2.bf16.msra.mxu0 0
        %4474 = vmatprep.subr.bf16.mxu0 0
        %4475 = vmatpush2.bf16.msra.mxu0 0
        %4476 = vmatprep.subr.bf16.mxu0 0
        %4477 = vmatpush2.bf16.msra.mxu0 0
        %4478 = vmatprep.subr.bf16.mxu0 0
        %4479 = vmatpush2.bf16.msra.mxu0 0
        %4480 = vmatprep.subr.bf16.mxu0 0
        %4481 = vmatpush2.bf16.msra.mxu0 0
        %4482 = vmatprep.subr.bf16.mxu0 0
        %4483 = vmatpush2.bf16.msra.mxu0 0
        %4484 = vmatprep.subr.bf16.mxu0 0
        %4485 = vmatpush2.bf16.msra.mxu0 0
        %4486 = vmatprep.mubr.bf16.mxu0 0
        %4487 = vmatmul.mubr.bf16.gmra.mxu0 %v4449
        %v4488 = vpop.f32.mrf.mxu0
        %v4489 = vadd.f32 0.0, %v4488
        %v4490 = vpop.f32.mrf.mxu0
        %v4491 = vpop.f32.mrf.mxu0
        %v4492 = vpop.f32.mrf.mxu0
        %4493 = vdwg.mxu0
        %v4495 = vsel %vm2253, %v4351, 0
        %v4498 = vsel %vm2309, %v4355, 0
        %4500 = vmatprep.subr.bf16.mxu0 0
        %4501 = vmatpush1.bf16.msra.mxu0 0
        %4502 = vmatprep.subr.bf16.mxu0 0
        %4503 = vmatpush1.bf16.msra.mxu0 0
        %4504 = vmatprep.subr.bf16.mxu0 0
        %4505 = vmatpush1.bf16.msra.mxu0 0
        %4506 = vmatprep.subr.bf16.mxu0 0
        %4507 = vmatpush1.bf16.msra.mxu0 0
        %4508 = vmatprep.subr.bf16.mxu0 0
        %4509 = vmatpush1.bf16.msra.mxu0 0
        %4510 = vmatprep.subr.bf16.mxu0 0
        %4511 = vmatpush1.bf16.msra.mxu0 0
        %4512 = vmatprep.subr.bf16.mxu0 0
        %4513 = vmatpush1.bf16.msra.mxu0 0
        %4514 = vmatprep.subr.bf16.mxu0 0
        %4515 = vmatpush1.bf16.msra.mxu0 %v4498
        %4516 = vmatprep.subr.bf16.mxu0 0
        %4517 = vmatpush2.bf16.msra.mxu0 0
        %4518 = vmatprep.subr.bf16.mxu0 0
        %4519 = vmatpush2.bf16.msra.mxu0 0
        %4520 = vmatprep.subr.bf16.mxu0 0
        %4521 = vmatpush2.bf16.msra.mxu0 0
        %4522 = vmatprep.subr.bf16.mxu0 0
        %4523 = vmatpush2.bf16.msra.mxu0 0
        %4524 = vmatprep.subr.bf16.mxu0 0
        %4525 = vmatpush2.bf16.msra.mxu0 0
        %4526 = vmatprep.subr.bf16.mxu0 0
        %4527 = vmatpush2.bf16.msra.mxu0 0
        %4528 = vmatprep.subr.bf16.mxu0 0
        %4529 = vmatpush2.bf16.msra.mxu0 0
        %4530 = vmatprep.subr.bf16.mxu0 0
        %4531 = vmatpush2.bf16.msra.mxu0 0
        %4532 = vmatprep.mubr.bf16.mxu0 0
        %4533 = vmatmul.mubr.bf16.gmra.mxu0 %v4495
        %v4534 = vpop.f32.mrf.mxu0
        %v4535 = vadd.f32 0.0, %v4534
        %v4536 = vpop.f32.mrf.mxu0
        %v4537 = vpop.f32.mrf.mxu0
        %v4538 = vpop.f32.mrf.mxu0
        %4539 = vdwg.mxu0
        %v4540 = vpack.c.bf16 %v4397, %v4397
        %v4541 = vpack.c.bf16 %v4443, %v4443
        %v4542 = vpack.c.bf16 %v4489, %v4489
        %v4543 = vpack.c.bf16 %v4535, %v4535
        %v4544 = vld [vmem:[%s10] sm:$0xf]
        %v4545 = vld [vmem:[%s10 + $0x4] sm:$0xf]
        %v4546 = vld [vmem:[%s10 + $0x8] sm:$0xf]
        %v4547 = vld [vmem:[%s10 + $0xc] sm:$0xf]
        %v4548 = vld [vmem:[%s10 + $0x10] sm:$0xf]
        %v4549 = vld [vmem:[%s10 + $0x14] sm:$0xf]
        %v4550 = vld [vmem:[%s10 + $0x18] sm:$0xf]
        %v4551 = vld [vmem:[%s10 + $0x1c] sm:$0xf]
        %v4552 = vld [vmem:[%s10 + $0x20] sm:$0xf]
        %v4553 = vld [vmem:[%s10 + $0x24] sm:$0xf]
        %v4554 = vld [vmem:[%s10 + $0x28] sm:$0xf]
        %v4555 = vld [vmem:[%s10 + $0x2c] sm:$0xf]
        %v4556 = vld [vmem:[%s10 + $0x30] sm:$0xf]
        %v4557 = vld [vmem:[%s10 + $0x34] sm:$0xf]
        %v4558 = vld [vmem:[%s10 + $0x38] sm:$0xf]
        %v4559 = vld [vmem:[%s10 + $0x3c] sm:$0xf]
        %v4564 = vunpack.c.l.b16 %v4544
        %v4565 = vunpack.c.l.b16 %v4545
        %v4566 = vunpack.c.l.b16 %v4546
        %v4567 = vunpack.c.l.b16 %v4547
        %v4568 = vpack.c.b16 %v4565, %v4564
        %v4569 = vpack.c.b16 %v4567, %v4566
        %v4573 = vsel %vm2068, %v4540, 0
        %4575 = vmatprep.subr.bf16.mxu0 0
        %4576 = vmatpush1.bf16.msra.mxu0 0
        %4577 = vmatprep.subr.bf16.mxu0 0
        %4578 = vmatpush1.bf16.msra.mxu0 0
        %4579 = vmatprep.subr.bf16.mxu0 0
        %4580 = vmatpush1.bf16.msra.mxu0 0
        %4581 = vmatprep.subr.bf16.mxu0 0
        %4582 = vmatpush1.bf16.msra.mxu0 0
        %4583 = vmatprep.subr.bf16.mxu0 0
        %4584 = vmatpush1.bf16.msra.mxu0 0
        %4585 = vmatprep.subr.bf16.mxu0 0
        %4586 = vmatpush1.bf16.msra.mxu0 0
        %4587 = vmatprep.subr.bf16.mxu0 0
        %4588 = vmatpush1.bf16.msra.mxu0 %v4569
        %4589 = vmatprep.subr.bf16.mxu0 0
        %4590 = vmatpush1.bf16.msra.mxu0 %v4568
        %4591 = vmatprep.subr.bf16.mxu0 0
        %4592 = vmatpush2.bf16.msra.mxu0 0
        %4593 = vmatprep.subr.bf16.mxu0 0
        %4594 = vmatpush2.bf16.msra.mxu0 0
        %4595 = vmatprep.subr.bf16.mxu0 0
        %4596 = vmatpush2.bf16.msra.mxu0 0
        %4597 = vmatprep.subr.bf16.mxu0 0
        %4598 = vmatpush2.bf16.msra.mxu0 0
        %4599 = vmatprep.subr.bf16.mxu0 0
        %4600 = vmatpush2.bf16.msra.mxu0 0
        %4601 = vmatprep.subr.bf16.mxu0 0
        %4602 = vmatpush2.bf16.msra.mxu0 0
        %4603 = vmatprep.subr.bf16.mxu0 0
        %4604 = vmatpush2.bf16.msra.mxu0 0
        %4605 = vmatprep.subr.bf16.mxu0 0
        %4606 = vmatpush2.bf16.msra.mxu0 0
        %4607 = vmatprep.mubr.bf16.mxu0 0
        %4608 = vmatmul.mubr.bf16.gmra.mxu0 %v4573
        %v4609 = vpop.f32.mrf.mxu0
        %v4610 = vadd.f32 0.0, %v4609
        %v4611 = vpop.f32.mrf.mxu0
        %v4612 = vpop.f32.mrf.mxu0
        %v4613 = vpop.f32.mrf.mxu0
        %4614 = vdwg.mxu0
        %v4619 = vunpack.c.l.b16 %v4548
        %v4620 = vunpack.c.l.b16 %v4549
        %v4621 = vunpack.c.l.b16 %v4550
        %v4622 = vunpack.c.l.b16 %v4551
        %v4623 = vpack.c.b16 %v4620, %v4619
        %v4624 = vpack.c.b16 %v4622, %v4621
        %v4628 = vsel %vm2068, %v4541, 0
        %4630 = vmatprep.subr.bf16.mxu0 0
        %4631 = vmatpush1.bf16.msra.mxu0 0
        %4632 = vmatprep.subr.bf16.mxu0 0
        %4633 = vmatpush1.bf16.msra.mxu0 0
        %4634 = vmatprep.subr.bf16.mxu0 0
        %4635 = vmatpush1.bf16.msra.mxu0 0
        %4636 = vmatprep.subr.bf16.mxu0 0
        %4637 = vmatpush1.bf16.msra.mxu0 0
        %4638 = vmatprep.subr.bf16.mxu0 0
        %4639 = vmatpush1.bf16.msra.mxu0 0
        %4640 = vmatprep.subr.bf16.mxu0 0
        %4641 = vmatpush1.bf16.msra.mxu0 0
        %4642 = vmatprep.subr.bf16.mxu0 0
        %4643 = vmatpush1.bf16.msra.mxu0 %v4624
        %4644 = vmatprep.subr.bf16.mxu0 0
        %4645 = vmatpush1.bf16.msra.mxu0 %v4623
        %4646 = vmatprep.subr.bf16.mxu0 0
        %4647 = vmatpush2.bf16.msra.mxu0 0
        %4648 = vmatprep.subr.bf16.mxu0 0
        %4649 = vmatpush2.bf16.msra.mxu0 0
        %4650 = vmatprep.subr.bf16.mxu0 0
        %4651 = vmatpush2.bf16.msra.mxu0 0
        %4652 = vmatprep.subr.bf16.mxu0 0
        %4653 = vmatpush2.bf16.msra.mxu0 0
        %4654 = vmatprep.subr.bf16.mxu0 0
        %4655 = vmatpush2.bf16.msra.mxu0 0
        %4656 = vmatprep.subr.bf16.mxu0 0
        %4657 = vmatpush2.bf16.msra.mxu0 0
        %4658 = vmatprep.subr.bf16.mxu0 0
        %4659 = vmatpush2.bf16.msra.mxu0 0
        %4660 = vmatprep.subr.bf16.mxu0 0
        %4661 = vmatpush2.bf16.msra.mxu0 0
        %4662 = vmatprep.mubr.bf16.mxu0 0
        %4663 = vmatmul.mubr.bf16.gmra.mxu0 %v4628
        %v4664 = vpop.f32.mrf.mxu0
        %v4665 = vadd.f32 0.0, %v4664
        %v4666 = vpop.f32.mrf.mxu0
        %v4667 = vpop.f32.mrf.mxu0
        %v4668 = vpop.f32.mrf.mxu0
        %4669 = vdwg.mxu0
        %v4674 = vunpack.c.l.b16 %v4552
        %v4675 = vunpack.c.l.b16 %v4553
        %v4676 = vunpack.c.l.b16 %v4554
        %v4677 = vunpack.c.l.b16 %v4555
        %v4678 = vpack.c.b16 %v4675, %v4674
        %v4679 = vpack.c.b16 %v4677, %v4676
        %v4683 = vsel %vm2068, %v4542, 0
        %4685 = vmatprep.subr.bf16.mxu0 0
        %4686 = vmatpush1.bf16.msra.mxu0 0
        %4687 = vmatprep.subr.bf16.mxu0 0
        %4688 = vmatpush1.bf16.msra.mxu0 0
        %4689 = vmatprep.subr.bf16.mxu0 0
        %4690 = vmatpush1.bf16.msra.mxu0 0
        %4691 = vmatprep.subr.bf16.mxu0 0
        %4692 = vmatpush1.bf16.msra.mxu0 0
        %4693 = vmatprep.subr.bf16.mxu0 0
        %4694 = vmatpush1.bf16.msra.mxu0 0
        %4695 = vmatprep.subr.bf16.mxu0 0
        %4696 = vmatpush1.bf16.msra.mxu0 0
        %4697 = vmatprep.subr.bf16.mxu0 0
        %4698 = vmatpush1.bf16.msra.mxu0 %v4679
        %4699 = vmatprep.subr.bf16.mxu0 0
        %4700 = vmatpush1.bf16.msra.mxu0 %v4678
        %4701 = vmatprep.subr.bf16.mxu0 0
        %4702 = vmatpush2.bf16.msra.mxu0 0
        %4703 = vmatprep.subr.bf16.mxu0 0
        %4704 = vmatpush2.bf16.msra.mxu0 0
        %4705 = vmatprep.subr.bf16.mxu0 0
        %4706 = vmatpush2.bf16.msra.mxu0 0
        %4707 = vmatprep.subr.bf16.mxu0 0
        %4708 = vmatpush2.bf16.msra.mxu0 0
        %4709 = vmatprep.subr.bf16.mxu0 0
        %4710 = vmatpush2.bf16.msra.mxu0 0
        %4711 = vmatprep.subr.bf16.mxu0 0
        %4712 = vmatpush2.bf16.msra.mxu0 0
        %4713 = vmatprep.subr.bf16.mxu0 0
        %4714 = vmatpush2.bf16.msra.mxu0 0
        %4715 = vmatprep.subr.bf16.mxu0 0
        %4716 = vmatpush2.bf16.msra.mxu0 0
        %4717 = vmatprep.mubr.bf16.mxu0 0
        %4718 = vmatmul.mubr.bf16.gmra.mxu0 %v4683
        %v4719 = vpop.f32.mrf.mxu0
        %v4720 = vadd.f32 0.0, %v4719
        %v4721 = vpop.f32.mrf.mxu0
        %v4722 = vpop.f32.mrf.mxu0
        %v4723 = vpop.f32.mrf.mxu0
        %4724 = vdwg.mxu0
        %v4729 = vunpack.c.l.b16 %v4556
        %v4730 = vunpack.c.l.b16 %v4557
        %v4731 = vunpack.c.l.b16 %v4558
        %v4732 = vunpack.c.l.b16 %v4559
        %v4733 = vpack.c.b16 %v4730, %v4729
        %v4734 = vpack.c.b16 %v4732, %v4731
        %v4738 = vsel %vm2068, %v4543, 0
        %4740 = vmatprep.subr.bf16.mxu0 0
        %4741 = vmatpush1.bf16.msra.mxu0 0
        %4742 = vmatprep.subr.bf16.mxu0 0
        %4743 = vmatpush1.bf16.msra.mxu0 0
        %4744 = vmatprep.subr.bf16.mxu0 0
        %4745 = vmatpush1.bf16.msra.mxu0 0
        %4746 = vmatprep.subr.bf16.mxu0 0
        %4747 = vmatpush1.bf16.msra.mxu0 0
        %4748 = vmatprep.subr.bf16.mxu0 0
        %4749 = vmatpush1.bf16.msra.mxu0 0
        %4750 = vmatprep.subr.bf16.mxu0 0
        %4751 = vmatpush1.bf16.msra.mxu0 0
        %4752 = vmatprep.subr.bf16.mxu0 0
        %4753 = vmatpush1.bf16.msra.mxu0 %v4734
        %4754 = vmatprep.subr.bf16.mxu0 0
        %4755 = vmatpush1.bf16.msra.mxu0 %v4733
        %4756 = vmatprep.subr.bf16.mxu0 0
        %4757 = vmatpush2.bf16.msra.mxu0 0
        %4758 = vmatprep.subr.bf16.mxu0 0
        %4759 = vmatpush2.bf16.msra.mxu0 0
        %4760 = vmatprep.subr.bf16.mxu0 0
        %4761 = vmatpush2.bf16.msra.mxu0 0
        %4762 = vmatprep.subr.bf16.mxu0 0
        %4763 = vmatpush2.bf16.msra.mxu0 0
        %4764 = vmatprep.subr.bf16.mxu0 0
        %4765 = vmatpush2.bf16.msra.mxu0 0
        %4766 = vmatprep.subr.bf16.mxu0 0
        %4767 = vmatpush2.bf16.msra.mxu0 0
        %4768 = vmatprep.subr.bf16.mxu0 0
        %4769 = vmatpush2.bf16.msra.mxu0 0
        %4770 = vmatprep.subr.bf16.mxu0 0
        %4771 = vmatpush2.bf16.msra.mxu0 0
        %4772 = vmatprep.mubr.bf16.mxu0 0
        %4773 = vmatmul.mubr.bf16.gmra.mxu0 %v4738
        %v4774 = vpop.f32.mrf.mxu0
        %v4775 = vadd.f32 0.0, %v4774
        %v4776 = vpop.f32.mrf.mxu0
        %v4777 = vpop.f32.mrf.mxu0
        %v4778 = vpop.f32.mrf.mxu0
        %4779 = vdwg.mxu0
        %v4780 = vadd.f32 %v4610, %v4665
        %v4781 = vadd.f32 %v4780, %v4720
        %v4782 = vadd.f32 %v4781, %v4775
        %v4783 = vld [vmem:[%s11] sm:$0x1]
        %v4785 = vlaneseq
        %v4786 = vshrl.u32 %v4785, 7
        %v4787 = vsub.s32 0, %v4786
        %v4788 = vrot.slane %v4783, %v4787
        %v4790 = vadd.f32 %v4782, %v4788
        %v4791 = vld [vmem:[%s12] sm:$0x1]
        %v4792 = vld [vmem:[%s13] sm:$0x1]
        %4793 = vadd.xlane.f32.xlu0 %v4790
        %v4794 = vpop.xlane.xlu0 %4793
        %v4795 = vmul.f32 %v4794, %v2746
        %v4796 = vsub.f32 %v4790, %v4795
        %v4797 = vmul.f32 %v4796, %v4796
        %4798 = vadd.xlane.f32.xlu0 %v4797
        %v4799 = vpop.xlane.xlu0 %4798
        %v4800 = vmul.f32 %v4799, %v2746
        %v4801 = vadd.f32 %v4800, 1e-05
        %v4802 = vrsqrt.pop %v4801
        %v4803 = vmul.f32 %v4796, %v4802
        %v4805 = vlaneseq
        %v4806 = vshrl.u32 %v4805, 7
        %v4807 = vsub.s32 0, %v4806
        %v4808 = vrot.slane %v4791, %v4807
        %v4810 = vmul.f32 %v4803, %v4808
        %v4812 = vlaneseq
        %v4813 = vshrl.u32 %v4812, 7
        %v4814 = vsub.s32 0, %v4813
        %v4815 = vrot.slane %v4792, %v4814
        %v4817 = vadd.f32 %v4810, %v4815
        %v4818 = vadd.f32 %v2770, %v4817
        %v4819 = vpack.c.bf16 %v4818, %v4818
        %v4820 = vld [vmem:[%s14] sm:$0xff]
        %v4821 = vld [vmem:[%s14 + $0x8] sm:$0xff]
        %v4822 = vld [vmem:[%s14 + $0x10] sm:$0xff]
        %v4823 = vld [vmem:[%s14 + $0x18] sm:$0xff]
        %v4824 = vld [vmem:[%s14 + $0x20] sm:$0xff]
        %v4825 = vld [vmem:[%s14 + $0x28] sm:$0xff]
        %v4826 = vld [vmem:[%s14 + $0x30] sm:$0xff]
        %v4827 = vld [vmem:[%s14 + $0x38] sm:$0xff]
        %v4828 = vld [vmem:[%s14 + $0x40] sm:$0xff]
        %v4829 = vld [vmem:[%s14 + $0x48] sm:$0xff]
        %v4830 = vld [vmem:[%s14 + $0x50] sm:$0xff]
        %v4831 = vld [vmem:[%s14 + $0x58] sm:$0xff]
        %v4832 = vld [vmem:[%s14 + $0x60] sm:$0xff]
        %v4833 = vld [vmem:[%s14 + $0x68] sm:$0xff]
        %v4834 = vld [vmem:[%s14 + $0x70] sm:$0xff]
        %v4835 = vld [vmem:[%s14 + $0x78] sm:$0xff]
        %v4836 = vld [vmem:[%s15] sm:$0x3]
        %v4838 = vlaneseq
        %v4839 = vshrl.u32 %v4838, 7
        %v4840 = vsub.s32 0, %v4839
        %v4841 = vrot.slane %v4836, %v4840
        %v4842 = vlaneseq
        %v4843 = vshrl.u32 %v4842, 7
        %v4844 = vsub.s32 1, %v4843
        %v4845 = vrot.slane %v4836, %v4844
        %v4864 = vunpack.c.l.b16 %v4820
        %v4865 = vunpack.c.h.b16 %v4820
        %v4866 = vunpack.c.l.b16 %v4821
        %v4867 = vunpack.c.h.b16 %v4821
        %v4868 = vunpack.c.l.b16 %v4822
        %v4869 = vunpack.c.h.b16 %v4822
        %v4870 = vunpack.c.l.b16 %v4823
        %v4871 = vunpack.c.h.b16 %v4823
        %v4872 = vunpack.c.l.b16 %v4824
        %v4873 = vunpack.c.h.b16 %v4824
        %v4874 = vunpack.c.l.b16 %v4825
        %v4875 = vunpack.c.h.b16 %v4825
        %v4876 = vunpack.c.l.b16 %v4826
        %v4877 = vunpack.c.h.b16 %v4826
        %v4878 = vunpack.c.l.b16 %v4827
        %v4879 = vunpack.c.h.b16 %v4827
        %v4880 = vunpack.c.l.b16 %v4828
        %v4881 = vunpack.c.h.b16 %v4828
        %v4882 = vunpack.c.l.b16 %v4829
        %v4883 = vunpack.c.h.b16 %v4829
        %v4884 = vunpack.c.l.b16 %v4830
        %v4885 = vunpack.c.h.b16 %v4830
        %v4886 = vunpack.c.l.b16 %v4831
        %v4887 = vunpack.c.h.b16 %v4831
        %v4888 = vunpack.c.l.b16 %v4832
        %v4889 = vunpack.c.h.b16 %v4832
        %v4890 = vunpack.c.l.b16 %v4833
        %v4891 = vunpack.c.h.b16 %v4833
        %v4892 = vunpack.c.l.b16 %v4834
        %v4893 = vunpack.c.h.b16 %v4834
        %v4894 = vunpack.c.l.b16 %v4835
        %v4895 = vunpack.c.h.b16 %v4835
        %v4896 = vpack.c.b16 %v4866, %v4864
        %v4897 = vpack.c.b16 %v4867, %v4865
        %v4898 = vpack.c.b16 %v4870, %v4868
        %v4899 = vpack.c.b16 %v4871, %v4869
        %v4900 = vpack.c.b16 %v4874, %v4872
        %v4901 = vpack.c.b16 %v4875, %v4873
        %v4902 = vpack.c.b16 %v4878, %v4876
        %v4903 = vpack.c.b16 %v4879, %v4877
        %v4904 = vpack.c.b16 %v4882, %v4880
        %v4905 = vpack.c.b16 %v4883, %v4881
        %v4906 = vpack.c.b16 %v4886, %v4884
        %v4907 = vpack.c.b16 %v4887, %v4885
        %v4908 = vpack.c.b16 %v4890, %v4888
        %v4909 = vpack.c.b16 %v4891, %v4889
        %v4910 = vpack.c.b16 %v4894, %v4892
        %v4911 = vpack.c.b16 %v4895, %v4893
        %4928 = vmatprep.subr.bf16.mxu0 %v4911
        %4929 = vmatpush1.bf16.msra.mxu0 %v4910
        %4930 = vmatprep.subr.bf16.mxu0 %v4909
        %4931 = vmatpush1.bf16.msra.mxu0 %v4908
        %4932 = vmatprep.subr.bf16.mxu0 %v4907
        %4933 = vmatpush1.bf16.msra.mxu0 %v4906
        %4934 = vmatprep.subr.bf16.mxu0 %v4905
        %4935 = vmatpush1.bf16.msra.mxu0 %v4904
        %4936 = vmatprep.subr.bf16.mxu0 %v4903
        %4937 = vmatpush1.bf16.msra.mxu0 %v4902
        %4938 = vmatprep.subr.bf16.mxu0 %v4901
        %4939 = vmatpush1.bf16.msra.mxu0 %v4900
        %4940 = vmatprep.subr.bf16.mxu0 %v4899
        %4941 = vmatpush1.bf16.msra.mxu0 %v4898
        %4942 = vmatprep.subr.bf16.mxu0 %v4897
        %4943 = vmatpush1.bf16.msra.mxu0 %v4896
        %4944 = vmatprep.subr.bf16.mxu0 0
        %4945 = vmatpush2.bf16.msra.mxu0 0
        %4946 = vmatprep.subr.bf16.mxu0 0
        %4947 = vmatpush2.bf16.msra.mxu0 0
        %4948 = vmatprep.subr.bf16.mxu0 0
        %4949 = vmatpush2.bf16.msra.mxu0 0
        %4950 = vmatprep.subr.bf16.mxu0 0
        %4951 = vmatpush2.bf16.msra.mxu0 0
        %4952 = vmatprep.subr.bf16.mxu0 0
        %4953 = vmatpush2.bf16.msra.mxu0 0
        %4954 = vmatprep.subr.bf16.mxu0 0
        %4955 = vmatpush2.bf16.msra.mxu0 0
        %4956 = vmatprep.subr.bf16.mxu0 0
        %4957 = vmatpush2.bf16.msra.mxu0 0
        %4958 = vmatprep.subr.bf16.mxu0 0
        %4959 = vmatpush2.bf16.msra.mxu0 0
        %4960 = vmatprep.mubr.bf16.mxu0 0
        %4961 = vmatmul.mubr.bf16.gmra.mxu0 %v4819
        %v4962 = vpop.f32.mrf.mxu0
        %v4963 = vadd.f32 %v4841, %v4962
        %v4964 = vpop.f32.mrf.mxu0
        %v4965 = vadd.f32 %v4845, %v4964
        %v4966 = vpop.f32.mrf.mxu0
        %v4967 = vpop.f32.mrf.mxu0
        %4968 = vdwg.mxu0
        %v4969 = vmax.f32 %v4963, 0.0
        %v4970 = vmax.f32 %v4965, 0.0
        %v4971 = vpack.c.bf16 %v4969, %v4969
        %v4972 = vpack.c.bf16 %v4970, %v4970
        %v4973 = vld [vmem:[%s16] sm:$0xf]
        %v4974 = vld [vmem:[%s16 + $0x4] sm:$0xf]
        %v4975 = vld [vmem:[%s16 + $0x8] sm:$0xf]
        %v4976 = vld [vmem:[%s16 + $0xc] sm:$0xf]
        %v4977 = vld [vmem:[%s16 + $0x10] sm:$0xf]
        %v4978 = vld [vmem:[%s16 + $0x14] sm:$0xf]
        %v4979 = vld [vmem:[%s16 + $0x18] sm:$0xf]
        %v4980 = vld [vmem:[%s16 + $0x1c] sm:$0xf]
        %v4981 = vld [vmem:[%s16 + $0x20] sm:$0xf]
        %v4982 = vld [vmem:[%s16 + $0x24] sm:$0xf]
        %v4983 = vld [vmem:[%s16 + $0x28] sm:$0xf]
        %v4984 = vld [vmem:[%s16 + $0x2c] sm:$0xf]
        %v4985 = vld [vmem:[%s16 + $0x30] sm:$0xf]
        %v4986 = vld [vmem:[%s16 + $0x34] sm:$0xf]
        %v4987 = vld [vmem:[%s16 + $0x38] sm:$0xf]
        %v4988 = vld [vmem:[%s16 + $0x3c] sm:$0xf]
        %v4989 = vld [vmem:[%s16 + $0x40] sm:$0xf]
        %v4990 = vld [vmem:[%s16 + $0x44] sm:$0xf]
        %v4991 = vld [vmem:[%s16 + $0x48] sm:$0xf]
        %v4992 = vld [vmem:[%s16 + $0x4c] sm:$0xf]
        %v4993 = vld [vmem:[%s16 + $0x50] sm:$0xf]
        %v4994 = vld [vmem:[%s16 + $0x54] sm:$0xf]
        %v4995 = vld [vmem:[%s16 + $0x58] sm:$0xf]
        %v4996 = vld [vmem:[%s16 + $0x5c] sm:$0xf]
        %v4997 = vld [vmem:[%s16 + $0x60] sm:$0xf]
        %v4998 = vld [vmem:[%s16 + $0x64] sm:$0xf]
        %v4999 = vld [vmem:[%s16 + $0x68] sm:$0xf]
        %v5000 = vld [vmem:[%s16 + $0x6c] sm:$0xf]
        %v5001 = vld [vmem:[%s16 + $0x70] sm:$0xf]
        %v5002 = vld [vmem:[%s16 + $0x74] sm:$0xf]
        %v5003 = vld [vmem:[%s16 + $0x78] sm:$0xf]
        %v5004 = vld [vmem:[%s16 + $0x7c] sm:$0xf]
        %v5005 = vld [vmem:[%s17] sm:$0x1]
        %v5007 = vlaneseq
        %v5008 = vshrl.u32 %v5007, 7
        %v5009 = vsub.s32 0, %v5008
        %v5010 = vrot.slane %v5005, %v5009
        %v5044 = vunpack.c.l.b16 %v4973
        %v5045 = vunpack.c.l.b16 %v4974
        %v5046 = vunpack.c.l.b16 %v4975
        %v5047 = vunpack.c.l.b16 %v4976
        %v5048 = vunpack.c.l.b16 %v4977
        %v5049 = vunpack.c.l.b16 %v4978
        %v5050 = vunpack.c.l.b16 %v4979
        %v5051 = vunpack.c.l.b16 %v4980
        %v5052 = vunpack.c.l.b16 %v4981
        %v5053 = vunpack.c.l.b16 %v4982
        %v5054 = vunpack.c.l.b16 %v4983
        %v5055 = vunpack.c.l.b16 %v4984
        %v5056 = vunpack.c.l.b16 %v4985
        %v5057 = vunpack.c.l.b16 %v4986
        %v5058 = vunpack.c.l.b16 %v4987
        %v5059 = vunpack.c.l.b16 %v4988
        %v5060 = vunpack.c.l.b16 %v4989
        %v5061 = vunpack.c.l.b16 %v4990
        %v5062 = vunpack.c.l.b16 %v4991
        %v5063 = vunpack.c.l.b16 %v4992
        %v5064 = vunpack.c.l.b16 %v4993
        %v5065 = vunpack.c.l.b16 %v4994
        %v5066 = vunpack.c.l.b16 %v4995
        %v5067 = vunpack.c.l.b16 %v4996
        %v5068 = vunpack.c.l.b16 %v4997
        %v5069 = vunpack.c.l.b16 %v4998
        %v5070 = vunpack.c.l.b16 %v4999
        %v5071 = vunpack.c.l.b16 %v5000
        %v5072 = vunpack.c.l.b16 %v5001
        %v5073 = vunpack.c.l.b16 %v5002
        %v5074 = vunpack.c.l.b16 %v5003
        %v5075 = vunpack.c.l.b16 %v5004
        %v5076 = vpack.c.b16 %v5045, %v5044
        %v5077 = vpack.c.b16 %v5047, %v5046
        %v5078 = vpack.c.b16 %v5049, %v5048
        %v5079 = vpack.c.b16 %v5051, %v5050
        %v5080 = vpack.c.b16 %v5053, %v5052
        %v5081 = vpack.c.b16 %v5055, %v5054
        %v5082 = vpack.c.b16 %v5057, %v5056
        %v5083 = vpack.c.b16 %v5059, %v5058
        %v5084 = vpack.c.b16 %v5061, %v5060
        %v5085 = vpack.c.b16 %v5063, %v5062
        %v5086 = vpack.c.b16 %v5065, %v5064
        %v5087 = vpack.c.b16 %v5067, %v5066
        %v5088 = vpack.c.b16 %v5069, %v5068
        %v5089 = vpack.c.b16 %v5071, %v5070
        %v5090 = vpack.c.b16 %v5073, %v5072
        %v5091 = vpack.c.b16 %v5075, %v5074
        %5108 = vmatprep.subr.bf16.mxu0 0
        %5109 = vmatpush1.bf16.msra.mxu0 %v5083
        %5110 = vmatprep.subr.bf16.mxu0 0
        %5111 = vmatpush1.bf16.msra.mxu0 %v5082
        %5112 = vmatprep.subr.bf16.mxu0 0
        %5113 = vmatpush1.bf16.msra.mxu0 %v5081
        %5114 = vmatprep.subr.bf16.mxu0 0
        %5115 = vmatpush1.bf16.msra.mxu0 %v5080
        %5116 = vmatprep.subr.bf16.mxu0 0
        %5117 = vmatpush1.bf16.msra.mxu0 %v5079
        %5118 = vmatprep.subr.bf16.mxu0 0
        %5119 = vmatpush1.bf16.msra.mxu0 %v5078
        %5120 = vmatprep.subr.bf16.mxu0 0
        %5121 = vmatpush1.bf16.msra.mxu0 %v5077
        %5122 = vmatprep.subr.bf16.mxu0 0
        %5123 = vmatpush1.bf16.msra.mxu0 %v5076
        %5124 = vmatprep.subr.bf16.mxu0 0
        %5125 = vmatpush2.bf16.msra.mxu0 %v5091
        %5126 = vmatprep.subr.bf16.mxu0 0
        %5127 = vmatpush2.bf16.msra.mxu0 %v5090
        %5128 = vmatprep.subr.bf16.mxu0 0
        %5129 = vmatpush2.bf16.msra.mxu0 %v5089
        %5130 = vmatprep.subr.bf16.mxu0 0
        %5131 = vmatpush2.bf16.msra.mxu0 %v5088
        %5132 = vmatprep.subr.bf16.mxu0 0
        %5133 = vmatpush2.bf16.msra.mxu0 %v5087
        %5134 = vmatprep.subr.bf16.mxu0 0
        %5135 = vmatpush2.bf16.msra.mxu0 %v5086
        %5136 = vmatprep.subr.bf16.mxu0 0
        %5137 = vmatpush2.bf16.msra.mxu0 %v5085
        %5138 = vmatprep.subr.bf16.mxu0 0
        %5139 = vmatpush2.bf16.msra.mxu0 %v5084
        %5140 = vmatprep.mubr.bf16.mxu0 %v4972
        %5141 = vmatmul.mubr.bf16.gmra.mxu0 %v4971
        %v5142 = vpop.f32.mrf.mxu0
        %v5143 = vadd.f32 %v5010, %v5142
        %v5144 = vpop.f32.mrf.mxu0
        %v5145 = vpop.f32.mrf.mxu0
        %v5146 = vpop.f32.mrf.mxu0
        %5147 = vdwg.mxu0
        %v5148 = vld [vmem:[%s18] sm:$0x1]
        %v5149 = vld [vmem:[%s19] sm:$0x1]
        %5150 = vadd.xlane.f32.xlu0 %v5143
        %v5151 = vpop.xlane.xlu0 %5150
        %v5152 = vmul.f32 %v5151, %v2746
        %v5153 = vsub.f32 %v5143, %v5152
        %v5154 = vmul.f32 %v5153, %v5153
        %5155 = vadd.xlane.f32.xlu0 %v5154
        %v5156 = vpop.xlane.xlu0 %5155
        %v5157 = vmul.f32 %v5156, %v2746
        %v5158 = vadd.f32 %v5157, 1e-05
        %v5159 = vrsqrt.pop %v5158
        %v5160 = vmul.f32 %v5153, %v5159
        %v5162 = vlaneseq
        %v5163 = vshrl.u32 %v5162, 7
        %v5164 = vsub.s32 0, %v5163
        %v5165 = vrot.slane %v5148, %v5164
        %v5167 = vmul.f32 %v5160, %v5165
        %v5169 = vlaneseq
        %v5170 = vshrl.u32 %v5169, 7
        %v5171 = vsub.s32 0, %v5170
        %v5172 = vrot.slane %v5149, %v5171
        %v5174 = vadd.f32 %v5167, %v5172
        %v5175 = vadd.f32 %v4818, %v5174
        %v5176 = vpack.c.bf16 %v5175, %v5175
        %5177 = vst [vmem:[%s716] sm:$0xf] %v5176
        %5178 = vst.msk [vmem:[%s697] sm:$0xff] %vm2253, %v2291
        %5179 = vst.msk [vmem:[%s697 + $0x8] sm:$0xff] %vm2253, %v2293
        %5180 = vst.msk [vmem:[%s697 + $0x10] sm:$0xff] %vm2253, %v2295
        %5181 = vst.msk [vmem:[%s697 + $0x18] sm:$0xff] %vm2253, %v2297
        %5182 = vst.msk [vmem:[%s704] sm:$0xff] %vm2253, %v4341
        %5183 = vst.msk [vmem:[%s704 + $0x8] sm:$0xff] %vm2253, %v4343
        %5184 = vst.msk [vmem:[%s704 + $0x10] sm:$0xff] %vm2253, %v4345
        %5185 = vst.msk [vmem:[%s704 + $0x18] sm:$0xff] %vm2253, %v4347
        %p5186 = scmp.lt.s32.totalorder %s40, 1
        %s5187 = scalar_select %p5186, %s40, 1
        %s5188 = smul.addr %s5187, 4
        %s5189 = scalar_lea.vmem %s20, %s5188
        %s5190 = sand.u32 %s504, 1
        %s5191 = scalar_lea.sflag [#allocation3], %s5190
        %s5192 = sand.u32 %s504, 1
        %s5193 = smul.addr %s5192, 32
        %s5194 = scalar_lea.vmem [#allocation2], %s5193
        %s5195 = sand.u32 %s530, 1
        %s5196 = scalar_lea.sflag [#allocation5], %s5195
        %s5197 = sand.u32 %s530, 1
        %s5198 = smul.addr %s5197, 32
        %s5199 = scalar_lea.vmem [#allocation4], %s5198
        // Predicated region
        $region101: #{decoder_forward.4} parent=99 // pred_check
          %p5200 = pneg %p488
        $region102: #{decoder_forward.4} parent=99 // pred_check_branch
          %5202 = sbr.rel (%p5200) target = $region104
        $region103: #{decoder_forward.4} parent=99 // pred_region
          _
        $region104: #{decoder_forward.4} parent=99 // pred_fallthru
          _
        // Predicated region
        $region105: #{decoder_forward.4} parent=99 // pred_check
          %p5203 = pneg %p514
        $region106: #{decoder_forward.4} parent=99 // pred_check_branch
          %5205 = sbr.rel (%p5203) target = $region108
        $region107: #{decoder_forward.4} parent=99 // pred_region
          %s5207 = ssub.s32 512, 512
          %5208 = vsyncadd %s5191, %s5207
          %s5209 = smul.addr %s40, 4
          %s5210 = smul.addr %s5209, 128
          %s5211 = scalar_lea.hbm %s21, %s5210
          %s5212 = sshll.u32 %s5194, 4
          %s5213 = int_to_ptr.vmem [resolvable:$true] %s5212
          %5218 = dma.vmem_to_hbm [thread:$0]  %s5213, 512, %s5211, %s5191, 128, 128, 8
        $region108: #{decoder_forward.4} parent=99 // pred_fallthru
          _
        // Predicated region
        $region109: #{decoder_forward.4} parent=99 // pred_check
          %p5219 = pneg %p540
        $region110: #{decoder_forward.4} parent=99 // pred_check_branch
          %5221 = sbr.rel (%p5219) target = $region112
        $region111: #{decoder_forward.4} parent=99 // pred_region
          %s5223 = ssub.s32 512, 512
          %5224 = vsyncadd %s5196, %s5223
          %s5225 = smul.addr %s40, 4
          %s5226 = smul.addr %s5225, 128
          %s5227 = scalar_lea.hbm %s22, %s5226
          %s5228 = sshll.u32 %s5199, 4
          %s5229 = int_to_ptr.vmem [resolvable:$true] %s5228
          %5234 = dma.vmem_to_hbm [thread:$0]  %s5229, 512, %s5227, %s5196, 128, 128, 8
        $region112: #{decoder_forward.4} parent=99 // pred_fallthru
          _
      $region100: #{decoder_forward.4} parent=5 // pred_fallthru
        _
      %p5235 = scmp.le.s32.totalorder 2, %s35
      // Predicated region
      $region113: #{decoder_forward.4} parent=5 // pred_check
        %p5236 = pneg %p5235
      $region114: #{decoder_forward.4} parent=5 // pred_check_branch
        %5238 = sbr.rel (%p5236) target = $region116
      $region115: #{decoder_forward.4} parent=5 // pred_region
        %s5239 = ssub.s32 %s35, 2
        // Predicated region
        $region117: #{decoder_forward.4} parent=115 // pred_check
          %p5240 = pneg %p494
        $region118: #{decoder_forward.4} parent=115 // pred_check_branch
          %5242 = sbr.rel (%p5240) target = $region120
        $region119: #{decoder_forward.4} parent=115 // pred_region
          %p5243 = scmp.lt.s32.totalorder %s41, 1
          %s5244 = scalar_select %p5243, %s41, 1
          %s5245 = smul.addr %s5244, 4
          %s5246 = scalar_lea.vmem %s20, %s5245
        $region120: #{decoder_forward.4} parent=115 // pred_fallthru
          _
        // Predicated region
        $region121: #{decoder_forward.4} parent=115 // pred_check
          %p5247 = pneg %p520
        $region122: #{decoder_forward.4} parent=115 // pred_check_branch
          %5249 = sbr.rel (%p5247) target = $region124
        $region123: #{decoder_forward.4} parent=115 // pred_region
          %s5250 = sand.u32 %s505, 1
          %s5251 = scalar_lea.sflag [#allocation3], %s5250
          %s5252 = sand.u32 %s505, 1
          %s5253 = smul.addr %s5252, 32
          %s5254 = scalar_lea.vmem [#allocation2], %s5253
          %5255 = dma.done %s5251, 512
        $region124: #{decoder_forward.4} parent=115 // pred_fallthru
          _
        // Predicated region
        $region125: #{decoder_forward.4} parent=115 // pred_check
          %p5256 = pneg %p546
        $region126: #{decoder_forward.4} parent=115 // pred_check_branch
          %5258 = sbr.rel (%p5256) target = $region128
        $region127: #{decoder_forward.4} parent=115 // pred_region
          %s5259 = sand.u32 %s531, 1
          %s5260 = scalar_lea.sflag [#allocation5], %s5259
          %s5261 = sand.u32 %s531, 1
          %s5262 = smul.addr %s5261, 32
          %s5263 = scalar_lea.vmem [#allocation4], %s5262
          %5264 = dma.done %s5260, 512
        $region128: #{decoder_forward.4} parent=115 // pred_fallthru
          _
      $region116: #{decoder_forward.4} parent=5 // pred_fallthru
        _
    $region6: #{decoder_forward.4} parent=1 // loop_footer
      %s39 = sadd.s32 1, %s35
    $region7: #{decoder_forward.4} parent=1 // loop_footer_branch
      %34 = sbr.rel target = $region3
    $region8: #{decoder_forward.4} parent=1 // loop_exit
      _
    %5265 = vsyncpa [#allocation3], 1
    %s5266 = scalar_lea.sflag [#allocation3], 1
    %5267 = vsyncpa %s5266, 1
    %5268 = vsyncpa [#allocation5], 1
    %s5269 = scalar_lea.sflag [#allocation5], 1
    %5270 = vsyncpa %s5269, 1

</llo_original>
